<compile_context>
chip_gen: v7x
topology: tpu7x:2x2x1
jax: 0.10.0
libtpu: 0.0.40
codegen_flags: <defaults>
</compile_context>

<pallas_src>
import jax
import jax.numpy as jnp
from jax import lax
from jax.experimental import pallas as pl
from jax.experimental.pallas import tpu as pltpu

_BN_EPS = 1e-5

# Static model dims (Weather: 3->16->32 channels, 64x64 input, fc 8192->4).
_C0, _C1, _C2 = 3, 16, 32
_HW = 64                  # input spatial size (fc 8192 = 32*16*16 => 64x64 input)
_IMG = _HW * _HW          # 4096 pixels per image
_H3 = _W3 = 16
_NCLS = 4


# ----------------------------------------------------------------------------
# "Shift forward by d pixels" along the flat pixel axis:
#   result[:, p] = x[:, (p + d) mod n]
# Implemented with pltpu.roll (XLU).  A tiny one-time probe pins down the roll
# convention / support so the conv taps cannot silently flip direction.
# ----------------------------------------------------------------------------
_SHIFT_IMPL = None


def _detect_shift_impl():
    n = 4096
    x = jnp.arange(8 * n, dtype=jnp.float32).reshape(8, n)
    want_fwd = jnp.roll(x, (-65) % n, axis=1)       # result[p] = x[p + 65]
    try:
        def k(x_ref, o_ref):
            o_ref[...] = pltpu.roll(x_ref[...], (-65) % n, axis=1)
        y = pl.pallas_call(
            k, out_shape=jax.ShapeDtypeStruct((8, n), jnp.float32))(x)
        if bool(jnp.array_equal(y, want_fwd)):
            return "roll"       # pltpu.roll follows jnp.roll convention
        if bool(jnp.array_equal(y, jnp.roll(x, 65, axis=1))):
            return "roll_rev"   # opposite convention
    except Exception:
        pass
    return "lax"                # fall back to jnp.roll (slices + concat)


def _shift_impl():
    global _SHIFT_IMPL
    if _SHIFT_IMPL is None:
        _SHIFT_IMPL = _detect_shift_impl()
    return _SHIFT_IMPL


def _shift_fwd(x, d, n):
    """result[:, p] = x[:, (p + d) mod n]  (d is a static Python int)."""
    d = d % n
    if d == 0:
        return x
    impl = _shift_impl()
    if impl == "roll":
        return pltpu.roll(x, (n - d) % n, axis=1)
    if impl == "roll_rev":
        return pltpu.roll(x, d, axis=1)
    return jnp.roll(x, -d, axis=1)


# ----------------------------------------------------------------------------
# Fused forward kernel: one grid step = T images, concatenated along lanes.
# ----------------------------------------------------------------------------
def _weather_kernel(x_ref, w1_ref, b1_ref, w2_ref, b2_ref, fcw_ref, fcb_ref,
                    o_ref):
    n = x_ref.shape[1]                 # T * 4096 pixels in this batch block
    t_imgs = n // _IMG

    # Per-image pixel coordinates (periodic over the concatenated images).
    q = lax.broadcasted_iota(jnp.int32, (1, n), 1) & (_IMG - 1)
    row = q >> 6                       # h in [0, 64)
    col = q & (_HW - 1)                # w in [0, 64)

    def conv_taps(act, s):
        """9 shifted + border-masked copies of act (C, n); s = pixel dilation."""
        outs = []
        for dh in (-1, 0, 1):
            for dw in (-1, 0, 1):
                v = _shift_fwd(act, (dh * _HW + dw) * s, n)
                conds = []
                if dh < 0:
                    conds.append(row >= s)
                if dh > 0:
                    conds.append(row < _HW - s)
                if dw < 0:
                    conds.append(col >= s)
                if dw > 0:
                    conds.append(col < _HW - s)
                if conds:
                    m = conds[0]
                    for c in conds[1:]:
                        m = m & c
                    v = jnp.where(m, v, 0.0)
                outs.append(v)
        return outs

    # ---- layer 1: 3x3 conv (3->16) as one MXU dot + folded-BN bias + ReLU ----
    x = x_ref[...]                                               # (3, n) f32
    p1 = jnp.concatenate(conv_taps(x, 1), axis=0)                # (27, n) f32
    a1 = jnp.dot(w1_ref[...], p1, preferred_element_type=jnp.float32)
    a1 = jnp.maximum(a1 + b1_ref[...], 0.0)                      # (16, n)

    # ---- 2x2 max pool, in-register (valid results at even h, w) ----
    m1 = jnp.maximum(a1, _shift_fwd(a1, 1, n))
    y1 = jnp.maximum(m1, _shift_fwd(m1, _HW, n))                 # (16, n)

    # ---- layer 2 on the x2-dilated grid: 3x3 conv (16->32) + bias + ReLU ----
    p2 = jnp.concatenate(
        [v.astype(jnp.bfloat16) for v in conv_taps(y1, 2)], axis=0)  # (144, n)
    a2 = jnp.dot(w2_ref[...], p2, preferred_element_type=jnp.float32)
    a2 = jnp.maximum(a2 + b2_ref[...], 0.0)                      # (32, n)

    # ---- 2x2 max pool on the dilated grid (valid results at h, w % 4 == 0) ----
    m2 = jnp.maximum(a2, _shift_fwd(a2, 2, n))
    y2 = jnp.maximum(m2, _shift_fwd(m2, 2 * _HW, n))             # (32, n)

    # ---- fc: dilated weight (zero off the valid 16x16 grid), per image ----
    segs = [y2[:, t * _IMG:(t + 1) * _IMG] for t in range(t_imgs)]  # (32, 4096)
    rows = []
    for c in range(_NCLS):
        wc = fcw_ref[c]                                          # (32, 4096)
        vals = []
        for t in range(t_imgs):
            s_lane = jnp.sum(wc * segs[t], axis=1, keepdims=True)   # (32, 1)
            vals.append(jnp.sum(s_lane, axis=0, keepdims=True))     # (1, 1)
        rows.append(jnp.concatenate(vals, axis=1))               # (1, T)
    o_ref[0] = jnp.concatenate(rows, axis=0) + fcb_ref[...]      # (4, T)


# ----------------------------------------------------------------------------
# Wrapper: BN folding, weight packing, batch tiling, single pallas_call.
# ----------------------------------------------------------------------------
def _fold_bn(conv_b, gamma, beta, mean, var):
    scale = gamma / jnp.sqrt(var + _BN_EPS)
    bias = beta + (conv_b - mean) * scale
    return scale.astype(jnp.float32), bias.astype(jnp.float32)


def weather_forward(params, x_nchw):
    B = x_nchw.shape[0]
    _shift_impl()   # resolve roll convention once, outside the kernel trace

    s1, b1 = _fold_bn(params['conv1_b'], params['bn1_g'], params['bn1_b'],
                      params['bn1_m'], params['bn1_v'])
    s2, b2 = _fold_bn(params['conv2_b'], params['bn2_g'], params['bn2_b'],
                      params['bn2_m'], params['bn2_v'])

    # Packed conv weights (Cout, 9*Cin), rows ordered (kh, kw, cin), with the
    # BN scale folded in.  Layer 1 stays f32, layer 2 goes bf16.
    w1p = jnp.transpose(params['conv1_w'], (3, 0, 1, 2)).reshape(_C1, 9 * _C0)
    w1p = (w1p * s1[:, None]).astype(jnp.float32)
    w2p = jnp.transpose(params['conv2_w'], (3, 0, 1, 2)).reshape(_C2, 9 * _C1)
    w2p = (w2p * s2[:, None]).astype(jnp.bfloat16)

    # FC weight scattered onto the dilated 64x64 grid (valid pixels every 4th).
    fc = params['fc_w'].reshape(_C2, _H3, _W3, _NCLS)            # (c, h3, w3, n)
    fcw = jnp.zeros((_NCLS, _C2, _HW, _HW), jnp.float32)
    fcw = fcw.at[:, :, ::4, ::4].set(jnp.transpose(fc, (3, 0, 1, 2)))
    fcw = fcw.reshape(_NCLS, _C2, _IMG)
    fcb = params['fc_b'].reshape(_NCLS, 1).astype(jnp.float32)

    # Batch tile T: keep grid >= 2 (v7x megacore) and VMEM well under 64 MiB.
    if B >= 8:
        T = 4
    else:
        T = max(1, B // 2)
    G = pl.cdiv(B, T)
    Bp = G * T

    # Channels-first, images concatenated along the lane-dense pixel axis.
    x2d = jnp.transpose(x_nchw, (1, 0, 2, 3)).reshape(_C0, B * _IMG)
    x2d = x2d.astype(jnp.float32)
    if Bp != B:
        x2d = jnp.pad(x2d, ((0, 0), (0, (Bp - B) * _IMG)))

    n_blk = T * _IMG
    out = pl.pallas_call(
        _weather_kernel,
        out_shape=jax.ShapeDtypeStruct((G, _NCLS, T), jnp.float32),
        grid=(G,),
        in_specs=[
            pl.BlockSpec((_C0, n_blk), lambda b: (0, b)),
            pl.BlockSpec((_C1, 9 * _C0), lambda b: (0, 0)),
            pl.BlockSpec((_C1, 1), lambda b: (0, 0)),
            pl.BlockSpec((_C2, 9 * _C1), lambda b: (0, 0)),
            pl.BlockSpec((_C2, 1), lambda b: (0, 0)),
            pl.BlockSpec((_NCLS, _C2, _IMG), lambda b: (0, 0, 0)),
            pl.BlockSpec((_NCLS, 1), lambda b: (0, 0)),
        ],
        out_specs=pl.BlockSpec((1, _NCLS, T), lambda b: (b, 0, 0)),
        compiler_params=pltpu.CompilerParams(
            dimension_semantics=("parallel",),
            vmem_limit_bytes=48 * 1024 * 1024,
        ),
    )(x2d, w1p, b1.reshape(_C1, 1), w2p, b2.reshape(_C2, 1), fcw, fcb)

    # (G, 4, T) -> (G*T, 4) -> drop padding images.
    return jnp.transpose(out, (0, 2, 1)).reshape(Bp, _NCLS)[:B]


# ----------------------------------------------------------------------------
# Deterministic synthetic parameters (shapes from Weather.__init__).
# Conv weights are HWIO; fc weight is (in, out) in PyTorch NCHW-flatten order.
# ----------------------------------------------------------------------------
def init_params(key):
    ks = jax.random.split(key, 14)

    def nrm(k, shape, scale):
        return (scale * jax.random.normal(k, shape)).astype(jnp.float32)

    p = {}
    p['conv1_w'] = nrm(ks[0], (3, 3, 3, 16), (3 * 3 * 3) ** -0.5)
    p['conv1_b'] = nrm(ks[1], (16,), 0.1)
    p['bn1_g'] = (1.0 + 0.1 * jax.random.normal(ks[2], (16,))).astype(jnp.float32)
    p['bn1_b'] = nrm(ks[3], (16,), 0.1)
    p['bn1_m'] = nrm(ks[4], (16,), 0.1)
    p['bn1_v'] = (1.0 + 0.1 * jax.random.normal(ks[5], (16,)) ** 2).astype(jnp.float32)

    p['conv2_w'] = nrm(ks[6], (3, 3, 16, 32), (3 * 3 * 16) ** -0.5)
    p['conv2_b'] = nrm(ks[7], (32,), 0.1)
    p['bn2_g'] = (1.0 + 0.1 * jax.random.normal(ks[8], (32,))).astype(jnp.float32)
    p['bn2_b'] = nrm(ks[9], (32,), 0.1)
    p['bn2_m'] = nrm(ks[10], (32,), 0.1)
    p['bn2_v'] = (1.0 + 0.1 * jax.random.normal(ks[11], (32,)) ** 2).astype(jnp.float32)

    p['fc_w'] = nrm(ks[12], (8192, 4), 8192 ** -0.5)
    p['fc_b'] = nrm(ks[13], (4,), 0.1)
    return p


# ----------------------------------------------------------------------------
# Pure-JAX reference (NCHW, same eval-mode BN semantics) for verification.
# ----------------------------------------------------------------------------
def ref_forward(params, x_nchw):
    def block(x, w_hwio, cb, g, bta, m, v):
        y = jax.lax.conv_general_dilated(
            x, w_hwio, window_strides=(1, 1), padding='SAME',
            dimension_numbers=('NCHW', 'HWIO', 'NCHW'))
        y = y + cb[None, :, None, None]
        y = ((y - m[None, :, None, None])
             * (g / jnp.sqrt(v + _BN_EPS))[None, :, None, None]
             + bta[None, :, None, None])
        y = jnp.maximum(y, 0.0)
        y = jax.lax.reduce_window(y, -jnp.inf, jax.lax.max,
                                  (1, 1, 2, 2), (1, 1, 2, 2), 'VALID')
        return y

    y = block(x_nchw, params['conv1_w'], params['conv1_b'], params['bn1_g'],
              params['bn1_b'], params['bn1_m'], params['bn1_v'])
    y = block(y, params['conv2_w'], params['conv2_b'], params['bn2_g'],
              params['bn2_b'], params['bn2_m'], params['bn2_v'])
    y = y.reshape(y.shape[0], -1)
    return y @ params['fc_w'] + params['fc_b']


if __name__ == "__main__":
    key = jax.random.PRNGKey(0)
    pkey, xkey = jax.random.split(key)
    params = init_params(pkey)

    fwd = jax.jit(weather_forward)
    for bsz in (2, 5):   # bsz=2: T=1, grid=2; bsz=5: T=2, grid=3 (padded batch)
        x = jax.random.normal(jax.random.fold_in(xkey, bsz),
                              (bsz, 3, 64, 64), dtype=jnp.float32)
        out = jax.block_until_ready(fwd(params, x))
        assert out.shape == (bsz, _NCLS), out.shape
        ref = ref_forward(params, x)
        max_err = float(jnp.max(jnp.abs(out - ref)))
        assert jnp.allclose(out, ref, rtol=2e-2, atol=2e-2), max_err

    print("KERNEL_OK")
</pallas_src>

<mosaic_0001>
module attributes {stable_mosaic.version = 11 : i64} {
  func.func @_weather_kernel(%arg0: i32, %arg1: memref<3x4096xf32, #tpu.memory_space<vmem>>, %arg2: memref<16x27xf32, #tpu.memory_space<vmem>>, %arg3: memref<16x1xf32, #tpu.memory_space<vmem>>, %arg4: memref<32x144xbf16, #tpu.memory_space<vmem>>, %arg5: memref<32x1xf32, #tpu.memory_space<vmem>>, %arg6: memref<4x32x4096xf32, #tpu.memory_space<vmem>>, %arg7: memref<4x1xf32, #tpu.memory_space<vmem>>, %arg8: memref<1x4x1xf32, #tpu.memory_space<vmem>>) attributes {dimension_semantics = [#tpu.dimension_semantics<parallel>], iteration_bounds = array<i64: 2>, scalar_prefetch = 0 : i64, scratch_operands = 0 : i64, tpu.core_type = #tpu.core_type<tc>, window_params = [{transform_indices = @transform_0, window_bounds = array<i64: 3, 4096>}, {pipeline_mode = #tpu.pipeline_mode<synchronous>, transform_indices = @transform_1, window_bounds = array<i64: 16, 27>}, {pipeline_mode = #tpu.pipeline_mode<synchronous>, transform_indices = @transform_2, window_bounds = array<i64: 16, 1>}, {pipeline_mode = #tpu.pipeline_mode<synchronous>, transform_indices = @transform_3, window_bounds = array<i64: 32, 144>}, {pipeline_mode = #tpu.pipeline_mode<synchronous>, transform_indices = @transform_4, window_bounds = array<i64: 32, 1>}, {pipeline_mode = #tpu.pipeline_mode<synchronous>, transform_indices = @transform_5, window_bounds = array<i64: 4, 32, 4096>}, {pipeline_mode = #tpu.pipeline_mode<synchronous>, transform_indices = @transform_6, window_bounds = array<i64: 4, 1>}, {transform_indices = @transform_7, window_bounds = array<i64: 1, 4, 1>}]} {
    %0 = tpu.iota {dimensions = array<i32: 1>} : vector<1x4096xi32>
    %c4095_i32 = arith.constant 4095 : i32
    %1 = vector.broadcast %c4095_i32 : i32 to vector<1x4096xi32>
    %2 = arith.andi %0, %1 : vector<1x4096xi32>
    %c6_i32 = arith.constant 6 : i32
    %3 = vector.broadcast %c6_i32 : i32 to vector<1x4096xi32>
    %4 = arith.shrsi %2, %3 : vector<1x4096xi32>
    %c63_i32 = arith.constant 63 : i32
    %5 = vector.broadcast %c63_i32 : i32 to vector<1x4096xi32>
    %6 = arith.andi %2, %5 : vector<1x4096xi32>
    %c0 = arith.constant 0 : index
    %c0_0 = arith.constant 0 : index
    %7 = vector.load %arg1[%c0, %c0_0] : memref<3x4096xf32, #tpu.memory_space<vmem>>, vector<3x4096xf32>
    %8 = vector.extract_strided_slice %7 {offsets = [0, 4031], sizes = [3, 65], strides = [1, 1]} : vector<3x4096xf32> to vector<3x65xf32>
    %9 = vector.extract_strided_slice %7 {offsets = [0, 0], sizes = [3, 4031], strides = [1, 1]} : vector<3x4096xf32> to vector<3x4031xf32>
    %10 = tpu.concatenate %8, %9 in 1 : vector<3x65xf32>, vector<3x4031xf32> -> vector<3x4096xf32>
    %c1_i32 = arith.constant 1 : i32
    %11 = vector.broadcast %c1_i32 : i32 to vector<1x4096xi32>
    %12 = arith.cmpi sge, %4, %11 : vector<1x4096xi32>
    %c1_i32_1 = arith.constant 1 : i32
    %13 = vector.broadcast %c1_i32_1 : i32 to vector<1x4096xi32>
    %14 = arith.cmpi sge, %6, %13 : vector<1x4096xi32>
    %15 = arith.andi %12, %14 : vector<1x4096xi1>
    %cst = arith.constant 0.000000e+00 : f32
    %16 = vector.shape_cast %15 : vector<1x4096xi1> to vector<1x4096xi1>
    %17 = vector.broadcast %16 : vector<1x4096xi1> to vector<3x4096xi1>
    %18 = vector.broadcast %cst : f32 to vector<3x4096xf32>
    %19 = arith.select %17, %10, %18 : vector<3x4096xi1>, vector<3x4096xf32>
    %20 = vector.extract_strided_slice %7 {offsets = [0, 4032], sizes = [3, 64], strides = [1, 1]} : vector<3x4096xf32> to vector<3x64xf32>
    %21 = vector.extract_strided_slice %7 {offsets = [0, 0], sizes = [3, 4032], strides = [1, 1]} : vector<3x4096xf32> to vector<3x4032xf32>
    %22 = tpu.concatenate %20, %21 in 1 : vector<3x64xf32>, vector<3x4032xf32> -> vector<3x4096xf32>
    %c1_i32_2 = arith.constant 1 : i32
    %23 = vector.broadcast %c1_i32_2 : i32 to vector<1x4096xi32>
    %24 = arith.cmpi sge, %4, %23 : vector<1x4096xi32>
    %cst_3 = arith.constant 0.000000e+00 : f32
    %25 = vector.shape_cast %24 : vector<1x4096xi1> to vector<1x4096xi1>
    %26 = vector.broadcast %25 : vector<1x4096xi1> to vector<3x4096xi1>
    %27 = vector.broadcast %cst_3 : f32 to vector<3x4096xf32>
    %28 = arith.select %26, %22, %27 : vector<3x4096xi1>, vector<3x4096xf32>
    %29 = vector.extract_strided_slice %7 {offsets = [0, 4033], sizes = [3, 63], strides = [1, 1]} : vector<3x4096xf32> to vector<3x63xf32>
    %30 = vector.extract_strided_slice %7 {offsets = [0, 0], sizes = [3, 4033], strides = [1, 1]} : vector<3x4096xf32> to vector<3x4033xf32>
    %31 = tpu.concatenate %29, %30 in 1 : vector<3x63xf32>, vector<3x4033xf32> -> vector<3x4096xf32>
    %c1_i32_4 = arith.constant 1 : i32
    %32 = vector.broadcast %c1_i32_4 : i32 to vector<1x4096xi32>
    %33 = arith.cmpi sge, %4, %32 : vector<1x4096xi32>
    %c63_i32_5 = arith.constant 63 : i32
    %34 = vector.broadcast %c63_i32_5 : i32 to vector<1x4096xi32>
    %35 = arith.cmpi slt, %6, %34 : vector<1x4096xi32>
    %36 = arith.andi %33, %35 : vector<1x4096xi1>
    %cst_6 = arith.constant 0.000000e+00 : f32
    %37 = vector.shape_cast %36 : vector<1x4096xi1> to vector<1x4096xi1>
    %38 = vector.broadcast %37 : vector<1x4096xi1> to vector<3x4096xi1>
    %39 = vector.broadcast %cst_6 : f32 to vector<3x4096xf32>
    %40 = arith.select %38, %31, %39 : vector<3x4096xi1>, vector<3x4096xf32>
    %41 = vector.extract_strided_slice %7 {offsets = [0, 4095], sizes = [3, 1], strides = [1, 1]} : vector<3x4096xf32> to vector<3x1xf32>
    %42 = vector.extract_strided_slice %7 {offsets = [0, 0], sizes = [3, 4095], strides = [1, 1]} : vector<3x4096xf32> to vector<3x4095xf32>
    %43 = tpu.concatenate %41, %42 in 1 : vector<3x1xf32>, vector<3x4095xf32> -> vector<3x4096xf32>
    %c1_i32_7 = arith.constant 1 : i32
    %44 = vector.broadcast %c1_i32_7 : i32 to vector<1x4096xi32>
    %45 = arith.cmpi sge, %6, %44 : vector<1x4096xi32>
    %cst_8 = arith.constant 0.000000e+00 : f32
    %46 = vector.shape_cast %45 : vector<1x4096xi1> to vector<1x4096xi1>
    %47 = vector.broadcast %46 : vector<1x4096xi1> to vector<3x4096xi1>
    %48 = vector.broadcast %cst_8 : f32 to vector<3x4096xf32>
    %49 = arith.select %47, %43, %48 : vector<3x4096xi1>, vector<3x4096xf32>
    %50 = vector.extract_strided_slice %7 {offsets = [0, 1], sizes = [3, 4095], strides = [1, 1]} : vector<3x4096xf32> to vector<3x4095xf32>
    %51 = vector.extract_strided_slice %7 {offsets = [0, 0], sizes = [3, 1], strides = [1, 1]} : vector<3x4096xf32> to vector<3x1xf32>
    %52 = tpu.concatenate %50, %51 in 1 : vector<3x4095xf32>, vector<3x1xf32> -> vector<3x4096xf32>
    %c63_i32_9 = arith.constant 63 : i32
    %53 = vector.broadcast %c63_i32_9 : i32 to vector<1x4096xi32>
    %54 = arith.cmpi slt, %6, %53 : vector<1x4096xi32>
    %cst_10 = arith.constant 0.000000e+00 : f32
    %55 = vector.shape_cast %54 : vector<1x4096xi1> to vector<1x4096xi1>
    %56 = vector.broadcast %55 : vector<1x4096xi1> to vector<3x4096xi1>
    %57 = vector.broadcast %cst_10 : f32 to vector<3x4096xf32>
    %58 = arith.select %56, %52, %57 : vector<3x4096xi1>, vector<3x4096xf32>
    %59 = vector.extract_strided_slice %7 {offsets = [0, 63], sizes = [3, 4033], strides = [1, 1]} : vector<3x4096xf32> to vector<3x4033xf32>
    %60 = vector.extract_strided_slice %7 {offsets = [0, 0], sizes = [3, 63], strides = [1, 1]} : vector<3x4096xf32> to vector<3x63xf32>
    %61 = tpu.concatenate %59, %60 in 1 : vector<3x4033xf32>, vector<3x63xf32> -> vector<3x4096xf32>
    %c63_i32_11 = arith.constant 63 : i32
    %62 = vector.broadcast %c63_i32_11 : i32 to vector<1x4096xi32>
    %63 = arith.cmpi slt, %4, %62 : vector<1x4096xi32>
    %c1_i32_12 = arith.constant 1 : i32
    %64 = vector.broadcast %c1_i32_12 : i32 to vector<1x4096xi32>
    %65 = arith.cmpi sge, %6, %64 : vector<1x4096xi32>
    %66 = arith.andi %63, %65 : vector<1x4096xi1>
    %cst_13 = arith.constant 0.000000e+00 : f32
    %67 = vector.shape_cast %66 : vector<1x4096xi1> to vector<1x4096xi1>
    %68 = vector.broadcast %67 : vector<1x4096xi1> to vector<3x4096xi1>
    %69 = vector.broadcast %cst_13 : f32 to vector<3x4096xf32>
    %70 = arith.select %68, %61, %69 : vector<3x4096xi1>, vector<3x4096xf32>
    %71 = vector.extract_strided_slice %7 {offsets = [0, 64], sizes = [3, 4032], strides = [1, 1]} : vector<3x4096xf32> to vector<3x4032xf32>
    %72 = vector.extract_strided_slice %7 {offsets = [0, 0], sizes = [3, 64], strides = [1, 1]} : vector<3x4096xf32> to vector<3x64xf32>
    %73 = tpu.concatenate %71, %72 in 1 : vector<3x4032xf32>, vector<3x64xf32> -> vector<3x4096xf32>
    %c63_i32_14 = arith.constant 63 : i32
    %74 = vector.broadcast %c63_i32_14 : i32 to vector<1x4096xi32>
    %75 = arith.cmpi slt, %4, %74 : vector<1x4096xi32>
    %cst_15 = arith.constant 0.000000e+00 : f32
    %76 = vector.shape_cast %75 : vector<1x4096xi1> to vector<1x4096xi1>
    %77 = vector.broadcast %76 : vector<1x4096xi1> to vector<3x4096xi1>
    %78 = vector.broadcast %cst_15 : f32 to vector<3x4096xf32>
    %79 = arith.select %77, %73, %78 : vector<3x4096xi1>, vector<3x4096xf32>
    %80 = vector.extract_strided_slice %7 {offsets = [0, 65], sizes = [3, 4031], strides = [1, 1]} : vector<3x4096xf32> to vector<3x4031xf32>
    %81 = vector.extract_strided_slice %7 {offsets = [0, 0], sizes = [3, 65], strides = [1, 1]} : vector<3x4096xf32> to vector<3x65xf32>
    %82 = tpu.concatenate %80, %81 in 1 : vector<3x4031xf32>, vector<3x65xf32> -> vector<3x4096xf32>
    %c63_i32_16 = arith.constant 63 : i32
    %83 = vector.broadcast %c63_i32_16 : i32 to vector<1x4096xi32>
    %84 = arith.cmpi slt, %4, %83 : vector<1x4096xi32>
    %c63_i32_17 = arith.constant 63 : i32
    %85 = vector.broadcast %c63_i32_17 : i32 to vector<1x4096xi32>
    %86 = arith.cmpi slt, %6, %85 : vector<1x4096xi32>
    %87 = arith.andi %84, %86 : vector<1x4096xi1>
    %cst_18 = arith.constant 0.000000e+00 : f32
    %88 = vector.shape_cast %87 : vector<1x4096xi1> to vector<1x4096xi1>
    %89 = vector.broadcast %88 : vector<1x4096xi1> to vector<3x4096xi1>
    %90 = vector.broadcast %cst_18 : f32 to vector<3x4096xf32>
    %91 = arith.select %89, %82, %90 : vector<3x4096xi1>, vector<3x4096xf32>
    %92 = tpu.concatenate %19, %28, %40, %49, %7, %58, %70, %79, %91 in 0 : vector<3x4096xf32>, vector<3x4096xf32>, vector<3x4096xf32>, vector<3x4096xf32>, vector<3x4096xf32>, vector<3x4096xf32>, vector<3x4096xf32>, vector<3x4096xf32>, vector<3x4096xf32> -> vector<27x4096xf32>
    %c0_19 = arith.constant 0 : index
    %c0_20 = arith.constant 0 : index
    %93 = vector.load %arg2[%c0_19, %c0_20] : memref<16x27xf32, #tpu.memory_space<vmem>>, vector<16x27xf32>
    %cst_21 = arith.constant dense<0.000000e+00> : vector<16x4096xf32>
    %94 = tpu.matmul %93, %92, %cst_21 {dimension_numbers = #tpu.dot_dimension_numbers<[1], [0], [0], [1], [0, 0, 1, 1], [], []>} : vector<16x27xf32>, vector<27x4096xf32>, vector<16x4096xf32> -> vector<16x4096xf32>
    %c0_22 = arith.constant 0 : index
    %c0_23 = arith.constant 0 : index
    %95 = vector.load %arg3[%c0_22, %c0_23] : memref<16x1xf32, #tpu.memory_space<vmem>>, vector<16x1xf32>
    %96 = vector.broadcast %95 : vector<16x1xf32> to vector<16x4096xf32>
    %97 = arith.addf %94, %96 : vector<16x4096xf32>
    %cst_24 = arith.constant 0.000000e+00 : f32
    %98 = vector.broadcast %cst_24 : f32 to vector<16x4096xf32>
    %99 = arith.maximumf %97, %98 : vector<16x4096xf32>
    %100 = vector.extract_strided_slice %99 {offsets = [0, 1], sizes = [16, 4095], strides = [1, 1]} : vector<16x4096xf32> to vector<16x4095xf32>
    %101 = vector.extract_strided_slice %99 {offsets = [0, 0], sizes = [16, 1], strides = [1, 1]} : vector<16x4096xf32> to vector<16x1xf32>
    %102 = tpu.concatenate %100, %101 in 1 : vector<16x4095xf32>, vector<16x1xf32> -> vector<16x4096xf32>
    %103 = arith.maximumf %99, %102 : vector<16x4096xf32>
    %104 = vector.extract_strided_slice %103 {offsets = [0, 64], sizes = [16, 4032], strides = [1, 1]} : vector<16x4096xf32> to vector<16x4032xf32>
    %105 = vector.extract_strided_slice %103 {offsets = [0, 0], sizes = [16, 64], strides = [1, 1]} : vector<16x4096xf32> to vector<16x64xf32>
    %106 = tpu.concatenate %104, %105 in 1 : vector<16x4032xf32>, vector<16x64xf32> -> vector<16x4096xf32>
    %107 = arith.maximumf %103, %106 : vector<16x4096xf32>
    %108 = vector.extract_strided_slice %107 {offsets = [0, 3966], sizes = [16, 130], strides = [1, 1]} : vector<16x4096xf32> to vector<16x130xf32>
    %109 = vector.extract_strided_slice %107 {offsets = [0, 0], sizes = [16, 3966], strides = [1, 1]} : vector<16x4096xf32> to vector<16x3966xf32>
    %110 = tpu.concatenate %108, %109 in 1 : vector<16x130xf32>, vector<16x3966xf32> -> vector<16x4096xf32>
    %c2_i32 = arith.constant 2 : i32
    %111 = vector.broadcast %c2_i32 : i32 to vector<1x4096xi32>
    %112 = arith.cmpi sge, %4, %111 : vector<1x4096xi32>
    %c2_i32_25 = arith.constant 2 : i32
    %113 = vector.broadcast %c2_i32_25 : i32 to vector<1x4096xi32>
    %114 = arith.cmpi sge, %6, %113 : vector<1x4096xi32>
    %115 = arith.andi %112, %114 : vector<1x4096xi1>
    %cst_26 = arith.constant 0.000000e+00 : f32
    %116 = vector.shape_cast %115 : vector<1x4096xi1> to vector<1x4096xi1>
    %117 = vector.broadcast %116 : vector<1x4096xi1> to vector<16x4096xi1>
    %118 = vector.broadcast %cst_26 : f32 to vector<16x4096xf32>
    %119 = arith.select %117, %110, %118 : vector<16x4096xi1>, vector<16x4096xf32>
    %120 = vector.extract_strided_slice %107 {offsets = [0, 3968], sizes = [16, 128], strides = [1, 1]} : vector<16x4096xf32> to vector<16x128xf32>
    %121 = vector.extract_strided_slice %107 {offsets = [0, 0], sizes = [16, 3968], strides = [1, 1]} : vector<16x4096xf32> to vector<16x3968xf32>
    %122 = tpu.concatenate %120, %121 in 1 : vector<16x128xf32>, vector<16x3968xf32> -> vector<16x4096xf32>
    %c2_i32_27 = arith.constant 2 : i32
    %123 = vector.broadcast %c2_i32_27 : i32 to vector<1x4096xi32>
    %124 = arith.cmpi sge, %4, %123 : vector<1x4096xi32>
    %cst_28 = arith.constant 0.000000e+00 : f32
    %125 = vector.shape_cast %124 : vector<1x4096xi1> to vector<1x4096xi1>
    %126 = vector.broadcast %125 : vector<1x4096xi1> to vector<16x4096xi1>
    %127 = vector.broadcast %cst_28 : f32 to vector<16x4096xf32>
    %128 = arith.select %126, %122, %127 : vector<16x4096xi1>, vector<16x4096xf32>
    %129 = vector.extract_strided_slice %107 {offsets = [0, 3970], sizes = [16, 126], strides = [1, 1]} : vector<16x4096xf32> to vector<16x126xf32>
    %130 = vector.extract_strided_slice %107 {offsets = [0, 0], sizes = [16, 3970], strides = [1, 1]} : vector<16x4096xf32> to vector<16x3970xf32>
    %131 = tpu.concatenate %129, %130 in 1 : vector<16x126xf32>, vector<16x3970xf32> -> vector<16x4096xf32>
    %c2_i32_29 = arith.constant 2 : i32
    %132 = vector.broadcast %c2_i32_29 : i32 to vector<1x4096xi32>
    %133 = arith.cmpi sge, %4, %132 : vector<1x4096xi32>
    %c62_i32 = arith.constant 62 : i32
    %134 = vector.broadcast %c62_i32 : i32 to vector<1x4096xi32>
    %135 = arith.cmpi slt, %6, %134 : vector<1x4096xi32>
    %136 = arith.andi %133, %135 : vector<1x4096xi1>
    %cst_30 = arith.constant 0.000000e+00 : f32
    %137 = vector.shape_cast %136 : vector<1x4096xi1> to vector<1x4096xi1>
    %138 = vector.broadcast %137 : vector<1x4096xi1> to vector<16x4096xi1>
    %139 = vector.broadcast %cst_30 : f32 to vector<16x4096xf32>
    %140 = arith.select %138, %131, %139 : vector<16x4096xi1>, vector<16x4096xf32>
    %141 = vector.extract_strided_slice %107 {offsets = [0, 4094], sizes = [16, 2], strides = [1, 1]} : vector<16x4096xf32> to vector<16x2xf32>
    %142 = vector.extract_strided_slice %107 {offsets = [0, 0], sizes = [16, 4094], strides = [1, 1]} : vector<16x4096xf32> to vector<16x4094xf32>
    %143 = tpu.concatenate %141, %142 in 1 : vector<16x2xf32>, vector<16x4094xf32> -> vector<16x4096xf32>
    %c2_i32_31 = arith.constant 2 : i32
    %144 = vector.broadcast %c2_i32_31 : i32 to vector<1x4096xi32>
    %145 = arith.cmpi sge, %6, %144 : vector<1x4096xi32>
    %cst_32 = arith.constant 0.000000e+00 : f32
    %146 = vector.shape_cast %145 : vector<1x4096xi1> to vector<1x4096xi1>
    %147 = vector.broadcast %146 : vector<1x4096xi1> to vector<16x4096xi1>
    %148 = vector.broadcast %cst_32 : f32 to vector<16x4096xf32>
    %149 = arith.select %147, %143, %148 : vector<16x4096xi1>, vector<16x4096xf32>
    %150 = vector.extract_strided_slice %107 {offsets = [0, 2], sizes = [16, 4094], strides = [1, 1]} : vector<16x4096xf32> to vector<16x4094xf32>
    %151 = vector.extract_strided_slice %107 {offsets = [0, 0], sizes = [16, 2], strides = [1, 1]} : vector<16x4096xf32> to vector<16x2xf32>
    %152 = tpu.concatenate %150, %151 in 1 : vector<16x4094xf32>, vector<16x2xf32> -> vector<16x4096xf32>
    %c62_i32_33 = arith.constant 62 : i32
    %153 = vector.broadcast %c62_i32_33 : i32 to vector<1x4096xi32>
    %154 = arith.cmpi slt, %6, %153 : vector<1x4096xi32>
    %cst_34 = arith.constant 0.000000e+00 : f32
    %155 = vector.shape_cast %154 : vector<1x4096xi1> to vector<1x4096xi1>
    %156 = vector.broadcast %155 : vector<1x4096xi1> to vector<16x4096xi1>
    %157 = vector.broadcast %cst_34 : f32 to vector<16x4096xf32>
    %158 = arith.select %156, %152, %157 : vector<16x4096xi1>, vector<16x4096xf32>
    %159 = vector.extract_strided_slice %107 {offsets = [0, 126], sizes = [16, 3970], strides = [1, 1]} : vector<16x4096xf32> to vector<16x3970xf32>
    %160 = vector.extract_strided_slice %107 {offsets = [0, 0], sizes = [16, 126], strides = [1, 1]} : vector<16x4096xf32> to vector<16x126xf32>
    %161 = tpu.concatenate %159, %160 in 1 : vector<16x3970xf32>, vector<16x126xf32> -> vector<16x4096xf32>
    %c62_i32_35 = arith.constant 62 : i32
    %162 = vector.broadcast %c62_i32_35 : i32 to vector<1x4096xi32>
    %163 = arith.cmpi slt, %4, %162 : vector<1x4096xi32>
    %c2_i32_36 = arith.constant 2 : i32
    %164 = vector.broadcast %c2_i32_36 : i32 to vector<1x4096xi32>
    %165 = arith.cmpi sge, %6, %164 : vector<1x4096xi32>
    %166 = arith.andi %163, %165 : vector<1x4096xi1>
    %cst_37 = arith.constant 0.000000e+00 : f32
    %167 = vector.shape_cast %166 : vector<1x4096xi1> to vector<1x4096xi1>
    %168 = vector.broadcast %167 : vector<1x4096xi1> to vector<16x4096xi1>
    %169 = vector.broadcast %cst_37 : f32 to vector<16x4096xf32>
    %170 = arith.select %168, %161, %169 : vector<16x4096xi1>, vector<16x4096xf32>
    %171 = vector.extract_strided_slice %107 {offsets = [0, 128], sizes = [16, 3968], strides = [1, 1]} : vector<16x4096xf32> to vector<16x3968xf32>
    %172 = vector.extract_strided_slice %107 {offsets = [0, 0], sizes = [16, 128], strides = [1, 1]} : vector<16x4096xf32> to vector<16x128xf32>
    %173 = tpu.concatenate %171, %172 in 1 : vector<16x3968xf32>, vector<16x128xf32> -> vector<16x4096xf32>
    %c62_i32_38 = arith.constant 62 : i32
    %174 = vector.broadcast %c62_i32_38 : i32 to vector<1x4096xi32>
    %175 = arith.cmpi slt, %4, %174 : vector<1x4096xi32>
    %cst_39 = arith.constant 0.000000e+00 : f32
    %176 = vector.shape_cast %175 : vector<1x4096xi1> to vector<1x4096xi1>
    %177 = vector.broadcast %176 : vector<1x4096xi1> to vector<16x4096xi1>
    %178 = vector.broadcast %cst_39 : f32 to vector<16x4096xf32>
    %179 = arith.select %177, %173, %178 : vector<16x4096xi1>, vector<16x4096xf32>
    %180 = vector.extract_strided_slice %107 {offsets = [0, 130], sizes = [16, 3966], strides = [1, 1]} : vector<16x4096xf32> to vector<16x3966xf32>
    %181 = vector.extract_strided_slice %107 {offsets = [0, 0], sizes = [16, 130], strides = [1, 1]} : vector<16x4096xf32> to vector<16x130xf32>
    %182 = tpu.concatenate %180, %181 in 1 : vector<16x3966xf32>, vector<16x130xf32> -> vector<16x4096xf32>
    %c62_i32_40 = arith.constant 62 : i32
    %183 = vector.broadcast %c62_i32_40 : i32 to vector<1x4096xi32>
    %184 = arith.cmpi slt, %4, %183 : vector<1x4096xi32>
    %c62_i32_41 = arith.constant 62 : i32
    %185 = vector.broadcast %c62_i32_41 : i32 to vector<1x4096xi32>
    %186 = arith.cmpi slt, %6, %185 : vector<1x4096xi32>
    %187 = arith.andi %184, %186 : vector<1x4096xi1>
    %cst_42 = arith.constant 0.000000e+00 : f32
    %188 = vector.shape_cast %187 : vector<1x4096xi1> to vector<1x4096xi1>
    %189 = vector.broadcast %188 : vector<1x4096xi1> to vector<16x4096xi1>
    %190 = vector.broadcast %cst_42 : f32 to vector<16x4096xf32>
    %191 = arith.select %189, %182, %190 : vector<16x4096xi1>, vector<16x4096xf32>
    %192 = arith.truncf %119 : vector<16x4096xf32> to vector<16x4096xbf16>
    %193 = arith.truncf %128 : vector<16x4096xf32> to vector<16x4096xbf16>
    %194 = arith.truncf %140 : vector<16x4096xf32> to vector<16x4096xbf16>
    %195 = arith.truncf %149 : vector<16x4096xf32> to vector<16x4096xbf16>
    %196 = arith.truncf %107 : vector<16x4096xf32> to vector<16x4096xbf16>
    %197 = arith.truncf %158 : vector<16x4096xf32> to vector<16x4096xbf16>
    %198 = arith.truncf %170 : vector<16x4096xf32> to vector<16x4096xbf16>
    %199 = arith.truncf %179 : vector<16x4096xf32> to vector<16x4096xbf16>
    %200 = arith.truncf %191 : vector<16x4096xf32> to vector<16x4096xbf16>
    %201 = tpu.concatenate %192, %193, %194, %195, %196, %197, %198, %199, %200 in 0 : vector<16x4096xbf16>, vector<16x4096xbf16>, vector<16x4096xbf16>, vector<16x4096xbf16>, vector<16x4096xbf16>, vector<16x4096xbf16>, vector<16x4096xbf16>, vector<16x4096xbf16>, vector<16x4096xbf16> -> vector<144x4096xbf16>
    %c0_43 = arith.constant 0 : index
    %c0_44 = arith.constant 0 : index
    %202 = vector.load %arg4[%c0_43, %c0_44] : memref<32x144xbf16, #tpu.memory_space<vmem>>, vector<32x144xbf16>
    %cst_45 = arith.constant dense<0.000000e+00> : vector<32x4096xf32>
    %203 = tpu.matmul %202, %201, %cst_45 {dimension_numbers = #tpu.dot_dimension_numbers<[1], [0], [0], [1], [0, 0, 1, 1], [], []>} : vector<32x144xbf16>, vector<144x4096xbf16>, vector<32x4096xf32> -> vector<32x4096xf32>
    %c0_46 = arith.constant 0 : index
    %c0_47 = arith.constant 0 : index
    %204 = vector.load %arg5[%c0_46, %c0_47] : memref<32x1xf32, #tpu.memory_space<vmem>>, vector<32x1xf32>
    %205 = vector.broadcast %204 : vector<32x1xf32> to vector<32x4096xf32>
    %206 = arith.addf %203, %205 : vector<32x4096xf32>
    %cst_48 = arith.constant 0.000000e+00 : f32
    %207 = vector.broadcast %cst_48 : f32 to vector<32x4096xf32>
    %208 = arith.maximumf %206, %207 : vector<32x4096xf32>
    %209 = vector.extract_strided_slice %208 {offsets = [0, 2], sizes = [32, 4094], strides = [1, 1]} : vector<32x4096xf32> to vector<32x4094xf32>
    %210 = vector.extract_strided_slice %208 {offsets = [0, 0], sizes = [32, 2], strides = [1, 1]} : vector<32x4096xf32> to vector<32x2xf32>
    %211 = tpu.concatenate %209, %210 in 1 : vector<32x4094xf32>, vector<32x2xf32> -> vector<32x4096xf32>
    %212 = arith.maximumf %208, %211 : vector<32x4096xf32>
    %213 = vector.extract_strided_slice %212 {offsets = [0, 128], sizes = [32, 3968], strides = [1, 1]} : vector<32x4096xf32> to vector<32x3968xf32>
    %214 = vector.extract_strided_slice %212 {offsets = [0, 0], sizes = [32, 128], strides = [1, 1]} : vector<32x4096xf32> to vector<32x128xf32>
    %215 = tpu.concatenate %213, %214 in 1 : vector<32x3968xf32>, vector<32x128xf32> -> vector<32x4096xf32>
    %216 = arith.maximumf %212, %215 : vector<32x4096xf32>
    %c0_49 = arith.constant 0 : index
    %c0_50 = arith.constant 0 : index
    %c0_51 = arith.constant 0 : index
    %217 = vector.load %arg6[%c0_49, %c0_50, %c0_51] : memref<4x32x4096xf32, #tpu.memory_space<vmem>>, vector<1x32x4096xf32>
    %218 = vector.shape_cast %217 : vector<1x32x4096xf32> to vector<32x4096xf32>
    %219 = arith.mulf %218, %216 : vector<32x4096xf32>
    %cst_52 = arith.constant dense<0.000000e+00> : vector<32xf32>
    %220 = vector.multi_reduction <add>, %219, %cst_52 [1] : vector<32x4096xf32> to vector<32xf32>
    %221 = vector.shape_cast %220 : vector<32xf32> to vector<32x1xf32>
    %cst_53 = arith.constant dense<0.000000e+00> : vector<1xf32>
    %222 = vector.multi_reduction <add>, %221, %cst_53 [0] : vector<32x1xf32> to vector<1xf32>
    %223 = vector.shape_cast %222 : vector<1xf32> to vector<1x1xf32>
    %c1 = arith.constant 1 : index
    %c0_54 = arith.constant 0 : index
    %c0_55 = arith.constant 0 : index
    %224 = vector.load %arg6[%c1, %c0_54, %c0_55] : memref<4x32x4096xf32, #tpu.memory_space<vmem>>, vector<1x32x4096xf32>
    %225 = vector.shape_cast %224 : vector<1x32x4096xf32> to vector<32x4096xf32>
    %226 = arith.mulf %225, %216 : vector<32x4096xf32>
    %cst_56 = arith.constant dense<0.000000e+00> : vector<32xf32>
    %227 = vector.multi_reduction <add>, %226, %cst_56 [1] : vector<32x4096xf32> to vector<32xf32>
    %228 = vector.shape_cast %227 : vector<32xf32> to vector<32x1xf32>
    %cst_57 = arith.constant dense<0.000000e+00> : vector<1xf32>
    %229 = vector.multi_reduction <add>, %228, %cst_57 [0] : vector<32x1xf32> to vector<1xf32>
    %230 = vector.shape_cast %229 : vector<1xf32> to vector<1x1xf32>
    %c2 = arith.constant 2 : index
    %c0_58 = arith.constant 0 : index
    %c0_59 = arith.constant 0 : index
    %231 = vector.load %arg6[%c2, %c0_58, %c0_59] : memref<4x32x4096xf32, #tpu.memory_space<vmem>>, vector<1x32x4096xf32>
    %232 = vector.shape_cast %231 : vector<1x32x4096xf32> to vector<32x4096xf32>
    %233 = arith.mulf %232, %216 : vector<32x4096xf32>
    %cst_60 = arith.constant dense<0.000000e+00> : vector<32xf32>
    %234 = vector.multi_reduction <add>, %233, %cst_60 [1] : vector<32x4096xf32> to vector<32xf32>
    %235 = vector.shape_cast %234 : vector<32xf32> to vector<32x1xf32>
    %cst_61 = arith.constant dense<0.000000e+00> : vector<1xf32>
    %236 = vector.multi_reduction <add>, %235, %cst_61 [0] : vector<32x1xf32> to vector<1xf32>
    %237 = vector.shape_cast %236 : vector<1xf32> to vector<1x1xf32>
    %c3 = arith.constant 3 : index
    %c0_62 = arith.constant 0 : index
    %c0_63 = arith.constant 0 : index
    %238 = vector.load %arg6[%c3, %c0_62, %c0_63] : memref<4x32x4096xf32, #tpu.memory_space<vmem>>, vector<1x32x4096xf32>
    %239 = vector.shape_cast %238 : vector<1x32x4096xf32> to vector<32x4096xf32>
    %240 = arith.mulf %239, %216 : vector<32x4096xf32>
    %cst_64 = arith.constant dense<0.000000e+00> : vector<32xf32>
    %241 = vector.multi_reduction <add>, %240, %cst_64 [1] : vector<32x4096xf32> to vector<32xf32>
    %242 = vector.shape_cast %241 : vector<32xf32> to vector<32x1xf32>
    %cst_65 = arith.constant dense<0.000000e+00> : vector<1xf32>
    %243 = vector.multi_reduction <add>, %242, %cst_65 [0] : vector<32x1xf32> to vector<1xf32>
    %244 = vector.shape_cast %243 : vector<1xf32> to vector<1x1xf32>
    %245 = tpu.concatenate %223, %230, %237, %244 in 0 : vector<1x1xf32>, vector<1x1xf32>, vector<1x1xf32>, vector<1x1xf32> -> vector<4x1xf32>
    %c0_66 = arith.constant 0 : index
    %c0_67 = arith.constant 0 : index
    %246 = vector.load %arg7[%c0_66, %c0_67] : memref<4x1xf32, #tpu.memory_space<vmem>>, vector<4x1xf32>
    %247 = arith.addf %245, %246 : vector<4x1xf32>
    %c0_68 = arith.constant 0 : index
    %c0_69 = arith.constant 0 : index
    %c0_70 = arith.constant 0 : index
    %248 = vector.load %arg8[%c0_68, %c0_69, %c0_70] : memref<1x4x1xf32, #tpu.memory_space<vmem>>, vector<1x4x1xf32>
    %249 = vector.shape_cast %248 : vector<1x4x1xf32> to vector<4x1xf32>
    %250 = vector.shape_cast %247 : vector<4x1xf32> to vector<1x4x1xf32>
    tpu.vector_store %arg8[%c0_68, %c0_69, %c0_70], %250 {strides = array<i32>} : memref<1x4x1xf32, #tpu.memory_space<vmem>>, vector<1x4x1xf32>,
    return
  }
  func.func @transform_0(%arg0: i32) -> (i32, i32) {
    %c0_i32 = arith.constant 0 : i32
    %c0_i32_0 = arith.constant 0 : i32
    return %c0_i32, %arg0 : i32, i32
  }
  func.func @transform_1(%arg0: i32) -> (i32, i32) {
    %c0_i32 = arith.constant 0 : i32
    %c0_i32_0 = arith.constant 0 : i32
    %c0_i32_1 = arith.constant 0 : i32
    return %c0_i32, %c0_i32_0 : i32, i32
  }
  func.func @transform_2(%arg0: i32) -> (i32, i32) {
    %c0_i32 = arith.constant 0 : i32
    %c0_i32_0 = arith.constant 0 : i32
    %c0_i32_1 = arith.constant 0 : i32
    return %c0_i32, %c0_i32_0 : i32, i32
  }
  func.func @transform_3(%arg0: i32) -> (i32, i32) {
    %c0_i32 = arith.constant 0 : i32
    %c0_i32_0 = arith.constant 0 : i32
    %c0_i32_1 = arith.constant 0 : i32
    return %c0_i32, %c0_i32_0 : i32, i32
  }
  func.func @transform_4(%arg0: i32) -> (i32, i32) {
    %c0_i32 = arith.constant 0 : i32
    %c0_i32_0 = arith.constant 0 : i32
    %c0_i32_1 = arith.constant 0 : i32
    return %c0_i32, %c0_i32_0 : i32, i32
  }
  func.func @transform_5(%arg0: i32) -> (i32, i32, i32) {
    %c0_i32 = arith.constant 0 : i32
    %c0_i32_0 = arith.constant 0 : i32
    %c0_i32_1 = arith.constant 0 : i32
    %c0_i32_2 = arith.constant 0 : i32
    return %c0_i32, %c0_i32_0, %c0_i32_1 : i32, i32, i32
  }
  func.func @transform_6(%arg0: i32) -> (i32, i32) {
    %c0_i32 = arith.constant 0 : i32
    %c0_i32_0 = arith.constant 0 : i32
    %c0_i32_1 = arith.constant 0 : i32
    return %c0_i32, %c0_i32_0 : i32, i32
  }
  func.func @transform_7(%arg0: i32) -> (i32, i32, i32) {
    %c0_i32 = arith.constant 0 : i32
    %c0_i32_0 = arith.constant 0 : i32
    %c0_i32_1 = arith.constant 0 : i32
    return %arg0, %c0_i32, %c0_i32_0 : i32, i32, i32
  }
}

</mosaic_0001>

<llo_original>
// kernel: weather_forward.1
$region0: #{weather_forward.1}
  #allocation0 [shape = 'u32[]', space=smem, size = 0x4, offset = 0x4, fixed_abs, tag = 'smem constant byte address 0x4 - core index']
  #allocation1 [shape = 'u32[144,128]{1,0:T(1,128)}', space=vmem, size = 0x12000, scoped, tag = 'internal scratch']
  %s0 = inlined_call_operand.vmem [shape: f32[3,8192], index: 0, kind: input, shape index: {}]
  %s1 = inlined_call_operand.vmem [shape: f32[16,27], index: 1, kind: input, shape index: {}]
  %s2 = inlined_call_operand.vmem [shape: f32[16,1], index: 2, kind: input, shape index: {}]
  %s3 = inlined_call_operand.vmem [shape: bf16[32,144], index: 3, kind: input, shape index: {}]
  %s4 = inlined_call_operand.vmem [shape: f32[32,1], index: 4, kind: input, shape index: {}]
  %s5 = inlined_call_operand.vmem [shape: f32[4,32,4096], index: 5, kind: input, shape index: {}]
  %s6 = inlined_call_operand.vmem [shape: f32[4,1], index: 6, kind: input, shape index: {}]
  %s7 = inlined_call_operand.vmem [shape: f32[2,4,1], index: 7, kind: output, shape index: {}]
  %s8 = sld [smem:[#allocation0]]
  $region61: #{weather_forward.1} parent=0
    _
  %s10 = ssub.s32 1, %s8
  %s11 = scalar_select 0, %s10, %s8
  loop: start=0, step=1, limit=4
  $region2: #{weather_forward.1} parent=0 // loop_pre_header
    _
  $region3: #{weather_forward.1} parent=0 // loop_header
    %s13 = sphi 0, %s17
    %p14 = scmp.ge.s32.totalorder %s13, 4
    %s23 = sphi 0, %s25
    %s26 = sphi 0, %s23
    %s27 = sphi 0, %s26
    %s43 = sphi 0, %s27
    %s47 = sphi 0, %s47
    %s49 = sphi 0, %s47
    %s50 = sphi 0, %s49
    %s64 = sphi 0, %s50
    %s68 = sphi 0, %s68
    %s70 = sphi 0, %s68
    %s71 = sphi 0, %s70
    %s85 = sphi 0, %s71
    %s89 = sphi 0, %s89
    %s91 = sphi 0, %s89
    %s92 = sphi 0, %s91
    %s106 = sphi 0, %s92
    %s110 = sphi 0, %s110
    %s112 = sphi 0, %s110
    %s113 = sphi 0, %s112
    %s127 = sphi 0, %s113
    %s131 = sphi 0, %s131
    %s133 = sphi 0, %s131
    %s134 = sphi 0, %s133
    %s148 = sphi 0, %s134
    %s152 = sphi 0, %s152
    %s154 = sphi 0, %s152
    %s155 = sphi 0, %s154
    %s169 = sphi 0, %s155
    %s175 = sphi 0, %s177
    %s178 = sphi 0, %s175
    %s179 = sphi 0, %s178
    %s195 = sphi 0, %s179
  $region4: #{weather_forward.1} parent=0 // loop_header_branch
    %16 = sbr.rel (%p14) target = $region8
  $region5: #{weather_forward.1} parent=0 // loop_body
    %s18 = ssub.s32 %s13, 1
    %s19 = ssub.s32 %s13, 2
    %s20 = sadd.s32 %s13, 1
    %s21 = ssub.s32 %s13, %s20
    %p22 = scmp.eq.s32.totalorder %s21, 0
    %s24 = sadd.s32 %s23, 1
    %s25 = scalar_select %p22, %s23, %s24
    %p28 = pneg %p22
    %p29 = scmp.eq.s32.totalorder %s13, 1
    %p30 = por %p28, %p29
    %p31 = scmp.ne.s32.totalorder %s23, %s26
    %p32 = scmp.eq.s32.totalorder %s13, 0
    %p33 = por %p31, %p32
    %p34 = scmp.ne.s32.totalorder %s23, %s26
    %p35 = scmp.eq.s32.totalorder %s18, 1
    %p36 = por %p34, %p35
    %p37 = scmp.ne.s32.totalorder %s26, %s27
    %p38 = scmp.eq.s32.totalorder %s18, 0
    %p39 = por %p37, %p38
    %p40 = scmp.ne.s32.totalorder %s26, %s27
    %p41 = scmp.eq.s32.totalorder %s19, 1
    %p42 = por %p40, %p41
    %p44 = scmp.ne.s32.totalorder %s27, %s43
    %p45 = scmp.eq.s32.totalorder %s19, 0
    %p46 = por %p44, %p45
    %s48 = sadd.s32 %s47, 1
    %p51 = scmp.eq.s32.totalorder %s13, 1
    %p52 = scmp.ne.s32.totalorder %s47, %s49
    %p53 = scmp.eq.s32.totalorder %s13, 0
    %p54 = por %p52, %p53
    %p55 = scmp.ne.s32.totalorder %s47, %s49
    %p56 = scmp.eq.s32.totalorder %s18, 1
    %p57 = por %p55, %p56
    %p58 = scmp.ne.s32.totalorder %s49, %s50
    %p59 = scmp.eq.s32.totalorder %s18, 0
    %p60 = por %p58, %p59
    %p61 = scmp.ne.s32.totalorder %s49, %s50
    %p62 = scmp.eq.s32.totalorder %s19, 1
    %p63 = por %p61, %p62
    %p65 = scmp.ne.s32.totalorder %s50, %s64
    %p66 = scmp.eq.s32.totalorder %s19, 0
    %p67 = por %p65, %p66
    %s69 = sadd.s32 %s68, 1
    %p72 = scmp.eq.s32.totalorder %s13, 1
    %p73 = scmp.ne.s32.totalorder %s68, %s70
    %p74 = scmp.eq.s32.totalorder %s13, 0
    %p75 = por %p73, %p74
    %p76 = scmp.ne.s32.totalorder %s68, %s70
    %p77 = scmp.eq.s32.totalorder %s18, 1
    %p78 = por %p76, %p77
    %p79 = scmp.ne.s32.totalorder %s70, %s71
    %p80 = scmp.eq.s32.totalorder %s18, 0
    %p81 = por %p79, %p80
    %p82 = scmp.ne.s32.totalorder %s70, %s71
    %p83 = scmp.eq.s32.totalorder %s19, 1
    %p84 = por %p82, %p83
    %p86 = scmp.ne.s32.totalorder %s71, %s85
    %p87 = scmp.eq.s32.totalorder %s19, 0
    %p88 = por %p86, %p87
    %s90 = sadd.s32 %s89, 1
    %p93 = scmp.eq.s32.totalorder %s13, 1
    %p94 = scmp.ne.s32.totalorder %s89, %s91
    %p95 = scmp.eq.s32.totalorder %s13, 0
    %p96 = por %p94, %p95
    %p97 = scmp.ne.s32.totalorder %s89, %s91
    %p98 = scmp.eq.s32.totalorder %s18, 1
    %p99 = por %p97, %p98
    %p100 = scmp.ne.s32.totalorder %s91, %s92
    %p101 = scmp.eq.s32.totalorder %s18, 0
    %p102 = por %p100, %p101
    %p103 = scmp.ne.s32.totalorder %s91, %s92
    %p104 = scmp.eq.s32.totalorder %s19, 1
    %p105 = por %p103, %p104
    %p107 = scmp.ne.s32.totalorder %s92, %s106
    %p108 = scmp.eq.s32.totalorder %s19, 0
    %p109 = por %p107, %p108
    %s111 = sadd.s32 %s110, 1
    %p114 = scmp.eq.s32.totalorder %s13, 1
    %p115 = scmp.ne.s32.totalorder %s110, %s112
    %p116 = scmp.eq.s32.totalorder %s13, 0
    %p117 = por %p115, %p116
    %p118 = scmp.ne.s32.totalorder %s110, %s112
    %p119 = scmp.eq.s32.totalorder %s18, 1
    %p120 = por %p118, %p119
    %p121 = scmp.ne.s32.totalorder %s112, %s113
    %p122 = scmp.eq.s32.totalorder %s18, 0
    %p123 = por %p121, %p122
    %p124 = scmp.ne.s32.totalorder %s112, %s113
    %p125 = scmp.eq.s32.totalorder %s19, 1
    %p126 = por %p124, %p125
    %p128 = scmp.ne.s32.totalorder %s113, %s127
    %p129 = scmp.eq.s32.totalorder %s19, 0
    %p130 = por %p128, %p129
    %s132 = sadd.s32 %s131, 1
    %p135 = scmp.eq.s32.totalorder %s13, 1
    %p136 = scmp.ne.s32.totalorder %s131, %s133
    %p137 = scmp.eq.s32.totalorder %s13, 0
    %p138 = por %p136, %p137
    %p139 = scmp.ne.s32.totalorder %s131, %s133
    %p140 = scmp.eq.s32.totalorder %s18, 1
    %p141 = por %p139, %p140
    %p142 = scmp.ne.s32.totalorder %s133, %s134
    %p143 = scmp.eq.s32.totalorder %s18, 0
    %p144 = por %p142, %p143
    %p145 = scmp.ne.s32.totalorder %s133, %s134
    %p146 = scmp.eq.s32.totalorder %s19, 1
    %p147 = por %p145, %p146
    %p149 = scmp.ne.s32.totalorder %s134, %s148
    %p150 = scmp.eq.s32.totalorder %s19, 0
    %p151 = por %p149, %p150
    %s153 = sadd.s32 %s152, 1
    %p156 = scmp.eq.s32.totalorder %s13, 1
    %p157 = scmp.ne.s32.totalorder %s152, %s154
    %p158 = scmp.eq.s32.totalorder %s13, 0
    %p159 = por %p157, %p158
    %p160 = scmp.ne.s32.totalorder %s152, %s154
    %p161 = scmp.eq.s32.totalorder %s18, 1
    %p162 = por %p160, %p161
    %p163 = scmp.ne.s32.totalorder %s154, %s155
    %p164 = scmp.eq.s32.totalorder %s18, 0
    %p165 = por %p163, %p164
    %p166 = scmp.ne.s32.totalorder %s154, %s155
    %p167 = scmp.eq.s32.totalorder %s19, 1
    %p168 = por %p166, %p167
    %p170 = scmp.ne.s32.totalorder %s155, %s169
    %p171 = scmp.eq.s32.totalorder %s19, 0
    %p172 = por %p170, %p171
    %s173 = ssub.s32 %s13, %s20
    %p174 = scmp.eq.s32.totalorder %s173, 0
    %s176 = sadd.s32 %s175, 1
    %s177 = scalar_select %p174, %s175, %s176
    %p180 = pneg %p174
    %p181 = scmp.eq.s32.totalorder %s13, 1
    %p182 = por %p180, %p181
    %p183 = scmp.ne.s32.totalorder %s175, %s178
    %p184 = scmp.eq.s32.totalorder %s13, 0
    %p185 = por %p183, %p184
    %p186 = scmp.ne.s32.totalorder %s175, %s178
    %p187 = scmp.eq.s32.totalorder %s18, 1
    %p188 = por %p186, %p187
    %p189 = scmp.ne.s32.totalorder %s178, %s179
    %p190 = scmp.eq.s32.totalorder %s18, 0
    %p191 = por %p189, %p190
    %p192 = scmp.ne.s32.totalorder %s178, %s179
    %p193 = scmp.eq.s32.totalorder %s19, 1
    %p194 = por %p192, %p193
    %p196 = scmp.ne.s32.totalorder %s179, %s195
    %p197 = scmp.eq.s32.totalorder %s19, 0
    %p198 = por %p196, %p197
    %p199 = scmp.le.s32.totalorder 1, %s13
    %p200 = scmp.lt.s32.totalorder %s13, 3
    %p201 = pnand %p199, %p200
    %p202 = pneg %p201
    // Predicated region
    $region9: #{weather_forward.1} parent=5 // pred_check
      _
    $region10: #{weather_forward.1} parent=5 // pred_check_branch
      %204 = sbr.rel (%p201) target = $region12
    $region11: #{weather_forward.1} parent=5 // pred_region
      %s205 = ssub.s32 %s13, 1
      // Predicated region
      $region13: #{weather_forward.1} parent=11 // pred_check
        %p206 = pneg %p60
      $region14: #{weather_forward.1} parent=11 // pred_check_branch
        %208 = sbr.rel (%p206) target = $region16
      $region15: #{weather_forward.1} parent=11 // pred_region
        _
      $region16: #{weather_forward.1} parent=11 // pred_fallthru
        _
      // Predicated region
      $region17: #{weather_forward.1} parent=11 // pred_check
        %p209 = pneg %p81
      $region18: #{weather_forward.1} parent=11 // pred_check_branch
        %211 = sbr.rel (%p209) target = $region20
      $region19: #{weather_forward.1} parent=11 // pred_region
        _
      $region20: #{weather_forward.1} parent=11 // pred_fallthru
        _
      // Predicated region
      $region21: #{weather_forward.1} parent=11 // pred_check
        %p212 = pneg %p102
      $region22: #{weather_forward.1} parent=11 // pred_check_branch
        %214 = sbr.rel (%p212) target = $region24
      $region23: #{weather_forward.1} parent=11 // pred_region
        _
      $region24: #{weather_forward.1} parent=11 // pred_fallthru
        _
      // Predicated region
      $region25: #{weather_forward.1} parent=11 // pred_check
        %p215 = pneg %p123
      $region26: #{weather_forward.1} parent=11 // pred_check_branch
        %217 = sbr.rel (%p215) target = $region28
      $region27: #{weather_forward.1} parent=11 // pred_region
        _
      $region28: #{weather_forward.1} parent=11 // pred_fallthru
        _
      // Predicated region
      $region29: #{weather_forward.1} parent=11 // pred_check
        %p218 = pneg %p144
      $region30: #{weather_forward.1} parent=11 // pred_check_branch
        %220 = sbr.rel (%p218) target = $region32
      $region31: #{weather_forward.1} parent=11 // pred_region
        _
      $region32: #{weather_forward.1} parent=11 // pred_fallthru
        _
      // Predicated region
      $region33: #{weather_forward.1} parent=11 // pred_check
        %p221 = pneg %p165
      $region34: #{weather_forward.1} parent=11 // pred_check_branch
        %223 = sbr.rel (%p221) target = $region36
      $region35: #{weather_forward.1} parent=11 // pred_region
        _
      $region36: #{weather_forward.1} parent=11 // pred_fallthru
        _
    $region12: #{weather_forward.1} parent=5 // pred_fallthru
      _
    %p224 = scmp.lt.s32.totalorder %s13, 2
    // Predicated region
    $region37: #{weather_forward.1} parent=5 // pred_check
      %p225 = pneg %p224
    $region38: #{weather_forward.1} parent=5 // pred_check_branch
      %227 = sbr.rel (%p225) target = $region40
    $region39: #{weather_forward.1} parent=5 // pred_region
      // Predicated region
      $region41: #{weather_forward.1} parent=39 // pred_check
        %p228 = pneg %p33
      $region42: #{weather_forward.1} parent=39 // pred_check_branch
        %230 = sbr.rel (%p228) target = $region44
      $region43: #{weather_forward.1} parent=39 // pred_region
        %s231 = smul.u32 32, %s13
        %p232 = scmp.lt.s32.totalorder %s231, 63
        %s233 = scalar_select %p232, %s231, 63
        %s234 = smul.addr %s233, 4
        %s235 = scalar_lea.vmem %s0, %s234
        %s236 = smul.u32 32, %s13
      $region44: #{weather_forward.1} parent=39 // pred_fallthru
        _
    $region40: #{weather_forward.1} parent=5 // pred_fallthru
      _
    %p237 = scmp.le.s32.totalorder 1, %s13
    %p238 = scmp.lt.s32.totalorder %s13, 3
    %p239 = pnand %p237, %p238
    %p240 = pneg %p239
    // Predicated region
    $region45: #{weather_forward.1} parent=5 // pred_check
      _
    $region46: #{weather_forward.1} parent=5 // pred_check_branch
      %242 = sbr.rel (%p239) target = $region48
    $region47: #{weather_forward.1} parent=5 // pred_region
      %s243 = ssub.s32 %s13, 1
      %s244 = smul.u32 32, %s18
      %p245 = scmp.lt.s32.totalorder %s244, 63
      %s246 = scalar_select %p245, %s244, 63
      %s247 = smul.addr %s246, 4
      %s248 = scalar_lea.vmem %s0, %s247
      %p249 = pneg %p39
      %p250 = pneg %p36
      %p251 = pneg %p60
      %p252 = pneg %p57
      %p253 = pneg %p81
      %p254 = pneg %p78
      %p255 = pneg %p102
      %p256 = pneg %p99
      %p257 = pneg %p123
      %p258 = pneg %p120
      %p259 = pneg %p144
      %p260 = pneg %p141
      %p261 = pneg %p165
      %p262 = pneg %p162
      %p263 = pneg %p191
      %p264 = pneg %p188
      %p265 = scmp.lt.s32.totalorder %s18, 1
      %s266 = scalar_select %p265, %s18, 1
      %s267 = smul.addr %s266, 4
      %s268 = scalar_lea.vmem %s7, %s267
      %s269 = smul.u32 32, %s18
      %p270 = scmp.lt.s32.totalorder %s269, 63
      %s271 = scalar_select %p270, %s269, 63
      %s272 = smul.addr %s271, 4
      %s273 = scalar_lea.vmem %s0, %s272
      %s274 = smul.u32 32, %s18
      %p275 = scmp.lt.s32.totalorder %s18, 1
      %s276 = scalar_select %p275, %s18, 1
      %s277 = smul.addr %s276, 4
      %s278 = scalar_lea.vmem %s7, %s277
      %v280 = vlaneseq
      %v281 = vand.u32 %v280, 127
      %v282 = vadd.s32 %v281, 128
      %v283 = vadd.s32 %v281, 256
      %v284 = vadd.s32 %v281, 384
      %v285 = vadd.s32 %v281, 512
      %v286 = vadd.s32 %v281, 640
      %v287 = vadd.s32 %v281, 768
      %v288 = vadd.s32 %v281, 896
      %v289 = vadd.s32 %v281, 1024
      %v290 = vadd.s32 %v281, 1152
      %v291 = vadd.s32 %v281, 1280
      %v292 = vadd.s32 %v281, 1408
      %v293 = vadd.s32 %v281, 1536
      %v294 = vadd.s32 %v281, 1664
      %v295 = vadd.s32 %v281, 1792
      %v296 = vadd.s32 %v281, 1920
      %v297 = vadd.s32 %v281, 2048
      %v298 = vadd.s32 %v281, 2176
      %v299 = vadd.s32 %v281, 2304
      %v300 = vadd.s32 %v281, 2432
      %v301 = vadd.s32 %v281, 2560
      %v302 = vadd.s32 %v281, 2688
      %v303 = vadd.s32 %v281, 2816
      %v304 = vadd.s32 %v281, 2944
      %v305 = vadd.s32 %v281, 3072
      %v306 = vadd.s32 %v281, 3200
      %v307 = vadd.s32 %v281, 3328
      %v308 = vadd.s32 %v281, 3456
      %v309 = vadd.s32 %v281, 3584
      %v310 = vadd.s32 %v281, 3712
      %v311 = vadd.s32 %v281, 3840
      %v312 = vadd.s32 %v281, 3968
      %v313 = vand.u32 %v281, 4095
      %v314 = vand.u32 %v282, 4095
      %v315 = vand.u32 %v283, 4095
      %v316 = vand.u32 %v284, 4095
      %v317 = vand.u32 %v285, 4095
      %v318 = vand.u32 %v286, 4095
      %v319 = vand.u32 %v287, 4095
      %v320 = vand.u32 %v288, 4095
      %v321 = vand.u32 %v289, 4095
      %v322 = vand.u32 %v290, 4095
      %v323 = vand.u32 %v291, 4095
      %v324 = vand.u32 %v292, 4095
      %v325 = vand.u32 %v293, 4095
      %v326 = vand.u32 %v294, 4095
      %v327 = vand.u32 %v295, 4095
      %v328 = vand.u32 %v296, 4095
      %v329 = vand.u32 %v297, 4095
      %v330 = vand.u32 %v298, 4095
      %v331 = vand.u32 %v299, 4095
      %v332 = vand.u32 %v300, 4095
      %v333 = vand.u32 %v301, 4095
      %v334 = vand.u32 %v302, 4095
      %v335 = vand.u32 %v303, 4095
      %v336 = vand.u32 %v304, 4095
      %v337 = vand.u32 %v305, 4095
      %v338 = vand.u32 %v306, 4095
      %v339 = vand.u32 %v307, 4095
      %v340 = vand.u32 %v308, 4095
      %v341 = vand.u32 %v309, 4095
      %v342 = vand.u32 %v310, 4095
      %v343 = vand.u32 %v311, 4095
      %v344 = vand.u32 %v312, 4095
      %v345 = vshra.s32 %v313, 6
      %v346 = vshra.s32 %v314, 6
      %v347 = vshra.s32 %v315, 6
      %v348 = vshra.s32 %v316, 6
      %v349 = vshra.s32 %v317, 6
      %v350 = vshra.s32 %v318, 6
      %v351 = vshra.s32 %v319, 6
      %v352 = vshra.s32 %v320, 6
      %v353 = vshra.s32 %v321, 6
      %v354 = vshra.s32 %v322, 6
      %v355 = vshra.s32 %v323, 6
      %v356 = vshra.s32 %v324, 6
      %v357 = vshra.s32 %v325, 6
      %v358 = vshra.s32 %v326, 6
      %v359 = vshra.s32 %v327, 6
      %v360 = vshra.s32 %v328, 6
      %v361 = vshra.s32 %v329, 6
      %v362 = vshra.s32 %v330, 6
      %v363 = vshra.s32 %v331, 6
      %v364 = vshra.s32 %v332, 6
      %v365 = vshra.s32 %v333, 6
      %v366 = vshra.s32 %v334, 6
      %v367 = vshra.s32 %v335, 6
      %v368 = vshra.s32 %v336, 6
      %v369 = vshra.s32 %v337, 6
      %v370 = vshra.s32 %v338, 6
      %v371 = vshra.s32 %v339, 6
      %v372 = vshra.s32 %v340, 6
      %v373 = vshra.s32 %v341, 6
      %v374 = vshra.s32 %v342, 6
      %v375 = vshra.s32 %v343, 6
      %v376 = vshra.s32 %v344, 6
      %v377 = vand.u32 %v313, 63
      %v378 = vand.u32 %v314, 63
      %v379 = vand.u32 %v315, 63
      %v380 = vand.u32 %v316, 63
      %v381 = vand.u32 %v317, 63
      %v382 = vand.u32 %v318, 63
      %v383 = vand.u32 %v319, 63
      %v384 = vand.u32 %v320, 63
      %v385 = vand.u32 %v321, 63
      %v386 = vand.u32 %v322, 63
      %v387 = vand.u32 %v323, 63
      %v388 = vand.u32 %v324, 63
      %v389 = vand.u32 %v325, 63
      %v390 = vand.u32 %v326, 63
      %v391 = vand.u32 %v327, 63
      %v392 = vand.u32 %v328, 63
      %v393 = vand.u32 %v329, 63
      %v394 = vand.u32 %v330, 63
      %v395 = vand.u32 %v331, 63
      %v396 = vand.u32 %v332, 63
      %v397 = vand.u32 %v333, 63
      %v398 = vand.u32 %v334, 63
      %v399 = vand.u32 %v335, 63
      %v400 = vand.u32 %v336, 63
      %v401 = vand.u32 %v337, 63
      %v402 = vand.u32 %v338, 63
      %v403 = vand.u32 %v339, 63
      %v404 = vand.u32 %v340, 63
      %v405 = vand.u32 %v341, 63
      %v406 = vand.u32 %v342, 63
      %v407 = vand.u32 %v343, 63
      %v408 = vand.u32 %v344, 63
      %v409 = vld [vmem:[%s273] sm:$0x77]
      %v410 = vld [vmem:[%s273 + $0x8] sm:$0x77]
      %v411 = vld [vmem:[%s273 + $0x10] sm:$0x77]
      %v412 = vld [vmem:[%s273 + $0x18] sm:$0x77]
      %v413 = vld [vmem:[%s273 + $0x20] sm:$0x77]
      %v414 = vld [vmem:[%s273 + $0x28] sm:$0x77]
      %v415 = vld [vmem:[%s273 + $0x30] sm:$0x77]
      %v416 = vld [vmem:[%s273 + $0x38] sm:$0x77]
      %v417 = vld [vmem:[%s273 + $0x40] sm:$0x77]
      %v418 = vld [vmem:[%s273 + $0x48] sm:$0x77]
      %v419 = vld [vmem:[%s273 + $0x50] sm:$0x77]
      %v420 = vld [vmem:[%s273 + $0x58] sm:$0x77]
      %v421 = vld [vmem:[%s273 + $0x60] sm:$0x77]
      %v422 = vld [vmem:[%s273 + $0x68] sm:$0x77]
      %v423 = vld [vmem:[%s273 + $0x70] sm:$0x77]
      %v424 = vld [vmem:[%s273 + $0x78] sm:$0x77]
      %v426 = vcombine.high %v424, %v424
      %427 = vrot.lane.b32.xlu0 %v426, 65
      %v428 = vpop.permute.xlu0 %427
      %v445 = vcombine.high %v409, %v409
      %v446 = vcombine.high %v410, %v410
      %v447 = vcombine.high %v411, %v411
      %v448 = vcombine.high %v412, %v412
      %v449 = vcombine.high %v413, %v413
      %v450 = vcombine.high %v414, %v414
      %v451 = vcombine.high %v415, %v415
      %v452 = vcombine.high %v416, %v416
      %v453 = vcombine.high %v417, %v417
      %v454 = vcombine.high %v418, %v418
      %v455 = vcombine.high %v419, %v419
      %v456 = vcombine.high %v420, %v420
      %v457 = vcombine.high %v421, %v421
      %v458 = vcombine.high %v422, %v422
      %v459 = vcombine.high %v423, %v423
      %460 = vrot.lane.b32.xlu0 %v409, 65
      %v461 = vpop.permute.xlu0 %460
      %462 = vrot.lane.b32.xlu0 %v445, 65
      %v463 = vpop.permute.xlu0 %462
      %464 = vrot.lane.b32.xlu0 %v410, 65
      %v465 = vpop.permute.xlu0 %464
      %466 = vrot.lane.b32.xlu0 %v446, 65
      %v467 = vpop.permute.xlu0 %466
      %468 = vrot.lane.b32.xlu0 %v411, 65
      %v469 = vpop.permute.xlu0 %468
      %470 = vrot.lane.b32.xlu0 %v447, 65
      %v471 = vpop.permute.xlu0 %470
      %472 = vrot.lane.b32.xlu0 %v412, 65
      %v473 = vpop.permute.xlu0 %472
      %474 = vrot.lane.b32.xlu0 %v448, 65
      %v475 = vpop.permute.xlu0 %474
      %476 = vrot.lane.b32.xlu0 %v413, 65
      %v477 = vpop.permute.xlu0 %476
      %478 = vrot.lane.b32.xlu0 %v449, 65
      %v479 = vpop.permute.xlu0 %478
      %480 = vrot.lane.b32.xlu0 %v414, 65
      %v481 = vpop.permute.xlu0 %480
      %482 = vrot.lane.b32.xlu0 %v450, 65
      %v483 = vpop.permute.xlu0 %482
      %484 = vrot.lane.b32.xlu0 %v415, 65
      %v485 = vpop.permute.xlu0 %484
      %486 = vrot.lane.b32.xlu0 %v451, 65
      %v487 = vpop.permute.xlu0 %486
      %488 = vrot.lane.b32.xlu0 %v416, 65
      %v489 = vpop.permute.xlu0 %488
      %490 = vrot.lane.b32.xlu0 %v452, 65
      %v491 = vpop.permute.xlu0 %490
      %492 = vrot.lane.b32.xlu0 %v417, 65
      %v493 = vpop.permute.xlu0 %492
      %494 = vrot.lane.b32.xlu0 %v453, 65
      %v495 = vpop.permute.xlu0 %494
      %496 = vrot.lane.b32.xlu0 %v418, 65
      %v497 = vpop.permute.xlu0 %496
      %498 = vrot.lane.b32.xlu0 %v454, 65
      %v499 = vpop.permute.xlu0 %498
      %500 = vrot.lane.b32.xlu0 %v419, 65
      %v501 = vpop.permute.xlu0 %500
      %502 = vrot.lane.b32.xlu0 %v455, 65
      %v503 = vpop.permute.xlu0 %502
      %504 = vrot.lane.b32.xlu0 %v420, 65
      %v505 = vpop.permute.xlu0 %504
      %506 = vrot.lane.b32.xlu0 %v456, 65
      %v507 = vpop.permute.xlu0 %506
      %508 = vrot.lane.b32.xlu0 %v421, 65
      %v509 = vpop.permute.xlu0 %508
      %510 = vrot.lane.b32.xlu0 %v457, 65
      %v511 = vpop.permute.xlu0 %510
      %512 = vrot.lane.b32.xlu0 %v422, 65
      %v513 = vpop.permute.xlu0 %512
      %514 = vrot.lane.b32.xlu0 %v458, 65
      %v515 = vpop.permute.xlu0 %514
      %516 = vrot.lane.b32.xlu0 %v423, 65
      %v517 = vpop.permute.xlu0 %516
      %518 = vrot.lane.b32.xlu0 %v459, 65
      %v519 = vpop.permute.xlu0 %518
      %520 = vrot.lane.b32.xlu0 %v424, 65
      %v521 = vpop.permute.xlu0 %520
      %vm522 = vcmask 531456
      %v523 = vsel %vm522, %v461, %v463
      %v524 = vsel %vm522, %v463, %v465
      %v525 = vsel %vm522, %v465, %v467
      %v526 = vsel %vm522, %v467, %v469
      %v527 = vsel %vm522, %v469, %v471
      %v528 = vsel %vm522, %v471, %v473
      %v529 = vsel %vm522, %v473, %v475
      %v530 = vsel %vm522, %v475, %v477
      %v531 = vsel %vm522, %v477, %v479
      %v532 = vsel %vm522, %v479, %v481
      %v533 = vsel %vm522, %v481, %v483
      %v534 = vsel %vm522, %v483, %v485
      %v535 = vsel %vm522, %v485, %v487
      %v536 = vsel %vm522, %v487, %v489
      %v537 = vsel %vm522, %v489, %v491
      %v538 = vsel %vm522, %v491, %v493
      %v539 = vsel %vm522, %v493, %v495
      %v540 = vsel %vm522, %v495, %v497
      %v541 = vsel %vm522, %v497, %v499
      %v542 = vsel %vm522, %v499, %v501
      %v543 = vsel %vm522, %v501, %v503
      %v544 = vsel %vm522, %v503, %v505
      %v545 = vsel %vm522, %v505, %v507
      %v546 = vsel %vm522, %v507, %v509
      %v547 = vsel %vm522, %v509, %v511
      %v548 = vsel %vm522, %v511, %v513
      %v549 = vsel %vm522, %v513, %v515
      %v550 = vsel %vm522, %v515, %v517
      %v551 = vsel %vm522, %v517, %v519
      %v552 = vsel %vm522, %v519, %v521
      %v553 = vsel %vm522, %v521, %v428
      %v586 = vsel %vm522, %v428, %v461
      %vm587 = vcmp.ge.s32.totalorder %v345, 1
      %vm588 = vcmp.ge.s32.totalorder %v346, 1
      %vm589 = vcmp.ge.s32.totalorder %v347, 1
      %vm590 = vcmp.ge.s32.totalorder %v348, 1
      %vm591 = vcmp.ge.s32.totalorder %v349, 1
      %vm592 = vcmp.ge.s32.totalorder %v350, 1
      %vm593 = vcmp.ge.s32.totalorder %v351, 1
      %vm594 = vcmp.ge.s32.totalorder %v352, 1
      %vm595 = vcmp.ge.s32.totalorder %v353, 1
      %vm596 = vcmp.ge.s32.totalorder %v354, 1
      %vm597 = vcmp.ge.s32.totalorder %v355, 1
      %vm598 = vcmp.ge.s32.totalorder %v356, 1
      %vm599 = vcmp.ge.s32.totalorder %v357, 1
      %vm600 = vcmp.ge.s32.totalorder %v358, 1
      %vm601 = vcmp.ge.s32.totalorder %v359, 1
      %vm602 = vcmp.ge.s32.totalorder %v360, 1
      %vm603 = vcmp.ge.s32.totalorder %v361, 1
      %vm604 = vcmp.ge.s32.totalorder %v362, 1
      %vm605 = vcmp.ge.s32.totalorder %v363, 1
      %vm606 = vcmp.ge.s32.totalorder %v364, 1
      %vm607 = vcmp.ge.s32.totalorder %v365, 1
      %vm608 = vcmp.ge.s32.totalorder %v366, 1
      %vm609 = vcmp.ge.s32.totalorder %v367, 1
      %vm610 = vcmp.ge.s32.totalorder %v368, 1
      %vm611 = vcmp.ge.s32.totalorder %v369, 1
      %vm612 = vcmp.ge.s32.totalorder %v370, 1
      %vm613 = vcmp.ge.s32.totalorder %v371, 1
      %vm614 = vcmp.ge.s32.totalorder %v372, 1
      %vm615 = vcmp.ge.s32.totalorder %v373, 1
      %vm616 = vcmp.ge.s32.totalorder %v374, 1
      %vm617 = vcmp.ge.s32.totalorder %v375, 1
      %vm618 = vcmp.ge.s32.totalorder %v376, 1
      %vm619 = vcmp.ge.s32.totalorder %v377, 1
      %vm620 = vcmp.ge.s32.totalorder %v378, 1
      %vm621 = vcmp.ge.s32.totalorder %v379, 1
      %vm622 = vcmp.ge.s32.totalorder %v380, 1
      %vm623 = vcmp.ge.s32.totalorder %v381, 1
      %vm624 = vcmp.ge.s32.totalorder %v382, 1
      %vm625 = vcmp.ge.s32.totalorder %v383, 1
      %vm626 = vcmp.ge.s32.totalorder %v384, 1
      %vm627 = vcmp.ge.s32.totalorder %v385, 1
      %vm628 = vcmp.ge.s32.totalorder %v386, 1
      %vm629 = vcmp.ge.s32.totalorder %v387, 1
      %vm630 = vcmp.ge.s32.totalorder %v388, 1
      %vm631 = vcmp.ge.s32.totalorder %v389, 1
      %vm632 = vcmp.ge.s32.totalorder %v390, 1
      %vm633 = vcmp.ge.s32.totalorder %v391, 1
      %vm634 = vcmp.ge.s32.totalorder %v392, 1
      %vm635 = vcmp.ge.s32.totalorder %v393, 1
      %vm636 = vcmp.ge.s32.totalorder %v394, 1
      %vm637 = vcmp.ge.s32.totalorder %v395, 1
      %vm638 = vcmp.ge.s32.totalorder %v396, 1
      %vm639 = vcmp.ge.s32.totalorder %v397, 1
      %vm640 = vcmp.ge.s32.totalorder %v398, 1
      %vm641 = vcmp.ge.s32.totalorder %v399, 1
      %vm642 = vcmp.ge.s32.totalorder %v400, 1
      %vm643 = vcmp.ge.s32.totalorder %v401, 1
      %vm644 = vcmp.ge.s32.totalorder %v402, 1
      %vm645 = vcmp.ge.s32.totalorder %v403, 1
      %vm646 = vcmp.ge.s32.totalorder %v404, 1
      %vm647 = vcmp.ge.s32.totalorder %v405, 1
      %vm648 = vcmp.ge.s32.totalorder %v406, 1
      %vm649 = vcmp.ge.s32.totalorder %v407, 1
      %vm650 = vcmp.ge.s32.totalorder %v408, 1
      %vm651 = vmand %vm587, %vm619
      %vm652 = vmand %vm588, %vm620
      %vm653 = vmand %vm589, %vm621
      %vm654 = vmand %vm590, %vm622
      %vm655 = vmand %vm591, %vm623
      %vm656 = vmand %vm592, %vm624
      %vm657 = vmand %vm593, %vm625
      %vm658 = vmand %vm594, %vm626
      %vm659 = vmand %vm595, %vm627
      %vm660 = vmand %vm596, %vm628
      %vm661 = vmand %vm597, %vm629
      %vm662 = vmand %vm598, %vm630
      %vm663 = vmand %vm599, %vm631
      %vm664 = vmand %vm600, %vm632
      %vm665 = vmand %vm601, %vm633
      %vm666 = vmand %vm602, %vm634
      %vm667 = vmand %vm603, %vm635
      %vm668 = vmand %vm604, %vm636
      %vm669 = vmand %vm605, %vm637
      %vm670 = vmand %vm606, %vm638
      %vm671 = vmand %vm607, %vm639
      %vm672 = vmand %vm608, %vm640
      %vm673 = vmand %vm609, %vm641
      %vm674 = vmand %vm610, %vm642
      %vm675 = vmand %vm611, %vm643
      %vm676 = vmand %vm612, %vm644
      %vm677 = vmand %vm613, %vm645
      %vm678 = vmand %vm614, %vm646
      %vm679 = vmand %vm615, %vm647
      %vm680 = vmand %vm616, %vm648
      %vm681 = vmand %vm617, %vm649
      %vm682 = vmand %vm618, %vm650
      %v683 = vsel %vm651, 1, 0
      %v684 = vsel %vm652, 1, 0
      %v685 = vsel %vm653, 1, 0
      %v686 = vsel %vm654, 1, 0
      %v687 = vsel %vm655, 1, 0
      %v688 = vsel %vm656, 1, 0
      %v689 = vsel %vm657, 1, 0
      %v690 = vsel %vm658, 1, 0
      %v691 = vsel %vm659, 1, 0
      %v692 = vsel %vm660, 1, 0
      %v693 = vsel %vm661, 1, 0
      %v694 = vsel %vm662, 1, 0
      %v695 = vsel %vm663, 1, 0
      %v696 = vsel %vm664, 1, 0
      %v697 = vsel %vm665, 1, 0
      %v698 = vsel %vm666, 1, 0
      %v699 = vsel %vm667, 1, 0
      %v700 = vsel %vm668, 1, 0
      %v701 = vsel %vm669, 1, 0
      %v702 = vsel %vm670, 1, 0
      %v703 = vsel %vm671, 1, 0
      %v704 = vsel %vm672, 1, 0
      %v705 = vsel %vm673, 1, 0
      %v706 = vsel %vm674, 1, 0
      %v707 = vsel %vm675, 1, 0
      %v708 = vsel %vm676, 1, 0
      %v709 = vsel %vm677, 1, 0
      %v710 = vsel %vm678, 1, 0
      %v711 = vsel %vm679, 1, 0
      %v712 = vsel %vm680, 1, 0
      %v713 = vsel %vm681, 1, 0
      %v714 = vsel %vm682, 1, 0
      %vm715 = vcmp.eq.s32.totalorder %v683, 1
      %vm716 = vcmp.eq.s32.totalorder %v684, 1
      %vm717 = vcmp.eq.s32.totalorder %v685, 1
      %vm718 = vcmp.eq.s32.totalorder %v686, 1
      %vm719 = vcmp.eq.s32.totalorder %v687, 1
      %vm720 = vcmp.eq.s32.totalorder %v688, 1
      %vm721 = vcmp.eq.s32.totalorder %v689, 1
      %vm722 = vcmp.eq.s32.totalorder %v690, 1
      %vm723 = vcmp.eq.s32.totalorder %v691, 1
      %vm724 = vcmp.eq.s32.totalorder %v692, 1
      %vm725 = vcmp.eq.s32.totalorder %v693, 1
      %vm726 = vcmp.eq.s32.totalorder %v694, 1
      %vm727 = vcmp.eq.s32.totalorder %v695, 1
      %vm728 = vcmp.eq.s32.totalorder %v696, 1
      %vm729 = vcmp.eq.s32.totalorder %v697, 1
      %vm730 = vcmp.eq.s32.totalorder %v698, 1
      %vm731 = vcmp.eq.s32.totalorder %v699, 1
      %vm732 = vcmp.eq.s32.totalorder %v700, 1
      %vm733 = vcmp.eq.s32.totalorder %v701, 1
      %vm734 = vcmp.eq.s32.totalorder %v702, 1
      %vm735 = vcmp.eq.s32.totalorder %v703, 1
      %vm736 = vcmp.eq.s32.totalorder %v704, 1
      %vm737 = vcmp.eq.s32.totalorder %v705, 1
      %vm738 = vcmp.eq.s32.totalorder %v706, 1
      %vm739 = vcmp.eq.s32.totalorder %v707, 1
      %vm740 = vcmp.eq.s32.totalorder %v708, 1
      %vm741 = vcmp.eq.s32.totalorder %v709, 1
      %vm742 = vcmp.eq.s32.totalorder %v710, 1
      %vm743 = vcmp.eq.s32.totalorder %v711, 1
      %vm744 = vcmp.eq.s32.totalorder %v712, 1
      %vm745 = vcmp.eq.s32.totalorder %v713, 1
      %vm746 = vcmp.eq.s32.totalorder %v714, 1
      %v747 = vsel %vm715, %v586, 0.0
      %v748 = vsel %vm716, %v523, 0.0
      %v749 = vsel %vm717, %v524, 0.0
      %v750 = vsel %vm718, %v525, 0.0
      %v751 = vsel %vm719, %v526, 0.0
      %v752 = vsel %vm720, %v527, 0.0
      %v753 = vsel %vm721, %v528, 0.0
      %v754 = vsel %vm722, %v529, 0.0
      %v755 = vsel %vm723, %v530, 0.0
      %v756 = vsel %vm724, %v531, 0.0
      %v757 = vsel %vm725, %v532, 0.0
      %v758 = vsel %vm726, %v533, 0.0
      %v759 = vsel %vm727, %v534, 0.0
      %v760 = vsel %vm728, %v535, 0.0
      %v761 = vsel %vm729, %v536, 0.0
      %v762 = vsel %vm730, %v537, 0.0
      %v763 = vsel %vm731, %v538, 0.0
      %v764 = vsel %vm732, %v539, 0.0
      %v765 = vsel %vm733, %v540, 0.0
      %v766 = vsel %vm734, %v541, 0.0
      %v767 = vsel %vm735, %v542, 0.0
      %v768 = vsel %vm736, %v543, 0.0
      %v769 = vsel %vm737, %v544, 0.0
      %v770 = vsel %vm738, %v545, 0.0
      %v771 = vsel %vm739, %v546, 0.0
      %v772 = vsel %vm740, %v547, 0.0
      %v773 = vsel %vm741, %v548, 0.0
      %v774 = vsel %vm742, %v549, 0.0
      %v775 = vsel %vm743, %v550, 0.0
      %v776 = vsel %vm744, %v551, 0.0
      %v777 = vsel %vm745, %v552, 0.0
      %v778 = vsel %vm746, %v553, 0.0
      %779 = vrot.lane.b32.xlu0 %v426, 64
      %v780 = vpop.permute.xlu0 %779
      %782 = vrot.lane.b32.xlu0 %v409, 64
      %v783 = vpop.permute.xlu0 %782
      %784 = vrot.lane.b32.xlu0 %v445, 64
      %v785 = vpop.permute.xlu0 %784
      %786 = vrot.lane.b32.xlu0 %v410, 64
      %v787 = vpop.permute.xlu0 %786
      %788 = vrot.lane.b32.xlu0 %v446, 64
      %v789 = vpop.permute.xlu0 %788
      %790 = vrot.lane.b32.xlu0 %v411, 64
      %v791 = vpop.permute.xlu0 %790
      %792 = vrot.lane.b32.xlu0 %v447, 64
      %v793 = vpop.permute.xlu0 %792
      %794 = vrot.lane.b32.xlu0 %v412, 64
      %v795 = vpop.permute.xlu0 %794
      %796 = vrot.lane.b32.xlu0 %v448, 64
      %v797 = vpop.permute.xlu0 %796
      %798 = vrot.lane.b32.xlu0 %v413, 64
      %v799 = vpop.permute.xlu0 %798
      %800 = vrot.lane.b32.xlu0 %v449, 64
      %v801 = vpop.permute.xlu0 %800
      %802 = vrot.lane.b32.xlu0 %v414, 64
      %v803 = vpop.permute.xlu0 %802
      %804 = vrot.lane.b32.xlu0 %v450, 64
      %v805 = vpop.permute.xlu0 %804
      %806 = vrot.lane.b32.xlu0 %v415, 64
      %v807 = vpop.permute.xlu0 %806
      %808 = vrot.lane.b32.xlu0 %v451, 64
      %v809 = vpop.permute.xlu0 %808
      %810 = vrot.lane.b32.xlu0 %v416, 64
      %v811 = vpop.permute.xlu0 %810
      %812 = vrot.lane.b32.xlu0 %v452, 64
      %v813 = vpop.permute.xlu0 %812
      %814 = vrot.lane.b32.xlu0 %v417, 64
      %v815 = vpop.permute.xlu0 %814
      %816 = vrot.lane.b32.xlu0 %v453, 64
      %v817 = vpop.permute.xlu0 %816
      %818 = vrot.lane.b32.xlu0 %v418, 64
      %v819 = vpop.permute.xlu0 %818
      %820 = vrot.lane.b32.xlu0 %v454, 64
      %v821 = vpop.permute.xlu0 %820
      %822 = vrot.lane.b32.xlu0 %v419, 64
      %v823 = vpop.permute.xlu0 %822
      %824 = vrot.lane.b32.xlu0 %v455, 64
      %v825 = vpop.permute.xlu0 %824
      %826 = vrot.lane.b32.xlu0 %v420, 64
      %v827 = vpop.permute.xlu0 %826
      %828 = vrot.lane.b32.xlu0 %v456, 64
      %v829 = vpop.permute.xlu0 %828
      %830 = vrot.lane.b32.xlu0 %v421, 64
      %v831 = vpop.permute.xlu0 %830
      %832 = vrot.lane.b32.xlu0 %v457, 64
      %v833 = vpop.permute.xlu0 %832
      %834 = vrot.lane.b32.xlu0 %v422, 64
      %v835 = vpop.permute.xlu0 %834
      %836 = vrot.lane.b32.xlu0 %v458, 64
      %v837 = vpop.permute.xlu0 %836
      %838 = vrot.lane.b32.xlu0 %v423, 64
      %v839 = vpop.permute.xlu0 %838
      %840 = vrot.lane.b32.xlu0 %v459, 64
      %v841 = vpop.permute.xlu0 %840
      %842 = vrot.lane.b32.xlu0 %v424, 64
      %v843 = vpop.permute.xlu0 %842
      %vm844 = vcmask 523264
      %v845 = vsel %vm844, %v783, %v785
      %v846 = vsel %vm844, %v785, %v787
      %v847 = vsel %vm844, %v787, %v789
      %v848 = vsel %vm844, %v789, %v791
      %v849 = vsel %vm844, %v791, %v793
      %v850 = vsel %vm844, %v793, %v795
      %v851 = vsel %vm844, %v795, %v797
      %v852 = vsel %vm844, %v797, %v799
      %v853 = vsel %vm844, %v799, %v801
      %v854 = vsel %vm844, %v801, %v803
      %v855 = vsel %vm844, %v803, %v805
      %v856 = vsel %vm844, %v805, %v807
      %v857 = vsel %vm844, %v807, %v809
      %v858 = vsel %vm844, %v809, %v811
      %v859 = vsel %vm844, %v811, %v813
      %v860 = vsel %vm844, %v813, %v815
      %v861 = vsel %vm844, %v815, %v817
      %v862 = vsel %vm844, %v817, %v819
      %v863 = vsel %vm844, %v819, %v821
      %v864 = vsel %vm844, %v821, %v823
      %v865 = vsel %vm844, %v823, %v825
      %v866 = vsel %vm844, %v825, %v827
      %v867 = vsel %vm844, %v827, %v829
      %v868 = vsel %vm844, %v829, %v831
      %v869 = vsel %vm844, %v831, %v833
      %v870 = vsel %vm844, %v833, %v835
      %v871 = vsel %vm844, %v835, %v837
      %v872 = vsel %vm844, %v837, %v839
      %v873 = vsel %vm844, %v839, %v841
      %v874 = vsel %vm844, %v841, %v843
      %v875 = vsel %vm844, %v843, %v780
      %v908 = vsel %vm844, %v780, %v783
      %v909 = vsel %vm587, 1, 0
      %v910 = vsel %vm588, 1, 0
      %v911 = vsel %vm589, 1, 0
      %v912 = vsel %vm590, 1, 0
      %v913 = vsel %vm591, 1, 0
      %v914 = vsel %vm592, 1, 0
      %v915 = vsel %vm593, 1, 0
      %v916 = vsel %vm594, 1, 0
      %v917 = vsel %vm595, 1, 0
      %v918 = vsel %vm596, 1, 0
      %v919 = vsel %vm597, 1, 0
      %v920 = vsel %vm598, 1, 0
      %v921 = vsel %vm599, 1, 0
      %v922 = vsel %vm600, 1, 0
      %v923 = vsel %vm601, 1, 0
      %v924 = vsel %vm602, 1, 0
      %v925 = vsel %vm603, 1, 0
      %v926 = vsel %vm604, 1, 0
      %v927 = vsel %vm605, 1, 0
      %v928 = vsel %vm606, 1, 0
      %v929 = vsel %vm607, 1, 0
      %v930 = vsel %vm608, 1, 0
      %v931 = vsel %vm609, 1, 0
      %v932 = vsel %vm610, 1, 0
      %v933 = vsel %vm611, 1, 0
      %v934 = vsel %vm612, 1, 0
      %v935 = vsel %vm613, 1, 0
      %v936 = vsel %vm614, 1, 0
      %v937 = vsel %vm615, 1, 0
      %v938 = vsel %vm616, 1, 0
      %v939 = vsel %vm617, 1, 0
      %v940 = vsel %vm618, 1, 0
      %vm941 = vcmp.eq.s32.totalorder %v909, 1
      %vm942 = vcmp.eq.s32.totalorder %v910, 1
      %vm943 = vcmp.eq.s32.totalorder %v911, 1
      %vm944 = vcmp.eq.s32.totalorder %v912, 1
      %vm945 = vcmp.eq.s32.totalorder %v913, 1
      %vm946 = vcmp.eq.s32.totalorder %v914, 1
      %vm947 = vcmp.eq.s32.totalorder %v915, 1
      %vm948 = vcmp.eq.s32.totalorder %v916, 1
      %vm949 = vcmp.eq.s32.totalorder %v917, 1
      %vm950 = vcmp.eq.s32.totalorder %v918, 1
      %vm951 = vcmp.eq.s32.totalorder %v919, 1
      %vm952 = vcmp.eq.s32.totalorder %v920, 1
      %vm953 = vcmp.eq.s32.totalorder %v921, 1
      %vm954 = vcmp.eq.s32.totalorder %v922, 1
      %vm955 = vcmp.eq.s32.totalorder %v923, 1
      %vm956 = vcmp.eq.s32.totalorder %v924, 1
      %vm957 = vcmp.eq.s32.totalorder %v925, 1
      %vm958 = vcmp.eq.s32.totalorder %v926, 1
      %vm959 = vcmp.eq.s32.totalorder %v927, 1
      %vm960 = vcmp.eq.s32.totalorder %v928, 1
      %vm961 = vcmp.eq.s32.totalorder %v929, 1
      %vm962 = vcmp.eq.s32.totalorder %v930, 1
      %vm963 = vcmp.eq.s32.totalorder %v931, 1
      %vm964 = vcmp.eq.s32.totalorder %v932, 1
      %vm965 = vcmp.eq.s32.totalorder %v933, 1
      %vm966 = vcmp.eq.s32.totalorder %v934, 1
      %vm967 = vcmp.eq.s32.totalorder %v935, 1
      %vm968 = vcmp.eq.s32.totalorder %v936, 1
      %vm969 = vcmp.eq.s32.totalorder %v937, 1
      %vm970 = vcmp.eq.s32.totalorder %v938, 1
      %vm971 = vcmp.eq.s32.totalorder %v939, 1
      %vm972 = vcmp.eq.s32.totalorder %v940, 1
      %v973 = vsel %vm941, %v908, 0.0
      %v974 = vsel %vm942, %v845, 0.0
      %v975 = vsel %vm943, %v846, 0.0
      %v976 = vsel %vm944, %v847, 0.0
      %v977 = vsel %vm945, %v848, 0.0
      %v978 = vsel %vm946, %v849, 0.0
      %v979 = vsel %vm947, %v850, 0.0
      %v980 = vsel %vm948, %v851, 0.0
      %v981 = vsel %vm949, %v852, 0.0
      %v982 = vsel %vm950, %v853, 0.0
      %v983 = vsel %vm951, %v854, 0.0
      %v984 = vsel %vm952, %v855, 0.0
      %v985 = vsel %vm953, %v856, 0.0
      %v986 = vsel %vm954, %v857, 0.0
      %v987 = vsel %vm955, %v858, 0.0
      %v988 = vsel %vm956, %v859, 0.0
      %v989 = vsel %vm957, %v860, 0.0
      %v990 = vsel %vm958, %v861, 0.0
      %v991 = vsel %vm959, %v862, 0.0
      %v992 = vsel %vm960, %v863, 0.0
      %v993 = vsel %vm961, %v864, 0.0
      %v994 = vsel %vm962, %v865, 0.0
      %v995 = vsel %vm963, %v866, 0.0
      %v996 = vsel %vm964, %v867, 0.0
      %v997 = vsel %vm965, %v868, 0.0
      %v998 = vsel %vm966, %v869, 0.0
      %v999 = vsel %vm967, %v870, 0.0
      %v1000 = vsel %vm968, %v871, 0.0
      %v1001 = vsel %vm969, %v872, 0.0
      %v1002 = vsel %vm970, %v873, 0.0
      %v1003 = vsel %vm971, %v874, 0.0
      %v1004 = vsel %vm972, %v875, 0.0
      %1005 = vrot.lane.b32.xlu0 %v426, 63
      %v1006 = vpop.permute.xlu0 %1005
      %1008 = vrot.lane.b32.xlu0 %v409, 63
      %v1009 = vpop.permute.xlu0 %1008
      %1010 = vrot.lane.b32.xlu0 %v445, 63
      %v1011 = vpop.permute.xlu0 %1010
      %1012 = vrot.lane.b32.xlu0 %v410, 63
      %v1013 = vpop.permute.xlu0 %1012
      %1014 = vrot.lane.b32.xlu0 %v446, 63
      %v1015 = vpop.permute.xlu0 %1014
      %1016 = vrot.lane.b32.xlu0 %v411, 63
      %v1017 = vpop.permute.xlu0 %1016
      %1018 = vrot.lane.b32.xlu0 %v447, 63
      %v1019 = vpop.permute.xlu0 %1018
      %1020 = vrot.lane.b32.xlu0 %v412, 63
      %v1021 = vpop.permute.xlu0 %1020
      %1022 = vrot.lane.b32.xlu0 %v448, 63
      %v1023 = vpop.permute.xlu0 %1022
      %1024 = vrot.lane.b32.xlu0 %v413, 63
      %v1025 = vpop.permute.xlu0 %1024
      %1026 = vrot.lane.b32.xlu0 %v449, 63
      %v1027 = vpop.permute.xlu0 %1026
      %1028 = vrot.lane.b32.xlu0 %v414, 63
      %v1029 = vpop.permute.xlu0 %1028
      %1030 = vrot.lane.b32.xlu0 %v450, 63
      %v1031 = vpop.permute.xlu0 %1030
      %1032 = vrot.lane.b32.xlu0 %v415, 63
      %v1033 = vpop.permute.xlu0 %1032
      %1034 = vrot.lane.b32.xlu0 %v451, 63
      %v1035 = vpop.permute.xlu0 %1034
      %1036 = vrot.lane.b32.xlu0 %v416, 63
      %v1037 = vpop.permute.xlu0 %1036
      %1038 = vrot.lane.b32.xlu0 %v452, 63
      %v1039 = vpop.permute.xlu0 %1038
      %1040 = vrot.lane.b32.xlu0 %v417, 63
      %v1041 = vpop.permute.xlu0 %1040
      %1042 = vrot.lane.b32.xlu0 %v453, 63
      %v1043 = vpop.permute.xlu0 %1042
      %1044 = vrot.lane.b32.xlu0 %v418, 63
      %v1045 = vpop.permute.xlu0 %1044
      %1046 = vrot.lane.b32.xlu0 %v454, 63
      %v1047 = vpop.permute.xlu0 %1046
      %1048 = vrot.lane.b32.xlu0 %v419, 63
      %v1049 = vpop.permute.xlu0 %1048
      %1050 = vrot.lane.b32.xlu0 %v455, 63
      %v1051 = vpop.permute.xlu0 %1050
      %1052 = vrot.lane.b32.xlu0 %v420, 63
      %v1053 = vpop.permute.xlu0 %1052
      %1054 = vrot.lane.b32.xlu0 %v456, 63
      %v1055 = vpop.permute.xlu0 %1054
      %1056 = vrot.lane.b32.xlu0 %v421, 63
      %v1057 = vpop.permute.xlu0 %1056
      %1058 = vrot.lane.b32.xlu0 %v457, 63
      %v1059 = vpop.permute.xlu0 %1058
      %1060 = vrot.lane.b32.xlu0 %v422, 63
      %v1061 = vpop.permute.xlu0 %1060
      %1062 = vrot.lane.b32.xlu0 %v458, 63
      %v1063 = vpop.permute.xlu0 %1062
      %1064 = vrot.lane.b32.xlu0 %v423, 63
      %v1065 = vpop.permute.xlu0 %1064
      %1066 = vrot.lane.b32.xlu0 %v459, 63
      %v1067 = vpop.permute.xlu0 %1066
      %1068 = vrot.lane.b32.xlu0 %v424, 63
      %v1069 = vpop.permute.xlu0 %1068
      %vm1070 = vcmask 515072
      %v1071 = vsel %vm1070, %v1009, %v1011
      %v1072 = vsel %vm1070, %v1011, %v1013
      %v1073 = vsel %vm1070, %v1013, %v1015
      %v1074 = vsel %vm1070, %v1015, %v1017
      %v1075 = vsel %vm1070, %v1017, %v1019
      %v1076 = vsel %vm1070, %v1019, %v1021
      %v1077 = vsel %vm1070, %v1021, %v1023
      %v1078 = vsel %vm1070, %v1023, %v1025
      %v1079 = vsel %vm1070, %v1025, %v1027
      %v1080 = vsel %vm1070, %v1027, %v1029
      %v1081 = vsel %vm1070, %v1029, %v1031
      %v1082 = vsel %vm1070, %v1031, %v1033
      %v1083 = vsel %vm1070, %v1033, %v1035
      %v1084 = vsel %vm1070, %v1035, %v1037
      %v1085 = vsel %vm1070, %v1037, %v1039
      %v1086 = vsel %vm1070, %v1039, %v1041
      %v1087 = vsel %vm1070, %v1041, %v1043
      %v1088 = vsel %vm1070, %v1043, %v1045
      %v1089 = vsel %vm1070, %v1045, %v1047
      %v1090 = vsel %vm1070, %v1047, %v1049
      %v1091 = vsel %vm1070, %v1049, %v1051
      %v1092 = vsel %vm1070, %v1051, %v1053
      %v1093 = vsel %vm1070, %v1053, %v1055
      %v1094 = vsel %vm1070, %v1055, %v1057
      %v1095 = vsel %vm1070, %v1057, %v1059
      %v1096 = vsel %vm1070, %v1059, %v1061
      %v1097 = vsel %vm1070, %v1061, %v1063
      %v1098 = vsel %vm1070, %v1063, %v1065
      %v1099 = vsel %vm1070, %v1065, %v1067
      %v1100 = vsel %vm1070, %v1067, %v1069
      %v1101 = vsel %vm1070, %v1069, %v1006
      %v1134 = vsel %vm1070, %v1006, %v1009
      %vm1135 = vcmp.lt.s32.totalorder %v377, 63
      %vm1136 = vcmp.lt.s32.totalorder %v378, 63
      %vm1137 = vcmp.lt.s32.totalorder %v379, 63
      %vm1138 = vcmp.lt.s32.totalorder %v380, 63
      %vm1139 = vcmp.lt.s32.totalorder %v381, 63
      %vm1140 = vcmp.lt.s32.totalorder %v382, 63
      %vm1141 = vcmp.lt.s32.totalorder %v383, 63
      %vm1142 = vcmp.lt.s32.totalorder %v384, 63
      %vm1143 = vcmp.lt.s32.totalorder %v385, 63
      %vm1144 = vcmp.lt.s32.totalorder %v386, 63
      %vm1145 = vcmp.lt.s32.totalorder %v387, 63
      %vm1146 = vcmp.lt.s32.totalorder %v388, 63
      %vm1147 = vcmp.lt.s32.totalorder %v389, 63
      %vm1148 = vcmp.lt.s32.totalorder %v390, 63
      %vm1149 = vcmp.lt.s32.totalorder %v391, 63
      %vm1150 = vcmp.lt.s32.totalorder %v392, 63
      %vm1151 = vcmp.lt.s32.totalorder %v393, 63
      %vm1152 = vcmp.lt.s32.totalorder %v394, 63
      %vm1153 = vcmp.lt.s32.totalorder %v395, 63
      %vm1154 = vcmp.lt.s32.totalorder %v396, 63
      %vm1155 = vcmp.lt.s32.totalorder %v397, 63
      %vm1156 = vcmp.lt.s32.totalorder %v398, 63
      %vm1157 = vcmp.lt.s32.totalorder %v399, 63
      %vm1158 = vcmp.lt.s32.totalorder %v400, 63
      %vm1159 = vcmp.lt.s32.totalorder %v401, 63
      %vm1160 = vcmp.lt.s32.totalorder %v402, 63
      %vm1161 = vcmp.lt.s32.totalorder %v403, 63
      %vm1162 = vcmp.lt.s32.totalorder %v404, 63
      %vm1163 = vcmp.lt.s32.totalorder %v405, 63
      %vm1164 = vcmp.lt.s32.totalorder %v406, 63
      %vm1165 = vcmp.lt.s32.totalorder %v407, 63
      %vm1166 = vcmp.lt.s32.totalorder %v408, 63
      %vm1167 = vmand %vm587, %vm1135
      %vm1168 = vmand %vm588, %vm1136
      %vm1169 = vmand %vm589, %vm1137
      %vm1170 = vmand %vm590, %vm1138
      %vm1171 = vmand %vm591, %vm1139
      %vm1172 = vmand %vm592, %vm1140
      %vm1173 = vmand %vm593, %vm1141
      %vm1174 = vmand %vm594, %vm1142
      %vm1175 = vmand %vm595, %vm1143
      %vm1176 = vmand %vm596, %vm1144
      %vm1177 = vmand %vm597, %vm1145
      %vm1178 = vmand %vm598, %vm1146
      %vm1179 = vmand %vm599, %vm1147
      %vm1180 = vmand %vm600, %vm1148
      %vm1181 = vmand %vm601, %vm1149
      %vm1182 = vmand %vm602, %vm1150
      %vm1183 = vmand %vm603, %vm1151
      %vm1184 = vmand %vm604, %vm1152
      %vm1185 = vmand %vm605, %vm1153
      %vm1186 = vmand %vm606, %vm1154
      %vm1187 = vmand %vm607, %vm1155
      %vm1188 = vmand %vm608, %vm1156
      %vm1189 = vmand %vm609, %vm1157
      %vm1190 = vmand %vm610, %vm1158
      %vm1191 = vmand %vm611, %vm1159
      %vm1192 = vmand %vm612, %vm1160
      %vm1193 = vmand %vm613, %vm1161
      %vm1194 = vmand %vm614, %vm1162
      %vm1195 = vmand %vm615, %vm1163
      %vm1196 = vmand %vm616, %vm1164
      %vm1197 = vmand %vm617, %vm1165
      %vm1198 = vmand %vm618, %vm1166
      %v1199 = vsel %vm1167, 1, 0
      %v1200 = vsel %vm1168, 1, 0
      %v1201 = vsel %vm1169, 1, 0
      %v1202 = vsel %vm1170, 1, 0
      %v1203 = vsel %vm1171, 1, 0
      %v1204 = vsel %vm1172, 1, 0
      %v1205 = vsel %vm1173, 1, 0
      %v1206 = vsel %vm1174, 1, 0
      %v1207 = vsel %vm1175, 1, 0
      %v1208 = vsel %vm1176, 1, 0
      %v1209 = vsel %vm1177, 1, 0
      %v1210 = vsel %vm1178, 1, 0
      %v1211 = vsel %vm1179, 1, 0
      %v1212 = vsel %vm1180, 1, 0
      %v1213 = vsel %vm1181, 1, 0
      %v1214 = vsel %vm1182, 1, 0
      %v1215 = vsel %vm1183, 1, 0
      %v1216 = vsel %vm1184, 1, 0
      %v1217 = vsel %vm1185, 1, 0
      %v1218 = vsel %vm1186, 1, 0
      %v1219 = vsel %vm1187, 1, 0
      %v1220 = vsel %vm1188, 1, 0
      %v1221 = vsel %vm1189, 1, 0
      %v1222 = vsel %vm1190, 1, 0
      %v1223 = vsel %vm1191, 1, 0
      %v1224 = vsel %vm1192, 1, 0
      %v1225 = vsel %vm1193, 1, 0
      %v1226 = vsel %vm1194, 1, 0
      %v1227 = vsel %vm1195, 1, 0
      %v1228 = vsel %vm1196, 1, 0
      %v1229 = vsel %vm1197, 1, 0
      %v1230 = vsel %vm1198, 1, 0
      %vm1231 = vcmp.eq.s32.totalorder %v1199, 1
      %vm1232 = vcmp.eq.s32.totalorder %v1200, 1
      %vm1233 = vcmp.eq.s32.totalorder %v1201, 1
      %vm1234 = vcmp.eq.s32.totalorder %v1202, 1
      %vm1235 = vcmp.eq.s32.totalorder %v1203, 1
      %vm1236 = vcmp.eq.s32.totalorder %v1204, 1
      %vm1237 = vcmp.eq.s32.totalorder %v1205, 1
      %vm1238 = vcmp.eq.s32.totalorder %v1206, 1
      %vm1239 = vcmp.eq.s32.totalorder %v1207, 1
      %vm1240 = vcmp.eq.s32.totalorder %v1208, 1
      %vm1241 = vcmp.eq.s32.totalorder %v1209, 1
      %vm1242 = vcmp.eq.s32.totalorder %v1210, 1
      %vm1243 = vcmp.eq.s32.totalorder %v1211, 1
      %vm1244 = vcmp.eq.s32.totalorder %v1212, 1
      %vm1245 = vcmp.eq.s32.totalorder %v1213, 1
      %vm1246 = vcmp.eq.s32.totalorder %v1214, 1
      %vm1247 = vcmp.eq.s32.totalorder %v1215, 1
      %vm1248 = vcmp.eq.s32.totalorder %v1216, 1
      %vm1249 = vcmp.eq.s32.totalorder %v1217, 1
      %vm1250 = vcmp.eq.s32.totalorder %v1218, 1
      %vm1251 = vcmp.eq.s32.totalorder %v1219, 1
      %vm1252 = vcmp.eq.s32.totalorder %v1220, 1
      %vm1253 = vcmp.eq.s32.totalorder %v1221, 1
      %vm1254 = vcmp.eq.s32.totalorder %v1222, 1
      %vm1255 = vcmp.eq.s32.totalorder %v1223, 1
      %vm1256 = vcmp.eq.s32.totalorder %v1224, 1
      %vm1257 = vcmp.eq.s32.totalorder %v1225, 1
      %vm1258 = vcmp.eq.s32.totalorder %v1226, 1
      %vm1259 = vcmp.eq.s32.totalorder %v1227, 1
      %vm1260 = vcmp.eq.s32.totalorder %v1228, 1
      %vm1261 = vcmp.eq.s32.totalorder %v1229, 1
      %vm1262 = vcmp.eq.s32.totalorder %v1230, 1
      %v1263 = vsel %vm1231, %v1134, 0.0
      %v1264 = vsel %vm1232, %v1071, 0.0
      %v1265 = vsel %vm1233, %v1072, 0.0
      %v1266 = vsel %vm1234, %v1073, 0.0
      %v1267 = vsel %vm1235, %v1074, 0.0
      %v1268 = vsel %vm1236, %v1075, 0.0
      %v1269 = vsel %vm1237, %v1076, 0.0
      %v1270 = vsel %vm1238, %v1077, 0.0
      %v1271 = vsel %vm1239, %v1078, 0.0
      %v1272 = vsel %vm1240, %v1079, 0.0
      %v1273 = vsel %vm1241, %v1080, 0.0
      %v1274 = vsel %vm1242, %v1081, 0.0
      %v1275 = vsel %vm1243, %v1082, 0.0
      %v1276 = vsel %vm1244, %v1083, 0.0
      %v1277 = vsel %vm1245, %v1084, 0.0
      %v1278 = vsel %vm1246, %v1085, 0.0
      %v1279 = vsel %vm1247, %v1086, 0.0
      %v1280 = vsel %vm1248, %v1087, 0.0
      %v1281 = vsel %vm1249, %v1088, 0.0
      %v1282 = vsel %vm1250, %v1089, 0.0
      %v1283 = vsel %vm1251, %v1090, 0.0
      %v1284 = vsel %vm1252, %v1091, 0.0
      %v1285 = vsel %vm1253, %v1092, 0.0
      %v1286 = vsel %vm1254, %v1093, 0.0
      %v1287 = vsel %vm1255, %v1094, 0.0
      %v1288 = vsel %vm1256, %v1095, 0.0
      %v1289 = vsel %vm1257, %v1096, 0.0
      %v1290 = vsel %vm1258, %v1097, 0.0
      %v1291 = vsel %vm1259, %v1098, 0.0
      %v1292 = vsel %vm1260, %v1099, 0.0
      %v1293 = vsel %vm1261, %v1100, 0.0
      %v1294 = vsel %vm1262, %v1101, 0.0
      %1295 = vrot.lane.b32.xlu0 %v426, 1
      %v1296 = vpop.permute.xlu0 %1295
      %1298 = vrot.lane.b32.xlu0 %v409, 1
      %v1299 = vpop.permute.xlu0 %1298
      %1300 = vrot.lane.b32.xlu0 %v445, 1
      %v1301 = vpop.permute.xlu0 %1300
      %1302 = vrot.lane.b32.xlu0 %v410, 1
      %v1303 = vpop.permute.xlu0 %1302
      %1304 = vrot.lane.b32.xlu0 %v446, 1
      %v1305 = vpop.permute.xlu0 %1304
      %1306 = vrot.lane.b32.xlu0 %v411, 1
      %v1307 = vpop.permute.xlu0 %1306
      %1308 = vrot.lane.b32.xlu0 %v447, 1
      %v1309 = vpop.permute.xlu0 %1308
      %1310 = vrot.lane.b32.xlu0 %v412, 1
      %v1311 = vpop.permute.xlu0 %1310
      %1312 = vrot.lane.b32.xlu0 %v448, 1
      %v1313 = vpop.permute.xlu0 %1312
      %1314 = vrot.lane.b32.xlu0 %v413, 1
      %v1315 = vpop.permute.xlu0 %1314
      %1316 = vrot.lane.b32.xlu0 %v449, 1
      %v1317 = vpop.permute.xlu0 %1316
      %1318 = vrot.lane.b32.xlu0 %v414, 1
      %v1319 = vpop.permute.xlu0 %1318
      %1320 = vrot.lane.b32.xlu0 %v450, 1
      %v1321 = vpop.permute.xlu0 %1320
      %1322 = vrot.lane.b32.xlu0 %v415, 1
      %v1323 = vpop.permute.xlu0 %1322
      %1324 = vrot.lane.b32.xlu0 %v451, 1
      %v1325 = vpop.permute.xlu0 %1324
      %1326 = vrot.lane.b32.xlu0 %v416, 1
      %v1327 = vpop.permute.xlu0 %1326
      %1328 = vrot.lane.b32.xlu0 %v452, 1
      %v1329 = vpop.permute.xlu0 %1328
      %1330 = vrot.lane.b32.xlu0 %v417, 1
      %v1331 = vpop.permute.xlu0 %1330
      %1332 = vrot.lane.b32.xlu0 %v453, 1
      %v1333 = vpop.permute.xlu0 %1332
      %1334 = vrot.lane.b32.xlu0 %v418, 1
      %v1335 = vpop.permute.xlu0 %1334
      %1336 = vrot.lane.b32.xlu0 %v454, 1
      %v1337 = vpop.permute.xlu0 %1336
      %1338 = vrot.lane.b32.xlu0 %v419, 1
      %v1339 = vpop.permute.xlu0 %1338
      %1340 = vrot.lane.b32.xlu0 %v455, 1
      %v1341 = vpop.permute.xlu0 %1340
      %1342 = vrot.lane.b32.xlu0 %v420, 1
      %v1343 = vpop.permute.xlu0 %1342
      %1344 = vrot.lane.b32.xlu0 %v456, 1
      %v1345 = vpop.permute.xlu0 %1344
      %1346 = vrot.lane.b32.xlu0 %v421, 1
      %v1347 = vpop.permute.xlu0 %1346
      %1348 = vrot.lane.b32.xlu0 %v457, 1
      %v1349 = vpop.permute.xlu0 %1348
      %1350 = vrot.lane.b32.xlu0 %v422, 1
      %v1351 = vpop.permute.xlu0 %1350
      %1352 = vrot.lane.b32.xlu0 %v458, 1
      %v1353 = vpop.permute.xlu0 %1352
      %1354 = vrot.lane.b32.xlu0 %v423, 1
      %v1355 = vpop.permute.xlu0 %1354
      %1356 = vrot.lane.b32.xlu0 %v459, 1
      %v1357 = vpop.permute.xlu0 %1356
      %1358 = vrot.lane.b32.xlu0 %v424, 1
      %v1359 = vpop.permute.xlu0 %1358
      %vm1360 = vcmask 7168
      %v1361 = vsel %vm1360, %v1299, %v1301
      %v1362 = vsel %vm1360, %v1301, %v1303
      %v1363 = vsel %vm1360, %v1303, %v1305
      %v1364 = vsel %vm1360, %v1305, %v1307
      %v1365 = vsel %vm1360, %v1307, %v1309
      %v1366 = vsel %vm1360, %v1309, %v1311
      %v1367 = vsel %vm1360, %v1311, %v1313
      %v1368 = vsel %vm1360, %v1313, %v1315
      %v1369 = vsel %vm1360, %v1315, %v1317
      %v1370 = vsel %vm1360, %v1317, %v1319
      %v1371 = vsel %vm1360, %v1319, %v1321
      %v1372 = vsel %vm1360, %v1321, %v1323
      %v1373 = vsel %vm1360, %v1323, %v1325
      %v1374 = vsel %vm1360, %v1325, %v1327
      %v1375 = vsel %vm1360, %v1327, %v1329
      %v1376 = vsel %vm1360, %v1329, %v1331
      %v1377 = vsel %vm1360, %v1331, %v1333
      %v1378 = vsel %vm1360, %v1333, %v1335
      %v1379 = vsel %vm1360, %v1335, %v1337
      %v1380 = vsel %vm1360, %v1337, %v1339
      %v1381 = vsel %vm1360, %v1339, %v1341
      %v1382 = vsel %vm1360, %v1341, %v1343
      %v1383 = vsel %vm1360, %v1343, %v1345
      %v1384 = vsel %vm1360, %v1345, %v1347
      %v1385 = vsel %vm1360, %v1347, %v1349
      %v1386 = vsel %vm1360, %v1349, %v1351
      %v1387 = vsel %vm1360, %v1351, %v1353
      %v1388 = vsel %vm1360, %v1353, %v1355
      %v1389 = vsel %vm1360, %v1355, %v1357
      %v1390 = vsel %vm1360, %v1357, %v1359
      %v1391 = vsel %vm1360, %v1359, %v1296
      %v1424 = vsel %vm1360, %v1296, %v1299
      %v1425 = vsel %vm619, 1, 0
      %v1426 = vsel %vm620, 1, 0
      %v1427 = vsel %vm621, 1, 0
      %v1428 = vsel %vm622, 1, 0
      %v1429 = vsel %vm623, 1, 0
      %v1430 = vsel %vm624, 1, 0
      %v1431 = vsel %vm625, 1, 0
      %v1432 = vsel %vm626, 1, 0
      %v1433 = vsel %vm627, 1, 0
      %v1434 = vsel %vm628, 1, 0
      %v1435 = vsel %vm629, 1, 0
      %v1436 = vsel %vm630, 1, 0
      %v1437 = vsel %vm631, 1, 0
      %v1438 = vsel %vm632, 1, 0
      %v1439 = vsel %vm633, 1, 0
      %v1440 = vsel %vm634, 1, 0
      %v1441 = vsel %vm635, 1, 0
      %v1442 = vsel %vm636, 1, 0
      %v1443 = vsel %vm637, 1, 0
      %v1444 = vsel %vm638, 1, 0
      %v1445 = vsel %vm639, 1, 0
      %v1446 = vsel %vm640, 1, 0
      %v1447 = vsel %vm641, 1, 0
      %v1448 = vsel %vm642, 1, 0
      %v1449 = vsel %vm643, 1, 0
      %v1450 = vsel %vm644, 1, 0
      %v1451 = vsel %vm645, 1, 0
      %v1452 = vsel %vm646, 1, 0
      %v1453 = vsel %vm647, 1, 0
      %v1454 = vsel %vm648, 1, 0
      %v1455 = vsel %vm649, 1, 0
      %v1456 = vsel %vm650, 1, 0
      %vm1457 = vcmp.eq.s32.totalorder %v1425, 1
      %vm1458 = vcmp.eq.s32.totalorder %v1426, 1
      %vm1459 = vcmp.eq.s32.totalorder %v1427, 1
      %vm1460 = vcmp.eq.s32.totalorder %v1428, 1
      %vm1461 = vcmp.eq.s32.totalorder %v1429, 1
      %vm1462 = vcmp.eq.s32.totalorder %v1430, 1
      %vm1463 = vcmp.eq.s32.totalorder %v1431, 1
      %vm1464 = vcmp.eq.s32.totalorder %v1432, 1
      %vm1465 = vcmp.eq.s32.totalorder %v1433, 1
      %vm1466 = vcmp.eq.s32.totalorder %v1434, 1
      %vm1467 = vcmp.eq.s32.totalorder %v1435, 1
      %vm1468 = vcmp.eq.s32.totalorder %v1436, 1
      %vm1469 = vcmp.eq.s32.totalorder %v1437, 1
      %vm1470 = vcmp.eq.s32.totalorder %v1438, 1
      %vm1471 = vcmp.eq.s32.totalorder %v1439, 1
      %vm1472 = vcmp.eq.s32.totalorder %v1440, 1
      %vm1473 = vcmp.eq.s32.totalorder %v1441, 1
      %vm1474 = vcmp.eq.s32.totalorder %v1442, 1
      %vm1475 = vcmp.eq.s32.totalorder %v1443, 1
      %vm1476 = vcmp.eq.s32.totalorder %v1444, 1
      %vm1477 = vcmp.eq.s32.totalorder %v1445, 1
      %vm1478 = vcmp.eq.s32.totalorder %v1446, 1
      %vm1479 = vcmp.eq.s32.totalorder %v1447, 1
      %vm1480 = vcmp.eq.s32.totalorder %v1448, 1
      %vm1481 = vcmp.eq.s32.totalorder %v1449, 1
      %vm1482 = vcmp.eq.s32.totalorder %v1450, 1
      %vm1483 = vcmp.eq.s32.totalorder %v1451, 1
      %vm1484 = vcmp.eq.s32.totalorder %v1452, 1
      %vm1485 = vcmp.eq.s32.totalorder %v1453, 1
      %vm1486 = vcmp.eq.s32.totalorder %v1454, 1
      %vm1487 = vcmp.eq.s32.totalorder %v1455, 1
      %vm1488 = vcmp.eq.s32.totalorder %v1456, 1
      %v1489 = vsel %vm1457, %v1424, 0.0
      %v1490 = vsel %vm1458, %v1361, 0.0
      %v1491 = vsel %vm1459, %v1362, 0.0
      %v1492 = vsel %vm1460, %v1363, 0.0
      %v1493 = vsel %vm1461, %v1364, 0.0
      %v1494 = vsel %vm1462, %v1365, 0.0
      %v1495 = vsel %vm1463, %v1366, 0.0
      %v1496 = vsel %vm1464, %v1367, 0.0
      %v1497 = vsel %vm1465, %v1368, 0.0
      %v1498 = vsel %vm1466, %v1369, 0.0
      %v1499 = vsel %vm1467, %v1370, 0.0
      %v1500 = vsel %vm1468, %v1371, 0.0
      %v1501 = vsel %vm1469, %v1372, 0.0
      %v1502 = vsel %vm1470, %v1373, 0.0
      %v1503 = vsel %vm1471, %v1374, 0.0
      %v1504 = vsel %vm1472, %v1375, 0.0
      %v1505 = vsel %vm1473, %v1376, 0.0
      %v1506 = vsel %vm1474, %v1377, 0.0
      %v1507 = vsel %vm1475, %v1378, 0.0
      %v1508 = vsel %vm1476, %v1379, 0.0
      %v1509 = vsel %vm1477, %v1380, 0.0
      %v1510 = vsel %vm1478, %v1381, 0.0
      %v1511 = vsel %vm1479, %v1382, 0.0
      %v1512 = vsel %vm1480, %v1383, 0.0
      %v1513 = vsel %vm1481, %v1384, 0.0
      %v1514 = vsel %vm1482, %v1385, 0.0
      %v1515 = vsel %vm1483, %v1386, 0.0
      %v1516 = vsel %vm1484, %v1387, 0.0
      %v1517 = vsel %vm1485, %v1388, 0.0
      %v1518 = vsel %vm1486, %v1389, 0.0
      %v1519 = vsel %vm1487, %v1390, 0.0
      %v1520 = vsel %vm1488, %v1391, 0.0
      %1521 = vrot.lane.b32.xlu0 %v409, 127
      %v1522 = vpop.permute.xlu0 %1521
      %1523 = vrot.lane.b32.xlu0 %v445, 127
      %v1524 = vpop.permute.xlu0 %1523
      %1525 = vrot.lane.b32.xlu0 %v410, 127
      %v1526 = vpop.permute.xlu0 %1525
      %1527 = vrot.lane.b32.xlu0 %v446, 127
      %v1528 = vpop.permute.xlu0 %1527
      %1529 = vrot.lane.b32.xlu0 %v411, 127
      %v1530 = vpop.permute.xlu0 %1529
      %1531 = vrot.lane.b32.xlu0 %v447, 127
      %v1532 = vpop.permute.xlu0 %1531
      %1533 = vrot.lane.b32.xlu0 %v412, 127
      %v1534 = vpop.permute.xlu0 %1533
      %1535 = vrot.lane.b32.xlu0 %v448, 127
      %v1536 = vpop.permute.xlu0 %1535
      %1537 = vrot.lane.b32.xlu0 %v413, 127
      %v1538 = vpop.permute.xlu0 %1537
      %1539 = vrot.lane.b32.xlu0 %v449, 127
      %v1540 = vpop.permute.xlu0 %1539
      %1541 = vrot.lane.b32.xlu0 %v414, 127
      %v1542 = vpop.permute.xlu0 %1541
      %1543 = vrot.lane.b32.xlu0 %v450, 127
      %v1544 = vpop.permute.xlu0 %1543
      %1545 = vrot.lane.b32.xlu0 %v415, 127
      %v1546 = vpop.permute.xlu0 %1545
      %1547 = vrot.lane.b32.xlu0 %v451, 127
      %v1548 = vpop.permute.xlu0 %1547
      %1549 = vrot.lane.b32.xlu0 %v416, 127
      %v1550 = vpop.permute.xlu0 %1549
      %1551 = vrot.lane.b32.xlu0 %v452, 127
      %v1552 = vpop.permute.xlu0 %1551
      %1553 = vrot.lane.b32.xlu0 %v417, 127
      %v1554 = vpop.permute.xlu0 %1553
      %1555 = vrot.lane.b32.xlu0 %v453, 127
      %v1556 = vpop.permute.xlu0 %1555
      %1557 = vrot.lane.b32.xlu0 %v418, 127
      %v1558 = vpop.permute.xlu0 %1557
      %1559 = vrot.lane.b32.xlu0 %v454, 127
      %v1560 = vpop.permute.xlu0 %1559
      %1561 = vrot.lane.b32.xlu0 %v419, 127
      %v1562 = vpop.permute.xlu0 %1561
      %1563 = vrot.lane.b32.xlu0 %v455, 127
      %v1564 = vpop.permute.xlu0 %1563
      %1565 = vrot.lane.b32.xlu0 %v420, 127
      %v1566 = vpop.permute.xlu0 %1565
      %1567 = vrot.lane.b32.xlu0 %v456, 127
      %v1568 = vpop.permute.xlu0 %1567
      %1569 = vrot.lane.b32.xlu0 %v421, 127
      %v1570 = vpop.permute.xlu0 %1569
      %1571 = vrot.lane.b32.xlu0 %v457, 127
      %v1572 = vpop.permute.xlu0 %1571
      %1573 = vrot.lane.b32.xlu0 %v422, 127
      %v1574 = vpop.permute.xlu0 %1573
      %1575 = vrot.lane.b32.xlu0 %v458, 127
      %v1576 = vpop.permute.xlu0 %1575
      %1577 = vrot.lane.b32.xlu0 %v423, 127
      %v1578 = vpop.permute.xlu0 %1577
      %1579 = vrot.lane.b32.xlu0 %v459, 127
      %v1580 = vpop.permute.xlu0 %1579
      %1581 = vrot.lane.b32.xlu0 %v424, 127
      %v1582 = vpop.permute.xlu0 %1581
      %1583 = vrot.lane.b32.xlu0 %v426, 127
      %v1584 = vpop.permute.xlu0 %1583
      %vm1585 = vcmask 1039360
      %v1586 = vsel %vm1585, %v1522, %v1524
      %v1587 = vsel %vm1585, %v1524, %v1526
      %v1588 = vsel %vm1585, %v1526, %v1528
      %v1589 = vsel %vm1585, %v1528, %v1530
      %v1590 = vsel %vm1585, %v1530, %v1532
      %v1591 = vsel %vm1585, %v1532, %v1534
      %v1592 = vsel %vm1585, %v1534, %v1536
      %v1593 = vsel %vm1585, %v1536, %v1538
      %v1594 = vsel %vm1585, %v1538, %v1540
      %v1595 = vsel %vm1585, %v1540, %v1542
      %v1596 = vsel %vm1585, %v1542, %v1544
      %v1597 = vsel %vm1585, %v1544, %v1546
      %v1598 = vsel %vm1585, %v1546, %v1548
      %v1599 = vsel %vm1585, %v1548, %v1550
      %v1600 = vsel %vm1585, %v1550, %v1552
      %v1601 = vsel %vm1585, %v1552, %v1554
      %v1602 = vsel %vm1585, %v1554, %v1556
      %v1603 = vsel %vm1585, %v1556, %v1558
      %v1604 = vsel %vm1585, %v1558, %v1560
      %v1605 = vsel %vm1585, %v1560, %v1562
      %v1606 = vsel %vm1585, %v1562, %v1564
      %v1607 = vsel %vm1585, %v1564, %v1566
      %v1608 = vsel %vm1585, %v1566, %v1568
      %v1609 = vsel %vm1585, %v1568, %v1570
      %v1610 = vsel %vm1585, %v1570, %v1572
      %v1611 = vsel %vm1585, %v1572, %v1574
      %v1612 = vsel %vm1585, %v1574, %v1576
      %v1613 = vsel %vm1585, %v1576, %v1578
      %v1614 = vsel %vm1585, %v1578, %v1580
      %v1615 = vsel %vm1585, %v1580, %v1582
      %v1616 = vsel %vm1585, %v1582, %v1584
      %v1650 = vsel %vm1585, %v1584, %v1522
      %v1651 = vsel %vm1135, 1, 0
      %v1652 = vsel %vm1136, 1, 0
      %v1653 = vsel %vm1137, 1, 0
      %v1654 = vsel %vm1138, 1, 0
      %v1655 = vsel %vm1139, 1, 0
      %v1656 = vsel %vm1140, 1, 0
      %v1657 = vsel %vm1141, 1, 0
      %v1658 = vsel %vm1142, 1, 0
      %v1659 = vsel %vm1143, 1, 0
      %v1660 = vsel %vm1144, 1, 0
      %v1661 = vsel %vm1145, 1, 0
      %v1662 = vsel %vm1146, 1, 0
      %v1663 = vsel %vm1147, 1, 0
      %v1664 = vsel %vm1148, 1, 0
      %v1665 = vsel %vm1149, 1, 0
      %v1666 = vsel %vm1150, 1, 0
      %v1667 = vsel %vm1151, 1, 0
      %v1668 = vsel %vm1152, 1, 0
      %v1669 = vsel %vm1153, 1, 0
      %v1670 = vsel %vm1154, 1, 0
      %v1671 = vsel %vm1155, 1, 0
      %v1672 = vsel %vm1156, 1, 0
      %v1673 = vsel %vm1157, 1, 0
      %v1674 = vsel %vm1158, 1, 0
      %v1675 = vsel %vm1159, 1, 0
      %v1676 = vsel %vm1160, 1, 0
      %v1677 = vsel %vm1161, 1, 0
      %v1678 = vsel %vm1162, 1, 0
      %v1679 = vsel %vm1163, 1, 0
      %v1680 = vsel %vm1164, 1, 0
      %v1681 = vsel %vm1165, 1, 0
      %v1682 = vsel %vm1166, 1, 0
      %vm1683 = vcmp.eq.s32.totalorder %v1651, 1
      %vm1684 = vcmp.eq.s32.totalorder %v1652, 1
      %vm1685 = vcmp.eq.s32.totalorder %v1653, 1
      %vm1686 = vcmp.eq.s32.totalorder %v1654, 1
      %vm1687 = vcmp.eq.s32.totalorder %v1655, 1
      %vm1688 = vcmp.eq.s32.totalorder %v1656, 1
      %vm1689 = vcmp.eq.s32.totalorder %v1657, 1
      %vm1690 = vcmp.eq.s32.totalorder %v1658, 1
      %vm1691 = vcmp.eq.s32.totalorder %v1659, 1
      %vm1692 = vcmp.eq.s32.totalorder %v1660, 1
      %vm1693 = vcmp.eq.s32.totalorder %v1661, 1
      %vm1694 = vcmp.eq.s32.totalorder %v1662, 1
      %vm1695 = vcmp.eq.s32.totalorder %v1663, 1
      %vm1696 = vcmp.eq.s32.totalorder %v1664, 1
      %vm1697 = vcmp.eq.s32.totalorder %v1665, 1
      %vm1698 = vcmp.eq.s32.totalorder %v1666, 1
      %vm1699 = vcmp.eq.s32.totalorder %v1667, 1
      %vm1700 = vcmp.eq.s32.totalorder %v1668, 1
      %vm1701 = vcmp.eq.s32.totalorder %v1669, 1
      %vm1702 = vcmp.eq.s32.totalorder %v1670, 1
      %vm1703 = vcmp.eq.s32.totalorder %v1671, 1
      %vm1704 = vcmp.eq.s32.totalorder %v1672, 1
      %vm1705 = vcmp.eq.s32.totalorder %v1673, 1
      %vm1706 = vcmp.eq.s32.totalorder %v1674, 1
      %vm1707 = vcmp.eq.s32.totalorder %v1675, 1
      %vm1708 = vcmp.eq.s32.totalorder %v1676, 1
      %vm1709 = vcmp.eq.s32.totalorder %v1677, 1
      %vm1710 = vcmp.eq.s32.totalorder %v1678, 1
      %vm1711 = vcmp.eq.s32.totalorder %v1679, 1
      %vm1712 = vcmp.eq.s32.totalorder %v1680, 1
      %vm1713 = vcmp.eq.s32.totalorder %v1681, 1
      %vm1714 = vcmp.eq.s32.totalorder %v1682, 1
      %v1715 = vsel %vm1683, %v1586, 0.0
      %v1716 = vsel %vm1684, %v1587, 0.0
      %v1717 = vsel %vm1685, %v1588, 0.0
      %v1718 = vsel %vm1686, %v1589, 0.0
      %v1719 = vsel %vm1687, %v1590, 0.0
      %v1720 = vsel %vm1688, %v1591, 0.0
      %v1721 = vsel %vm1689, %v1592, 0.0
      %v1722 = vsel %vm1690, %v1593, 0.0
      %v1723 = vsel %vm1691, %v1594, 0.0
      %v1724 = vsel %vm1692, %v1595, 0.0
      %v1725 = vsel %vm1693, %v1596, 0.0
      %v1726 = vsel %vm1694, %v1597, 0.0
      %v1727 = vsel %vm1695, %v1598, 0.0
      %v1728 = vsel %vm1696, %v1599, 0.0
      %v1729 = vsel %vm1697, %v1600, 0.0
      %v1730 = vsel %vm1698, %v1601, 0.0
      %v1731 = vsel %vm1699, %v1602, 0.0
      %v1732 = vsel %vm1700, %v1603, 0.0
      %v1733 = vsel %vm1701, %v1604, 0.0
      %v1734 = vsel %vm1702, %v1605, 0.0
      %v1735 = vsel %vm1703, %v1606, 0.0
      %v1736 = vsel %vm1704, %v1607, 0.0
      %v1737 = vsel %vm1705, %v1608, 0.0
      %v1738 = vsel %vm1706, %v1609, 0.0
      %v1739 = vsel %vm1707, %v1610, 0.0
      %v1740 = vsel %vm1708, %v1611, 0.0
      %v1741 = vsel %vm1709, %v1612, 0.0
      %v1742 = vsel %vm1710, %v1613, 0.0
      %v1743 = vsel %vm1711, %v1614, 0.0
      %v1744 = vsel %vm1712, %v1615, 0.0
      %v1745 = vsel %vm1713, %v1616, 0.0
      %v1746 = vsel %vm1714, %v1650, 0.0
      %vm1747 = vcmp.lt.s32.totalorder %v345, 63
      %vm1748 = vcmp.lt.s32.totalorder %v346, 63
      %vm1749 = vcmp.lt.s32.totalorder %v347, 63
      %vm1750 = vcmp.lt.s32.totalorder %v348, 63
      %vm1751 = vcmp.lt.s32.totalorder %v349, 63
      %vm1752 = vcmp.lt.s32.totalorder %v350, 63
      %vm1753 = vcmp.lt.s32.totalorder %v351, 63
      %vm1754 = vcmp.lt.s32.totalorder %v352, 63
      %vm1755 = vcmp.lt.s32.totalorder %v353, 63
      %vm1756 = vcmp.lt.s32.totalorder %v354, 63
      %vm1757 = vcmp.lt.s32.totalorder %v355, 63
      %vm1758 = vcmp.lt.s32.totalorder %v356, 63
      %vm1759 = vcmp.lt.s32.totalorder %v357, 63
      %vm1760 = vcmp.lt.s32.totalorder %v358, 63
      %vm1761 = vcmp.lt.s32.totalorder %v359, 63
      %vm1762 = vcmp.lt.s32.totalorder %v360, 63
      %vm1763 = vcmp.lt.s32.totalorder %v361, 63
      %vm1764 = vcmp.lt.s32.totalorder %v362, 63
      %vm1765 = vcmp.lt.s32.totalorder %v363, 63
      %vm1766 = vcmp.lt.s32.totalorder %v364, 63
      %vm1767 = vcmp.lt.s32.totalorder %v365, 63
      %vm1768 = vcmp.lt.s32.totalorder %v366, 63
      %vm1769 = vcmp.lt.s32.totalorder %v367, 63
      %vm1770 = vcmp.lt.s32.totalorder %v368, 63
      %vm1771 = vcmp.lt.s32.totalorder %v369, 63
      %vm1772 = vcmp.lt.s32.totalorder %v370, 63
      %vm1773 = vcmp.lt.s32.totalorder %v371, 63
      %vm1774 = vcmp.lt.s32.totalorder %v372, 63
      %vm1775 = vcmp.lt.s32.totalorder %v373, 63
      %vm1776 = vcmp.lt.s32.totalorder %v374, 63
      %vm1777 = vcmp.lt.s32.totalorder %v375, 63
      %vm1778 = vcmp.lt.s32.totalorder %v376, 63
      %vm1779 = vmand %vm1747, %vm619
      %vm1780 = vmand %vm1748, %vm620
      %vm1781 = vmand %vm1749, %vm621
      %vm1782 = vmand %vm1750, %vm622
      %vm1783 = vmand %vm1751, %vm623
      %vm1784 = vmand %vm1752, %vm624
      %vm1785 = vmand %vm1753, %vm625
      %vm1786 = vmand %vm1754, %vm626
      %vm1787 = vmand %vm1755, %vm627
      %vm1788 = vmand %vm1756, %vm628
      %vm1789 = vmand %vm1757, %vm629
      %vm1790 = vmand %vm1758, %vm630
      %vm1791 = vmand %vm1759, %vm631
      %vm1792 = vmand %vm1760, %vm632
      %vm1793 = vmand %vm1761, %vm633
      %vm1794 = vmand %vm1762, %vm634
      %vm1795 = vmand %vm1763, %vm635
      %vm1796 = vmand %vm1764, %vm636
      %vm1797 = vmand %vm1765, %vm637
      %vm1798 = vmand %vm1766, %vm638
      %vm1799 = vmand %vm1767, %vm639
      %vm1800 = vmand %vm1768, %vm640
      %vm1801 = vmand %vm1769, %vm641
      %vm1802 = vmand %vm1770, %vm642
      %vm1803 = vmand %vm1771, %vm643
      %vm1804 = vmand %vm1772, %vm644
      %vm1805 = vmand %vm1773, %vm645
      %vm1806 = vmand %vm1774, %vm646
      %vm1807 = vmand %vm1775, %vm647
      %vm1808 = vmand %vm1776, %vm648
      %vm1809 = vmand %vm1777, %vm649
      %vm1810 = vmand %vm1778, %vm650
      %v1811 = vsel %vm1779, 1, 0
      %v1812 = vsel %vm1780, 1, 0
      %v1813 = vsel %vm1781, 1, 0
      %v1814 = vsel %vm1782, 1, 0
      %v1815 = vsel %vm1783, 1, 0
      %v1816 = vsel %vm1784, 1, 0
      %v1817 = vsel %vm1785, 1, 0
      %v1818 = vsel %vm1786, 1, 0
      %v1819 = vsel %vm1787, 1, 0
      %v1820 = vsel %vm1788, 1, 0
      %v1821 = vsel %vm1789, 1, 0
      %v1822 = vsel %vm1790, 1, 0
      %v1823 = vsel %vm1791, 1, 0
      %v1824 = vsel %vm1792, 1, 0
      %v1825 = vsel %vm1793, 1, 0
      %v1826 = vsel %vm1794, 1, 0
      %v1827 = vsel %vm1795, 1, 0
      %v1828 = vsel %vm1796, 1, 0
      %v1829 = vsel %vm1797, 1, 0
      %v1830 = vsel %vm1798, 1, 0
      %v1831 = vsel %vm1799, 1, 0
      %v1832 = vsel %vm1800, 1, 0
      %v1833 = vsel %vm1801, 1, 0
      %v1834 = vsel %vm1802, 1, 0
      %v1835 = vsel %vm1803, 1, 0
      %v1836 = vsel %vm1804, 1, 0
      %v1837 = vsel %vm1805, 1, 0
      %v1838 = vsel %vm1806, 1, 0
      %v1839 = vsel %vm1807, 1, 0
      %v1840 = vsel %vm1808, 1, 0
      %v1841 = vsel %vm1809, 1, 0
      %v1842 = vsel %vm1810, 1, 0
      %vm1843 = vcmp.eq.s32.totalorder %v1811, 1
      %vm1844 = vcmp.eq.s32.totalorder %v1812, 1
      %vm1845 = vcmp.eq.s32.totalorder %v1813, 1
      %vm1846 = vcmp.eq.s32.totalorder %v1814, 1
      %vm1847 = vcmp.eq.s32.totalorder %v1815, 1
      %vm1848 = vcmp.eq.s32.totalorder %v1816, 1
      %vm1849 = vcmp.eq.s32.totalorder %v1817, 1
      %vm1850 = vcmp.eq.s32.totalorder %v1818, 1
      %vm1851 = vcmp.eq.s32.totalorder %v1819, 1
      %vm1852 = vcmp.eq.s32.totalorder %v1820, 1
      %vm1853 = vcmp.eq.s32.totalorder %v1821, 1
      %vm1854 = vcmp.eq.s32.totalorder %v1822, 1
      %vm1855 = vcmp.eq.s32.totalorder %v1823, 1
      %vm1856 = vcmp.eq.s32.totalorder %v1824, 1
      %vm1857 = vcmp.eq.s32.totalorder %v1825, 1
      %vm1858 = vcmp.eq.s32.totalorder %v1826, 1
      %vm1859 = vcmp.eq.s32.totalorder %v1827, 1
      %vm1860 = vcmp.eq.s32.totalorder %v1828, 1
      %vm1861 = vcmp.eq.s32.totalorder %v1829, 1
      %vm1862 = vcmp.eq.s32.totalorder %v1830, 1
      %vm1863 = vcmp.eq.s32.totalorder %v1831, 1
      %vm1864 = vcmp.eq.s32.totalorder %v1832, 1
      %vm1865 = vcmp.eq.s32.totalorder %v1833, 1
      %vm1866 = vcmp.eq.s32.totalorder %v1834, 1
      %vm1867 = vcmp.eq.s32.totalorder %v1835, 1
      %vm1868 = vcmp.eq.s32.totalorder %v1836, 1
      %vm1869 = vcmp.eq.s32.totalorder %v1837, 1
      %vm1870 = vcmp.eq.s32.totalorder %v1838, 1
      %vm1871 = vcmp.eq.s32.totalorder %v1839, 1
      %vm1872 = vcmp.eq.s32.totalorder %v1840, 1
      %vm1873 = vcmp.eq.s32.totalorder %v1841, 1
      %vm1874 = vcmp.eq.s32.totalorder %v1842, 1
      %v1875 = vsel %vm1843, %v523, 0.0
      %v1876 = vsel %vm1844, %v524, 0.0
      %v1877 = vsel %vm1845, %v525, 0.0
      %v1878 = vsel %vm1846, %v526, 0.0
      %v1879 = vsel %vm1847, %v527, 0.0
      %v1880 = vsel %vm1848, %v528, 0.0
      %v1881 = vsel %vm1849, %v529, 0.0
      %v1882 = vsel %vm1850, %v530, 0.0
      %v1883 = vsel %vm1851, %v531, 0.0
      %v1884 = vsel %vm1852, %v532, 0.0
      %v1885 = vsel %vm1853, %v533, 0.0
      %v1886 = vsel %vm1854, %v534, 0.0
      %v1887 = vsel %vm1855, %v535, 0.0
      %v1888 = vsel %vm1856, %v536, 0.0
      %v1889 = vsel %vm1857, %v537, 0.0
      %v1890 = vsel %vm1858, %v538, 0.0
      %v1891 = vsel %vm1859, %v539, 0.0
      %v1892 = vsel %vm1860, %v540, 0.0
      %v1893 = vsel %vm1861, %v541, 0.0
      %v1894 = vsel %vm1862, %v542, 0.0
      %v1895 = vsel %vm1863, %v543, 0.0
      %v1896 = vsel %vm1864, %v544, 0.0
      %v1897 = vsel %vm1865, %v545, 0.0
      %v1898 = vsel %vm1866, %v546, 0.0
      %v1899 = vsel %vm1867, %v547, 0.0
      %v1900 = vsel %vm1868, %v548, 0.0
      %v1901 = vsel %vm1869, %v549, 0.0
      %v1902 = vsel %vm1870, %v550, 0.0
      %v1903 = vsel %vm1871, %v551, 0.0
      %v1904 = vsel %vm1872, %v552, 0.0
      %v1905 = vsel %vm1873, %v553, 0.0
      %v1906 = vsel %vm1874, %v586, 0.0
      %v1907 = vsel %vm1747, 1, 0
      %v1908 = vsel %vm1748, 1, 0
      %v1909 = vsel %vm1749, 1, 0
      %v1910 = vsel %vm1750, 1, 0
      %v1911 = vsel %vm1751, 1, 0
      %v1912 = vsel %vm1752, 1, 0
      %v1913 = vsel %vm1753, 1, 0
      %v1914 = vsel %vm1754, 1, 0
      %v1915 = vsel %vm1755, 1, 0
      %v1916 = vsel %vm1756, 1, 0
      %v1917 = vsel %vm1757, 1, 0
      %v1918 = vsel %vm1758, 1, 0
      %v1919 = vsel %vm1759, 1, 0
      %v1920 = vsel %vm1760, 1, 0
      %v1921 = vsel %vm1761, 1, 0
      %v1922 = vsel %vm1762, 1, 0
      %v1923 = vsel %vm1763, 1, 0
      %v1924 = vsel %vm1764, 1, 0
      %v1925 = vsel %vm1765, 1, 0
      %v1926 = vsel %vm1766, 1, 0
      %v1927 = vsel %vm1767, 1, 0
      %v1928 = vsel %vm1768, 1, 0
      %v1929 = vsel %vm1769, 1, 0
      %v1930 = vsel %vm1770, 1, 0
      %v1931 = vsel %vm1771, 1, 0
      %v1932 = vsel %vm1772, 1, 0
      %v1933 = vsel %vm1773, 1, 0
      %v1934 = vsel %vm1774, 1, 0
      %v1935 = vsel %vm1775, 1, 0
      %v1936 = vsel %vm1776, 1, 0
      %v1937 = vsel %vm1777, 1, 0
      %v1938 = vsel %vm1778, 1, 0
      %vm1939 = vcmp.eq.s32.totalorder %v1907, 1
      %vm1940 = vcmp.eq.s32.totalorder %v1908, 1
      %vm1941 = vcmp.eq.s32.totalorder %v1909, 1
      %vm1942 = vcmp.eq.s32.totalorder %v1910, 1
      %vm1943 = vcmp.eq.s32.totalorder %v1911, 1
      %vm1944 = vcmp.eq.s32.totalorder %v1912, 1
      %vm1945 = vcmp.eq.s32.totalorder %v1913, 1
      %vm1946 = vcmp.eq.s32.totalorder %v1914, 1
      %vm1947 = vcmp.eq.s32.totalorder %v1915, 1
      %vm1948 = vcmp.eq.s32.totalorder %v1916, 1
      %vm1949 = vcmp.eq.s32.totalorder %v1917, 1
      %vm1950 = vcmp.eq.s32.totalorder %v1918, 1
      %vm1951 = vcmp.eq.s32.totalorder %v1919, 1
      %vm1952 = vcmp.eq.s32.totalorder %v1920, 1
      %vm1953 = vcmp.eq.s32.totalorder %v1921, 1
      %vm1954 = vcmp.eq.s32.totalorder %v1922, 1
      %vm1955 = vcmp.eq.s32.totalorder %v1923, 1
      %vm1956 = vcmp.eq.s32.totalorder %v1924, 1
      %vm1957 = vcmp.eq.s32.totalorder %v1925, 1
      %vm1958 = vcmp.eq.s32.totalorder %v1926, 1
      %vm1959 = vcmp.eq.s32.totalorder %v1927, 1
      %vm1960 = vcmp.eq.s32.totalorder %v1928, 1
      %vm1961 = vcmp.eq.s32.totalorder %v1929, 1
      %vm1962 = vcmp.eq.s32.totalorder %v1930, 1
      %vm1963 = vcmp.eq.s32.totalorder %v1931, 1
      %vm1964 = vcmp.eq.s32.totalorder %v1932, 1
      %vm1965 = vcmp.eq.s32.totalorder %v1933, 1
      %vm1966 = vcmp.eq.s32.totalorder %v1934, 1
      %vm1967 = vcmp.eq.s32.totalorder %v1935, 1
      %vm1968 = vcmp.eq.s32.totalorder %v1936, 1
      %vm1969 = vcmp.eq.s32.totalorder %v1937, 1
      %vm1970 = vcmp.eq.s32.totalorder %v1938, 1
      %v1971 = vsel %vm1939, %v845, 0.0
      %v1972 = vsel %vm1940, %v846, 0.0
      %v1973 = vsel %vm1941, %v847, 0.0
      %v1974 = vsel %vm1942, %v848, 0.0
      %v1975 = vsel %vm1943, %v849, 0.0
      %v1976 = vsel %vm1944, %v850, 0.0
      %v1977 = vsel %vm1945, %v851, 0.0
      %v1978 = vsel %vm1946, %v852, 0.0
      %v1979 = vsel %vm1947, %v853, 0.0
      %v1980 = vsel %vm1948, %v854, 0.0
      %v1981 = vsel %vm1949, %v855, 0.0
      %v1982 = vsel %vm1950, %v856, 0.0
      %v1983 = vsel %vm1951, %v857, 0.0
      %v1984 = vsel %vm1952, %v858, 0.0
      %v1985 = vsel %vm1953, %v859, 0.0
      %v1986 = vsel %vm1954, %v860, 0.0
      %v1987 = vsel %vm1955, %v861, 0.0
      %v1988 = vsel %vm1956, %v862, 0.0
      %v1989 = vsel %vm1957, %v863, 0.0
      %v1990 = vsel %vm1958, %v864, 0.0
      %v1991 = vsel %vm1959, %v865, 0.0
      %v1992 = vsel %vm1960, %v866, 0.0
      %v1993 = vsel %vm1961, %v867, 0.0
      %v1994 = vsel %vm1962, %v868, 0.0
      %v1995 = vsel %vm1963, %v869, 0.0
      %v1996 = vsel %vm1964, %v870, 0.0
      %v1997 = vsel %vm1965, %v871, 0.0
      %v1998 = vsel %vm1966, %v872, 0.0
      %v1999 = vsel %vm1967, %v873, 0.0
      %v2000 = vsel %vm1968, %v874, 0.0
      %v2001 = vsel %vm1969, %v875, 0.0
      %v2002 = vsel %vm1970, %v908, 0.0
      %vm2003 = vmand %vm1747, %vm1135
      %vm2004 = vmand %vm1748, %vm1136
      %vm2005 = vmand %vm1749, %vm1137
      %vm2006 = vmand %vm1750, %vm1138
      %vm2007 = vmand %vm1751, %vm1139
      %vm2008 = vmand %vm1752, %vm1140
      %vm2009 = vmand %vm1753, %vm1141
      %vm2010 = vmand %vm1754, %vm1142
      %vm2011 = vmand %vm1755, %vm1143
      %vm2012 = vmand %vm1756, %vm1144
      %vm2013 = vmand %vm1757, %vm1145
      %vm2014 = vmand %vm1758, %vm1146
      %vm2015 = vmand %vm1759, %vm1147
      %vm2016 = vmand %vm1760, %vm1148
      %vm2017 = vmand %vm1761, %vm1149
      %vm2018 = vmand %vm1762, %vm1150
      %vm2019 = vmand %vm1763, %vm1151
      %vm2020 = vmand %vm1764, %vm1152
      %vm2021 = vmand %vm1765, %vm1153
      %vm2022 = vmand %vm1766, %vm1154
      %vm2023 = vmand %vm1767, %vm1155
      %vm2024 = vmand %vm1768, %vm1156
      %vm2025 = vmand %vm1769, %vm1157
      %vm2026 = vmand %vm1770, %vm1158
      %vm2027 = vmand %vm1771, %vm1159
      %vm2028 = vmand %vm1772, %vm1160
      %vm2029 = vmand %vm1773, %vm1161
      %vm2030 = vmand %vm1774, %vm1162
      %vm2031 = vmand %vm1775, %vm1163
      %vm2032 = vmand %vm1776, %vm1164
      %vm2033 = vmand %vm1777, %vm1165
      %vm2034 = vmand %vm1778, %vm1166
      %v2035 = vsel %vm2003, 1, 0
      %v2036 = vsel %vm2004, 1, 0
      %v2037 = vsel %vm2005, 1, 0
      %v2038 = vsel %vm2006, 1, 0
      %v2039 = vsel %vm2007, 1, 0
      %v2040 = vsel %vm2008, 1, 0
      %v2041 = vsel %vm2009, 1, 0
      %v2042 = vsel %vm2010, 1, 0
      %v2043 = vsel %vm2011, 1, 0
      %v2044 = vsel %vm2012, 1, 0
      %v2045 = vsel %vm2013, 1, 0
      %v2046 = vsel %vm2014, 1, 0
      %v2047 = vsel %vm2015, 1, 0
      %v2048 = vsel %vm2016, 1, 0
      %v2049 = vsel %vm2017, 1, 0
      %v2050 = vsel %vm2018, 1, 0
      %v2051 = vsel %vm2019, 1, 0
      %v2052 = vsel %vm2020, 1, 0
      %v2053 = vsel %vm2021, 1, 0
      %v2054 = vsel %vm2022, 1, 0
      %v2055 = vsel %vm2023, 1, 0
      %v2056 = vsel %vm2024, 1, 0
      %v2057 = vsel %vm2025, 1, 0
      %v2058 = vsel %vm2026, 1, 0
      %v2059 = vsel %vm2027, 1, 0
      %v2060 = vsel %vm2028, 1, 0
      %v2061 = vsel %vm2029, 1, 0
      %v2062 = vsel %vm2030, 1, 0
      %v2063 = vsel %vm2031, 1, 0
      %v2064 = vsel %vm2032, 1, 0
      %v2065 = vsel %vm2033, 1, 0
      %v2066 = vsel %vm2034, 1, 0
      %vm2067 = vcmp.eq.s32.totalorder %v2035, 1
      %vm2068 = vcmp.eq.s32.totalorder %v2036, 1
      %vm2069 = vcmp.eq.s32.totalorder %v2037, 1
      %vm2070 = vcmp.eq.s32.totalorder %v2038, 1
      %vm2071 = vcmp.eq.s32.totalorder %v2039, 1
      %vm2072 = vcmp.eq.s32.totalorder %v2040, 1
      %vm2073 = vcmp.eq.s32.totalorder %v2041, 1
      %vm2074 = vcmp.eq.s32.totalorder %v2042, 1
      %vm2075 = vcmp.eq.s32.totalorder %v2043, 1
      %vm2076 = vcmp.eq.s32.totalorder %v2044, 1
      %vm2077 = vcmp.eq.s32.totalorder %v2045, 1
      %vm2078 = vcmp.eq.s32.totalorder %v2046, 1
      %vm2079 = vcmp.eq.s32.totalorder %v2047, 1
      %vm2080 = vcmp.eq.s32.totalorder %v2048, 1
      %vm2081 = vcmp.eq.s32.totalorder %v2049, 1
      %vm2082 = vcmp.eq.s32.totalorder %v2050, 1
      %vm2083 = vcmp.eq.s32.totalorder %v2051, 1
      %vm2084 = vcmp.eq.s32.totalorder %v2052, 1
      %vm2085 = vcmp.eq.s32.totalorder %v2053, 1
      %vm2086 = vcmp.eq.s32.totalorder %v2054, 1
      %vm2087 = vcmp.eq.s32.totalorder %v2055, 1
      %vm2088 = vcmp.eq.s32.totalorder %v2056, 1
      %vm2089 = vcmp.eq.s32.totalorder %v2057, 1
      %vm2090 = vcmp.eq.s32.totalorder %v2058, 1
      %vm2091 = vcmp.eq.s32.totalorder %v2059, 1
      %vm2092 = vcmp.eq.s32.totalorder %v2060, 1
      %vm2093 = vcmp.eq.s32.totalorder %v2061, 1
      %vm2094 = vcmp.eq.s32.totalorder %v2062, 1
      %vm2095 = vcmp.eq.s32.totalorder %v2063, 1
      %vm2096 = vcmp.eq.s32.totalorder %v2064, 1
      %vm2097 = vcmp.eq.s32.totalorder %v2065, 1
      %vm2098 = vcmp.eq.s32.totalorder %v2066, 1
      %v2099 = vsel %vm2067, %v1071, 0.0
      %v2100 = vsel %vm2068, %v1072, 0.0
      %v2101 = vsel %vm2069, %v1073, 0.0
      %v2102 = vsel %vm2070, %v1074, 0.0
      %v2103 = vsel %vm2071, %v1075, 0.0
      %v2104 = vsel %vm2072, %v1076, 0.0
      %v2105 = vsel %vm2073, %v1077, 0.0
      %v2106 = vsel %vm2074, %v1078, 0.0
      %v2107 = vsel %vm2075, %v1079, 0.0
      %v2108 = vsel %vm2076, %v1080, 0.0
      %v2109 = vsel %vm2077, %v1081, 0.0
      %v2110 = vsel %vm2078, %v1082, 0.0
      %v2111 = vsel %vm2079, %v1083, 0.0
      %v2112 = vsel %vm2080, %v1084, 0.0
      %v2113 = vsel %vm2081, %v1085, 0.0
      %v2114 = vsel %vm2082, %v1086, 0.0
      %v2115 = vsel %vm2083, %v1087, 0.0
      %v2116 = vsel %vm2084, %v1088, 0.0
      %v2117 = vsel %vm2085, %v1089, 0.0
      %v2118 = vsel %vm2086, %v1090, 0.0
      %v2119 = vsel %vm2087, %v1091, 0.0
      %v2120 = vsel %vm2088, %v1092, 0.0
      %v2121 = vsel %vm2089, %v1093, 0.0
      %v2122 = vsel %vm2090, %v1094, 0.0
      %v2123 = vsel %vm2091, %v1095, 0.0
      %v2124 = vsel %vm2092, %v1096, 0.0
      %v2125 = vsel %vm2093, %v1097, 0.0
      %v2126 = vsel %vm2094, %v1098, 0.0
      %v2127 = vsel %vm2095, %v1099, 0.0
      %v2128 = vsel %vm2096, %v1100, 0.0
      %v2129 = vsel %vm2097, %v1101, 0.0
      %v2130 = vsel %vm2098, %v1134, 0.0
      %v2163 = vrot.slane %v973, 5
      %v2164 = vrot.slane %v974, 5
      %v2165 = vrot.slane %v975, 5
      %v2166 = vrot.slane %v976, 5
      %v2167 = vrot.slane %v977, 5
      %v2168 = vrot.slane %v978, 5
      %v2169 = vrot.slane %v979, 5
      %v2170 = vrot.slane %v980, 5
      %v2171 = vrot.slane %v981, 5
      %v2172 = vrot.slane %v982, 5
      %v2173 = vrot.slane %v983, 5
      %v2174 = vrot.slane %v984, 5
      %v2175 = vrot.slane %v985, 5
      %v2176 = vrot.slane %v986, 5
      %v2177 = vrot.slane %v987, 5
      %v2178 = vrot.slane %v988, 5
      %v2179 = vrot.slane %v989, 5
      %v2180 = vrot.slane %v990, 5
      %v2181 = vrot.slane %v991, 5
      %v2182 = vrot.slane %v992, 5
      %v2183 = vrot.slane %v993, 5
      %v2184 = vrot.slane %v994, 5
      %v2185 = vrot.slane %v995, 5
      %v2186 = vrot.slane %v996, 5
      %v2187 = vrot.slane %v997, 5
      %v2188 = vrot.slane %v998, 5
      %v2189 = vrot.slane %v999, 5
      %v2190 = vrot.slane %v1000, 5
      %v2191 = vrot.slane %v1001, 5
      %v2192 = vrot.slane %v1002, 5
      %v2193 = vrot.slane %v1003, 5
      %v2194 = vrot.slane %v1004, 5
      %v2259 = vrot.slane %v1263, 2
      %v2260 = vrot.slane %v1264, 2
      %v2261 = vrot.slane %v1265, 2
      %v2262 = vrot.slane %v1266, 2
      %v2263 = vrot.slane %v1267, 2
      %v2264 = vrot.slane %v1268, 2
      %v2265 = vrot.slane %v1269, 2
      %v2266 = vrot.slane %v1270, 2
      %v2267 = vrot.slane %v1271, 2
      %v2268 = vrot.slane %v1272, 2
      %v2269 = vrot.slane %v1273, 2
      %v2270 = vrot.slane %v1274, 2
      %v2271 = vrot.slane %v1275, 2
      %v2272 = vrot.slane %v1276, 2
      %v2273 = vrot.slane %v1277, 2
      %v2274 = vrot.slane %v1278, 2
      %v2275 = vrot.slane %v1279, 2
      %v2276 = vrot.slane %v1280, 2
      %v2277 = vrot.slane %v1281, 2
      %v2278 = vrot.slane %v1282, 2
      %v2279 = vrot.slane %v1283, 2
      %v2280 = vrot.slane %v1284, 2
      %v2281 = vrot.slane %v1285, 2
      %v2282 = vrot.slane %v1286, 2
      %v2283 = vrot.slane %v1287, 2
      %v2284 = vrot.slane %v1288, 2
      %v2285 = vrot.slane %v1289, 2
      %v2286 = vrot.slane %v1290, 2
      %v2287 = vrot.slane %v1291, 2
      %v2288 = vrot.slane %v1292, 2
      %v2289 = vrot.slane %v1293, 2
      %v2290 = vrot.slane %v1294, 2
      %v2355 = vrot.slane %v1489, 7
      %v2356 = vrot.slane %v1490, 7
      %v2357 = vrot.slane %v1491, 7
      %v2358 = vrot.slane %v1492, 7
      %v2359 = vrot.slane %v1493, 7
      %v2360 = vrot.slane %v1494, 7
      %v2361 = vrot.slane %v1495, 7
      %v2362 = vrot.slane %v1496, 7
      %v2363 = vrot.slane %v1497, 7
      %v2364 = vrot.slane %v1498, 7
      %v2365 = vrot.slane %v1499, 7
      %v2366 = vrot.slane %v1500, 7
      %v2367 = vrot.slane %v1501, 7
      %v2368 = vrot.slane %v1502, 7
      %v2369 = vrot.slane %v1503, 7
      %v2370 = vrot.slane %v1504, 7
      %v2371 = vrot.slane %v1505, 7
      %v2372 = vrot.slane %v1506, 7
      %v2373 = vrot.slane %v1507, 7
      %v2374 = vrot.slane %v1508, 7
      %v2375 = vrot.slane %v1509, 7
      %v2376 = vrot.slane %v1510, 7
      %v2377 = vrot.slane %v1511, 7
      %v2378 = vrot.slane %v1512, 7
      %v2379 = vrot.slane %v1513, 7
      %v2380 = vrot.slane %v1514, 7
      %v2381 = vrot.slane %v1515, 7
      %v2382 = vrot.slane %v1516, 7
      %v2383 = vrot.slane %v1517, 7
      %v2384 = vrot.slane %v1518, 7
      %v2385 = vrot.slane %v1519, 7
      %v2386 = vrot.slane %v1520, 7
      %v2419 = vcombine.low %v409, %v409
      %v2420 = vcombine.low %v410, %v410
      %v2421 = vcombine.low %v411, %v411
      %v2422 = vcombine.low %v412, %v412
      %v2423 = vcombine.low %v413, %v413
      %v2424 = vcombine.low %v414, %v414
      %v2425 = vcombine.low %v415, %v415
      %v2426 = vcombine.low %v416, %v416
      %v2427 = vcombine.low %v417, %v417
      %v2428 = vcombine.low %v418, %v418
      %v2429 = vcombine.low %v419, %v419
      %v2430 = vcombine.low %v420, %v420
      %v2431 = vcombine.low %v421, %v421
      %v2432 = vcombine.low %v422, %v422
      %v2433 = vcombine.low %v423, %v423
      %v2434 = vcombine.low %v424, %v424
      %v2483 = vrot.slane %v1715, 1
      %v2484 = vrot.slane %v1716, 1
      %v2485 = vrot.slane %v1717, 1
      %v2486 = vrot.slane %v1718, 1
      %v2487 = vrot.slane %v1719, 1
      %v2488 = vrot.slane %v1720, 1
      %v2489 = vrot.slane %v1721, 1
      %v2490 = vrot.slane %v1722, 1
      %v2491 = vrot.slane %v1723, 1
      %v2492 = vrot.slane %v1724, 1
      %v2493 = vrot.slane %v1725, 1
      %v2494 = vrot.slane %v1726, 1
      %v2495 = vrot.slane %v1727, 1
      %v2496 = vrot.slane %v1728, 1
      %v2497 = vrot.slane %v1729, 1
      %v2498 = vrot.slane %v1730, 1
      %v2499 = vrot.slane %v1731, 1
      %v2500 = vrot.slane %v1732, 1
      %v2501 = vrot.slane %v1733, 1
      %v2502 = vrot.slane %v1734, 1
      %v2503 = vrot.slane %v1735, 1
      %v2504 = vrot.slane %v1736, 1
      %v2505 = vrot.slane %v1737, 1
      %v2506 = vrot.slane %v1738, 1
      %v2507 = vrot.slane %v1739, 1
      %v2508 = vrot.slane %v1740, 1
      %v2509 = vrot.slane %v1741, 1
      %v2510 = vrot.slane %v1742, 1
      %v2511 = vrot.slane %v1743, 1
      %v2512 = vrot.slane %v1744, 1
      %v2513 = vrot.slane %v1745, 1
      %v2514 = vrot.slane %v1746, 1
      %v2579 = vrot.slane %v1875, 6
      %v2580 = vrot.slane %v1876, 6
      %v2581 = vrot.slane %v1877, 6
      %v2582 = vrot.slane %v1878, 6
      %v2583 = vrot.slane %v1879, 6
      %v2584 = vrot.slane %v1880, 6
      %v2585 = vrot.slane %v1881, 6
      %v2586 = vrot.slane %v1882, 6
      %v2587 = vrot.slane %v1883, 6
      %v2588 = vrot.slane %v1884, 6
      %v2589 = vrot.slane %v1885, 6
      %v2590 = vrot.slane %v1886, 6
      %v2591 = vrot.slane %v1887, 6
      %v2592 = vrot.slane %v1888, 6
      %v2593 = vrot.slane %v1889, 6
      %v2594 = vrot.slane %v1890, 6
      %v2595 = vrot.slane %v1891, 6
      %v2596 = vrot.slane %v1892, 6
      %v2597 = vrot.slane %v1893, 6
      %v2598 = vrot.slane %v1894, 6
      %v2599 = vrot.slane %v1895, 6
      %v2600 = vrot.slane %v1896, 6
      %v2601 = vrot.slane %v1897, 6
      %v2602 = vrot.slane %v1898, 6
      %v2603 = vrot.slane %v1899, 6
      %v2604 = vrot.slane %v1900, 6
      %v2605 = vrot.slane %v1901, 6
      %v2606 = vrot.slane %v1902, 6
      %v2607 = vrot.slane %v1903, 6
      %v2608 = vrot.slane %v1904, 6
      %v2609 = vrot.slane %v1905, 6
      %v2610 = vrot.slane %v1906, 6
      %v2675 = vrot.slane %v1971, 3
      %v2676 = vrot.slane %v1972, 3
      %v2677 = vrot.slane %v1973, 3
      %v2678 = vrot.slane %v1974, 3
      %v2679 = vrot.slane %v1975, 3
      %v2680 = vrot.slane %v1976, 3
      %v2681 = vrot.slane %v1977, 3
      %v2682 = vrot.slane %v1978, 3
      %v2683 = vrot.slane %v1979, 3
      %v2684 = vrot.slane %v1980, 3
      %v2685 = vrot.slane %v1981, 3
      %v2686 = vrot.slane %v1982, 3
      %v2687 = vrot.slane %v1983, 3
      %v2688 = vrot.slane %v1984, 3
      %v2689 = vrot.slane %v1985, 3
      %v2690 = vrot.slane %v1986, 3
      %v2691 = vrot.slane %v1987, 3
      %v2692 = vrot.slane %v1988, 3
      %v2693 = vrot.slane %v1989, 3
      %v2694 = vrot.slane %v1990, 3
      %v2695 = vrot.slane %v1991, 3
      %v2696 = vrot.slane %v1992, 3
      %v2697 = vrot.slane %v1993, 3
      %v2698 = vrot.slane %v1994, 3
      %v2699 = vrot.slane %v1995, 3
      %v2700 = vrot.slane %v1996, 3
      %v2701 = vrot.slane %v1997, 3
      %v2702 = vrot.slane %v1998, 3
      %v2703 = vrot.slane %v1999, 3
      %v2704 = vrot.slane %v2000, 3
      %v2705 = vrot.slane %v2001, 3
      %v2706 = vrot.slane %v2002, 3
      %vm2739 = vcmask 1042432
      %v2740 = vsel %vm2739, %v747, %v2163
      %v2741 = vsel %vm2739, %v748, %v2164
      %v2742 = vsel %vm2739, %v749, %v2165
      %v2743 = vsel %vm2739, %v750, %v2166
      %v2744 = vsel %vm2739, %v751, %v2167
      %v2745 = vsel %vm2739, %v752, %v2168
      %v2746 = vsel %vm2739, %v753, %v2169
      %v2747 = vsel %vm2739, %v754, %v2170
      %v2748 = vsel %vm2739, %v755, %v2171
      %v2749 = vsel %vm2739, %v756, %v2172
      %v2750 = vsel %vm2739, %v757, %v2173
      %v2751 = vsel %vm2739, %v758, %v2174
      %v2752 = vsel %vm2739, %v759, %v2175
      %v2753 = vsel %vm2739, %v760, %v2176
      %v2754 = vsel %vm2739, %v761, %v2177
      %v2755 = vsel %vm2739, %v762, %v2178
      %v2756 = vsel %vm2739, %v763, %v2179
      %v2757 = vsel %vm2739, %v764, %v2180
      %v2758 = vsel %vm2739, %v765, %v2181
      %v2759 = vsel %vm2739, %v766, %v2182
      %v2760 = vsel %vm2739, %v767, %v2183
      %v2761 = vsel %vm2739, %v768, %v2184
      %v2762 = vsel %vm2739, %v769, %v2185
      %v2763 = vsel %vm2739, %v770, %v2186
      %v2764 = vsel %vm2739, %v771, %v2187
      %v2765 = vsel %vm2739, %v772, %v2188
      %v2766 = vsel %vm2739, %v773, %v2189
      %v2767 = vsel %vm2739, %v774, %v2190
      %v2768 = vsel %vm2739, %v775, %v2191
      %v2769 = vsel %vm2739, %v776, %v2192
      %v2770 = vsel %vm2739, %v777, %v2193
      %v2771 = vsel %vm2739, %v778, %v2194
      %vm2772 = vcmask 1045504
      %v2773 = vsel %vm2772, %v2740, %v2259
      %v2774 = vsel %vm2772, %v2741, %v2260
      %v2775 = vsel %vm2772, %v2742, %v2261
      %v2776 = vsel %vm2772, %v2743, %v2262
      %v2777 = vsel %vm2772, %v2744, %v2263
      %v2778 = vsel %vm2772, %v2745, %v2264
      %v2779 = vsel %vm2772, %v2746, %v2265
      %v2780 = vsel %vm2772, %v2747, %v2266
      %v2781 = vsel %vm2772, %v2748, %v2267
      %v2782 = vsel %vm2772, %v2749, %v2268
      %v2783 = vsel %vm2772, %v2750, %v2269
      %v2784 = vsel %vm2772, %v2751, %v2270
      %v2785 = vsel %vm2772, %v2752, %v2271
      %v2786 = vsel %vm2772, %v2753, %v2272
      %v2787 = vsel %vm2772, %v2754, %v2273
      %v2788 = vsel %vm2772, %v2755, %v2274
      %v2789 = vsel %vm2772, %v2756, %v2275
      %v2790 = vsel %vm2772, %v2757, %v2276
      %v2791 = vsel %vm2772, %v2758, %v2277
      %v2792 = vsel %vm2772, %v2759, %v2278
      %v2793 = vsel %vm2772, %v2760, %v2279
      %v2794 = vsel %vm2772, %v2761, %v2280
      %v2795 = vsel %vm2772, %v2762, %v2281
      %v2796 = vsel %vm2772, %v2763, %v2282
      %v2797 = vsel %vm2772, %v2764, %v2283
      %v2798 = vsel %vm2772, %v2765, %v2284
      %v2799 = vsel %vm2772, %v2766, %v2285
      %v2800 = vsel %vm2772, %v2767, %v2286
      %v2801 = vsel %vm2772, %v2768, %v2287
      %v2802 = vsel %vm2772, %v2769, %v2288
      %v2803 = vsel %vm2772, %v2770, %v2289
      %v2804 = vsel %vm2772, %v2771, %v2290
      %vm2805 = vcmask 1040384
      %v2806 = vsel %vm2805, %v2259, %v2355
      %v2807 = vsel %vm2805, %v2260, %v2356
      %v2808 = vsel %vm2805, %v2261, %v2357
      %v2809 = vsel %vm2805, %v2262, %v2358
      %v2810 = vsel %vm2805, %v2263, %v2359
      %v2811 = vsel %vm2805, %v2264, %v2360
      %v2812 = vsel %vm2805, %v2265, %v2361
      %v2813 = vsel %vm2805, %v2266, %v2362
      %v2814 = vsel %vm2805, %v2267, %v2363
      %v2815 = vsel %vm2805, %v2268, %v2364
      %v2816 = vsel %vm2805, %v2269, %v2365
      %v2817 = vsel %vm2805, %v2270, %v2366
      %v2818 = vsel %vm2805, %v2271, %v2367
      %v2819 = vsel %vm2805, %v2272, %v2368
      %v2820 = vsel %vm2805, %v2273, %v2369
      %v2821 = vsel %vm2805, %v2274, %v2370
      %v2822 = vsel %vm2805, %v2275, %v2371
      %v2823 = vsel %vm2805, %v2276, %v2372
      %v2824 = vsel %vm2805, %v2277, %v2373
      %v2825 = vsel %vm2805, %v2278, %v2374
      %v2826 = vsel %vm2805, %v2279, %v2375
      %v2827 = vsel %vm2805, %v2280, %v2376
      %v2828 = vsel %vm2805, %v2281, %v2377
      %v2829 = vsel %vm2805, %v2282, %v2378
      %v2830 = vsel %vm2805, %v2283, %v2379
      %v2831 = vsel %vm2805, %v2284, %v2380
      %v2832 = vsel %vm2805, %v2285, %v2381
      %v2833 = vsel %vm2805, %v2286, %v2382
      %v2834 = vsel %vm2805, %v2287, %v2383
      %v2835 = vsel %vm2805, %v2288, %v2384
      %v2836 = vsel %vm2805, %v2289, %v2385
      %v2837 = vsel %vm2805, %v2290, %v2386
      %vm2838 = vcmask 1043456
      %v2839 = vsel %vm2838, %v2806, %v2419
      %v2840 = vsel %vm2838, %v2807, %v409
      %v2841 = vsel %vm2838, %v2808, %v2420
      %v2842 = vsel %vm2838, %v2809, %v410
      %v2843 = vsel %vm2838, %v2810, %v2421
      %v2844 = vsel %vm2838, %v2811, %v411
      %v2845 = vsel %vm2838, %v2812, %v2422
      %v2846 = vsel %vm2838, %v2813, %v412
      %v2847 = vsel %vm2838, %v2814, %v2423
      %v2848 = vsel %vm2838, %v2815, %v413
      %v2849 = vsel %vm2838, %v2816, %v2424
      %v2850 = vsel %vm2838, %v2817, %v414
      %v2851 = vsel %vm2838, %v2818, %v2425
      %v2852 = vsel %vm2838, %v2819, %v415
      %v2853 = vsel %vm2838, %v2820, %v2426
      %v2854 = vsel %vm2838, %v2821, %v416
      %v2855 = vsel %vm2838, %v2822, %v2427
      %v2856 = vsel %vm2838, %v2823, %v417
      %v2857 = vsel %vm2838, %v2824, %v2428
      %v2858 = vsel %vm2838, %v2825, %v418
      %v2859 = vsel %vm2838, %v2826, %v2429
      %v2860 = vsel %vm2838, %v2827, %v419
      %v2861 = vsel %vm2838, %v2828, %v2430
      %v2862 = vsel %vm2838, %v2829, %v420
      %v2863 = vsel %vm2838, %v2830, %v2431
      %v2864 = vsel %vm2838, %v2831, %v421
      %v2865 = vsel %vm2838, %v2832, %v2432
      %v2866 = vsel %vm2838, %v2833, %v422
      %v2867 = vsel %vm2838, %v2834, %v2433
      %v2868 = vsel %vm2838, %v2835, %v423
      %v2869 = vsel %vm2838, %v2836, %v2434
      %v2870 = vsel %vm2838, %v2837, %v424
      %vm2871 = vcmask 1046528
      %v2872 = vsel %vm2871, %v2839, %v2483
      %v2873 = vsel %vm2871, %v2840, %v2484
      %v2874 = vsel %vm2871, %v2841, %v2485
      %v2875 = vsel %vm2871, %v2842, %v2486
      %v2876 = vsel %vm2871, %v2843, %v2487
      %v2877 = vsel %vm2871, %v2844, %v2488
      %v2878 = vsel %vm2871, %v2845, %v2489
      %v2879 = vsel %vm2871, %v2846, %v2490
      %v2880 = vsel %vm2871, %v2847, %v2491
      %v2881 = vsel %vm2871, %v2848, %v2492
      %v2882 = vsel %vm2871, %v2849, %v2493
      %v2883 = vsel %vm2871, %v2850, %v2494
      %v2884 = vsel %vm2871, %v2851, %v2495
      %v2885 = vsel %vm2871, %v2852, %v2496
      %v2886 = vsel %vm2871, %v2853, %v2497
      %v2887 = vsel %vm2871, %v2854, %v2498
      %v2888 = vsel %vm2871, %v2855, %v2499
      %v2889 = vsel %vm2871, %v2856, %v2500
      %v2890 = vsel %vm2871, %v2857, %v2501
      %v2891 = vsel %vm2871, %v2858, %v2502
      %v2892 = vsel %vm2871, %v2859, %v2503
      %v2893 = vsel %vm2871, %v2860, %v2504
      %v2894 = vsel %vm2871, %v2861, %v2505
      %v2895 = vsel %vm2871, %v2862, %v2506
      %v2896 = vsel %vm2871, %v2863, %v2507
      %v2897 = vsel %vm2871, %v2864, %v2508
      %v2898 = vsel %vm2871, %v2865, %v2509
      %v2899 = vsel %vm2871, %v2866, %v2510
      %v2900 = vsel %vm2871, %v2867, %v2511
      %v2901 = vsel %vm2871, %v2868, %v2512
      %v2902 = vsel %vm2871, %v2869, %v2513
      %v2903 = vsel %vm2871, %v2870, %v2514
      %vm2904 = vcmask 1041408
      %v2905 = vsel %vm2904, %v2483, %v2579
      %v2906 = vsel %vm2904, %v2484, %v2580
      %v2907 = vsel %vm2904, %v2485, %v2581
      %v2908 = vsel %vm2904, %v2486, %v2582
      %v2909 = vsel %vm2904, %v2487, %v2583
      %v2910 = vsel %vm2904, %v2488, %v2584
      %v2911 = vsel %vm2904, %v2489, %v2585
      %v2912 = vsel %vm2904, %v2490, %v2586
      %v2913 = vsel %vm2904, %v2491, %v2587
      %v2914 = vsel %vm2904, %v2492, %v2588
      %v2915 = vsel %vm2904, %v2493, %v2589
      %v2916 = vsel %vm2904, %v2494, %v2590
      %v2917 = vsel %vm2904, %v2495, %v2591
      %v2918 = vsel %vm2904, %v2496, %v2592
      %v2919 = vsel %vm2904, %v2497, %v2593
      %v2920 = vsel %vm2904, %v2498, %v2594
      %v2921 = vsel %vm2904, %v2499, %v2595
      %v2922 = vsel %vm2904, %v2500, %v2596
      %v2923 = vsel %vm2904, %v2501, %v2597
      %v2924 = vsel %vm2904, %v2502, %v2598
      %v2925 = vsel %vm2904, %v2503, %v2599
      %v2926 = vsel %vm2904, %v2504, %v2600
      %v2927 = vsel %vm2904, %v2505, %v2601
      %v2928 = vsel %vm2904, %v2506, %v2602
      %v2929 = vsel %vm2904, %v2507, %v2603
      %v2930 = vsel %vm2904, %v2508, %v2604
      %v2931 = vsel %vm2904, %v2509, %v2605
      %v2932 = vsel %vm2904, %v2510, %v2606
      %v2933 = vsel %vm2904, %v2511, %v2607
      %v2934 = vsel %vm2904, %v2512, %v2608
      %v2935 = vsel %vm2904, %v2513, %v2609
      %v2936 = vsel %vm2904, %v2514, %v2610
      %vm2937 = vcmask 1044480
      %v2938 = vsel %vm2937, %v2905, %v2675
      %v2939 = vsel %vm2937, %v2906, %v2676
      %v2940 = vsel %vm2937, %v2907, %v2677
      %v2941 = vsel %vm2937, %v2908, %v2678
      %v2942 = vsel %vm2937, %v2909, %v2679
      %v2943 = vsel %vm2937, %v2910, %v2680
      %v2944 = vsel %vm2937, %v2911, %v2681
      %v2945 = vsel %vm2937, %v2912, %v2682
      %v2946 = vsel %vm2937, %v2913, %v2683
      %v2947 = vsel %vm2937, %v2914, %v2684
      %v2948 = vsel %vm2937, %v2915, %v2685
      %v2949 = vsel %vm2937, %v2916, %v2686
      %v2950 = vsel %vm2937, %v2917, %v2687
      %v2951 = vsel %vm2937, %v2918, %v2688
      %v2952 = vsel %vm2937, %v2919, %v2689
      %v2953 = vsel %vm2937, %v2920, %v2690
      %v2954 = vsel %vm2937, %v2921, %v2691
      %v2955 = vsel %vm2937, %v2922, %v2692
      %v2956 = vsel %vm2937, %v2923, %v2693
      %v2957 = vsel %vm2937, %v2924, %v2694
      %v2958 = vsel %vm2937, %v2925, %v2695
      %v2959 = vsel %vm2937, %v2926, %v2696
      %v2960 = vsel %vm2937, %v2927, %v2697
      %v2961 = vsel %vm2937, %v2928, %v2698
      %v2962 = vsel %vm2937, %v2929, %v2699
      %v2963 = vsel %vm2937, %v2930, %v2700
      %v2964 = vsel %vm2937, %v2931, %v2701
      %v2965 = vsel %vm2937, %v2932, %v2702
      %v2966 = vsel %vm2937, %v2933, %v2703
      %v2967 = vsel %vm2937, %v2934, %v2704
      %v2968 = vsel %vm2937, %v2935, %v2705
      %v2969 = vsel %vm2937, %v2936, %v2706
      %v2970 = vld [vmem:[%s1] sm:$0xff]
      %v2971 = vld [vmem:[%s1 + $0x8] sm:$0xff]
      %v2972 = vld [vmem:[%s2] sm:$0xff]
      %v2973 = vld [vmem:[%s2 + $0x8] sm:$0xff]
      %2975 = vset.pattern.permute.xlu0 0
      %2976 = vperm.xlu0 %2975, %v2972
      %v2977 = vpop.permute.xlu0 %2976
      %2980 = vset.pattern.permute.xlu0 0
      %2981 = vperm.xlu0 %2980, %v2973
      %v2982 = vpop.permute.xlu0 %2981
      %vm2984 = vcmask 220160
      %v2986 = vsel %vm2984, %v2970, 0
      %v2989 = vsel %vm2984, %v2971, 0
      %v2992 = vsel %vm2739, %v2099, 0
      %v2995 = vsel %vm2739, %v2100, 0
      %v2998 = vsel %vm2739, %v2101, 0
      %v3001 = vsel %vm2739, %v2102, 0
      %v3004 = vsel %vm2739, %v2103, 0
      %v3007 = vsel %vm2739, %v2104, 0
      %v3010 = vsel %vm2739, %v2105, 0
      %v3013 = vsel %vm2739, %v2106, 0
      %v3016 = vsel %vm2739, %v2107, 0
      %v3019 = vsel %vm2739, %v2108, 0
      %v3022 = vsel %vm2739, %v2109, 0
      %v3025 = vsel %vm2739, %v2110, 0
      %v3028 = vsel %vm2739, %v2111, 0
      %v3031 = vsel %vm2739, %v2112, 0
      %v3034 = vsel %vm2739, %v2113, 0
      %v3037 = vsel %vm2739, %v2114, 0
      %v3040 = vsel %vm2739, %v2115, 0
      %v3043 = vsel %vm2739, %v2116, 0
      %v3046 = vsel %vm2739, %v2117, 0
      %v3049 = vsel %vm2739, %v2118, 0
      %v3052 = vsel %vm2739, %v2119, 0
      %v3055 = vsel %vm2739, %v2120, 0
      %v3058 = vsel %vm2739, %v2121, 0
      %v3061 = vsel %vm2739, %v2122, 0
      %v3064 = vsel %vm2739, %v2123, 0
      %v3067 = vsel %vm2739, %v2124, 0
      %v3070 = vsel %vm2739, %v2125, 0
      %v3073 = vsel %vm2739, %v2126, 0
      %v3076 = vsel %vm2739, %v2127, 0
      %v3079 = vsel %vm2739, %v2128, 0
      %v3082 = vsel %vm2739, %v2129, 0
      %v3085 = vsel %vm2739, %v2130, 0
      %3087 = vmatprep.subr.mxu0 %v2774
      %3088 = vmatpush1.msra.mxu0 %v2773
      %3089 = vmatprep.subr.mxu0 %v2873
      %3090 = vmatpush1.msra.mxu0 %v2872
      %3091 = vmatprep.subr.mxu0 %v2939
      %3092 = vmatpush1.msra.mxu0 %v2938
      %3093 = vmatprep.subr.mxu0 %v2995
      %3094 = vmatpush1.msra.mxu0 %v2992
      %3095 = vmatprep.subr.mxu0 0.0
      %3096 = vmatpush1.msra.mxu0 0.0
      %3097 = vmatprep.subr.mxu0 0.0
      %3098 = vmatpush1.msra.mxu0 0.0
      %3099 = vmatprep.subr.mxu0 0.0
      %3100 = vmatpush1.msra.mxu0 0.0
      %3101 = vmatprep.subr.mxu0 0.0
      %3102 = vmatpush1.msra.mxu0 0.0
      %3103 = vmatprep.subr.mxu0 0.0
      %3104 = vmatpush1.msra.mxu0 0.0
      %3105 = vmatprep.subr.mxu0 0.0
      %3106 = vmatpush1.msra.mxu0 0.0
      %3107 = vmatprep.subr.mxu0 0.0
      %3108 = vmatpush1.msra.mxu0 0.0
      %3109 = vmatprep.subr.mxu0 0.0
      %3110 = vmatpush1.msra.mxu0 0.0
      %3111 = vmatprep.subr.mxu0 0.0
      %3112 = vmatpush1.msra.mxu0 0.0
      %3113 = vmatprep.subr.mxu0 0.0
      %3114 = vmatpush1.msra.mxu0 0.0
      %3115 = vmatprep.subr.mxu0 0.0
      %3116 = vmatpush1.msra.mxu0 0.0
      %3117 = vmatprep.subr.mxu0 0.0
      %3118 = vmatpush1.msra.mxu0 0.0
      %3119 = vmatprep.subr.mxu0 0.0
      %3120 = vmatpush1.msra.mxu0 0.0
      %3121 = vmatprep.subr.mxu0 0.0
      %3122 = vmatpush1.msra.mxu0 0.0
      %3123 = vmatprep.subr.mxu0 0.0
      %3124 = vmatpush1.msra.mxu0 0.0
      %3125 = vmatprep.subr.mxu0 0.0
      %3126 = vmatpush1.msra.mxu0 0.0
      %3127 = vmatprep.subr.mxu0 0.0
      %3128 = vmatpush1.msra.mxu0 0.0
      %3129 = vmatprep.subr.mxu0 0.0
      %3130 = vmatpush1.msra.mxu0 0.0
      %3131 = vmatprep.subr.mxu0 0.0
      %3132 = vmatpush1.msra.mxu0 0.0
      %3133 = vmatprep.subr.mxu0 0.0
      %3134 = vmatpush1.msra.mxu0 0.0
      %3135 = vmatprep.subr.mxu0 0.0
      %3136 = vmatpush1.msra.mxu0 0.0
      %3137 = vmatprep.subr.mxu0 0.0
      %3138 = vmatpush1.msra.mxu0 0.0
      %3139 = vmatprep.subr.mxu0 0.0
      %3140 = vmatpush1.msra.mxu0 0.0
      %3141 = vmatprep.subr.mxu0 0.0
      %3142 = vmatpush1.msra.mxu0 0.0
      %3143 = vmatprep.subr.mxu0 0.0
      %3144 = vmatpush1.msra.mxu0 0.0
      %3145 = vmatprep.subr.mxu0 0.0
      %3146 = vmatpush1.msra.mxu0 0.0
      %3147 = vmatprep.subr.mxu0 0.0
      %3148 = vmatpush1.msra.mxu0 0.0
      %3149 = vmatprep.subr.mxu0 0.0
      %3150 = vmatpush1.msra.mxu0 0.0
      %3151 = vmatprep.mubr.f32.mxu0 0.0
      %3152 = vmatmul.mubr.f32.gmra.mrb[0].mxu0 %v2986
      %v3153 = vpop.f32.mrb[0].mxu0
      %v3154 = vadd.f32 %v2977, %v3153
      %v3155 = vpop.f32.mrb[0].mxu0
      %v3156 = vadd.f32 %v2977, %v3155
      %3157 = vmatprep.mubr.f32.mxu0 0.0
      %3158 = vmatmul.mubr.f32.gmra.mrb[0].mxu0 %v2989
      %v3159 = vpop.f32.mrb[0].mxu0
      %v3160 = vadd.f32 %v2982, %v3159
      %v3161 = vpop.f32.mrb[0].mxu0
      %v3162 = vadd.f32 %v2982, %v3161
      %3163 = vdwg.mxu0
      %3164 = vmatprep.subr.mxu0 %v2776
      %3165 = vmatpush1.msra.mxu0 %v2775
      %3166 = vmatprep.subr.mxu0 %v2875
      %3167 = vmatpush1.msra.mxu0 %v2874
      %3168 = vmatprep.subr.mxu0 %v2941
      %3169 = vmatpush1.msra.mxu0 %v2940
      %3170 = vmatprep.subr.mxu0 %v3001
      %3171 = vmatpush1.msra.mxu0 %v2998
      %3172 = vmatprep.subr.mxu0 0.0
      %3173 = vmatpush1.msra.mxu0 0.0
      %3174 = vmatprep.subr.mxu0 0.0
      %3175 = vmatpush1.msra.mxu0 0.0
      %3176 = vmatprep.subr.mxu0 0.0
      %3177 = vmatpush1.msra.mxu0 0.0
      %3178 = vmatprep.subr.mxu0 0.0
      %3179 = vmatpush1.msra.mxu0 0.0
      %3180 = vmatprep.subr.mxu0 0.0
      %3181 = vmatpush1.msra.mxu0 0.0
      %3182 = vmatprep.subr.mxu0 0.0
      %3183 = vmatpush1.msra.mxu0 0.0
      %3184 = vmatprep.subr.mxu0 0.0
      %3185 = vmatpush1.msra.mxu0 0.0
      %3186 = vmatprep.subr.mxu0 0.0
      %3187 = vmatpush1.msra.mxu0 0.0
      %3188 = vmatprep.subr.mxu0 0.0
      %3189 = vmatpush1.msra.mxu0 0.0
      %3190 = vmatprep.subr.mxu0 0.0
      %3191 = vmatpush1.msra.mxu0 0.0
      %3192 = vmatprep.subr.mxu0 0.0
      %3193 = vmatpush1.msra.mxu0 0.0
      %3194 = vmatprep.subr.mxu0 0.0
      %3195 = vmatpush1.msra.mxu0 0.0
      %3196 = vmatprep.subr.mxu0 0.0
      %3197 = vmatpush1.msra.mxu0 0.0
      %3198 = vmatprep.subr.mxu0 0.0
      %3199 = vmatpush1.msra.mxu0 0.0
      %3200 = vmatprep.subr.mxu0 0.0
      %3201 = vmatpush1.msra.mxu0 0.0
      %3202 = vmatprep.subr.mxu0 0.0
      %3203 = vmatpush1.msra.mxu0 0.0
      %3204 = vmatprep.subr.mxu0 0.0
      %3205 = vmatpush1.msra.mxu0 0.0
      %3206 = vmatprep.subr.mxu0 0.0
      %3207 = vmatpush1.msra.mxu0 0.0
      %3208 = vmatprep.subr.mxu0 0.0
      %3209 = vmatpush1.msra.mxu0 0.0
      %3210 = vmatprep.subr.mxu0 0.0
      %3211 = vmatpush1.msra.mxu0 0.0
      %3212 = vmatprep.subr.mxu0 0.0
      %3213 = vmatpush1.msra.mxu0 0.0
      %3214 = vmatprep.subr.mxu0 0.0
      %3215 = vmatpush1.msra.mxu0 0.0
      %3216 = vmatprep.subr.mxu0 0.0
      %3217 = vmatpush1.msra.mxu0 0.0
      %3218 = vmatprep.subr.mxu0 0.0
      %3219 = vmatpush1.msra.mxu0 0.0
      %3220 = vmatprep.subr.mxu0 0.0
      %3221 = vmatpush1.msra.mxu0 0.0
      %3222 = vmatprep.subr.mxu0 0.0
      %3223 = vmatpush1.msra.mxu0 0.0
      %3224 = vmatprep.subr.mxu0 0.0
      %3225 = vmatpush1.msra.mxu0 0.0
      %3226 = vmatprep.subr.mxu0 0.0
      %3227 = vmatpush1.msra.mxu0 0.0
      %3228 = vmatprep.mubr.f32.mxu0 0.0
      %3229 = vmatmul.mubr.f32.gmra.mrb[0].mxu0 %v2986
      %v3230 = vpop.f32.mrb[0].mxu0
      %v3231 = vadd.f32 %v2977, %v3230
      %v3232 = vpop.f32.mrb[0].mxu0
      %v3233 = vadd.f32 %v2977, %v3232
      %3234 = vmatprep.mubr.f32.mxu0 0.0
      %3235 = vmatmul.mubr.f32.gmra.mrb[0].mxu0 %v2989
      %v3236 = vpop.f32.mrb[0].mxu0
      %v3237 = vadd.f32 %v2982, %v3236
      %v3238 = vpop.f32.mrb[0].mxu0
      %v3239 = vadd.f32 %v2982, %v3238
      %3240 = vdwg.mxu0
      %3241 = vmatprep.subr.mxu0 %v2778
      %3242 = vmatpush1.msra.mxu0 %v2777
      %3243 = vmatprep.subr.mxu0 %v2877
      %3244 = vmatpush1.msra.mxu0 %v2876
      %3245 = vmatprep.subr.mxu0 %v2943
      %3246 = vmatpush1.msra.mxu0 %v2942
      %3247 = vmatprep.subr.mxu0 %v3007
      %3248 = vmatpush1.msra.mxu0 %v3004
      %3249 = vmatprep.subr.mxu0 0.0
      %3250 = vmatpush1.msra.mxu0 0.0
      %3251 = vmatprep.subr.mxu0 0.0
      %3252 = vmatpush1.msra.mxu0 0.0
      %3253 = vmatprep.subr.mxu0 0.0
      %3254 = vmatpush1.msra.mxu0 0.0
      %3255 = vmatprep.subr.mxu0 0.0
      %3256 = vmatpush1.msra.mxu0 0.0
      %3257 = vmatprep.subr.mxu0 0.0
      %3258 = vmatpush1.msra.mxu0 0.0
      %3259 = vmatprep.subr.mxu0 0.0
      %3260 = vmatpush1.msra.mxu0 0.0
      %3261 = vmatprep.subr.mxu0 0.0
      %3262 = vmatpush1.msra.mxu0 0.0
      %3263 = vmatprep.subr.mxu0 0.0
      %3264 = vmatpush1.msra.mxu0 0.0
      %3265 = vmatprep.subr.mxu0 0.0
      %3266 = vmatpush1.msra.mxu0 0.0
      %3267 = vmatprep.subr.mxu0 0.0
      %3268 = vmatpush1.msra.mxu0 0.0
      %3269 = vmatprep.subr.mxu0 0.0
      %3270 = vmatpush1.msra.mxu0 0.0
      %3271 = vmatprep.subr.mxu0 0.0
      %3272 = vmatpush1.msra.mxu0 0.0
      %3273 = vmatprep.subr.mxu0 0.0
      %3274 = vmatpush1.msra.mxu0 0.0
      %3275 = vmatprep.subr.mxu0 0.0
      %3276 = vmatpush1.msra.mxu0 0.0
      %3277 = vmatprep.subr.mxu0 0.0
      %3278 = vmatpush1.msra.mxu0 0.0
      %3279 = vmatprep.subr.mxu0 0.0
      %3280 = vmatpush1.msra.mxu0 0.0
      %3281 = vmatprep.subr.mxu0 0.0
      %3282 = vmatpush1.msra.mxu0 0.0
      %3283 = vmatprep.subr.mxu0 0.0
      %3284 = vmatpush1.msra.mxu0 0.0
      %3285 = vmatprep.subr.mxu0 0.0
      %3286 = vmatpush1.msra.mxu0 0.0
      %3287 = vmatprep.subr.mxu0 0.0
      %3288 = vmatpush1.msra.mxu0 0.0
      %3289 = vmatprep.subr.mxu0 0.0
      %3290 = vmatpush1.msra.mxu0 0.0
      %3291 = vmatprep.subr.mxu0 0.0
      %3292 = vmatpush1.msra.mxu0 0.0
      %3293 = vmatprep.subr.mxu0 0.0
      %3294 = vmatpush1.msra.mxu0 0.0
      %3295 = vmatprep.subr.mxu0 0.0
      %3296 = vmatpush1.msra.mxu0 0.0
      %3297 = vmatprep.subr.mxu0 0.0
      %3298 = vmatpush1.msra.mxu0 0.0
      %3299 = vmatprep.subr.mxu0 0.0
      %3300 = vmatpush1.msra.mxu0 0.0
      %3301 = vmatprep.subr.mxu0 0.0
      %3302 = vmatpush1.msra.mxu0 0.0
      %3303 = vmatprep.subr.mxu0 0.0
      %3304 = vmatpush1.msra.mxu0 0.0
      %3305 = vmatprep.mubr.f32.mxu0 0.0
      %3306 = vmatmul.mubr.f32.gmra.mrb[0].mxu0 %v2986
      %v3307 = vpop.f32.mrb[0].mxu0
      %v3308 = vadd.f32 %v2977, %v3307
      %v3309 = vpop.f32.mrb[0].mxu0
      %v3310 = vadd.f32 %v2977, %v3309
      %3311 = vmatprep.mubr.f32.mxu0 0.0
      %3312 = vmatmul.mubr.f32.gmra.mrb[0].mxu0 %v2989
      %v3313 = vpop.f32.mrb[0].mxu0
      %v3314 = vadd.f32 %v2982, %v3313
      %v3315 = vpop.f32.mrb[0].mxu0
      %v3316 = vadd.f32 %v2982, %v3315
      %3317 = vdwg.mxu0
      %3318 = vmatprep.subr.mxu0 %v2780
      %3319 = vmatpush1.msra.mxu0 %v2779
      %3320 = vmatprep.subr.mxu0 %v2879
      %3321 = vmatpush1.msra.mxu0 %v2878
      %3322 = vmatprep.subr.mxu0 %v2945
      %3323 = vmatpush1.msra.mxu0 %v2944
      %3324 = vmatprep.subr.mxu0 %v3013
      %3325 = vmatpush1.msra.mxu0 %v3010
      %3326 = vmatprep.subr.mxu0 0.0
      %3327 = vmatpush1.msra.mxu0 0.0
      %3328 = vmatprep.subr.mxu0 0.0
      %3329 = vmatpush1.msra.mxu0 0.0
      %3330 = vmatprep.subr.mxu0 0.0
      %3331 = vmatpush1.msra.mxu0 0.0
      %3332 = vmatprep.subr.mxu0 0.0
      %3333 = vmatpush1.msra.mxu0 0.0
      %3334 = vmatprep.subr.mxu0 0.0
      %3335 = vmatpush1.msra.mxu0 0.0
      %3336 = vmatprep.subr.mxu0 0.0
      %3337 = vmatpush1.msra.mxu0 0.0
      %3338 = vmatprep.subr.mxu0 0.0
      %3339 = vmatpush1.msra.mxu0 0.0
      %3340 = vmatprep.subr.mxu0 0.0
      %3341 = vmatpush1.msra.mxu0 0.0
      %3342 = vmatprep.subr.mxu0 0.0
      %3343 = vmatpush1.msra.mxu0 0.0
      %3344 = vmatprep.subr.mxu0 0.0
      %3345 = vmatpush1.msra.mxu0 0.0
      %3346 = vmatprep.subr.mxu0 0.0
      %3347 = vmatpush1.msra.mxu0 0.0
      %3348 = vmatprep.subr.mxu0 0.0
      %3349 = vmatpush1.msra.mxu0 0.0
      %3350 = vmatprep.subr.mxu0 0.0
      %3351 = vmatpush1.msra.mxu0 0.0
      %3352 = vmatprep.subr.mxu0 0.0
      %3353 = vmatpush1.msra.mxu0 0.0
      %3354 = vmatprep.subr.mxu0 0.0
      %3355 = vmatpush1.msra.mxu0 0.0
      %3356 = vmatprep.subr.mxu0 0.0
      %3357 = vmatpush1.msra.mxu0 0.0
      %3358 = vmatprep.subr.mxu0 0.0
      %3359 = vmatpush1.msra.mxu0 0.0
      %3360 = vmatprep.subr.mxu0 0.0
      %3361 = vmatpush1.msra.mxu0 0.0
      %3362 = vmatprep.subr.mxu0 0.0
      %3363 = vmatpush1.msra.mxu0 0.0
      %3364 = vmatprep.subr.mxu0 0.0
      %3365 = vmatpush1.msra.mxu0 0.0
      %3366 = vmatprep.subr.mxu0 0.0
      %3367 = vmatpush1.msra.mxu0 0.0
      %3368 = vmatprep.subr.mxu0 0.0
      %3369 = vmatpush1.msra.mxu0 0.0
      %3370 = vmatprep.subr.mxu0 0.0
      %3371 = vmatpush1.msra.mxu0 0.0
      %3372 = vmatprep.subr.mxu0 0.0
      %3373 = vmatpush1.msra.mxu0 0.0
      %3374 = vmatprep.subr.mxu0 0.0
      %3375 = vmatpush1.msra.mxu0 0.0
      %3376 = vmatprep.subr.mxu0 0.0
      %3377 = vmatpush1.msra.mxu0 0.0
      %3378 = vmatprep.subr.mxu0 0.0
      %3379 = vmatpush1.msra.mxu0 0.0
      %3380 = vmatprep.subr.mxu0 0.0
      %3381 = vmatpush1.msra.mxu0 0.0
      %3382 = vmatprep.mubr.f32.mxu0 0.0
      %3383 = vmatmul.mubr.f32.gmra.mrb[0].mxu0 %v2986
      %v3384 = vpop.f32.mrb[0].mxu0
      %v3385 = vadd.f32 %v2977, %v3384
      %v3386 = vpop.f32.mrb[0].mxu0
      %v3387 = vadd.f32 %v2977, %v3386
      %3388 = vmatprep.mubr.f32.mxu0 0.0
      %3389 = vmatmul.mubr.f32.gmra.mrb[0].mxu0 %v2989
      %v3390 = vpop.f32.mrb[0].mxu0
      %v3391 = vadd.f32 %v2982, %v3390
      %v3392 = vpop.f32.mrb[0].mxu0
      %v3393 = vadd.f32 %v2982, %v3392
      %3394 = vdwg.mxu0
      %3395 = vmatprep.subr.mxu0 %v2782
      %3396 = vmatpush1.msra.mxu0 %v2781
      %3397 = vmatprep.subr.mxu0 %v2881
      %3398 = vmatpush1.msra.mxu0 %v2880
      %3399 = vmatprep.subr.mxu0 %v2947
      %3400 = vmatpush1.msra.mxu0 %v2946
      %3401 = vmatprep.subr.mxu0 %v3019
      %3402 = vmatpush1.msra.mxu0 %v3016
      %3403 = vmatprep.subr.mxu0 0.0
      %3404 = vmatpush1.msra.mxu0 0.0
      %3405 = vmatprep.subr.mxu0 0.0
      %3406 = vmatpush1.msra.mxu0 0.0
      %3407 = vmatprep.subr.mxu0 0.0
      %3408 = vmatpush1.msra.mxu0 0.0
      %3409 = vmatprep.subr.mxu0 0.0
      %3410 = vmatpush1.msra.mxu0 0.0
      %3411 = vmatprep.subr.mxu0 0.0
      %3412 = vmatpush1.msra.mxu0 0.0
      %3413 = vmatprep.subr.mxu0 0.0
      %3414 = vmatpush1.msra.mxu0 0.0
      %3415 = vmatprep.subr.mxu0 0.0
      %3416 = vmatpush1.msra.mxu0 0.0
      %3417 = vmatprep.subr.mxu0 0.0
      %3418 = vmatpush1.msra.mxu0 0.0
      %3419 = vmatprep.subr.mxu0 0.0
      %3420 = vmatpush1.msra.mxu0 0.0
      %3421 = vmatprep.subr.mxu0 0.0
      %3422 = vmatpush1.msra.mxu0 0.0
      %3423 = vmatprep.subr.mxu0 0.0
      %3424 = vmatpush1.msra.mxu0 0.0
      %3425 = vmatprep.subr.mxu0 0.0
      %3426 = vmatpush1.msra.mxu0 0.0
      %3427 = vmatprep.subr.mxu0 0.0
      %3428 = vmatpush1.msra.mxu0 0.0
      %3429 = vmatprep.subr.mxu0 0.0
      %3430 = vmatpush1.msra.mxu0 0.0
      %3431 = vmatprep.subr.mxu0 0.0
      %3432 = vmatpush1.msra.mxu0 0.0
      %3433 = vmatprep.subr.mxu0 0.0
      %3434 = vmatpush1.msra.mxu0 0.0
      %3435 = vmatprep.subr.mxu0 0.0
      %3436 = vmatpush1.msra.mxu0 0.0
      %3437 = vmatprep.subr.mxu0 0.0
      %3438 = vmatpush1.msra.mxu0 0.0
      %3439 = vmatprep.subr.mxu0 0.0
      %3440 = vmatpush1.msra.mxu0 0.0
      %3441 = vmatprep.subr.mxu0 0.0
      %3442 = vmatpush1.msra.mxu0 0.0
      %3443 = vmatprep.subr.mxu0 0.0
      %3444 = vmatpush1.msra.mxu0 0.0
      %3445 = vmatprep.subr.mxu0 0.0
      %3446 = vmatpush1.msra.mxu0 0.0
      %3447 = vmatprep.subr.mxu0 0.0
      %3448 = vmatpush1.msra.mxu0 0.0
      %3449 = vmatprep.subr.mxu0 0.0
      %3450 = vmatpush1.msra.mxu0 0.0
      %3451 = vmatprep.subr.mxu0 0.0
      %3452 = vmatpush1.msra.mxu0 0.0
      %3453 = vmatprep.subr.mxu0 0.0
      %3454 = vmatpush1.msra.mxu0 0.0
      %3455 = vmatprep.subr.mxu0 0.0
      %3456 = vmatpush1.msra.mxu0 0.0
      %3457 = vmatprep.subr.mxu0 0.0
      %3458 = vmatpush1.msra.mxu0 0.0
      %3459 = vmatprep.mubr.f32.mxu0 0.0
      %3460 = vmatmul.mubr.f32.gmra.mrb[0].mxu0 %v2986
      %v3461 = vpop.f32.mrb[0].mxu0
      %v3462 = vadd.f32 %v2977, %v3461
      %v3463 = vpop.f32.mrb[0].mxu0
      %v3464 = vadd.f32 %v2977, %v3463
      %3465 = vmatprep.mubr.f32.mxu0 0.0
      %3466 = vmatmul.mubr.f32.gmra.mrb[0].mxu0 %v2989
      %v3467 = vpop.f32.mrb[0].mxu0
      %v3468 = vadd.f32 %v2982, %v3467
      %v3469 = vpop.f32.mrb[0].mxu0
      %v3470 = vadd.f32 %v2982, %v3469
      %3471 = vdwg.mxu0
      %3472 = vmatprep.subr.mxu0 %v2784
      %3473 = vmatpush1.msra.mxu0 %v2783
      %3474 = vmatprep.subr.mxu0 %v2883
      %3475 = vmatpush1.msra.mxu0 %v2882
      %3476 = vmatprep.subr.mxu0 %v2949
      %3477 = vmatpush1.msra.mxu0 %v2948
      %3478 = vmatprep.subr.mxu0 %v3025
      %3479 = vmatpush1.msra.mxu0 %v3022
      %3480 = vmatprep.subr.mxu0 0.0
      %3481 = vmatpush1.msra.mxu0 0.0
      %3482 = vmatprep.subr.mxu0 0.0
      %3483 = vmatpush1.msra.mxu0 0.0
      %3484 = vmatprep.subr.mxu0 0.0
      %3485 = vmatpush1.msra.mxu0 0.0
      %3486 = vmatprep.subr.mxu0 0.0
      %3487 = vmatpush1.msra.mxu0 0.0
      %3488 = vmatprep.subr.mxu0 0.0
      %3489 = vmatpush1.msra.mxu0 0.0
      %3490 = vmatprep.subr.mxu0 0.0
      %3491 = vmatpush1.msra.mxu0 0.0
      %3492 = vmatprep.subr.mxu0 0.0
      %3493 = vmatpush1.msra.mxu0 0.0
      %3494 = vmatprep.subr.mxu0 0.0
      %3495 = vmatpush1.msra.mxu0 0.0
      %3496 = vmatprep.subr.mxu0 0.0
      %3497 = vmatpush1.msra.mxu0 0.0
      %3498 = vmatprep.subr.mxu0 0.0
      %3499 = vmatpush1.msra.mxu0 0.0
      %3500 = vmatprep.subr.mxu0 0.0
      %3501 = vmatpush1.msra.mxu0 0.0
      %3502 = vmatprep.subr.mxu0 0.0
      %3503 = vmatpush1.msra.mxu0 0.0
      %3504 = vmatprep.subr.mxu0 0.0
      %3505 = vmatpush1.msra.mxu0 0.0
      %3506 = vmatprep.subr.mxu0 0.0
      %3507 = vmatpush1.msra.mxu0 0.0
      %3508 = vmatprep.subr.mxu0 0.0
      %3509 = vmatpush1.msra.mxu0 0.0
      %3510 = vmatprep.subr.mxu0 0.0
      %3511 = vmatpush1.msra.mxu0 0.0
      %3512 = vmatprep.subr.mxu0 0.0
      %3513 = vmatpush1.msra.mxu0 0.0
      %3514 = vmatprep.subr.mxu0 0.0
      %3515 = vmatpush1.msra.mxu0 0.0
      %3516 = vmatprep.subr.mxu0 0.0
      %3517 = vmatpush1.msra.mxu0 0.0
      %3518 = vmatprep.subr.mxu0 0.0
      %3519 = vmatpush1.msra.mxu0 0.0
      %3520 = vmatprep.subr.mxu0 0.0
      %3521 = vmatpush1.msra.mxu0 0.0
      %3522 = vmatprep.subr.mxu0 0.0
      %3523 = vmatpush1.msra.mxu0 0.0
      %3524 = vmatprep.subr.mxu0 0.0
      %3525 = vmatpush1.msra.mxu0 0.0
      %3526 = vmatprep.subr.mxu0 0.0
      %3527 = vmatpush1.msra.mxu0 0.0
      %3528 = vmatprep.subr.mxu0 0.0
      %3529 = vmatpush1.msra.mxu0 0.0
      %3530 = vmatprep.subr.mxu0 0.0
      %3531 = vmatpush1.msra.mxu0 0.0
      %3532 = vmatprep.subr.mxu0 0.0
      %3533 = vmatpush1.msra.mxu0 0.0
      %3534 = vmatprep.subr.mxu0 0.0
      %3535 = vmatpush1.msra.mxu0 0.0
      %3536 = vmatprep.mubr.f32.mxu0 0.0
      %3537 = vmatmul.mubr.f32.gmra.mrb[0].mxu0 %v2986
      %v3538 = vpop.f32.mrb[0].mxu0
      %v3539 = vadd.f32 %v2977, %v3538
      %v3540 = vpop.f32.mrb[0].mxu0
      %v3541 = vadd.f32 %v2977, %v3540
      %3542 = vmatprep.mubr.f32.mxu0 0.0
      %3543 = vmatmul.mubr.f32.gmra.mrb[0].mxu0 %v2989
      %v3544 = vpop.f32.mrb[0].mxu0
      %v3545 = vadd.f32 %v2982, %v3544
      %v3546 = vpop.f32.mrb[0].mxu0
      %v3547 = vadd.f32 %v2982, %v3546
      %3548 = vdwg.mxu0
      %3549 = vmatprep.subr.mxu0 %v2786
      %3550 = vmatpush1.msra.mxu0 %v2785
      %3551 = vmatprep.subr.mxu0 %v2885
      %3552 = vmatpush1.msra.mxu0 %v2884
      %3553 = vmatprep.subr.mxu0 %v2951
      %3554 = vmatpush1.msra.mxu0 %v2950
      %3555 = vmatprep.subr.mxu0 %v3031
      %3556 = vmatpush1.msra.mxu0 %v3028
      %3557 = vmatprep.subr.mxu0 0.0
      %3558 = vmatpush1.msra.mxu0 0.0
      %3559 = vmatprep.subr.mxu0 0.0
      %3560 = vmatpush1.msra.mxu0 0.0
      %3561 = vmatprep.subr.mxu0 0.0
      %3562 = vmatpush1.msra.mxu0 0.0
      %3563 = vmatprep.subr.mxu0 0.0
      %3564 = vmatpush1.msra.mxu0 0.0
      %3565 = vmatprep.subr.mxu0 0.0
      %3566 = vmatpush1.msra.mxu0 0.0
      %3567 = vmatprep.subr.mxu0 0.0
      %3568 = vmatpush1.msra.mxu0 0.0
      %3569 = vmatprep.subr.mxu0 0.0
      %3570 = vmatpush1.msra.mxu0 0.0
      %3571 = vmatprep.subr.mxu0 0.0
      %3572 = vmatpush1.msra.mxu0 0.0
      %3573 = vmatprep.subr.mxu0 0.0
      %3574 = vmatpush1.msra.mxu0 0.0
      %3575 = vmatprep.subr.mxu0 0.0
      %3576 = vmatpush1.msra.mxu0 0.0
      %3577 = vmatprep.subr.mxu0 0.0
      %3578 = vmatpush1.msra.mxu0 0.0
      %3579 = vmatprep.subr.mxu0 0.0
      %3580 = vmatpush1.msra.mxu0 0.0
      %3581 = vmatprep.subr.mxu0 0.0
      %3582 = vmatpush1.msra.mxu0 0.0
      %3583 = vmatprep.subr.mxu0 0.0
      %3584 = vmatpush1.msra.mxu0 0.0
      %3585 = vmatprep.subr.mxu0 0.0
      %3586 = vmatpush1.msra.mxu0 0.0
      %3587 = vmatprep.subr.mxu0 0.0
      %3588 = vmatpush1.msra.mxu0 0.0
      %3589 = vmatprep.subr.mxu0 0.0
      %3590 = vmatpush1.msra.mxu0 0.0
      %3591 = vmatprep.subr.mxu0 0.0
      %3592 = vmatpush1.msra.mxu0 0.0
      %3593 = vmatprep.subr.mxu0 0.0
      %3594 = vmatpush1.msra.mxu0 0.0
      %3595 = vmatprep.subr.mxu0 0.0
      %3596 = vmatpush1.msra.mxu0 0.0
      %3597 = vmatprep.subr.mxu0 0.0
      %3598 = vmatpush1.msra.mxu0 0.0
      %3599 = vmatprep.subr.mxu0 0.0
      %3600 = vmatpush1.msra.mxu0 0.0
      %3601 = vmatprep.subr.mxu0 0.0
      %3602 = vmatpush1.msra.mxu0 0.0
      %3603 = vmatprep.subr.mxu0 0.0
      %3604 = vmatpush1.msra.mxu0 0.0
      %3605 = vmatprep.subr.mxu0 0.0
      %3606 = vmatpush1.msra.mxu0 0.0
      %3607 = vmatprep.subr.mxu0 0.0
      %3608 = vmatpush1.msra.mxu0 0.0
      %3609 = vmatprep.subr.mxu0 0.0
      %3610 = vmatpush1.msra.mxu0 0.0
      %3611 = vmatprep.subr.mxu0 0.0
      %3612 = vmatpush1.msra.mxu0 0.0
      %3613 = vmatprep.mubr.f32.mxu0 0.0
      %3614 = vmatmul.mubr.f32.gmra.mrb[0].mxu0 %v2986
      %v3615 = vpop.f32.mrb[0].mxu0
      %v3616 = vadd.f32 %v2977, %v3615
      %v3617 = vpop.f32.mrb[0].mxu0
      %v3618 = vadd.f32 %v2977, %v3617
      %3619 = vmatprep.mubr.f32.mxu0 0.0
      %3620 = vmatmul.mubr.f32.gmra.mrb[0].mxu0 %v2989
      %v3621 = vpop.f32.mrb[0].mxu0
      %v3622 = vadd.f32 %v2982, %v3621
      %v3623 = vpop.f32.mrb[0].mxu0
      %v3624 = vadd.f32 %v2982, %v3623
      %3625 = vdwg.mxu0
      %3626 = vmatprep.subr.mxu0 %v2788
      %3627 = vmatpush1.msra.mxu0 %v2787
      %3628 = vmatprep.subr.mxu0 %v2887
      %3629 = vmatpush1.msra.mxu0 %v2886
      %3630 = vmatprep.subr.mxu0 %v2953
      %3631 = vmatpush1.msra.mxu0 %v2952
      %3632 = vmatprep.subr.mxu0 %v3037
      %3633 = vmatpush1.msra.mxu0 %v3034
      %3634 = vmatprep.subr.mxu0 0.0
      %3635 = vmatpush1.msra.mxu0 0.0
      %3636 = vmatprep.subr.mxu0 0.0
      %3637 = vmatpush1.msra.mxu0 0.0
      %3638 = vmatprep.subr.mxu0 0.0
      %3639 = vmatpush1.msra.mxu0 0.0
      %3640 = vmatprep.subr.mxu0 0.0
      %3641 = vmatpush1.msra.mxu0 0.0
      %3642 = vmatprep.subr.mxu0 0.0
      %3643 = vmatpush1.msra.mxu0 0.0
      %3644 = vmatprep.subr.mxu0 0.0
      %3645 = vmatpush1.msra.mxu0 0.0
      %3646 = vmatprep.subr.mxu0 0.0
      %3647 = vmatpush1.msra.mxu0 0.0
      %3648 = vmatprep.subr.mxu0 0.0
      %3649 = vmatpush1.msra.mxu0 0.0
      %3650 = vmatprep.subr.mxu0 0.0
      %3651 = vmatpush1.msra.mxu0 0.0
      %3652 = vmatprep.subr.mxu0 0.0
      %3653 = vmatpush1.msra.mxu0 0.0
      %3654 = vmatprep.subr.mxu0 0.0
      %3655 = vmatpush1.msra.mxu0 0.0
      %3656 = vmatprep.subr.mxu0 0.0
      %3657 = vmatpush1.msra.mxu0 0.0
      %3658 = vmatprep.subr.mxu0 0.0
      %3659 = vmatpush1.msra.mxu0 0.0
      %3660 = vmatprep.subr.mxu0 0.0
      %3661 = vmatpush1.msra.mxu0 0.0
      %3662 = vmatprep.subr.mxu0 0.0
      %3663 = vmatpush1.msra.mxu0 0.0
      %3664 = vmatprep.subr.mxu0 0.0
      %3665 = vmatpush1.msra.mxu0 0.0
      %3666 = vmatprep.subr.mxu0 0.0
      %3667 = vmatpush1.msra.mxu0 0.0
      %3668 = vmatprep.subr.mxu0 0.0
      %3669 = vmatpush1.msra.mxu0 0.0
      %3670 = vmatprep.subr.mxu0 0.0
      %3671 = vmatpush1.msra.mxu0 0.0
      %3672 = vmatprep.subr.mxu0 0.0
      %3673 = vmatpush1.msra.mxu0 0.0
      %3674 = vmatprep.subr.mxu0 0.0
      %3675 = vmatpush1.msra.mxu0 0.0
      %3676 = vmatprep.subr.mxu0 0.0
      %3677 = vmatpush1.msra.mxu0 0.0
      %3678 = vmatprep.subr.mxu0 0.0
      %3679 = vmatpush1.msra.mxu0 0.0
      %3680 = vmatprep.subr.mxu0 0.0
      %3681 = vmatpush1.msra.mxu0 0.0
      %3682 = vmatprep.subr.mxu0 0.0
      %3683 = vmatpush1.msra.mxu0 0.0
      %3684 = vmatprep.subr.mxu0 0.0
      %3685 = vmatpush1.msra.mxu0 0.0
      %3686 = vmatprep.subr.mxu0 0.0
      %3687 = vmatpush1.msra.mxu0 0.0
      %3688 = vmatprep.subr.mxu0 0.0
      %3689 = vmatpush1.msra.mxu0 0.0
      %3690 = vmatprep.mubr.f32.mxu0 0.0
      %3691 = vmatmul.mubr.f32.gmra.mrb[0].mxu0 %v2986
      %v3692 = vpop.f32.mrb[0].mxu0
      %v3693 = vadd.f32 %v2977, %v3692
      %v3694 = vpop.f32.mrb[0].mxu0
      %v3695 = vadd.f32 %v2977, %v3694
      %3696 = vmatprep.mubr.f32.mxu0 0.0
      %3697 = vmatmul.mubr.f32.gmra.mrb[0].mxu0 %v2989
      %v3698 = vpop.f32.mrb[0].mxu0
      %v3699 = vadd.f32 %v2982, %v3698
      %v3700 = vpop.f32.mrb[0].mxu0
      %v3701 = vadd.f32 %v2982, %v3700
      %3702 = vdwg.mxu0
      %3703 = vmatprep.subr.mxu0 %v2790
      %3704 = vmatpush1.msra.mxu0 %v2789
      %3705 = vmatprep.subr.mxu0 %v2889
      %3706 = vmatpush1.msra.mxu0 %v2888
      %3707 = vmatprep.subr.mxu0 %v2955
      %3708 = vmatpush1.msra.mxu0 %v2954
      %3709 = vmatprep.subr.mxu0 %v3043
      %3710 = vmatpush1.msra.mxu0 %v3040
      %3711 = vmatprep.subr.mxu0 0.0
      %3712 = vmatpush1.msra.mxu0 0.0
      %3713 = vmatprep.subr.mxu0 0.0
      %3714 = vmatpush1.msra.mxu0 0.0
      %3715 = vmatprep.subr.mxu0 0.0
      %3716 = vmatpush1.msra.mxu0 0.0
      %3717 = vmatprep.subr.mxu0 0.0
      %3718 = vmatpush1.msra.mxu0 0.0
      %3719 = vmatprep.subr.mxu0 0.0
      %3720 = vmatpush1.msra.mxu0 0.0
      %3721 = vmatprep.subr.mxu0 0.0
      %3722 = vmatpush1.msra.mxu0 0.0
      %3723 = vmatprep.subr.mxu0 0.0
      %3724 = vmatpush1.msra.mxu0 0.0
      %3725 = vmatprep.subr.mxu0 0.0
      %3726 = vmatpush1.msra.mxu0 0.0
      %3727 = vmatprep.subr.mxu0 0.0
      %3728 = vmatpush1.msra.mxu0 0.0
      %3729 = vmatprep.subr.mxu0 0.0
      %3730 = vmatpush1.msra.mxu0 0.0
      %3731 = vmatprep.subr.mxu0 0.0
      %3732 = vmatpush1.msra.mxu0 0.0
      %3733 = vmatprep.subr.mxu0 0.0
      %3734 = vmatpush1.msra.mxu0 0.0
      %3735 = vmatprep.subr.mxu0 0.0
      %3736 = vmatpush1.msra.mxu0 0.0
      %3737 = vmatprep.subr.mxu0 0.0
      %3738 = vmatpush1.msra.mxu0 0.0
      %3739 = vmatprep.subr.mxu0 0.0
      %3740 = vmatpush1.msra.mxu0 0.0
      %3741 = vmatprep.subr.mxu0 0.0
      %3742 = vmatpush1.msra.mxu0 0.0
      %3743 = vmatprep.subr.mxu0 0.0
      %3744 = vmatpush1.msra.mxu0 0.0
      %3745 = vmatprep.subr.mxu0 0.0
      %3746 = vmatpush1.msra.mxu0 0.0
      %3747 = vmatprep.subr.mxu0 0.0
      %3748 = vmatpush1.msra.mxu0 0.0
      %3749 = vmatprep.subr.mxu0 0.0
      %3750 = vmatpush1.msra.mxu0 0.0
      %3751 = vmatprep.subr.mxu0 0.0
      %3752 = vmatpush1.msra.mxu0 0.0
      %3753 = vmatprep.subr.mxu0 0.0
      %3754 = vmatpush1.msra.mxu0 0.0
      %3755 = vmatprep.subr.mxu0 0.0
      %3756 = vmatpush1.msra.mxu0 0.0
      %3757 = vmatprep.subr.mxu0 0.0
      %3758 = vmatpush1.msra.mxu0 0.0
      %3759 = vmatprep.subr.mxu0 0.0
      %3760 = vmatpush1.msra.mxu0 0.0
      %3761 = vmatprep.subr.mxu0 0.0
      %3762 = vmatpush1.msra.mxu0 0.0
      %3763 = vmatprep.subr.mxu0 0.0
      %3764 = vmatpush1.msra.mxu0 0.0
      %3765 = vmatprep.subr.mxu0 0.0
      %3766 = vmatpush1.msra.mxu0 0.0
      %3767 = vmatprep.mubr.f32.mxu0 0.0
      %3768 = vmatmul.mubr.f32.gmra.mrb[0].mxu0 %v2986
      %v3769 = vpop.f32.mrb[0].mxu0
      %v3770 = vadd.f32 %v2977, %v3769
      %v3771 = vpop.f32.mrb[0].mxu0
      %v3772 = vadd.f32 %v2977, %v3771
      %3773 = vmatprep.mubr.f32.mxu0 0.0
      %3774 = vmatmul.mubr.f32.gmra.mrb[0].mxu0 %v2989
      %v3775 = vpop.f32.mrb[0].mxu0
      %v3776 = vadd.f32 %v2982, %v3775
      %v3777 = vpop.f32.mrb[0].mxu0
      %v3778 = vadd.f32 %v2982, %v3777
      %3779 = vdwg.mxu0
      %3780 = vmatprep.subr.mxu0 %v2792
      %3781 = vmatpush1.msra.mxu0 %v2791
      %3782 = vmatprep.subr.mxu0 %v2891
      %3783 = vmatpush1.msra.mxu0 %v2890
      %3784 = vmatprep.subr.mxu0 %v2957
      %3785 = vmatpush1.msra.mxu0 %v2956
      %3786 = vmatprep.subr.mxu0 %v3049
      %3787 = vmatpush1.msra.mxu0 %v3046
      %3788 = vmatprep.subr.mxu0 0.0
      %3789 = vmatpush1.msra.mxu0 0.0
      %3790 = vmatprep.subr.mxu0 0.0
      %3791 = vmatpush1.msra.mxu0 0.0
      %3792 = vmatprep.subr.mxu0 0.0
      %3793 = vmatpush1.msra.mxu0 0.0
      %3794 = vmatprep.subr.mxu0 0.0
      %3795 = vmatpush1.msra.mxu0 0.0
      %3796 = vmatprep.subr.mxu0 0.0
      %3797 = vmatpush1.msra.mxu0 0.0
      %3798 = vmatprep.subr.mxu0 0.0
      %3799 = vmatpush1.msra.mxu0 0.0
      %3800 = vmatprep.subr.mxu0 0.0
      %3801 = vmatpush1.msra.mxu0 0.0
      %3802 = vmatprep.subr.mxu0 0.0
      %3803 = vmatpush1.msra.mxu0 0.0
      %3804 = vmatprep.subr.mxu0 0.0
      %3805 = vmatpush1.msra.mxu0 0.0
      %3806 = vmatprep.subr.mxu0 0.0
      %3807 = vmatpush1.msra.mxu0 0.0
      %3808 = vmatprep.subr.mxu0 0.0
      %3809 = vmatpush1.msra.mxu0 0.0
      %3810 = vmatprep.subr.mxu0 0.0
      %3811 = vmatpush1.msra.mxu0 0.0
      %3812 = vmatprep.subr.mxu0 0.0
      %3813 = vmatpush1.msra.mxu0 0.0
      %3814 = vmatprep.subr.mxu0 0.0
      %3815 = vmatpush1.msra.mxu0 0.0
      %3816 = vmatprep.subr.mxu0 0.0
      %3817 = vmatpush1.msra.mxu0 0.0
      %3818 = vmatprep.subr.mxu0 0.0
      %3819 = vmatpush1.msra.mxu0 0.0
      %3820 = vmatprep.subr.mxu0 0.0
      %3821 = vmatpush1.msra.mxu0 0.0
      %3822 = vmatprep.subr.mxu0 0.0
      %3823 = vmatpush1.msra.mxu0 0.0
      %3824 = vmatprep.subr.mxu0 0.0
      %3825 = vmatpush1.msra.mxu0 0.0
      %3826 = vmatprep.subr.mxu0 0.0
      %3827 = vmatpush1.msra.mxu0 0.0
      %3828 = vmatprep.subr.mxu0 0.0
      %3829 = vmatpush1.msra.mxu0 0.0
      %3830 = vmatprep.subr.mxu0 0.0
      %3831 = vmatpush1.msra.mxu0 0.0
      %3832 = vmatprep.subr.mxu0 0.0
      %3833 = vmatpush1.msra.mxu0 0.0
      %3834 = vmatprep.subr.mxu0 0.0
      %3835 = vmatpush1.msra.mxu0 0.0
      %3836 = vmatprep.subr.mxu0 0.0
      %3837 = vmatpush1.msra.mxu0 0.0
      %3838 = vmatprep.subr.mxu0 0.0
      %3839 = vmatpush1.msra.mxu0 0.0
      %3840 = vmatprep.subr.mxu0 0.0
      %3841 = vmatpush1.msra.mxu0 0.0
      %3842 = vmatprep.subr.mxu0 0.0
      %3843 = vmatpush1.msra.mxu0 0.0
      %3844 = vmatprep.mubr.f32.mxu0 0.0
      %3845 = vmatmul.mubr.f32.gmra.mrb[0].mxu0 %v2986
      %v3846 = vpop.f32.mrb[0].mxu0
      %v3847 = vadd.f32 %v2977, %v3846
      %v3848 = vpop.f32.mrb[0].mxu0
      %v3849 = vadd.f32 %v2977, %v3848
      %3850 = vmatprep.mubr.f32.mxu0 0.0
      %3851 = vmatmul.mubr.f32.gmra.mrb[0].mxu0 %v2989
      %v3852 = vpop.f32.mrb[0].mxu0
      %v3853 = vadd.f32 %v2982, %v3852
      %v3854 = vpop.f32.mrb[0].mxu0
      %v3855 = vadd.f32 %v2982, %v3854
      %3856 = vdwg.mxu0
      %3857 = vmatprep.subr.mxu0 %v2794
      %3858 = vmatpush1.msra.mxu0 %v2793
      %3859 = vmatprep.subr.mxu0 %v2893
      %3860 = vmatpush1.msra.mxu0 %v2892
      %3861 = vmatprep.subr.mxu0 %v2959
      %3862 = vmatpush1.msra.mxu0 %v2958
      %3863 = vmatprep.subr.mxu0 %v3055
      %3864 = vmatpush1.msra.mxu0 %v3052
      %3865 = vmatprep.subr.mxu0 0.0
      %3866 = vmatpush1.msra.mxu0 0.0
      %3867 = vmatprep.subr.mxu0 0.0
      %3868 = vmatpush1.msra.mxu0 0.0
      %3869 = vmatprep.subr.mxu0 0.0
      %3870 = vmatpush1.msra.mxu0 0.0
      %3871 = vmatprep.subr.mxu0 0.0
      %3872 = vmatpush1.msra.mxu0 0.0
      %3873 = vmatprep.subr.mxu0 0.0
      %3874 = vmatpush1.msra.mxu0 0.0
      %3875 = vmatprep.subr.mxu0 0.0
      %3876 = vmatpush1.msra.mxu0 0.0
      %3877 = vmatprep.subr.mxu0 0.0
      %3878 = vmatpush1.msra.mxu0 0.0
      %3879 = vmatprep.subr.mxu0 0.0
      %3880 = vmatpush1.msra.mxu0 0.0
      %3881 = vmatprep.subr.mxu0 0.0
      %3882 = vmatpush1.msra.mxu0 0.0
      %3883 = vmatprep.subr.mxu0 0.0
      %3884 = vmatpush1.msra.mxu0 0.0
      %3885 = vmatprep.subr.mxu0 0.0
      %3886 = vmatpush1.msra.mxu0 0.0
      %3887 = vmatprep.subr.mxu0 0.0
      %3888 = vmatpush1.msra.mxu0 0.0
      %3889 = vmatprep.subr.mxu0 0.0
      %3890 = vmatpush1.msra.mxu0 0.0
      %3891 = vmatprep.subr.mxu0 0.0
      %3892 = vmatpush1.msra.mxu0 0.0
      %3893 = vmatprep.subr.mxu0 0.0
      %3894 = vmatpush1.msra.mxu0 0.0
      %3895 = vmatprep.subr.mxu0 0.0
      %3896 = vmatpush1.msra.mxu0 0.0
      %3897 = vmatprep.subr.mxu0 0.0
      %3898 = vmatpush1.msra.mxu0 0.0
      %3899 = vmatprep.subr.mxu0 0.0
      %3900 = vmatpush1.msra.mxu0 0.0
      %3901 = vmatprep.subr.mxu0 0.0
      %3902 = vmatpush1.msra.mxu0 0.0
      %3903 = vmatprep.subr.mxu0 0.0
      %3904 = vmatpush1.msra.mxu0 0.0
      %3905 = vmatprep.subr.mxu0 0.0
      %3906 = vmatpush1.msra.mxu0 0.0
      %3907 = vmatprep.subr.mxu0 0.0
      %3908 = vmatpush1.msra.mxu0 0.0
      %3909 = vmatprep.subr.mxu0 0.0
      %3910 = vmatpush1.msra.mxu0 0.0
      %3911 = vmatprep.subr.mxu0 0.0
      %3912 = vmatpush1.msra.mxu0 0.0
      %3913 = vmatprep.subr.mxu0 0.0
      %3914 = vmatpush1.msra.mxu0 0.0
      %3915 = vmatprep.subr.mxu0 0.0
      %3916 = vmatpush1.msra.mxu0 0.0
      %3917 = vmatprep.subr.mxu0 0.0
      %3918 = vmatpush1.msra.mxu0 0.0
      %3919 = vmatprep.subr.mxu0 0.0
      %3920 = vmatpush1.msra.mxu0 0.0
      %3921 = vmatprep.mubr.f32.mxu0 0.0
      %3922 = vmatmul.mubr.f32.gmra.mrb[0].mxu0 %v2986
      %v3923 = vpop.f32.mrb[0].mxu0
      %v3924 = vadd.f32 %v2977, %v3923
      %v3925 = vpop.f32.mrb[0].mxu0
      %v3926 = vadd.f32 %v2977, %v3925
      %3927 = vmatprep.mubr.f32.mxu0 0.0
      %3928 = vmatmul.mubr.f32.gmra.mrb[0].mxu0 %v2989
      %v3929 = vpop.f32.mrb[0].mxu0
      %v3930 = vadd.f32 %v2982, %v3929
      %v3931 = vpop.f32.mrb[0].mxu0
      %v3932 = vadd.f32 %v2982, %v3931
      %3933 = vdwg.mxu0
      %3934 = vmatprep.subr.mxu0 %v2796
      %3935 = vmatpush1.msra.mxu0 %v2795
      %3936 = vmatprep.subr.mxu0 %v2895
      %3937 = vmatpush1.msra.mxu0 %v2894
      %3938 = vmatprep.subr.mxu0 %v2961
      %3939 = vmatpush1.msra.mxu0 %v2960
      %3940 = vmatprep.subr.mxu0 %v3061
      %3941 = vmatpush1.msra.mxu0 %v3058
      %3942 = vmatprep.subr.mxu0 0.0
      %3943 = vmatpush1.msra.mxu0 0.0
      %3944 = vmatprep.subr.mxu0 0.0
      %3945 = vmatpush1.msra.mxu0 0.0
      %3946 = vmatprep.subr.mxu0 0.0
      %3947 = vmatpush1.msra.mxu0 0.0
      %3948 = vmatprep.subr.mxu0 0.0
      %3949 = vmatpush1.msra.mxu0 0.0
      %3950 = vmatprep.subr.mxu0 0.0
      %3951 = vmatpush1.msra.mxu0 0.0
      %3952 = vmatprep.subr.mxu0 0.0
      %3953 = vmatpush1.msra.mxu0 0.0
      %3954 = vmatprep.subr.mxu0 0.0
      %3955 = vmatpush1.msra.mxu0 0.0
      %3956 = vmatprep.subr.mxu0 0.0
      %3957 = vmatpush1.msra.mxu0 0.0
      %3958 = vmatprep.subr.mxu0 0.0
      %3959 = vmatpush1.msra.mxu0 0.0
      %3960 = vmatprep.subr.mxu0 0.0
      %3961 = vmatpush1.msra.mxu0 0.0
      %3962 = vmatprep.subr.mxu0 0.0
      %3963 = vmatpush1.msra.mxu0 0.0
      %3964 = vmatprep.subr.mxu0 0.0
      %3965 = vmatpush1.msra.mxu0 0.0
      %3966 = vmatprep.subr.mxu0 0.0
      %3967 = vmatpush1.msra.mxu0 0.0
      %3968 = vmatprep.subr.mxu0 0.0
      %3969 = vmatpush1.msra.mxu0 0.0
      %3970 = vmatprep.subr.mxu0 0.0
      %3971 = vmatpush1.msra.mxu0 0.0
      %3972 = vmatprep.subr.mxu0 0.0
      %3973 = vmatpush1.msra.mxu0 0.0
      %3974 = vmatprep.subr.mxu0 0.0
      %3975 = vmatpush1.msra.mxu0 0.0
      %3976 = vmatprep.subr.mxu0 0.0
      %3977 = vmatpush1.msra.mxu0 0.0
      %3978 = vmatprep.subr.mxu0 0.0
      %3979 = vmatpush1.msra.mxu0 0.0
      %3980 = vmatprep.subr.mxu0 0.0
      %3981 = vmatpush1.msra.mxu0 0.0
      %3982 = vmatprep.subr.mxu0 0.0
      %3983 = vmatpush1.msra.mxu0 0.0
      %3984 = vmatprep.subr.mxu0 0.0
      %3985 = vmatpush1.msra.mxu0 0.0
      %3986 = vmatprep.subr.mxu0 0.0
      %3987 = vmatpush1.msra.mxu0 0.0
      %3988 = vmatprep.subr.mxu0 0.0
      %3989 = vmatpush1.msra.mxu0 0.0
      %3990 = vmatprep.subr.mxu0 0.0
      %3991 = vmatpush1.msra.mxu0 0.0
      %3992 = vmatprep.subr.mxu0 0.0
      %3993 = vmatpush1.msra.mxu0 0.0
      %3994 = vmatprep.subr.mxu0 0.0
      %3995 = vmatpush1.msra.mxu0 0.0
      %3996 = vmatprep.subr.mxu0 0.0
      %3997 = vmatpush1.msra.mxu0 0.0
      %3998 = vmatprep.mubr.f32.mxu0 0.0
      %3999 = vmatmul.mubr.f32.gmra.mrb[0].mxu0 %v2986
      %v4000 = vpop.f32.mrb[0].mxu0
      %v4001 = vadd.f32 %v2977, %v4000
      %v4002 = vpop.f32.mrb[0].mxu0
      %v4003 = vadd.f32 %v2977, %v4002
      %4004 = vmatprep.mubr.f32.mxu0 0.0
      %4005 = vmatmul.mubr.f32.gmra.mrb[0].mxu0 %v2989
      %v4006 = vpop.f32.mrb[0].mxu0
      %v4007 = vadd.f32 %v2982, %v4006
      %v4008 = vpop.f32.mrb[0].mxu0
      %v4009 = vadd.f32 %v2982, %v4008
      %4010 = vdwg.mxu0
      %4011 = vmatprep.subr.mxu0 %v2798
      %4012 = vmatpush1.msra.mxu0 %v2797
      %4013 = vmatprep.subr.mxu0 %v2897
      %4014 = vmatpush1.msra.mxu0 %v2896
      %4015 = vmatprep.subr.mxu0 %v2963
      %4016 = vmatpush1.msra.mxu0 %v2962
      %4017 = vmatprep.subr.mxu0 %v3067
      %4018 = vmatpush1.msra.mxu0 %v3064
      %4019 = vmatprep.subr.mxu0 0.0
      %4020 = vmatpush1.msra.mxu0 0.0
      %4021 = vmatprep.subr.mxu0 0.0
      %4022 = vmatpush1.msra.mxu0 0.0
      %4023 = vmatprep.subr.mxu0 0.0
      %4024 = vmatpush1.msra.mxu0 0.0
      %4025 = vmatprep.subr.mxu0 0.0
      %4026 = vmatpush1.msra.mxu0 0.0
      %4027 = vmatprep.subr.mxu0 0.0
      %4028 = vmatpush1.msra.mxu0 0.0
      %4029 = vmatprep.subr.mxu0 0.0
      %4030 = vmatpush1.msra.mxu0 0.0
      %4031 = vmatprep.subr.mxu0 0.0
      %4032 = vmatpush1.msra.mxu0 0.0
      %4033 = vmatprep.subr.mxu0 0.0
      %4034 = vmatpush1.msra.mxu0 0.0
      %4035 = vmatprep.subr.mxu0 0.0
      %4036 = vmatpush1.msra.mxu0 0.0
      %4037 = vmatprep.subr.mxu0 0.0
      %4038 = vmatpush1.msra.mxu0 0.0
      %4039 = vmatprep.subr.mxu0 0.0
      %4040 = vmatpush1.msra.mxu0 0.0
      %4041 = vmatprep.subr.mxu0 0.0
      %4042 = vmatpush1.msra.mxu0 0.0
      %4043 = vmatprep.subr.mxu0 0.0
      %4044 = vmatpush1.msra.mxu0 0.0
      %4045 = vmatprep.subr.mxu0 0.0
      %4046 = vmatpush1.msra.mxu0 0.0
      %4047 = vmatprep.subr.mxu0 0.0
      %4048 = vmatpush1.msra.mxu0 0.0
      %4049 = vmatprep.subr.mxu0 0.0
      %4050 = vmatpush1.msra.mxu0 0.0
      %4051 = vmatprep.subr.mxu0 0.0
      %4052 = vmatpush1.msra.mxu0 0.0
      %4053 = vmatprep.subr.mxu0 0.0
      %4054 = vmatpush1.msra.mxu0 0.0
      %4055 = vmatprep.subr.mxu0 0.0
      %4056 = vmatpush1.msra.mxu0 0.0
      %4057 = vmatprep.subr.mxu0 0.0
      %4058 = vmatpush1.msra.mxu0 0.0
      %4059 = vmatprep.subr.mxu0 0.0
      %4060 = vmatpush1.msra.mxu0 0.0
      %4061 = vmatprep.subr.mxu0 0.0
      %4062 = vmatpush1.msra.mxu0 0.0
      %4063 = vmatprep.subr.mxu0 0.0
      %4064 = vmatpush1.msra.mxu0 0.0
      %4065 = vmatprep.subr.mxu0 0.0
      %4066 = vmatpush1.msra.mxu0 0.0
      %4067 = vmatprep.subr.mxu0 0.0
      %4068 = vmatpush1.msra.mxu0 0.0
      %4069 = vmatprep.subr.mxu0 0.0
      %4070 = vmatpush1.msra.mxu0 0.0
      %4071 = vmatprep.subr.mxu0 0.0
      %4072 = vmatpush1.msra.mxu0 0.0
      %4073 = vmatprep.subr.mxu0 0.0
      %4074 = vmatpush1.msra.mxu0 0.0
      %4075 = vmatprep.mubr.f32.mxu0 0.0
      %4076 = vmatmul.mubr.f32.gmra.mrb[0].mxu0 %v2986
      %v4077 = vpop.f32.mrb[0].mxu0
      %v4078 = vadd.f32 %v2977, %v4077
      %v4079 = vpop.f32.mrb[0].mxu0
      %v4080 = vadd.f32 %v2977, %v4079
      %4081 = vmatprep.mubr.f32.mxu0 0.0
      %4082 = vmatmul.mubr.f32.gmra.mrb[0].mxu0 %v2989
      %v4083 = vpop.f32.mrb[0].mxu0
      %v4084 = vadd.f32 %v2982, %v4083
      %v4085 = vpop.f32.mrb[0].mxu0
      %v4086 = vadd.f32 %v2982, %v4085
      %4087 = vdwg.mxu0
      %4088 = vmatprep.subr.mxu0 %v2800
      %4089 = vmatpush1.msra.mxu0 %v2799
      %4090 = vmatprep.subr.mxu0 %v2899
      %4091 = vmatpush1.msra.mxu0 %v2898
      %4092 = vmatprep.subr.mxu0 %v2965
      %4093 = vmatpush1.msra.mxu0 %v2964
      %4094 = vmatprep.subr.mxu0 %v3073
      %4095 = vmatpush1.msra.mxu0 %v3070
      %4096 = vmatprep.subr.mxu0 0.0
      %4097 = vmatpush1.msra.mxu0 0.0
      %4098 = vmatprep.subr.mxu0 0.0
      %4099 = vmatpush1.msra.mxu0 0.0
      %4100 = vmatprep.subr.mxu0 0.0
      %4101 = vmatpush1.msra.mxu0 0.0
      %4102 = vmatprep.subr.mxu0 0.0
      %4103 = vmatpush1.msra.mxu0 0.0
      %4104 = vmatprep.subr.mxu0 0.0
      %4105 = vmatpush1.msra.mxu0 0.0
      %4106 = vmatprep.subr.mxu0 0.0
      %4107 = vmatpush1.msra.mxu0 0.0
      %4108 = vmatprep.subr.mxu0 0.0
      %4109 = vmatpush1.msra.mxu0 0.0
      %4110 = vmatprep.subr.mxu0 0.0
      %4111 = vmatpush1.msra.mxu0 0.0
      %4112 = vmatprep.subr.mxu0 0.0
      %4113 = vmatpush1.msra.mxu0 0.0
      %4114 = vmatprep.subr.mxu0 0.0
      %4115 = vmatpush1.msra.mxu0 0.0
      %4116 = vmatprep.subr.mxu0 0.0
      %4117 = vmatpush1.msra.mxu0 0.0
      %4118 = vmatprep.subr.mxu0 0.0
      %4119 = vmatpush1.msra.mxu0 0.0
      %4120 = vmatprep.subr.mxu0 0.0
      %4121 = vmatpush1.msra.mxu0 0.0
      %4122 = vmatprep.subr.mxu0 0.0
      %4123 = vmatpush1.msra.mxu0 0.0
      %4124 = vmatprep.subr.mxu0 0.0
      %4125 = vmatpush1.msra.mxu0 0.0
      %4126 = vmatprep.subr.mxu0 0.0
      %4127 = vmatpush1.msra.mxu0 0.0
      %4128 = vmatprep.subr.mxu0 0.0
      %4129 = vmatpush1.msra.mxu0 0.0
      %4130 = vmatprep.subr.mxu0 0.0
      %4131 = vmatpush1.msra.mxu0 0.0
      %4132 = vmatprep.subr.mxu0 0.0
      %4133 = vmatpush1.msra.mxu0 0.0
      %4134 = vmatprep.subr.mxu0 0.0
      %4135 = vmatpush1.msra.mxu0 0.0
      %4136 = vmatprep.subr.mxu0 0.0
      %4137 = vmatpush1.msra.mxu0 0.0
      %4138 = vmatprep.subr.mxu0 0.0
      %4139 = vmatpush1.msra.mxu0 0.0
      %4140 = vmatprep.subr.mxu0 0.0
      %4141 = vmatpush1.msra.mxu0 0.0
      %4142 = vmatprep.subr.mxu0 0.0
      %4143 = vmatpush1.msra.mxu0 0.0
      %4144 = vmatprep.subr.mxu0 0.0
      %4145 = vmatpush1.msra.mxu0 0.0
      %4146 = vmatprep.subr.mxu0 0.0
      %4147 = vmatpush1.msra.mxu0 0.0
      %4148 = vmatprep.subr.mxu0 0.0
      %4149 = vmatpush1.msra.mxu0 0.0
      %4150 = vmatprep.subr.mxu0 0.0
      %4151 = vmatpush1.msra.mxu0 0.0
      %4152 = vmatprep.mubr.f32.mxu0 0.0
      %4153 = vmatmul.mubr.f32.gmra.mrb[0].mxu0 %v2986
      %v4154 = vpop.f32.mrb[0].mxu0
      %v4155 = vadd.f32 %v2977, %v4154
      %v4156 = vpop.f32.mrb[0].mxu0
      %v4157 = vadd.f32 %v2977, %v4156
      %4158 = vmatprep.mubr.f32.mxu0 0.0
      %4159 = vmatmul.mubr.f32.gmra.mrb[0].mxu0 %v2989
      %v4160 = vpop.f32.mrb[0].mxu0
      %v4161 = vadd.f32 %v2982, %v4160
      %v4162 = vpop.f32.mrb[0].mxu0
      %v4163 = vadd.f32 %v2982, %v4162
      %4164 = vdwg.mxu0
      %4165 = vmatprep.subr.mxu0 %v2802
      %4166 = vmatpush1.msra.mxu0 %v2801
      %4167 = vmatprep.subr.mxu0 %v2901
      %4168 = vmatpush1.msra.mxu0 %v2900
      %4169 = vmatprep.subr.mxu0 %v2967
      %4170 = vmatpush1.msra.mxu0 %v2966
      %4171 = vmatprep.subr.mxu0 %v3079
      %4172 = vmatpush1.msra.mxu0 %v3076
      %4173 = vmatprep.subr.mxu0 0.0
      %4174 = vmatpush1.msra.mxu0 0.0
      %4175 = vmatprep.subr.mxu0 0.0
      %4176 = vmatpush1.msra.mxu0 0.0
      %4177 = vmatprep.subr.mxu0 0.0
      %4178 = vmatpush1.msra.mxu0 0.0
      %4179 = vmatprep.subr.mxu0 0.0
      %4180 = vmatpush1.msra.mxu0 0.0
      %4181 = vmatprep.subr.mxu0 0.0
      %4182 = vmatpush1.msra.mxu0 0.0
      %4183 = vmatprep.subr.mxu0 0.0
      %4184 = vmatpush1.msra.mxu0 0.0
      %4185 = vmatprep.subr.mxu0 0.0
      %4186 = vmatpush1.msra.mxu0 0.0
      %4187 = vmatprep.subr.mxu0 0.0
      %4188 = vmatpush1.msra.mxu0 0.0
      %4189 = vmatprep.subr.mxu0 0.0
      %4190 = vmatpush1.msra.mxu0 0.0
      %4191 = vmatprep.subr.mxu0 0.0
      %4192 = vmatpush1.msra.mxu0 0.0
      %4193 = vmatprep.subr.mxu0 0.0
      %4194 = vmatpush1.msra.mxu0 0.0
      %4195 = vmatprep.subr.mxu0 0.0
      %4196 = vmatpush1.msra.mxu0 0.0
      %4197 = vmatprep.subr.mxu0 0.0
      %4198 = vmatpush1.msra.mxu0 0.0
      %4199 = vmatprep.subr.mxu0 0.0
      %4200 = vmatpush1.msra.mxu0 0.0
      %4201 = vmatprep.subr.mxu0 0.0
      %4202 = vmatpush1.msra.mxu0 0.0
      %4203 = vmatprep.subr.mxu0 0.0
      %4204 = vmatpush1.msra.mxu0 0.0
      %4205 = vmatprep.subr.mxu0 0.0
      %4206 = vmatpush1.msra.mxu0 0.0
      %4207 = vmatprep.subr.mxu0 0.0
      %4208 = vmatpush1.msra.mxu0 0.0
      %4209 = vmatprep.subr.mxu0 0.0
      %4210 = vmatpush1.msra.mxu0 0.0
      %4211 = vmatprep.subr.mxu0 0.0
      %4212 = vmatpush1.msra.mxu0 0.0
      %4213 = vmatprep.subr.mxu0 0.0
      %4214 = vmatpush1.msra.mxu0 0.0
      %4215 = vmatprep.subr.mxu0 0.0
      %4216 = vmatpush1.msra.mxu0 0.0
      %4217 = vmatprep.subr.mxu0 0.0
      %4218 = vmatpush1.msra.mxu0 0.0
      %4219 = vmatprep.subr.mxu0 0.0
      %4220 = vmatpush1.msra.mxu0 0.0
      %4221 = vmatprep.subr.mxu0 0.0
      %4222 = vmatpush1.msra.mxu0 0.0
      %4223 = vmatprep.subr.mxu0 0.0
      %4224 = vmatpush1.msra.mxu0 0.0
      %4225 = vmatprep.subr.mxu0 0.0
      %4226 = vmatpush1.msra.mxu0 0.0
      %4227 = vmatprep.subr.mxu0 0.0
      %4228 = vmatpush1.msra.mxu0 0.0
      %4229 = vmatprep.mubr.f32.mxu0 0.0
      %4230 = vmatmul.mubr.f32.gmra.mrb[0].mxu0 %v2986
      %v4231 = vpop.f32.mrb[0].mxu0
      %v4232 = vadd.f32 %v2977, %v4231
      %v4233 = vpop.f32.mrb[0].mxu0
      %v4234 = vadd.f32 %v2977, %v4233
      %4235 = vmatprep.mubr.f32.mxu0 0.0
      %4236 = vmatmul.mubr.f32.gmra.mrb[0].mxu0 %v2989
      %v4237 = vpop.f32.mrb[0].mxu0
      %v4238 = vadd.f32 %v2982, %v4237
      %v4239 = vpop.f32.mrb[0].mxu0
      %v4240 = vadd.f32 %v2982, %v4239
      %4241 = vdwg.mxu0
      %4242 = vmatprep.subr.mxu0 %v2804
      %4243 = vmatpush1.msra.mxu0 %v2803
      %4244 = vmatprep.subr.mxu0 %v2903
      %4245 = vmatpush1.msra.mxu0 %v2902
      %4246 = vmatprep.subr.mxu0 %v2969
      %4247 = vmatpush1.msra.mxu0 %v2968
      %4248 = vmatprep.subr.mxu0 %v3085
      %4249 = vmatpush1.msra.mxu0 %v3082
      %4250 = vmatprep.subr.mxu0 0.0
      %4251 = vmatpush1.msra.mxu0 0.0
      %4252 = vmatprep.subr.mxu0 0.0
      %4253 = vmatpush1.msra.mxu0 0.0
      %4254 = vmatprep.subr.mxu0 0.0
      %4255 = vmatpush1.msra.mxu0 0.0
      %4256 = vmatprep.subr.mxu0 0.0
      %4257 = vmatpush1.msra.mxu0 0.0
      %4258 = vmatprep.subr.mxu0 0.0
      %4259 = vmatpush1.msra.mxu0 0.0
      %4260 = vmatprep.subr.mxu0 0.0
      %4261 = vmatpush1.msra.mxu0 0.0
      %4262 = vmatprep.subr.mxu0 0.0
      %4263 = vmatpush1.msra.mxu0 0.0
      %4264 = vmatprep.subr.mxu0 0.0
      %4265 = vmatpush1.msra.mxu0 0.0
      %4266 = vmatprep.subr.mxu0 0.0
      %4267 = vmatpush1.msra.mxu0 0.0
      %4268 = vmatprep.subr.mxu0 0.0
      %4269 = vmatpush1.msra.mxu0 0.0
      %4270 = vmatprep.subr.mxu0 0.0
      %4271 = vmatpush1.msra.mxu0 0.0
      %4272 = vmatprep.subr.mxu0 0.0
      %4273 = vmatpush1.msra.mxu0 0.0
      %4274 = vmatprep.subr.mxu0 0.0
      %4275 = vmatpush1.msra.mxu0 0.0
      %4276 = vmatprep.subr.mxu0 0.0
      %4277 = vmatpush1.msra.mxu0 0.0
      %4278 = vmatprep.subr.mxu0 0.0
      %4279 = vmatpush1.msra.mxu0 0.0
      %4280 = vmatprep.subr.mxu0 0.0
      %4281 = vmatpush1.msra.mxu0 0.0
      %4282 = vmatprep.subr.mxu0 0.0
      %4283 = vmatpush1.msra.mxu0 0.0
      %4284 = vmatprep.subr.mxu0 0.0
      %4285 = vmatpush1.msra.mxu0 0.0
      %4286 = vmatprep.subr.mxu0 0.0
      %4287 = vmatpush1.msra.mxu0 0.0
      %4288 = vmatprep.subr.mxu0 0.0
      %4289 = vmatpush1.msra.mxu0 0.0
      %4290 = vmatprep.subr.mxu0 0.0
      %4291 = vmatpush1.msra.mxu0 0.0
      %4292 = vmatprep.subr.mxu0 0.0
      %4293 = vmatpush1.msra.mxu0 0.0
      %4294 = vmatprep.subr.mxu0 0.0
      %4295 = vmatpush1.msra.mxu0 0.0
      %4296 = vmatprep.subr.mxu0 0.0
      %4297 = vmatpush1.msra.mxu0 0.0
      %4298 = vmatprep.subr.mxu0 0.0
      %4299 = vmatpush1.msra.mxu0 0.0
      %4300 = vmatprep.subr.mxu0 0.0
      %4301 = vmatpush1.msra.mxu0 0.0
      %4302 = vmatprep.subr.mxu0 0.0
      %4303 = vmatpush1.msra.mxu0 0.0
      %4304 = vmatprep.subr.mxu0 0.0
      %4305 = vmatpush1.msra.mxu0 0.0
      %4306 = vmatprep.mubr.f32.mxu0 0.0
      %4307 = vmatmul.mubr.f32.gmra.mrb[0].mxu0 %v2986
      %v4308 = vpop.f32.mrb[0].mxu0
      %v4309 = vadd.f32 %v2977, %v4308
      %v4310 = vpop.f32.mrb[0].mxu0
      %v4311 = vadd.f32 %v2977, %v4310
      %4312 = vmatprep.mubr.f32.mxu0 0.0
      %4313 = vmatmul.mubr.f32.gmra.mrb[0].mxu0 %v2989
      %v4314 = vpop.f32.mrb[0].mxu0
      %v4315 = vadd.f32 %v2982, %v4314
      %v4316 = vpop.f32.mrb[0].mxu0
      %v4317 = vadd.f32 %v2982, %v4316
      %4318 = vdwg.mxu0
      %v4319 = vmax.f32 %v3154, 0.0
      %v4320 = vmax.f32 %v3156, 0.0
      %v4321 = vmax.f32 %v3231, 0.0
      %v4322 = vmax.f32 %v3233, 0.0
      %v4323 = vmax.f32 %v3308, 0.0
      %v4324 = vmax.f32 %v3310, 0.0
      %v4325 = vmax.f32 %v3385, 0.0
      %v4326 = vmax.f32 %v3387, 0.0
      %v4327 = vmax.f32 %v3462, 0.0
      %v4328 = vmax.f32 %v3464, 0.0
      %v4329 = vmax.f32 %v3539, 0.0
      %v4330 = vmax.f32 %v3541, 0.0
      %v4331 = vmax.f32 %v3616, 0.0
      %v4332 = vmax.f32 %v3618, 0.0
      %v4333 = vmax.f32 %v3693, 0.0
      %v4334 = vmax.f32 %v3695, 0.0
      %v4335 = vmax.f32 %v3770, 0.0
      %v4336 = vmax.f32 %v3772, 0.0
      %v4337 = vmax.f32 %v3847, 0.0
      %v4338 = vmax.f32 %v3849, 0.0
      %v4339 = vmax.f32 %v3924, 0.0
      %v4340 = vmax.f32 %v3926, 0.0
      %v4341 = vmax.f32 %v4001, 0.0
      %v4342 = vmax.f32 %v4003, 0.0
      %v4343 = vmax.f32 %v4078, 0.0
      %v4344 = vmax.f32 %v4080, 0.0
      %v4345 = vmax.f32 %v4155, 0.0
      %v4346 = vmax.f32 %v4157, 0.0
      %v4347 = vmax.f32 %v4232, 0.0
      %v4348 = vmax.f32 %v4234, 0.0
      %v4349 = vmax.f32 %v4309, 0.0
      %v4350 = vmax.f32 %v4311, 0.0
      %v4351 = vmax.f32 %v3160, 0.0
      %v4352 = vmax.f32 %v3162, 0.0
      %v4353 = vmax.f32 %v3237, 0.0
      %v4354 = vmax.f32 %v3239, 0.0
      %v4355 = vmax.f32 %v3314, 0.0
      %v4356 = vmax.f32 %v3316, 0.0
      %v4357 = vmax.f32 %v3391, 0.0
      %v4358 = vmax.f32 %v3393, 0.0
      %v4359 = vmax.f32 %v3468, 0.0
      %v4360 = vmax.f32 %v3470, 0.0
      %v4361 = vmax.f32 %v3545, 0.0
      %v4362 = vmax.f32 %v3547, 0.0
      %v4363 = vmax.f32 %v3622, 0.0
      %v4364 = vmax.f32 %v3624, 0.0
      %v4365 = vmax.f32 %v3699, 0.0
      %v4366 = vmax.f32 %v3701, 0.0
      %v4367 = vmax.f32 %v3776, 0.0
      %v4368 = vmax.f32 %v3778, 0.0
      %v4369 = vmax.f32 %v3853, 0.0
      %v4370 = vmax.f32 %v3855, 0.0
      %v4371 = vmax.f32 %v3930, 0.0
      %v4372 = vmax.f32 %v3932, 0.0
      %v4373 = vmax.f32 %v4007, 0.0
      %v4374 = vmax.f32 %v4009, 0.0
      %v4375 = vmax.f32 %v4084, 0.0
      %v4376 = vmax.f32 %v4086, 0.0
      %v4377 = vmax.f32 %v4161, 0.0
      %v4378 = vmax.f32 %v4163, 0.0
      %v4379 = vmax.f32 %v4238, 0.0
      %v4380 = vmax.f32 %v4240, 0.0
      %v4381 = vmax.f32 %v4315, 0.0
      %v4382 = vmax.f32 %v4317, 0.0
      %4447 = vrot.lane.b32.xlu0 %v4319, 127
      %v4448 = vpop.permute.xlu0 %4447
      %4449 = vrot.lane.b32.xlu0 %v4320, 127
      %v4450 = vpop.permute.xlu0 %4449
      %4451 = vrot.lane.b32.xlu0 %v4321, 127
      %v4452 = vpop.permute.xlu0 %4451
      %4453 = vrot.lane.b32.xlu0 %v4322, 127
      %v4454 = vpop.permute.xlu0 %4453
      %4455 = vrot.lane.b32.xlu0 %v4323, 127
      %v4456 = vpop.permute.xlu0 %4455
      %4457 = vrot.lane.b32.xlu0 %v4324, 127
      %v4458 = vpop.permute.xlu0 %4457
      %4459 = vrot.lane.b32.xlu0 %v4325, 127
      %v4460 = vpop.permute.xlu0 %4459
      %4461 = vrot.lane.b32.xlu0 %v4326, 127
      %v4462 = vpop.permute.xlu0 %4461
      %4463 = vrot.lane.b32.xlu0 %v4327, 127
      %v4464 = vpop.permute.xlu0 %4463
      %4465 = vrot.lane.b32.xlu0 %v4328, 127
      %v4466 = vpop.permute.xlu0 %4465
      %4467 = vrot.lane.b32.xlu0 %v4329, 127
      %v4468 = vpop.permute.xlu0 %4467
      %4469 = vrot.lane.b32.xlu0 %v4330, 127
      %v4470 = vpop.permute.xlu0 %4469
      %4471 = vrot.lane.b32.xlu0 %v4331, 127
      %v4472 = vpop.permute.xlu0 %4471
      %4473 = vrot.lane.b32.xlu0 %v4332, 127
      %v4474 = vpop.permute.xlu0 %4473
      %4475 = vrot.lane.b32.xlu0 %v4333, 127
      %v4476 = vpop.permute.xlu0 %4475
      %4477 = vrot.lane.b32.xlu0 %v4334, 127
      %v4478 = vpop.permute.xlu0 %4477
      %4479 = vrot.lane.b32.xlu0 %v4335, 127
      %v4480 = vpop.permute.xlu0 %4479
      %4481 = vrot.lane.b32.xlu0 %v4336, 127
      %v4482 = vpop.permute.xlu0 %4481
      %4483 = vrot.lane.b32.xlu0 %v4337, 127
      %v4484 = vpop.permute.xlu0 %4483
      %4485 = vrot.lane.b32.xlu0 %v4338, 127
      %v4486 = vpop.permute.xlu0 %4485
      %4487 = vrot.lane.b32.xlu0 %v4339, 127
      %v4488 = vpop.permute.xlu0 %4487
      %4489 = vrot.lane.b32.xlu0 %v4340, 127
      %v4490 = vpop.permute.xlu0 %4489
      %4491 = vrot.lane.b32.xlu0 %v4341, 127
      %v4492 = vpop.permute.xlu0 %4491
      %4493 = vrot.lane.b32.xlu0 %v4342, 127
      %v4494 = vpop.permute.xlu0 %4493
      %4495 = vrot.lane.b32.xlu0 %v4343, 127
      %v4496 = vpop.permute.xlu0 %4495
      %4497 = vrot.lane.b32.xlu0 %v4344, 127
      %v4498 = vpop.permute.xlu0 %4497
      %4499 = vrot.lane.b32.xlu0 %v4345, 127
      %v4500 = vpop.permute.xlu0 %4499
      %4501 = vrot.lane.b32.xlu0 %v4346, 127
      %v4502 = vpop.permute.xlu0 %4501
      %4503 = vrot.lane.b32.xlu0 %v4347, 127
      %v4504 = vpop.permute.xlu0 %4503
      %4505 = vrot.lane.b32.xlu0 %v4348, 127
      %v4506 = vpop.permute.xlu0 %4505
      %4507 = vrot.lane.b32.xlu0 %v4349, 127
      %v4508 = vpop.permute.xlu0 %4507
      %4509 = vrot.lane.b32.xlu0 %v4350, 127
      %v4510 = vpop.permute.xlu0 %4509
      %4511 = vrot.lane.b32.xlu0 %v4351, 127
      %v4512 = vpop.permute.xlu0 %4511
      %4513 = vrot.lane.b32.xlu0 %v4352, 127
      %v4514 = vpop.permute.xlu0 %4513
      %4515 = vrot.lane.b32.xlu0 %v4353, 127
      %v4516 = vpop.permute.xlu0 %4515
      %4517 = vrot.lane.b32.xlu0 %v4354, 127
      %v4518 = vpop.permute.xlu0 %4517
      %4519 = vrot.lane.b32.xlu0 %v4355, 127
      %v4520 = vpop.permute.xlu0 %4519
      %4521 = vrot.lane.b32.xlu0 %v4356, 127
      %v4522 = vpop.permute.xlu0 %4521
      %4523 = vrot.lane.b32.xlu0 %v4357, 127
      %v4524 = vpop.permute.xlu0 %4523
      %4525 = vrot.lane.b32.xlu0 %v4358, 127
      %v4526 = vpop.permute.xlu0 %4525
      %4527 = vrot.lane.b32.xlu0 %v4359, 127
      %v4528 = vpop.permute.xlu0 %4527
      %4529 = vrot.lane.b32.xlu0 %v4360, 127
      %v4530 = vpop.permute.xlu0 %4529
      %4531 = vrot.lane.b32.xlu0 %v4361, 127
      %v4532 = vpop.permute.xlu0 %4531
      %4533 = vrot.lane.b32.xlu0 %v4362, 127
      %v4534 = vpop.permute.xlu0 %4533
      %4535 = vrot.lane.b32.xlu0 %v4363, 127
      %v4536 = vpop.permute.xlu0 %4535
      %4537 = vrot.lane.b32.xlu0 %v4364, 127
      %v4538 = vpop.permute.xlu0 %4537
      %4539 = vrot.lane.b32.xlu0 %v4365, 127
      %v4540 = vpop.permute.xlu0 %4539
      %4541 = vrot.lane.b32.xlu0 %v4366, 127
      %v4542 = vpop.permute.xlu0 %4541
      %4543 = vrot.lane.b32.xlu0 %v4367, 127
      %v4544 = vpop.permute.xlu0 %4543
      %4545 = vrot.lane.b32.xlu0 %v4368, 127
      %v4546 = vpop.permute.xlu0 %4545
      %4547 = vrot.lane.b32.xlu0 %v4369, 127
      %v4548 = vpop.permute.xlu0 %4547
      %4549 = vrot.lane.b32.xlu0 %v4370, 127
      %v4550 = vpop.permute.xlu0 %4549
      %4551 = vrot.lane.b32.xlu0 %v4371, 127
      %v4552 = vpop.permute.xlu0 %4551
      %4553 = vrot.lane.b32.xlu0 %v4372, 127
      %v4554 = vpop.permute.xlu0 %4553
      %4555 = vrot.lane.b32.xlu0 %v4373, 127
      %v4556 = vpop.permute.xlu0 %4555
      %4557 = vrot.lane.b32.xlu0 %v4374, 127
      %v4558 = vpop.permute.xlu0 %4557
      %4559 = vrot.lane.b32.xlu0 %v4375, 127
      %v4560 = vpop.permute.xlu0 %4559
      %4561 = vrot.lane.b32.xlu0 %v4376, 127
      %v4562 = vpop.permute.xlu0 %4561
      %4563 = vrot.lane.b32.xlu0 %v4377, 127
      %v4564 = vpop.permute.xlu0 %4563
      %4565 = vrot.lane.b32.xlu0 %v4378, 127
      %v4566 = vpop.permute.xlu0 %4565
      %4567 = vrot.lane.b32.xlu0 %v4379, 127
      %v4568 = vpop.permute.xlu0 %4567
      %4569 = vrot.lane.b32.xlu0 %v4380, 127
      %v4570 = vpop.permute.xlu0 %4569
      %4571 = vrot.lane.b32.xlu0 %v4381, 127
      %v4572 = vpop.permute.xlu0 %4571
      %4573 = vrot.lane.b32.xlu0 %v4382, 127
      %v4574 = vpop.permute.xlu0 %4573
      %v4575 = vsel %vm1585, %v4448, %v4450
      %v4576 = vsel %vm1585, %v4450, %v4452
      %v4577 = vsel %vm1585, %v4452, %v4454
      %v4578 = vsel %vm1585, %v4454, %v4456
      %v4579 = vsel %vm1585, %v4456, %v4458
      %v4580 = vsel %vm1585, %v4458, %v4460
      %v4581 = vsel %vm1585, %v4460, %v4462
      %v4582 = vsel %vm1585, %v4462, %v4464
      %v4583 = vsel %vm1585, %v4464, %v4466
      %v4584 = vsel %vm1585, %v4466, %v4468
      %v4585 = vsel %vm1585, %v4468, %v4470
      %v4586 = vsel %vm1585, %v4470, %v4472
      %v4587 = vsel %vm1585, %v4472, %v4474
      %v4588 = vsel %vm1585, %v4474, %v4476
      %v4589 = vsel %vm1585, %v4476, %v4478
      %v4590 = vsel %vm1585, %v4478, %v4480
      %v4591 = vsel %vm1585, %v4480, %v4482
      %v4592 = vsel %vm1585, %v4482, %v4484
      %v4593 = vsel %vm1585, %v4484, %v4486
      %v4594 = vsel %vm1585, %v4486, %v4488
      %v4595 = vsel %vm1585, %v4488, %v4490
      %v4596 = vsel %vm1585, %v4490, %v4492
      %v4597 = vsel %vm1585, %v4492, %v4494
      %v4598 = vsel %vm1585, %v4494, %v4496
      %v4599 = vsel %vm1585, %v4496, %v4498
      %v4600 = vsel %vm1585, %v4498, %v4500
      %v4601 = vsel %vm1585, %v4500, %v4502
      %v4602 = vsel %vm1585, %v4502, %v4504
      %v4603 = vsel %vm1585, %v4504, %v4506
      %v4604 = vsel %vm1585, %v4506, %v4508
      %v4605 = vsel %vm1585, %v4508, %v4510
      %v4606 = vsel %vm1585, %v4512, %v4514
      %v4607 = vsel %vm1585, %v4514, %v4516
      %v4608 = vsel %vm1585, %v4516, %v4518
      %v4609 = vsel %vm1585, %v4518, %v4520
      %v4610 = vsel %vm1585, %v4520, %v4522
      %v4611 = vsel %vm1585, %v4522, %v4524
      %v4612 = vsel %vm1585, %v4524, %v4526
      %v4613 = vsel %vm1585, %v4526, %v4528
      %v4614 = vsel %vm1585, %v4528, %v4530
      %v4615 = vsel %vm1585, %v4530, %v4532
      %v4616 = vsel %vm1585, %v4532, %v4534
      %v4617 = vsel %vm1585, %v4534, %v4536
      %v4618 = vsel %vm1585, %v4536, %v4538
      %v4619 = vsel %vm1585, %v4538, %v4540
      %v4620 = vsel %vm1585, %v4540, %v4542
      %v4621 = vsel %vm1585, %v4542, %v4544
      %v4622 = vsel %vm1585, %v4544, %v4546
      %v4623 = vsel %vm1585, %v4546, %v4548
      %v4624 = vsel %vm1585, %v4548, %v4550
      %v4625 = vsel %vm1585, %v4550, %v4552
      %v4626 = vsel %vm1585, %v4552, %v4554
      %v4627 = vsel %vm1585, %v4554, %v4556
      %v4628 = vsel %vm1585, %v4556, %v4558
      %v4629 = vsel %vm1585, %v4558, %v4560
      %v4630 = vsel %vm1585, %v4560, %v4562
      %v4631 = vsel %vm1585, %v4562, %v4564
      %v4632 = vsel %vm1585, %v4564, %v4566
      %v4633 = vsel %vm1585, %v4566, %v4568
      %v4634 = vsel %vm1585, %v4568, %v4570
      %v4635 = vsel %vm1585, %v4570, %v4572
      %v4636 = vsel %vm1585, %v4572, %v4574
      %v4703 = vsel %vm1585, %v4510, %v4448
      %v4704 = vsel %vm1585, %v4574, %v4512
      %v4705 = vmax.f32 %v4319, %v4575
      %v4706 = vmax.f32 %v4320, %v4576
      %v4707 = vmax.f32 %v4321, %v4577
      %v4708 = vmax.f32 %v4322, %v4578
      %v4709 = vmax.f32 %v4323, %v4579
      %v4710 = vmax.f32 %v4324, %v4580
      %v4711 = vmax.f32 %v4325, %v4581
      %v4712 = vmax.f32 %v4326, %v4582
      %v4713 = vmax.f32 %v4327, %v4583
      %v4714 = vmax.f32 %v4328, %v4584
      %v4715 = vmax.f32 %v4329, %v4585
      %v4716 = vmax.f32 %v4330, %v4586
      %v4717 = vmax.f32 %v4331, %v4587
      %v4718 = vmax.f32 %v4332, %v4588
      %v4719 = vmax.f32 %v4333, %v4589
      %v4720 = vmax.f32 %v4334, %v4590
      %v4721 = vmax.f32 %v4335, %v4591
      %v4722 = vmax.f32 %v4336, %v4592
      %v4723 = vmax.f32 %v4337, %v4593
      %v4724 = vmax.f32 %v4338, %v4594
      %v4725 = vmax.f32 %v4339, %v4595
      %v4726 = vmax.f32 %v4340, %v4596
      %v4727 = vmax.f32 %v4341, %v4597
      %v4728 = vmax.f32 %v4342, %v4598
      %v4729 = vmax.f32 %v4343, %v4599
      %v4730 = vmax.f32 %v4344, %v4600
      %v4731 = vmax.f32 %v4345, %v4601
      %v4732 = vmax.f32 %v4346, %v4602
      %v4733 = vmax.f32 %v4347, %v4603
      %v4734 = vmax.f32 %v4348, %v4604
      %v4735 = vmax.f32 %v4349, %v4605
      %v4736 = vmax.f32 %v4350, %v4703
      %v4737 = vmax.f32 %v4351, %v4606
      %v4738 = vmax.f32 %v4352, %v4607
      %v4739 = vmax.f32 %v4353, %v4608
      %v4740 = vmax.f32 %v4354, %v4609
      %v4741 = vmax.f32 %v4355, %v4610
      %v4742 = vmax.f32 %v4356, %v4611
      %v4743 = vmax.f32 %v4357, %v4612
      %v4744 = vmax.f32 %v4358, %v4613
      %v4745 = vmax.f32 %v4359, %v4614
      %v4746 = vmax.f32 %v4360, %v4615
      %v4747 = vmax.f32 %v4361, %v4616
      %v4748 = vmax.f32 %v4362, %v4617
      %v4749 = vmax.f32 %v4363, %v4618
      %v4750 = vmax.f32 %v4364, %v4619
      %v4751 = vmax.f32 %v4365, %v4620
      %v4752 = vmax.f32 %v4366, %v4621
      %v4753 = vmax.f32 %v4367, %v4622
      %v4754 = vmax.f32 %v4368, %v4623
      %v4755 = vmax.f32 %v4369, %v4624
      %v4756 = vmax.f32 %v4370, %v4625
      %v4757 = vmax.f32 %v4371, %v4626
      %v4758 = vmax.f32 %v4372, %v4627
      %v4759 = vmax.f32 %v4373, %v4628
      %v4760 = vmax.f32 %v4374, %v4629
      %v4761 = vmax.f32 %v4375, %v4630
      %v4762 = vmax.f32 %v4376, %v4631
      %v4763 = vmax.f32 %v4377, %v4632
      %v4764 = vmax.f32 %v4378, %v4633
      %v4765 = vmax.f32 %v4379, %v4634
      %v4766 = vmax.f32 %v4380, %v4635
      %v4767 = vmax.f32 %v4381, %v4636
      %v4768 = vmax.f32 %v4382, %v4704
      %4833 = vrot.lane.b32.xlu0 %v4705, 64
      %v4834 = vpop.permute.xlu0 %4833
      %4835 = vrot.lane.b32.xlu0 %v4706, 64
      %v4836 = vpop.permute.xlu0 %4835
      %4837 = vrot.lane.b32.xlu0 %v4707, 64
      %v4838 = vpop.permute.xlu0 %4837
      %4839 = vrot.lane.b32.xlu0 %v4708, 64
      %v4840 = vpop.permute.xlu0 %4839
      %4841 = vrot.lane.b32.xlu0 %v4709, 64
      %v4842 = vpop.permute.xlu0 %4841
      %4843 = vrot.lane.b32.xlu0 %v4710, 64
      %v4844 = vpop.permute.xlu0 %4843
      %4845 = vrot.lane.b32.xlu0 %v4711, 64
      %v4846 = vpop.permute.xlu0 %4845
      %4847 = vrot.lane.b32.xlu0 %v4712, 64
      %v4848 = vpop.permute.xlu0 %4847
      %4849 = vrot.lane.b32.xlu0 %v4713, 64
      %v4850 = vpop.permute.xlu0 %4849
      %4851 = vrot.lane.b32.xlu0 %v4714, 64
      %v4852 = vpop.permute.xlu0 %4851
      %4853 = vrot.lane.b32.xlu0 %v4715, 64
      %v4854 = vpop.permute.xlu0 %4853
      %4855 = vrot.lane.b32.xlu0 %v4716, 64
      %v4856 = vpop.permute.xlu0 %4855
      %4857 = vrot.lane.b32.xlu0 %v4717, 64
      %v4858 = vpop.permute.xlu0 %4857
      %4859 = vrot.lane.b32.xlu0 %v4718, 64
      %v4860 = vpop.permute.xlu0 %4859
      %4861 = vrot.lane.b32.xlu0 %v4719, 64
      %v4862 = vpop.permute.xlu0 %4861
      %4863 = vrot.lane.b32.xlu0 %v4720, 64
      %v4864 = vpop.permute.xlu0 %4863
      %4865 = vrot.lane.b32.xlu0 %v4721, 64
      %v4866 = vpop.permute.xlu0 %4865
      %4867 = vrot.lane.b32.xlu0 %v4722, 64
      %v4868 = vpop.permute.xlu0 %4867
      %4869 = vrot.lane.b32.xlu0 %v4723, 64
      %v4870 = vpop.permute.xlu0 %4869
      %4871 = vrot.lane.b32.xlu0 %v4724, 64
      %v4872 = vpop.permute.xlu0 %4871
      %4873 = vrot.lane.b32.xlu0 %v4725, 64
      %v4874 = vpop.permute.xlu0 %4873
      %4875 = vrot.lane.b32.xlu0 %v4726, 64
      %v4876 = vpop.permute.xlu0 %4875
      %4877 = vrot.lane.b32.xlu0 %v4727, 64
      %v4878 = vpop.permute.xlu0 %4877
      %4879 = vrot.lane.b32.xlu0 %v4728, 64
      %v4880 = vpop.permute.xlu0 %4879
      %4881 = vrot.lane.b32.xlu0 %v4729, 64
      %v4882 = vpop.permute.xlu0 %4881
      %4883 = vrot.lane.b32.xlu0 %v4730, 64
      %v4884 = vpop.permute.xlu0 %4883
      %4885 = vrot.lane.b32.xlu0 %v4731, 64
      %v4886 = vpop.permute.xlu0 %4885
      %4887 = vrot.lane.b32.xlu0 %v4732, 64
      %v4888 = vpop.permute.xlu0 %4887
      %4889 = vrot.lane.b32.xlu0 %v4733, 64
      %v4890 = vpop.permute.xlu0 %4889
      %4891 = vrot.lane.b32.xlu0 %v4734, 64
      %v4892 = vpop.permute.xlu0 %4891
      %4893 = vrot.lane.b32.xlu0 %v4735, 64
      %v4894 = vpop.permute.xlu0 %4893
      %4895 = vrot.lane.b32.xlu0 %v4736, 64
      %v4896 = vpop.permute.xlu0 %4895
      %4897 = vrot.lane.b32.xlu0 %v4737, 64
      %v4898 = vpop.permute.xlu0 %4897
      %4899 = vrot.lane.b32.xlu0 %v4738, 64
      %v4900 = vpop.permute.xlu0 %4899
      %4901 = vrot.lane.b32.xlu0 %v4739, 64
      %v4902 = vpop.permute.xlu0 %4901
      %4903 = vrot.lane.b32.xlu0 %v4740, 64
      %v4904 = vpop.permute.xlu0 %4903
      %4905 = vrot.lane.b32.xlu0 %v4741, 64
      %v4906 = vpop.permute.xlu0 %4905
      %4907 = vrot.lane.b32.xlu0 %v4742, 64
      %v4908 = vpop.permute.xlu0 %4907
      %4909 = vrot.lane.b32.xlu0 %v4743, 64
      %v4910 = vpop.permute.xlu0 %4909
      %4911 = vrot.lane.b32.xlu0 %v4744, 64
      %v4912 = vpop.permute.xlu0 %4911
      %4913 = vrot.lane.b32.xlu0 %v4745, 64
      %v4914 = vpop.permute.xlu0 %4913
      %4915 = vrot.lane.b32.xlu0 %v4746, 64
      %v4916 = vpop.permute.xlu0 %4915
      %4917 = vrot.lane.b32.xlu0 %v4747, 64
      %v4918 = vpop.permute.xlu0 %4917
      %4919 = vrot.lane.b32.xlu0 %v4748, 64
      %v4920 = vpop.permute.xlu0 %4919
      %4921 = vrot.lane.b32.xlu0 %v4749, 64
      %v4922 = vpop.permute.xlu0 %4921
      %4923 = vrot.lane.b32.xlu0 %v4750, 64
      %v4924 = vpop.permute.xlu0 %4923
      %4925 = vrot.lane.b32.xlu0 %v4751, 64
      %v4926 = vpop.permute.xlu0 %4925
      %4927 = vrot.lane.b32.xlu0 %v4752, 64
      %v4928 = vpop.permute.xlu0 %4927
      %4929 = vrot.lane.b32.xlu0 %v4753, 64
      %v4930 = vpop.permute.xlu0 %4929
      %4931 = vrot.lane.b32.xlu0 %v4754, 64
      %v4932 = vpop.permute.xlu0 %4931
      %4933 = vrot.lane.b32.xlu0 %v4755, 64
      %v4934 = vpop.permute.xlu0 %4933
      %4935 = vrot.lane.b32.xlu0 %v4756, 64
      %v4936 = vpop.permute.xlu0 %4935
      %4937 = vrot.lane.b32.xlu0 %v4757, 64
      %v4938 = vpop.permute.xlu0 %4937
      %4939 = vrot.lane.b32.xlu0 %v4758, 64
      %v4940 = vpop.permute.xlu0 %4939
      %4941 = vrot.lane.b32.xlu0 %v4759, 64
      %v4942 = vpop.permute.xlu0 %4941
      %4943 = vrot.lane.b32.xlu0 %v4760, 64
      %v4944 = vpop.permute.xlu0 %4943
      %4945 = vrot.lane.b32.xlu0 %v4761, 64
      %v4946 = vpop.permute.xlu0 %4945
      %4947 = vrot.lane.b32.xlu0 %v4762, 64
      %v4948 = vpop.permute.xlu0 %4947
      %4949 = vrot.lane.b32.xlu0 %v4763, 64
      %v4950 = vpop.permute.xlu0 %4949
      %4951 = vrot.lane.b32.xlu0 %v4764, 64
      %v4952 = vpop.permute.xlu0 %4951
      %4953 = vrot.lane.b32.xlu0 %v4765, 64
      %v4954 = vpop.permute.xlu0 %4953
      %4955 = vrot.lane.b32.xlu0 %v4766, 64
      %v4956 = vpop.permute.xlu0 %4955
      %4957 = vrot.lane.b32.xlu0 %v4767, 64
      %v4958 = vpop.permute.xlu0 %4957
      %4959 = vrot.lane.b32.xlu0 %v4768, 64
      %v4960 = vpop.permute.xlu0 %4959
      %v4961 = vsel %vm844, %v4834, %v4836
      %v4962 = vsel %vm844, %v4836, %v4838
      %v4963 = vsel %vm844, %v4838, %v4840
      %v4964 = vsel %vm844, %v4840, %v4842
      %v4965 = vsel %vm844, %v4842, %v4844
      %v4966 = vsel %vm844, %v4844, %v4846
      %v4967 = vsel %vm844, %v4846, %v4848
      %v4968 = vsel %vm844, %v4848, %v4850
      %v4969 = vsel %vm844, %v4850, %v4852
      %v4970 = vsel %vm844, %v4852, %v4854
      %v4971 = vsel %vm844, %v4854, %v4856
      %v4972 = vsel %vm844, %v4856, %v4858
      %v4973 = vsel %vm844, %v4858, %v4860
      %v4974 = vsel %vm844, %v4860, %v4862
      %v4975 = vsel %vm844, %v4862, %v4864
      %v4976 = vsel %vm844, %v4864, %v4866
      %v4977 = vsel %vm844, %v4866, %v4868
      %v4978 = vsel %vm844, %v4868, %v4870
      %v4979 = vsel %vm844, %v4870, %v4872
      %v4980 = vsel %vm844, %v4872, %v4874
      %v4981 = vsel %vm844, %v4874, %v4876
      %v4982 = vsel %vm844, %v4876, %v4878
      %v4983 = vsel %vm844, %v4878, %v4880
      %v4984 = vsel %vm844, %v4880, %v4882
      %v4985 = vsel %vm844, %v4882, %v4884
      %v4986 = vsel %vm844, %v4884, %v4886
      %v4987 = vsel %vm844, %v4886, %v4888
      %v4988 = vsel %vm844, %v4888, %v4890
      %v4989 = vsel %vm844, %v4890, %v4892
      %v4990 = vsel %vm844, %v4892, %v4894
      %v4991 = vsel %vm844, %v4894, %v4896
      %v4992 = vsel %vm844, %v4898, %v4900
      %v4993 = vsel %vm844, %v4900, %v4902
      %v4994 = vsel %vm844, %v4902, %v4904
      %v4995 = vsel %vm844, %v4904, %v4906
      %v4996 = vsel %vm844, %v4906, %v4908
      %v4997 = vsel %vm844, %v4908, %v4910
      %v4998 = vsel %vm844, %v4910, %v4912
      %v4999 = vsel %vm844, %v4912, %v4914
      %v5000 = vsel %vm844, %v4914, %v4916
      %v5001 = vsel %vm844, %v4916, %v4918
      %v5002 = vsel %vm844, %v4918, %v4920
      %v5003 = vsel %vm844, %v4920, %v4922
      %v5004 = vsel %vm844, %v4922, %v4924
      %v5005 = vsel %vm844, %v4924, %v4926
      %v5006 = vsel %vm844, %v4926, %v4928
      %v5007 = vsel %vm844, %v4928, %v4930
      %v5008 = vsel %vm844, %v4930, %v4932
      %v5009 = vsel %vm844, %v4932, %v4934
      %v5010 = vsel %vm844, %v4934, %v4936
      %v5011 = vsel %vm844, %v4936, %v4938
      %v5012 = vsel %vm844, %v4938, %v4940
      %v5013 = vsel %vm844, %v4940, %v4942
      %v5014 = vsel %vm844, %v4942, %v4944
      %v5015 = vsel %vm844, %v4944, %v4946
      %v5016 = vsel %vm844, %v4946, %v4948
      %v5017 = vsel %vm844, %v4948, %v4950
      %v5018 = vsel %vm844, %v4950, %v4952
      %v5019 = vsel %vm844, %v4952, %v4954
      %v5020 = vsel %vm844, %v4954, %v4956
      %v5021 = vsel %vm844, %v4956, %v4958
      %v5022 = vsel %vm844, %v4958, %v4960
      %v5089 = vsel %vm844, %v4896, %v4834
      %v5090 = vsel %vm844, %v4960, %v4898
      %v5091 = vmax.f32 %v4705, %v4961
      %v5092 = vmax.f32 %v4706, %v4962
      %v5093 = vmax.f32 %v4707, %v4963
      %v5094 = vmax.f32 %v4708, %v4964
      %v5095 = vmax.f32 %v4709, %v4965
      %v5096 = vmax.f32 %v4710, %v4966
      %v5097 = vmax.f32 %v4711, %v4967
      %v5098 = vmax.f32 %v4712, %v4968
      %v5099 = vmax.f32 %v4713, %v4969
      %v5100 = vmax.f32 %v4714, %v4970
      %v5101 = vmax.f32 %v4715, %v4971
      %v5102 = vmax.f32 %v4716, %v4972
      %v5103 = vmax.f32 %v4717, %v4973
      %v5104 = vmax.f32 %v4718, %v4974
      %v5105 = vmax.f32 %v4719, %v4975
      %v5106 = vmax.f32 %v4720, %v4976
      %v5107 = vmax.f32 %v4721, %v4977
      %v5108 = vmax.f32 %v4722, %v4978
      %v5109 = vmax.f32 %v4723, %v4979
      %v5110 = vmax.f32 %v4724, %v4980
      %v5111 = vmax.f32 %v4725, %v4981
      %v5112 = vmax.f32 %v4726, %v4982
      %v5113 = vmax.f32 %v4727, %v4983
      %v5114 = vmax.f32 %v4728, %v4984
      %v5115 = vmax.f32 %v4729, %v4985
      %v5116 = vmax.f32 %v4730, %v4986
      %v5117 = vmax.f32 %v4731, %v4987
      %v5118 = vmax.f32 %v4732, %v4988
      %v5119 = vmax.f32 %v4733, %v4989
      %v5120 = vmax.f32 %v4734, %v4990
      %v5121 = vmax.f32 %v4735, %v4991
      %v5122 = vmax.f32 %v4736, %v5089
      %v5123 = vmax.f32 %v4737, %v4992
      %v5124 = vmax.f32 %v4738, %v4993
      %v5125 = vmax.f32 %v4739, %v4994
      %v5126 = vmax.f32 %v4740, %v4995
      %v5127 = vmax.f32 %v4741, %v4996
      %v5128 = vmax.f32 %v4742, %v4997
      %v5129 = vmax.f32 %v4743, %v4998
      %v5130 = vmax.f32 %v4744, %v4999
      %v5131 = vmax.f32 %v4745, %v5000
      %v5132 = vmax.f32 %v4746, %v5001
      %v5133 = vmax.f32 %v4747, %v5002
      %v5134 = vmax.f32 %v4748, %v5003
      %v5135 = vmax.f32 %v4749, %v5004
      %v5136 = vmax.f32 %v4750, %v5005
      %v5137 = vmax.f32 %v4751, %v5006
      %v5138 = vmax.f32 %v4752, %v5007
      %v5139 = vmax.f32 %v4753, %v5008
      %v5140 = vmax.f32 %v4754, %v5009
      %v5141 = vmax.f32 %v4755, %v5010
      %v5142 = vmax.f32 %v4756, %v5011
      %v5143 = vmax.f32 %v4757, %v5012
      %v5144 = vmax.f32 %v4758, %v5013
      %v5145 = vmax.f32 %v4759, %v5014
      %v5146 = vmax.f32 %v4760, %v5015
      %v5147 = vmax.f32 %v4761, %v5016
      %v5148 = vmax.f32 %v4762, %v5017
      %v5149 = vmax.f32 %v4763, %v5018
      %v5150 = vmax.f32 %v4764, %v5019
      %v5151 = vmax.f32 %v4765, %v5020
      %v5152 = vmax.f32 %v4766, %v5021
      %v5153 = vmax.f32 %v4767, %v5022
      %v5154 = vmax.f32 %v4768, %v5090
      %5159 = vrot.lane.b32.xlu0 %v5121, 2
      %v5160 = vpop.permute.xlu0 %5159
      %5161 = vrot.lane.b32.xlu0 %v5122, 2
      %v5162 = vpop.permute.xlu0 %5161
      %5163 = vrot.lane.b32.xlu0 %v5153, 2
      %v5164 = vpop.permute.xlu0 %5163
      %5165 = vrot.lane.b32.xlu0 %v5154, 2
      %v5166 = vpop.permute.xlu0 %5165
      %vm5167 = vcmask 15360
      %v5168 = vsel %vm5167, %v5160, %v5162
      %v5169 = vsel %vm5167, %v5164, %v5166
      %5234 = vrot.lane.b32.xlu0 %v5091, 2
      %v5235 = vpop.permute.xlu0 %5234
      %5236 = vrot.lane.b32.xlu0 %v5092, 2
      %v5237 = vpop.permute.xlu0 %5236
      %5238 = vrot.lane.b32.xlu0 %v5093, 2
      %v5239 = vpop.permute.xlu0 %5238
      %5240 = vrot.lane.b32.xlu0 %v5094, 2
      %v5241 = vpop.permute.xlu0 %5240
      %5242 = vrot.lane.b32.xlu0 %v5095, 2
      %v5243 = vpop.permute.xlu0 %5242
      %5244 = vrot.lane.b32.xlu0 %v5096, 2
      %v5245 = vpop.permute.xlu0 %5244
      %5246 = vrot.lane.b32.xlu0 %v5097, 2
      %v5247 = vpop.permute.xlu0 %5246
      %5248 = vrot.lane.b32.xlu0 %v5098, 2
      %v5249 = vpop.permute.xlu0 %5248
      %5250 = vrot.lane.b32.xlu0 %v5099, 2
      %v5251 = vpop.permute.xlu0 %5250
      %5252 = vrot.lane.b32.xlu0 %v5100, 2
      %v5253 = vpop.permute.xlu0 %5252
      %5254 = vrot.lane.b32.xlu0 %v5101, 2
      %v5255 = vpop.permute.xlu0 %5254
      %5256 = vrot.lane.b32.xlu0 %v5102, 2
      %v5257 = vpop.permute.xlu0 %5256
      %5258 = vrot.lane.b32.xlu0 %v5103, 2
      %v5259 = vpop.permute.xlu0 %5258
      %5260 = vrot.lane.b32.xlu0 %v5104, 2
      %v5261 = vpop.permute.xlu0 %5260
      %5262 = vrot.lane.b32.xlu0 %v5105, 2
      %v5263 = vpop.permute.xlu0 %5262
      %5264 = vrot.lane.b32.xlu0 %v5106, 2
      %v5265 = vpop.permute.xlu0 %5264
      %5266 = vrot.lane.b32.xlu0 %v5107, 2
      %v5267 = vpop.permute.xlu0 %5266
      %5268 = vrot.lane.b32.xlu0 %v5108, 2
      %v5269 = vpop.permute.xlu0 %5268
      %5270 = vrot.lane.b32.xlu0 %v5109, 2
      %v5271 = vpop.permute.xlu0 %5270
      %5272 = vrot.lane.b32.xlu0 %v5110, 2
      %v5273 = vpop.permute.xlu0 %5272
      %5274 = vrot.lane.b32.xlu0 %v5111, 2
      %v5275 = vpop.permute.xlu0 %5274
      %5276 = vrot.lane.b32.xlu0 %v5112, 2
      %v5277 = vpop.permute.xlu0 %5276
      %5278 = vrot.lane.b32.xlu0 %v5113, 2
      %v5279 = vpop.permute.xlu0 %5278
      %5280 = vrot.lane.b32.xlu0 %v5114, 2
      %v5281 = vpop.permute.xlu0 %5280
      %5282 = vrot.lane.b32.xlu0 %v5115, 2
      %v5283 = vpop.permute.xlu0 %5282
      %5284 = vrot.lane.b32.xlu0 %v5116, 2
      %v5285 = vpop.permute.xlu0 %5284
      %5286 = vrot.lane.b32.xlu0 %v5117, 2
      %v5287 = vpop.permute.xlu0 %5286
      %5288 = vrot.lane.b32.xlu0 %v5118, 2
      %v5289 = vpop.permute.xlu0 %5288
      %5290 = vrot.lane.b32.xlu0 %v5119, 2
      %v5291 = vpop.permute.xlu0 %5290
      %5292 = vrot.lane.b32.xlu0 %v5120, 2
      %v5293 = vpop.permute.xlu0 %5292
      %5294 = vrot.lane.b32.xlu0 %v5123, 2
      %v5295 = vpop.permute.xlu0 %5294
      %5296 = vrot.lane.b32.xlu0 %v5124, 2
      %v5297 = vpop.permute.xlu0 %5296
      %5298 = vrot.lane.b32.xlu0 %v5125, 2
      %v5299 = vpop.permute.xlu0 %5298
      %5300 = vrot.lane.b32.xlu0 %v5126, 2
      %v5301 = vpop.permute.xlu0 %5300
      %5302 = vrot.lane.b32.xlu0 %v5127, 2
      %v5303 = vpop.permute.xlu0 %5302
      %5304 = vrot.lane.b32.xlu0 %v5128, 2
      %v5305 = vpop.permute.xlu0 %5304
      %5306 = vrot.lane.b32.xlu0 %v5129, 2
      %v5307 = vpop.permute.xlu0 %5306
      %5308 = vrot.lane.b32.xlu0 %v5130, 2
      %v5309 = vpop.permute.xlu0 %5308
      %5310 = vrot.lane.b32.xlu0 %v5131, 2
      %v5311 = vpop.permute.xlu0 %5310
      %5312 = vrot.lane.b32.xlu0 %v5132, 2
      %v5313 = vpop.permute.xlu0 %5312
      %5314 = vrot.lane.b32.xlu0 %v5133, 2
      %v5315 = vpop.permute.xlu0 %5314
      %5316 = vrot.lane.b32.xlu0 %v5134, 2
      %v5317 = vpop.permute.xlu0 %5316
      %5318 = vrot.lane.b32.xlu0 %v5135, 2
      %v5319 = vpop.permute.xlu0 %5318
      %5320 = vrot.lane.b32.xlu0 %v5136, 2
      %v5321 = vpop.permute.xlu0 %5320
      %5322 = vrot.lane.b32.xlu0 %v5137, 2
      %v5323 = vpop.permute.xlu0 %5322
      %5324 = vrot.lane.b32.xlu0 %v5138, 2
      %v5325 = vpop.permute.xlu0 %5324
      %5326 = vrot.lane.b32.xlu0 %v5139, 2
      %v5327 = vpop.permute.xlu0 %5326
      %5328 = vrot.lane.b32.xlu0 %v5140, 2
      %v5329 = vpop.permute.xlu0 %5328
      %5330 = vrot.lane.b32.xlu0 %v5141, 2
      %v5331 = vpop.permute.xlu0 %5330
      %5332 = vrot.lane.b32.xlu0 %v5142, 2
      %v5333 = vpop.permute.xlu0 %5332
      %5334 = vrot.lane.b32.xlu0 %v5143, 2
      %v5335 = vpop.permute.xlu0 %5334
      %5336 = vrot.lane.b32.xlu0 %v5144, 2
      %v5337 = vpop.permute.xlu0 %5336
      %5338 = vrot.lane.b32.xlu0 %v5145, 2
      %v5339 = vpop.permute.xlu0 %5338
      %5340 = vrot.lane.b32.xlu0 %v5146, 2
      %v5341 = vpop.permute.xlu0 %5340
      %5342 = vrot.lane.b32.xlu0 %v5147, 2
      %v5343 = vpop.permute.xlu0 %5342
      %5344 = vrot.lane.b32.xlu0 %v5148, 2
      %v5345 = vpop.permute.xlu0 %5344
      %5346 = vrot.lane.b32.xlu0 %v5149, 2
      %v5347 = vpop.permute.xlu0 %5346
      %5348 = vrot.lane.b32.xlu0 %v5150, 2
      %v5349 = vpop.permute.xlu0 %5348
      %5350 = vrot.lane.b32.xlu0 %v5151, 2
      %v5351 = vpop.permute.xlu0 %5350
      %5352 = vrot.lane.b32.xlu0 %v5152, 2
      %v5353 = vpop.permute.xlu0 %5352
      %v5354 = vsel %vm5167, %v5235, %v5237
      %v5355 = vsel %vm5167, %v5237, %v5239
      %v5356 = vsel %vm5167, %v5239, %v5241
      %v5357 = vsel %vm5167, %v5241, %v5243
      %v5358 = vsel %vm5167, %v5243, %v5245
      %v5359 = vsel %vm5167, %v5245, %v5247
      %v5360 = vsel %vm5167, %v5247, %v5249
      %v5361 = vsel %vm5167, %v5249, %v5251
      %v5362 = vsel %vm5167, %v5251, %v5253
      %v5363 = vsel %vm5167, %v5253, %v5255
      %v5364 = vsel %vm5167, %v5255, %v5257
      %v5365 = vsel %vm5167, %v5257, %v5259
      %v5366 = vsel %vm5167, %v5259, %v5261
      %v5367 = vsel %vm5167, %v5261, %v5263
      %v5368 = vsel %vm5167, %v5263, %v5265
      %v5369 = vsel %vm5167, %v5265, %v5267
      %v5370 = vsel %vm5167, %v5267, %v5269
      %v5371 = vsel %vm5167, %v5269, %v5271
      %v5372 = vsel %vm5167, %v5271, %v5273
      %v5373 = vsel %vm5167, %v5273, %v5275
      %v5374 = vsel %vm5167, %v5275, %v5277
      %v5375 = vsel %vm5167, %v5277, %v5279
      %v5376 = vsel %vm5167, %v5279, %v5281
      %v5377 = vsel %vm5167, %v5281, %v5283
      %v5378 = vsel %vm5167, %v5283, %v5285
      %v5379 = vsel %vm5167, %v5285, %v5287
      %v5380 = vsel %vm5167, %v5287, %v5289
      %v5381 = vsel %vm5167, %v5289, %v5291
      %v5382 = vsel %vm5167, %v5291, %v5293
      %v5383 = vsel %vm5167, %v5293, %v5160
      %v5384 = vsel %vm5167, %v5295, %v5297
      %v5385 = vsel %vm5167, %v5297, %v5299
      %v5386 = vsel %vm5167, %v5299, %v5301
      %v5387 = vsel %vm5167, %v5301, %v5303
      %v5388 = vsel %vm5167, %v5303, %v5305
      %v5389 = vsel %vm5167, %v5305, %v5307
      %v5390 = vsel %vm5167, %v5307, %v5309
      %v5391 = vsel %vm5167, %v5309, %v5311
      %v5392 = vsel %vm5167, %v5311, %v5313
      %v5393 = vsel %vm5167, %v5313, %v5315
      %v5394 = vsel %vm5167, %v5315, %v5317
      %v5395 = vsel %vm5167, %v5317, %v5319
      %v5396 = vsel %vm5167, %v5319, %v5321
      %v5397 = vsel %vm5167, %v5321, %v5323
      %v5398 = vsel %vm5167, %v5323, %v5325
      %v5399 = vsel %vm5167, %v5325, %v5327
      %v5400 = vsel %vm5167, %v5327, %v5329
      %v5401 = vsel %vm5167, %v5329, %v5331
      %v5402 = vsel %vm5167, %v5331, %v5333
      %v5403 = vsel %vm5167, %v5333, %v5335
      %v5404 = vsel %vm5167, %v5335, %v5337
      %v5405 = vsel %vm5167, %v5337, %v5339
      %v5406 = vsel %vm5167, %v5339, %v5341
      %v5407 = vsel %vm5167, %v5341, %v5343
      %v5408 = vsel %vm5167, %v5343, %v5345
      %v5409 = vsel %vm5167, %v5345, %v5347
      %v5410 = vsel %vm5167, %v5347, %v5349
      %v5411 = vsel %vm5167, %v5349, %v5351
      %v5412 = vsel %vm5167, %v5351, %v5353
      %v5413 = vsel %vm5167, %v5353, %v5164
      %v5476 = vsel %vm5167, %v5162, %v5235
      %v5477 = vsel %vm5167, %v5166, %v5295
      %vm5478 = vcmp.ge.s32.totalorder %v345, 2
      %vm5479 = vcmp.ge.s32.totalorder %v346, 2
      %vm5480 = vcmp.ge.s32.totalorder %v347, 2
      %vm5481 = vcmp.ge.s32.totalorder %v348, 2
      %vm5482 = vcmp.ge.s32.totalorder %v349, 2
      %vm5483 = vcmp.ge.s32.totalorder %v350, 2
      %vm5484 = vcmp.ge.s32.totalorder %v351, 2
      %vm5485 = vcmp.ge.s32.totalorder %v352, 2
      %vm5486 = vcmp.ge.s32.totalorder %v353, 2
      %vm5487 = vcmp.ge.s32.totalorder %v354, 2
      %vm5488 = vcmp.ge.s32.totalorder %v355, 2
      %vm5489 = vcmp.ge.s32.totalorder %v356, 2
      %vm5490 = vcmp.ge.s32.totalorder %v357, 2
      %vm5491 = vcmp.ge.s32.totalorder %v358, 2
      %vm5492 = vcmp.ge.s32.totalorder %v359, 2
      %vm5493 = vcmp.ge.s32.totalorder %v360, 2
      %vm5494 = vcmp.ge.s32.totalorder %v361, 2
      %vm5495 = vcmp.ge.s32.totalorder %v362, 2
      %vm5496 = vcmp.ge.s32.totalorder %v363, 2
      %vm5497 = vcmp.ge.s32.totalorder %v364, 2
      %vm5498 = vcmp.ge.s32.totalorder %v365, 2
      %vm5499 = vcmp.ge.s32.totalorder %v366, 2
      %vm5500 = vcmp.ge.s32.totalorder %v367, 2
      %vm5501 = vcmp.ge.s32.totalorder %v368, 2
      %vm5502 = vcmp.ge.s32.totalorder %v369, 2
      %vm5503 = vcmp.ge.s32.totalorder %v370, 2
      %vm5504 = vcmp.ge.s32.totalorder %v371, 2
      %vm5505 = vcmp.ge.s32.totalorder %v372, 2
      %vm5506 = vcmp.ge.s32.totalorder %v373, 2
      %vm5507 = vcmp.ge.s32.totalorder %v374, 2
      %vm5508 = vcmp.ge.s32.totalorder %v375, 2
      %vm5509 = vcmp.ge.s32.totalorder %v376, 2
      %vm5510 = vcmp.ge.s32.totalorder %v377, 2
      %vm5511 = vcmp.ge.s32.totalorder %v378, 2
      %vm5512 = vcmp.ge.s32.totalorder %v379, 2
      %vm5513 = vcmp.ge.s32.totalorder %v380, 2
      %vm5514 = vcmp.ge.s32.totalorder %v381, 2
      %vm5515 = vcmp.ge.s32.totalorder %v382, 2
      %vm5516 = vcmp.ge.s32.totalorder %v383, 2
      %vm5517 = vcmp.ge.s32.totalorder %v384, 2
      %vm5518 = vcmp.ge.s32.totalorder %v385, 2
      %vm5519 = vcmp.ge.s32.totalorder %v386, 2
      %vm5520 = vcmp.ge.s32.totalorder %v387, 2
      %vm5521 = vcmp.ge.s32.totalorder %v388, 2
      %vm5522 = vcmp.ge.s32.totalorder %v389, 2
      %vm5523 = vcmp.ge.s32.totalorder %v390, 2
      %vm5524 = vcmp.ge.s32.totalorder %v391, 2
      %vm5525 = vcmp.ge.s32.totalorder %v392, 2
      %vm5526 = vcmp.ge.s32.totalorder %v393, 2
      %vm5527 = vcmp.ge.s32.totalorder %v394, 2
      %vm5528 = vcmp.ge.s32.totalorder %v395, 2
      %vm5529 = vcmp.ge.s32.totalorder %v396, 2
      %vm5530 = vcmp.ge.s32.totalorder %v397, 2
      %vm5531 = vcmp.ge.s32.totalorder %v398, 2
      %vm5532 = vcmp.ge.s32.totalorder %v399, 2
      %vm5533 = vcmp.ge.s32.totalorder %v400, 2
      %vm5534 = vcmp.ge.s32.totalorder %v401, 2
      %vm5535 = vcmp.ge.s32.totalorder %v402, 2
      %vm5536 = vcmp.ge.s32.totalorder %v403, 2
      %vm5537 = vcmp.ge.s32.totalorder %v404, 2
      %vm5538 = vcmp.ge.s32.totalorder %v405, 2
      %vm5539 = vcmp.ge.s32.totalorder %v406, 2
      %vm5540 = vcmp.ge.s32.totalorder %v407, 2
      %vm5541 = vcmp.ge.s32.totalorder %v408, 2
      %vm5542 = vmand %vm5478, %vm5510
      %vm5543 = vmand %vm5479, %vm5511
      %vm5544 = vmand %vm5480, %vm5512
      %vm5545 = vmand %vm5481, %vm5513
      %vm5546 = vmand %vm5482, %vm5514
      %vm5547 = vmand %vm5483, %vm5515
      %vm5548 = vmand %vm5484, %vm5516
      %vm5549 = vmand %vm5485, %vm5517
      %vm5550 = vmand %vm5486, %vm5518
      %vm5551 = vmand %vm5487, %vm5519
      %vm5552 = vmand %vm5488, %vm5520
      %vm5553 = vmand %vm5489, %vm5521
      %vm5554 = vmand %vm5490, %vm5522
      %vm5555 = vmand %vm5491, %vm5523
      %vm5556 = vmand %vm5492, %vm5524
      %vm5557 = vmand %vm5493, %vm5525
      %vm5558 = vmand %vm5494, %vm5526
      %vm5559 = vmand %vm5495, %vm5527
      %vm5560 = vmand %vm5496, %vm5528
      %vm5561 = vmand %vm5497, %vm5529
      %vm5562 = vmand %vm5498, %vm5530
      %vm5563 = vmand %vm5499, %vm5531
      %vm5564 = vmand %vm5500, %vm5532
      %vm5565 = vmand %vm5501, %vm5533
      %vm5566 = vmand %vm5502, %vm5534
      %vm5567 = vmand %vm5503, %vm5535
      %vm5568 = vmand %vm5504, %vm5536
      %vm5569 = vmand %vm5505, %vm5537
      %vm5570 = vmand %vm5506, %vm5538
      %vm5571 = vmand %vm5507, %vm5539
      %vm5572 = vmand %vm5508, %vm5540
      %vm5573 = vmand %vm5509, %vm5541
      %v5574 = vsel %vm5542, 1, 0
      %v5575 = vsel %vm5543, 1, 0
      %v5576 = vsel %vm5544, 1, 0
      %v5577 = vsel %vm5545, 1, 0
      %v5578 = vsel %vm5546, 1, 0
      %v5579 = vsel %vm5547, 1, 0
      %v5580 = vsel %vm5548, 1, 0
      %v5581 = vsel %vm5549, 1, 0
      %v5582 = vsel %vm5550, 1, 0
      %v5583 = vsel %vm5551, 1, 0
      %v5584 = vsel %vm5552, 1, 0
      %v5585 = vsel %vm5553, 1, 0
      %v5586 = vsel %vm5554, 1, 0
      %v5587 = vsel %vm5555, 1, 0
      %v5588 = vsel %vm5556, 1, 0
      %v5589 = vsel %vm5557, 1, 0
      %v5590 = vsel %vm5558, 1, 0
      %v5591 = vsel %vm5559, 1, 0
      %v5592 = vsel %vm5560, 1, 0
      %v5593 = vsel %vm5561, 1, 0
      %v5594 = vsel %vm5562, 1, 0
      %v5595 = vsel %vm5563, 1, 0
      %v5596 = vsel %vm5564, 1, 0
      %v5597 = vsel %vm5565, 1, 0
      %v5598 = vsel %vm5566, 1, 0
      %v5599 = vsel %vm5567, 1, 0
      %v5600 = vsel %vm5568, 1, 0
      %v5601 = vsel %vm5569, 1, 0
      %v5602 = vsel %vm5570, 1, 0
      %v5603 = vsel %vm5571, 1, 0
      %v5604 = vsel %vm5572, 1, 0
      %v5605 = vsel %vm5573, 1, 0
      %vm5606 = vcmp.eq.s32.totalorder %v5574, 1
      %vm5607 = vcmp.eq.s32.totalorder %v5575, 1
      %vm5608 = vcmp.eq.s32.totalorder %v5576, 1
      %vm5609 = vcmp.eq.s32.totalorder %v5577, 1
      %vm5610 = vcmp.eq.s32.totalorder %v5578, 1
      %vm5611 = vcmp.eq.s32.totalorder %v5579, 1
      %vm5612 = vcmp.eq.s32.totalorder %v5580, 1
      %vm5613 = vcmp.eq.s32.totalorder %v5581, 1
      %vm5614 = vcmp.eq.s32.totalorder %v5582, 1
      %vm5615 = vcmp.eq.s32.totalorder %v5583, 1
      %vm5616 = vcmp.eq.s32.totalorder %v5584, 1
      %vm5617 = vcmp.eq.s32.totalorder %v5585, 1
      %vm5618 = vcmp.eq.s32.totalorder %v5586, 1
      %vm5619 = vcmp.eq.s32.totalorder %v5587, 1
      %vm5620 = vcmp.eq.s32.totalorder %v5588, 1
      %vm5621 = vcmp.eq.s32.totalorder %v5589, 1
      %vm5622 = vcmp.eq.s32.totalorder %v5590, 1
      %vm5623 = vcmp.eq.s32.totalorder %v5591, 1
      %vm5624 = vcmp.eq.s32.totalorder %v5592, 1
      %vm5625 = vcmp.eq.s32.totalorder %v5593, 1
      %vm5626 = vcmp.eq.s32.totalorder %v5594, 1
      %vm5627 = vcmp.eq.s32.totalorder %v5595, 1
      %vm5628 = vcmp.eq.s32.totalorder %v5596, 1
      %vm5629 = vcmp.eq.s32.totalorder %v5597, 1
      %vm5630 = vcmp.eq.s32.totalorder %v5598, 1
      %vm5631 = vcmp.eq.s32.totalorder %v5599, 1
      %vm5632 = vcmp.eq.s32.totalorder %v5600, 1
      %vm5633 = vcmp.eq.s32.totalorder %v5601, 1
      %vm5634 = vcmp.eq.s32.totalorder %v5602, 1
      %vm5635 = vcmp.eq.s32.totalorder %v5603, 1
      %vm5636 = vcmp.eq.s32.totalorder %v5604, 1
      %vm5637 = vcmp.eq.s32.totalorder %v5605, 1
      %v5638 = vsel %vm5606, %v5168, 0.0
      %v5639 = vsel %vm5607, %v5476, 0.0
      %v5640 = vsel %vm5608, %v5354, 0.0
      %v5641 = vsel %vm5609, %v5355, 0.0
      %v5642 = vsel %vm5610, %v5356, 0.0
      %v5643 = vsel %vm5611, %v5357, 0.0
      %v5644 = vsel %vm5612, %v5358, 0.0
      %v5645 = vsel %vm5613, %v5359, 0.0
      %v5646 = vsel %vm5614, %v5360, 0.0
      %v5647 = vsel %vm5615, %v5361, 0.0
      %v5648 = vsel %vm5616, %v5362, 0.0
      %v5649 = vsel %vm5617, %v5363, 0.0
      %v5650 = vsel %vm5618, %v5364, 0.0
      %v5651 = vsel %vm5619, %v5365, 0.0
      %v5652 = vsel %vm5620, %v5366, 0.0
      %v5653 = vsel %vm5621, %v5367, 0.0
      %v5654 = vsel %vm5622, %v5368, 0.0
      %v5655 = vsel %vm5623, %v5369, 0.0
      %v5656 = vsel %vm5624, %v5370, 0.0
      %v5657 = vsel %vm5625, %v5371, 0.0
      %v5658 = vsel %vm5626, %v5372, 0.0
      %v5659 = vsel %vm5627, %v5373, 0.0
      %v5660 = vsel %vm5628, %v5374, 0.0
      %v5661 = vsel %vm5629, %v5375, 0.0
      %v5662 = vsel %vm5630, %v5376, 0.0
      %v5663 = vsel %vm5631, %v5377, 0.0
      %v5664 = vsel %vm5632, %v5378, 0.0
      %v5665 = vsel %vm5633, %v5379, 0.0
      %v5666 = vsel %vm5634, %v5380, 0.0
      %v5667 = vsel %vm5635, %v5381, 0.0
      %v5668 = vsel %vm5636, %v5382, 0.0
      %v5669 = vsel %vm5637, %v5383, 0.0
      %v5670 = vsel %vm5606, %v5169, 0.0
      %v5671 = vsel %vm5607, %v5477, 0.0
      %v5672 = vsel %vm5608, %v5384, 0.0
      %v5673 = vsel %vm5609, %v5385, 0.0
      %v5674 = vsel %vm5610, %v5386, 0.0
      %v5675 = vsel %vm5611, %v5387, 0.0
      %v5676 = vsel %vm5612, %v5388, 0.0
      %v5677 = vsel %vm5613, %v5389, 0.0
      %v5678 = vsel %vm5614, %v5390, 0.0
      %v5679 = vsel %vm5615, %v5391, 0.0
      %v5680 = vsel %vm5616, %v5392, 0.0
      %v5681 = vsel %vm5617, %v5393, 0.0
      %v5682 = vsel %vm5618, %v5394, 0.0
      %v5683 = vsel %vm5619, %v5395, 0.0
      %v5684 = vsel %vm5620, %v5396, 0.0
      %v5685 = vsel %vm5621, %v5397, 0.0
      %v5686 = vsel %vm5622, %v5398, 0.0
      %v5687 = vsel %vm5623, %v5399, 0.0
      %v5688 = vsel %vm5624, %v5400, 0.0
      %v5689 = vsel %vm5625, %v5401, 0.0
      %v5690 = vsel %vm5626, %v5402, 0.0
      %v5691 = vsel %vm5627, %v5403, 0.0
      %v5692 = vsel %vm5628, %v5404, 0.0
      %v5693 = vsel %vm5629, %v5405, 0.0
      %v5694 = vsel %vm5630, %v5406, 0.0
      %v5695 = vsel %vm5631, %v5407, 0.0
      %v5696 = vsel %vm5632, %v5408, 0.0
      %v5697 = vsel %vm5633, %v5409, 0.0
      %v5698 = vsel %vm5634, %v5410, 0.0
      %v5699 = vsel %vm5635, %v5411, 0.0
      %v5700 = vsel %vm5636, %v5412, 0.0
      %v5701 = vsel %vm5637, %v5413, 0.0
      %v5702 = vsel %vm5478, 1, 0
      %v5703 = vsel %vm5479, 1, 0
      %v5704 = vsel %vm5480, 1, 0
      %v5705 = vsel %vm5481, 1, 0
      %v5706 = vsel %vm5482, 1, 0
      %v5707 = vsel %vm5483, 1, 0
      %v5708 = vsel %vm5484, 1, 0
      %v5709 = vsel %vm5485, 1, 0
      %v5710 = vsel %vm5486, 1, 0
      %v5711 = vsel %vm5487, 1, 0
      %v5712 = vsel %vm5488, 1, 0
      %v5713 = vsel %vm5489, 1, 0
      %v5714 = vsel %vm5490, 1, 0
      %v5715 = vsel %vm5491, 1, 0
      %v5716 = vsel %vm5492, 1, 0
      %v5717 = vsel %vm5493, 1, 0
      %v5718 = vsel %vm5494, 1, 0
      %v5719 = vsel %vm5495, 1, 0
      %v5720 = vsel %vm5496, 1, 0
      %v5721 = vsel %vm5497, 1, 0
      %v5722 = vsel %vm5498, 1, 0
      %v5723 = vsel %vm5499, 1, 0
      %v5724 = vsel %vm5500, 1, 0
      %v5725 = vsel %vm5501, 1, 0
      %v5726 = vsel %vm5502, 1, 0
      %v5727 = vsel %vm5503, 1, 0
      %v5728 = vsel %vm5504, 1, 0
      %v5729 = vsel %vm5505, 1, 0
      %v5730 = vsel %vm5506, 1, 0
      %v5731 = vsel %vm5507, 1, 0
      %v5732 = vsel %vm5508, 1, 0
      %v5733 = vsel %vm5509, 1, 0
      %vm5734 = vcmp.eq.s32.totalorder %v5702, 1
      %vm5735 = vcmp.eq.s32.totalorder %v5703, 1
      %vm5736 = vcmp.eq.s32.totalorder %v5704, 1
      %vm5737 = vcmp.eq.s32.totalorder %v5705, 1
      %vm5738 = vcmp.eq.s32.totalorder %v5706, 1
      %vm5739 = vcmp.eq.s32.totalorder %v5707, 1
      %vm5740 = vcmp.eq.s32.totalorder %v5708, 1
      %vm5741 = vcmp.eq.s32.totalorder %v5709, 1
      %vm5742 = vcmp.eq.s32.totalorder %v5710, 1
      %vm5743 = vcmp.eq.s32.totalorder %v5711, 1
      %vm5744 = vcmp.eq.s32.totalorder %v5712, 1
      %vm5745 = vcmp.eq.s32.totalorder %v5713, 1
      %vm5746 = vcmp.eq.s32.totalorder %v5714, 1
      %vm5747 = vcmp.eq.s32.totalorder %v5715, 1
      %vm5748 = vcmp.eq.s32.totalorder %v5716, 1
      %vm5749 = vcmp.eq.s32.totalorder %v5717, 1
      %vm5750 = vcmp.eq.s32.totalorder %v5718, 1
      %vm5751 = vcmp.eq.s32.totalorder %v5719, 1
      %vm5752 = vcmp.eq.s32.totalorder %v5720, 1
      %vm5753 = vcmp.eq.s32.totalorder %v5721, 1
      %vm5754 = vcmp.eq.s32.totalorder %v5722, 1
      %vm5755 = vcmp.eq.s32.totalorder %v5723, 1
      %vm5756 = vcmp.eq.s32.totalorder %v5724, 1
      %vm5757 = vcmp.eq.s32.totalorder %v5725, 1
      %vm5758 = vcmp.eq.s32.totalorder %v5726, 1
      %vm5759 = vcmp.eq.s32.totalorder %v5727, 1
      %vm5760 = vcmp.eq.s32.totalorder %v5728, 1
      %vm5761 = vcmp.eq.s32.totalorder %v5729, 1
      %vm5762 = vcmp.eq.s32.totalorder %v5730, 1
      %vm5763 = vcmp.eq.s32.totalorder %v5731, 1
      %vm5764 = vcmp.eq.s32.totalorder %v5732, 1
      %vm5765 = vcmp.eq.s32.totalorder %v5733, 1
      %v5766 = vsel %vm5734, %v5122, 0.0
      %v5767 = vsel %vm5735, %v5091, 0.0
      %v5768 = vsel %vm5736, %v5092, 0.0
      %v5769 = vsel %vm5737, %v5093, 0.0
      %v5770 = vsel %vm5738, %v5094, 0.0
      %v5771 = vsel %vm5739, %v5095, 0.0
      %v5772 = vsel %vm5740, %v5096, 0.0
      %v5773 = vsel %vm5741, %v5097, 0.0
      %v5774 = vsel %vm5742, %v5098, 0.0
      %v5775 = vsel %vm5743, %v5099, 0.0
      %v5776 = vsel %vm5744, %v5100, 0.0
      %v5777 = vsel %vm5745, %v5101, 0.0
      %v5778 = vsel %vm5746, %v5102, 0.0
      %v5779 = vsel %vm5747, %v5103, 0.0
      %v5780 = vsel %vm5748, %v5104, 0.0
      %v5781 = vsel %vm5749, %v5105, 0.0
      %v5782 = vsel %vm5750, %v5106, 0.0
      %v5783 = vsel %vm5751, %v5107, 0.0
      %v5784 = vsel %vm5752, %v5108, 0.0
      %v5785 = vsel %vm5753, %v5109, 0.0
      %v5786 = vsel %vm5754, %v5110, 0.0
      %v5787 = vsel %vm5755, %v5111, 0.0
      %v5788 = vsel %vm5756, %v5112, 0.0
      %v5789 = vsel %vm5757, %v5113, 0.0
      %v5790 = vsel %vm5758, %v5114, 0.0
      %v5791 = vsel %vm5759, %v5115, 0.0
      %v5792 = vsel %vm5760, %v5116, 0.0
      %v5793 = vsel %vm5761, %v5117, 0.0
      %v5794 = vsel %vm5762, %v5118, 0.0
      %v5795 = vsel %vm5763, %v5119, 0.0
      %v5796 = vsel %vm5764, %v5120, 0.0
      %v5797 = vsel %vm5765, %v5121, 0.0
      %v5798 = vsel %vm5734, %v5154, 0.0
      %v5799 = vsel %vm5735, %v5123, 0.0
      %v5800 = vsel %vm5736, %v5124, 0.0
      %v5801 = vsel %vm5737, %v5125, 0.0
      %v5802 = vsel %vm5738, %v5126, 0.0
      %v5803 = vsel %vm5739, %v5127, 0.0
      %v5804 = vsel %vm5740, %v5128, 0.0
      %v5805 = vsel %vm5741, %v5129, 0.0
      %v5806 = vsel %vm5742, %v5130, 0.0
      %v5807 = vsel %vm5743, %v5131, 0.0
      %v5808 = vsel %vm5744, %v5132, 0.0
      %v5809 = vsel %vm5745, %v5133, 0.0
      %v5810 = vsel %vm5746, %v5134, 0.0
      %v5811 = vsel %vm5747, %v5135, 0.0
      %v5812 = vsel %vm5748, %v5136, 0.0
      %v5813 = vsel %vm5749, %v5137, 0.0
      %v5814 = vsel %vm5750, %v5138, 0.0
      %v5815 = vsel %vm5751, %v5139, 0.0
      %v5816 = vsel %vm5752, %v5140, 0.0
      %v5817 = vsel %vm5753, %v5141, 0.0
      %v5818 = vsel %vm5754, %v5142, 0.0
      %v5819 = vsel %vm5755, %v5143, 0.0
      %v5820 = vsel %vm5756, %v5144, 0.0
      %v5821 = vsel %vm5757, %v5145, 0.0
      %v5822 = vsel %vm5758, %v5146, 0.0
      %v5823 = vsel %vm5759, %v5147, 0.0
      %v5824 = vsel %vm5760, %v5148, 0.0
      %v5825 = vsel %vm5761, %v5149, 0.0
      %v5826 = vsel %vm5762, %v5150, 0.0
      %v5827 = vsel %vm5763, %v5151, 0.0
      %v5828 = vsel %vm5764, %v5152, 0.0
      %v5829 = vsel %vm5765, %v5153, 0.0
      %5830 = vrot.lane.b32.xlu0 %v5122, 126
      %v5831 = vpop.permute.xlu0 %5830
      %5832 = vrot.lane.b32.xlu0 %v5154, 126
      %v5833 = vpop.permute.xlu0 %5832
      %5836 = vrot.lane.b32.xlu0 %v5091, 126
      %v5837 = vpop.permute.xlu0 %5836
      %5838 = vrot.lane.b32.xlu0 %v5092, 126
      %v5839 = vpop.permute.xlu0 %5838
      %5840 = vrot.lane.b32.xlu0 %v5093, 126
      %v5841 = vpop.permute.xlu0 %5840
      %5842 = vrot.lane.b32.xlu0 %v5094, 126
      %v5843 = vpop.permute.xlu0 %5842
      %5844 = vrot.lane.b32.xlu0 %v5095, 126
      %v5845 = vpop.permute.xlu0 %5844
      %5846 = vrot.lane.b32.xlu0 %v5096, 126
      %v5847 = vpop.permute.xlu0 %5846
      %5848 = vrot.lane.b32.xlu0 %v5097, 126
      %v5849 = vpop.permute.xlu0 %5848
      %5850 = vrot.lane.b32.xlu0 %v5098, 126
      %v5851 = vpop.permute.xlu0 %5850
      %5852 = vrot.lane.b32.xlu0 %v5099, 126
      %v5853 = vpop.permute.xlu0 %5852
      %5854 = vrot.lane.b32.xlu0 %v5100, 126
      %v5855 = vpop.permute.xlu0 %5854
      %5856 = vrot.lane.b32.xlu0 %v5101, 126
      %v5857 = vpop.permute.xlu0 %5856
      %5858 = vrot.lane.b32.xlu0 %v5102, 126
      %v5859 = vpop.permute.xlu0 %5858
      %5860 = vrot.lane.b32.xlu0 %v5103, 126
      %v5861 = vpop.permute.xlu0 %5860
      %5862 = vrot.lane.b32.xlu0 %v5104, 126
      %v5863 = vpop.permute.xlu0 %5862
      %5864 = vrot.lane.b32.xlu0 %v5105, 126
      %v5865 = vpop.permute.xlu0 %5864
      %5866 = vrot.lane.b32.xlu0 %v5106, 126
      %v5867 = vpop.permute.xlu0 %5866
      %5868 = vrot.lane.b32.xlu0 %v5107, 126
      %v5869 = vpop.permute.xlu0 %5868
      %5870 = vrot.lane.b32.xlu0 %v5108, 126
      %v5871 = vpop.permute.xlu0 %5870
      %5872 = vrot.lane.b32.xlu0 %v5109, 126
      %v5873 = vpop.permute.xlu0 %5872
      %5874 = vrot.lane.b32.xlu0 %v5110, 126
      %v5875 = vpop.permute.xlu0 %5874
      %5876 = vrot.lane.b32.xlu0 %v5111, 126
      %v5877 = vpop.permute.xlu0 %5876
      %5878 = vrot.lane.b32.xlu0 %v5112, 126
      %v5879 = vpop.permute.xlu0 %5878
      %5880 = vrot.lane.b32.xlu0 %v5113, 126
      %v5881 = vpop.permute.xlu0 %5880
      %5882 = vrot.lane.b32.xlu0 %v5114, 126
      %v5883 = vpop.permute.xlu0 %5882
      %5884 = vrot.lane.b32.xlu0 %v5115, 126
      %v5885 = vpop.permute.xlu0 %5884
      %5886 = vrot.lane.b32.xlu0 %v5116, 126
      %v5887 = vpop.permute.xlu0 %5886
      %5888 = vrot.lane.b32.xlu0 %v5117, 126
      %v5889 = vpop.permute.xlu0 %5888
      %5890 = vrot.lane.b32.xlu0 %v5118, 126
      %v5891 = vpop.permute.xlu0 %5890
      %5892 = vrot.lane.b32.xlu0 %v5119, 126
      %v5893 = vpop.permute.xlu0 %5892
      %5894 = vrot.lane.b32.xlu0 %v5120, 126
      %v5895 = vpop.permute.xlu0 %5894
      %5896 = vrot.lane.b32.xlu0 %v5121, 126
      %v5897 = vpop.permute.xlu0 %5896
      %5898 = vrot.lane.b32.xlu0 %v5123, 126
      %v5899 = vpop.permute.xlu0 %5898
      %5900 = vrot.lane.b32.xlu0 %v5124, 126
      %v5901 = vpop.permute.xlu0 %5900
      %5902 = vrot.lane.b32.xlu0 %v5125, 126
      %v5903 = vpop.permute.xlu0 %5902
      %5904 = vrot.lane.b32.xlu0 %v5126, 126
      %v5905 = vpop.permute.xlu0 %5904
      %5906 = vrot.lane.b32.xlu0 %v5127, 126
      %v5907 = vpop.permute.xlu0 %5906
      %5908 = vrot.lane.b32.xlu0 %v5128, 126
      %v5909 = vpop.permute.xlu0 %5908
      %5910 = vrot.lane.b32.xlu0 %v5129, 126
      %v5911 = vpop.permute.xlu0 %5910
      %5912 = vrot.lane.b32.xlu0 %v5130, 126
      %v5913 = vpop.permute.xlu0 %5912
      %5914 = vrot.lane.b32.xlu0 %v5131, 126
      %v5915 = vpop.permute.xlu0 %5914
      %5916 = vrot.lane.b32.xlu0 %v5132, 126
      %v5917 = vpop.permute.xlu0 %5916
      %5918 = vrot.lane.b32.xlu0 %v5133, 126
      %v5919 = vpop.permute.xlu0 %5918
      %5920 = vrot.lane.b32.xlu0 %v5134, 126
      %v5921 = vpop.permute.xlu0 %5920
      %5922 = vrot.lane.b32.xlu0 %v5135, 126
      %v5923 = vpop.permute.xlu0 %5922
      %5924 = vrot.lane.b32.xlu0 %v5136, 126
      %v5925 = vpop.permute.xlu0 %5924
      %5926 = vrot.lane.b32.xlu0 %v5137, 126
      %v5927 = vpop.permute.xlu0 %5926
      %5928 = vrot.lane.b32.xlu0 %v5138, 126
      %v5929 = vpop.permute.xlu0 %5928
      %5930 = vrot.lane.b32.xlu0 %v5139, 126
      %v5931 = vpop.permute.xlu0 %5930
      %5932 = vrot.lane.b32.xlu0 %v5140, 126
      %v5933 = vpop.permute.xlu0 %5932
      %5934 = vrot.lane.b32.xlu0 %v5141, 126
      %v5935 = vpop.permute.xlu0 %5934
      %5936 = vrot.lane.b32.xlu0 %v5142, 126
      %v5937 = vpop.permute.xlu0 %5936
      %5938 = vrot.lane.b32.xlu0 %v5143, 126
      %v5939 = vpop.permute.xlu0 %5938
      %5940 = vrot.lane.b32.xlu0 %v5144, 126
      %v5941 = vpop.permute.xlu0 %5940
      %5942 = vrot.lane.b32.xlu0 %v5145, 126
      %v5943 = vpop.permute.xlu0 %5942
      %5944 = vrot.lane.b32.xlu0 %v5146, 126
      %v5945 = vpop.permute.xlu0 %5944
      %5946 = vrot.lane.b32.xlu0 %v5147, 126
      %v5947 = vpop.permute.xlu0 %5946
      %5948 = vrot.lane.b32.xlu0 %v5148, 126
      %v5949 = vpop.permute.xlu0 %5948
      %5950 = vrot.lane.b32.xlu0 %v5149, 126
      %v5951 = vpop.permute.xlu0 %5950
      %5952 = vrot.lane.b32.xlu0 %v5150, 126
      %v5953 = vpop.permute.xlu0 %5952
      %5954 = vrot.lane.b32.xlu0 %v5151, 126
      %v5955 = vpop.permute.xlu0 %5954
      %5956 = vrot.lane.b32.xlu0 %v5152, 126
      %v5957 = vpop.permute.xlu0 %5956
      %5958 = vrot.lane.b32.xlu0 %v5153, 126
      %v5959 = vpop.permute.xlu0 %5958
      %vm5960 = vcmask 1031168
      %v5961 = vsel %vm5960, %v5837, %v5839
      %v5962 = vsel %vm5960, %v5839, %v5841
      %v5963 = vsel %vm5960, %v5841, %v5843
      %v5964 = vsel %vm5960, %v5843, %v5845
      %v5965 = vsel %vm5960, %v5845, %v5847
      %v5966 = vsel %vm5960, %v5847, %v5849
      %v5967 = vsel %vm5960, %v5849, %v5851
      %v5968 = vsel %vm5960, %v5851, %v5853
      %v5969 = vsel %vm5960, %v5853, %v5855
      %v5970 = vsel %vm5960, %v5855, %v5857
      %v5971 = vsel %vm5960, %v5857, %v5859
      %v5972 = vsel %vm5960, %v5859, %v5861
      %v5973 = vsel %vm5960, %v5861, %v5863
      %v5974 = vsel %vm5960, %v5863, %v5865
      %v5975 = vsel %vm5960, %v5865, %v5867
      %v5976 = vsel %vm5960, %v5867, %v5869
      %v5977 = vsel %vm5960, %v5869, %v5871
      %v5978 = vsel %vm5960, %v5871, %v5873
      %v5979 = vsel %vm5960, %v5873, %v5875
      %v5980 = vsel %vm5960, %v5875, %v5877
      %v5981 = vsel %vm5960, %v5877, %v5879
      %v5982 = vsel %vm5960, %v5879, %v5881
      %v5983 = vsel %vm5960, %v5881, %v5883
      %v5984 = vsel %vm5960, %v5883, %v5885
      %v5985 = vsel %vm5960, %v5885, %v5887
      %v5986 = vsel %vm5960, %v5887, %v5889
      %v5987 = vsel %vm5960, %v5889, %v5891
      %v5988 = vsel %vm5960, %v5891, %v5893
      %v5989 = vsel %vm5960, %v5893, %v5895
      %v5990 = vsel %vm5960, %v5895, %v5897
      %v5991 = vsel %vm5960, %v5897, %v5831
      %v5992 = vsel %vm5960, %v5899, %v5901
      %v5993 = vsel %vm5960, %v5901, %v5903
      %v5994 = vsel %vm5960, %v5903, %v5905
      %v5995 = vsel %vm5960, %v5905, %v5907
      %v5996 = vsel %vm5960, %v5907, %v5909
      %v5997 = vsel %vm5960, %v5909, %v5911
      %v5998 = vsel %vm5960, %v5911, %v5913
      %v5999 = vsel %vm5960, %v5913, %v5915
      %v6000 = vsel %vm5960, %v5915, %v5917
      %v6001 = vsel %vm5960, %v5917, %v5919
      %v6002 = vsel %vm5960, %v5919, %v5921
      %v6003 = vsel %vm5960, %v5921, %v5923
      %v6004 = vsel %vm5960, %v5923, %v5925
      %v6005 = vsel %vm5960, %v5925, %v5927
      %v6006 = vsel %vm5960, %v5927, %v5929
      %v6007 = vsel %vm5960, %v5929, %v5931
      %v6008 = vsel %vm5960, %v5931, %v5933
      %v6009 = vsel %vm5960, %v5933, %v5935
      %v6010 = vsel %vm5960, %v5935, %v5937
      %v6011 = vsel %vm5960, %v5937, %v5939
      %v6012 = vsel %vm5960, %v5939, %v5941
      %v6013 = vsel %vm5960, %v5941, %v5943
      %v6014 = vsel %vm5960, %v5943, %v5945
      %v6015 = vsel %vm5960, %v5945, %v5947
      %v6016 = vsel %vm5960, %v5947, %v5949
      %v6017 = vsel %vm5960, %v5949, %v5951
      %v6018 = vsel %vm5960, %v5951, %v5953
      %v6019 = vsel %vm5960, %v5953, %v5955
      %v6020 = vsel %vm5960, %v5955, %v5957
      %v6021 = vsel %vm5960, %v5957, %v5959
      %v6022 = vsel %vm5960, %v5959, %v5833
      %v6087 = vsel %vm5960, %v5831, %v5837
      %v6088 = vsel %vm5960, %v5833, %v5899
      %vm6089 = vcmp.lt.s32.totalorder %v377, 62
      %vm6090 = vcmp.lt.s32.totalorder %v378, 62
      %vm6091 = vcmp.lt.s32.totalorder %v379, 62
      %vm6092 = vcmp.lt.s32.totalorder %v380, 62
      %vm6093 = vcmp.lt.s32.totalorder %v381, 62
      %vm6094 = vcmp.lt.s32.totalorder %v382, 62
      %vm6095 = vcmp.lt.s32.totalorder %v383, 62
      %vm6096 = vcmp.lt.s32.totalorder %v384, 62
      %vm6097 = vcmp.lt.s32.totalorder %v385, 62
      %vm6098 = vcmp.lt.s32.totalorder %v386, 62
      %vm6099 = vcmp.lt.s32.totalorder %v387, 62
      %vm6100 = vcmp.lt.s32.totalorder %v388, 62
      %vm6101 = vcmp.lt.s32.totalorder %v389, 62
      %vm6102 = vcmp.lt.s32.totalorder %v390, 62
      %vm6103 = vcmp.lt.s32.totalorder %v391, 62
      %vm6104 = vcmp.lt.s32.totalorder %v392, 62
      %vm6105 = vcmp.lt.s32.totalorder %v393, 62
      %vm6106 = vcmp.lt.s32.totalorder %v394, 62
      %vm6107 = vcmp.lt.s32.totalorder %v395, 62
      %vm6108 = vcmp.lt.s32.totalorder %v396, 62
      %vm6109 = vcmp.lt.s32.totalorder %v397, 62
      %vm6110 = vcmp.lt.s32.totalorder %v398, 62
      %vm6111 = vcmp.lt.s32.totalorder %v399, 62
      %vm6112 = vcmp.lt.s32.totalorder %v400, 62
      %vm6113 = vcmp.lt.s32.totalorder %v401, 62
      %vm6114 = vcmp.lt.s32.totalorder %v402, 62
      %vm6115 = vcmp.lt.s32.totalorder %v403, 62
      %vm6116 = vcmp.lt.s32.totalorder %v404, 62
      %vm6117 = vcmp.lt.s32.totalorder %v405, 62
      %vm6118 = vcmp.lt.s32.totalorder %v406, 62
      %vm6119 = vcmp.lt.s32.totalorder %v407, 62
      %vm6120 = vcmp.lt.s32.totalorder %v408, 62
      %vm6121 = vmand %vm5478, %vm6089
      %vm6122 = vmand %vm5479, %vm6090
      %vm6123 = vmand %vm5480, %vm6091
      %vm6124 = vmand %vm5481, %vm6092
      %vm6125 = vmand %vm5482, %vm6093
      %vm6126 = vmand %vm5483, %vm6094
      %vm6127 = vmand %vm5484, %vm6095
      %vm6128 = vmand %vm5485, %vm6096
      %vm6129 = vmand %vm5486, %vm6097
      %vm6130 = vmand %vm5487, %vm6098
      %vm6131 = vmand %vm5488, %vm6099
      %vm6132 = vmand %vm5489, %vm6100
      %vm6133 = vmand %vm5490, %vm6101
      %vm6134 = vmand %vm5491, %vm6102
      %vm6135 = vmand %vm5492, %vm6103
      %vm6136 = vmand %vm5493, %vm6104
      %vm6137 = vmand %vm5494, %vm6105
      %vm6138 = vmand %vm5495, %vm6106
      %vm6139 = vmand %vm5496, %vm6107
      %vm6140 = vmand %vm5497, %vm6108
      %vm6141 = vmand %vm5498, %vm6109
      %vm6142 = vmand %vm5499, %vm6110
      %vm6143 = vmand %vm5500, %vm6111
      %vm6144 = vmand %vm5501, %vm6112
      %vm6145 = vmand %vm5502, %vm6113
      %vm6146 = vmand %vm5503, %vm6114
      %vm6147 = vmand %vm5504, %vm6115
      %vm6148 = vmand %vm5505, %vm6116
      %vm6149 = vmand %vm5506, %vm6117
      %vm6150 = vmand %vm5507, %vm6118
      %vm6151 = vmand %vm5508, %vm6119
      %vm6152 = vmand %vm5509, %vm6120
      %v6153 = vsel %vm6121, 1, 0
      %v6154 = vsel %vm6122, 1, 0
      %v6155 = vsel %vm6123, 1, 0
      %v6156 = vsel %vm6124, 1, 0
      %v6157 = vsel %vm6125, 1, 0
      %v6158 = vsel %vm6126, 1, 0
      %v6159 = vsel %vm6127, 1, 0
      %v6160 = vsel %vm6128, 1, 0
      %v6161 = vsel %vm6129, 1, 0
      %v6162 = vsel %vm6130, 1, 0
      %v6163 = vsel %vm6131, 1, 0
      %v6164 = vsel %vm6132, 1, 0
      %v6165 = vsel %vm6133, 1, 0
      %v6166 = vsel %vm6134, 1, 0
      %v6167 = vsel %vm6135, 1, 0
      %v6168 = vsel %vm6136, 1, 0
      %v6169 = vsel %vm6137, 1, 0
      %v6170 = vsel %vm6138, 1, 0
      %v6171 = vsel %vm6139, 1, 0
      %v6172 = vsel %vm6140, 1, 0
      %v6173 = vsel %vm6141, 1, 0
      %v6174 = vsel %vm6142, 1, 0
      %v6175 = vsel %vm6143, 1, 0
      %v6176 = vsel %vm6144, 1, 0
      %v6177 = vsel %vm6145, 1, 0
      %v6178 = vsel %vm6146, 1, 0
      %v6179 = vsel %vm6147, 1, 0
      %v6180 = vsel %vm6148, 1, 0
      %v6181 = vsel %vm6149, 1, 0
      %v6182 = vsel %vm6150, 1, 0
      %v6183 = vsel %vm6151, 1, 0
      %v6184 = vsel %vm6152, 1, 0
      %vm6185 = vcmp.eq.s32.totalorder %v6153, 1
      %vm6186 = vcmp.eq.s32.totalorder %v6154, 1
      %vm6187 = vcmp.eq.s32.totalorder %v6155, 1
      %vm6188 = vcmp.eq.s32.totalorder %v6156, 1
      %vm6189 = vcmp.eq.s32.totalorder %v6157, 1
      %vm6190 = vcmp.eq.s32.totalorder %v6158, 1
      %vm6191 = vcmp.eq.s32.totalorder %v6159, 1
      %vm6192 = vcmp.eq.s32.totalorder %v6160, 1
      %vm6193 = vcmp.eq.s32.totalorder %v6161, 1
      %vm6194 = vcmp.eq.s32.totalorder %v6162, 1
      %vm6195 = vcmp.eq.s32.totalorder %v6163, 1
      %vm6196 = vcmp.eq.s32.totalorder %v6164, 1
      %vm6197 = vcmp.eq.s32.totalorder %v6165, 1
      %vm6198 = vcmp.eq.s32.totalorder %v6166, 1
      %vm6199 = vcmp.eq.s32.totalorder %v6167, 1
      %vm6200 = vcmp.eq.s32.totalorder %v6168, 1
      %vm6201 = vcmp.eq.s32.totalorder %v6169, 1
      %vm6202 = vcmp.eq.s32.totalorder %v6170, 1
      %vm6203 = vcmp.eq.s32.totalorder %v6171, 1
      %vm6204 = vcmp.eq.s32.totalorder %v6172, 1
      %vm6205 = vcmp.eq.s32.totalorder %v6173, 1
      %vm6206 = vcmp.eq.s32.totalorder %v6174, 1
      %vm6207 = vcmp.eq.s32.totalorder %v6175, 1
      %vm6208 = vcmp.eq.s32.totalorder %v6176, 1
      %vm6209 = vcmp.eq.s32.totalorder %v6177, 1
      %vm6210 = vcmp.eq.s32.totalorder %v6178, 1
      %vm6211 = vcmp.eq.s32.totalorder %v6179, 1
      %vm6212 = vcmp.eq.s32.totalorder %v6180, 1
      %vm6213 = vcmp.eq.s32.totalorder %v6181, 1
      %vm6214 = vcmp.eq.s32.totalorder %v6182, 1
      %vm6215 = vcmp.eq.s32.totalorder %v6183, 1
      %vm6216 = vcmp.eq.s32.totalorder %v6184, 1
      %v6217 = vsel %vm6185, %v6087, 0.0
      %v6218 = vsel %vm6186, %v5961, 0.0
      %v6219 = vsel %vm6187, %v5962, 0.0
      %v6220 = vsel %vm6188, %v5963, 0.0
      %v6221 = vsel %vm6189, %v5964, 0.0
      %v6222 = vsel %vm6190, %v5965, 0.0
      %v6223 = vsel %vm6191, %v5966, 0.0
      %v6224 = vsel %vm6192, %v5967, 0.0
      %v6225 = vsel %vm6193, %v5968, 0.0
      %v6226 = vsel %vm6194, %v5969, 0.0
      %v6227 = vsel %vm6195, %v5970, 0.0
      %v6228 = vsel %vm6196, %v5971, 0.0
      %v6229 = vsel %vm6197, %v5972, 0.0
      %v6230 = vsel %vm6198, %v5973, 0.0
      %v6231 = vsel %vm6199, %v5974, 0.0
      %v6232 = vsel %vm6200, %v5975, 0.0
      %v6233 = vsel %vm6201, %v5976, 0.0
      %v6234 = vsel %vm6202, %v5977, 0.0
      %v6235 = vsel %vm6203, %v5978, 0.0
      %v6236 = vsel %vm6204, %v5979, 0.0
      %v6237 = vsel %vm6205, %v5980, 0.0
      %v6238 = vsel %vm6206, %v5981, 0.0
      %v6239 = vsel %vm6207, %v5982, 0.0
      %v6240 = vsel %vm6208, %v5983, 0.0
      %v6241 = vsel %vm6209, %v5984, 0.0
      %v6242 = vsel %vm6210, %v5985, 0.0
      %v6243 = vsel %vm6211, %v5986, 0.0
      %v6244 = vsel %vm6212, %v5987, 0.0
      %v6245 = vsel %vm6213, %v5988, 0.0
      %v6246 = vsel %vm6214, %v5989, 0.0
      %v6247 = vsel %vm6215, %v5990, 0.0
      %v6248 = vsel %vm6216, %v5991, 0.0
      %v6249 = vsel %vm6185, %v6088, 0.0
      %v6250 = vsel %vm6186, %v5992, 0.0
      %v6251 = vsel %vm6187, %v5993, 0.0
      %v6252 = vsel %vm6188, %v5994, 0.0
      %v6253 = vsel %vm6189, %v5995, 0.0
      %v6254 = vsel %vm6190, %v5996, 0.0
      %v6255 = vsel %vm6191, %v5997, 0.0
      %v6256 = vsel %vm6192, %v5998, 0.0
      %v6257 = vsel %vm6193, %v5999, 0.0
      %v6258 = vsel %vm6194, %v6000, 0.0
      %v6259 = vsel %vm6195, %v6001, 0.0
      %v6260 = vsel %vm6196, %v6002, 0.0
      %v6261 = vsel %vm6197, %v6003, 0.0
      %v6262 = vsel %vm6198, %v6004, 0.0
      %v6263 = vsel %vm6199, %v6005, 0.0
      %v6264 = vsel %vm6200, %v6006, 0.0
      %v6265 = vsel %vm6201, %v6007, 0.0
      %v6266 = vsel %vm6202, %v6008, 0.0
      %v6267 = vsel %vm6203, %v6009, 0.0
      %v6268 = vsel %vm6204, %v6010, 0.0
      %v6269 = vsel %vm6205, %v6011, 0.0
      %v6270 = vsel %vm6206, %v6012, 0.0
      %v6271 = vsel %vm6207, %v6013, 0.0
      %v6272 = vsel %vm6208, %v6014, 0.0
      %v6273 = vsel %vm6209, %v6015, 0.0
      %v6274 = vsel %vm6210, %v6016, 0.0
      %v6275 = vsel %vm6211, %v6017, 0.0
      %v6276 = vsel %vm6212, %v6018, 0.0
      %v6277 = vsel %vm6213, %v6019, 0.0
      %v6278 = vsel %vm6214, %v6020, 0.0
      %v6279 = vsel %vm6215, %v6021, 0.0
      %v6280 = vsel %vm6216, %v6022, 0.0
      %v6281 = vsel %vm5510, 1, 0
      %v6282 = vsel %vm5511, 1, 0
      %v6283 = vsel %vm5512, 1, 0
      %v6284 = vsel %vm5513, 1, 0
      %v6285 = vsel %vm5514, 1, 0
      %v6286 = vsel %vm5515, 1, 0
      %v6287 = vsel %vm5516, 1, 0
      %v6288 = vsel %vm5517, 1, 0
      %v6289 = vsel %vm5518, 1, 0
      %v6290 = vsel %vm5519, 1, 0
      %v6291 = vsel %vm5520, 1, 0
      %v6292 = vsel %vm5521, 1, 0
      %v6293 = vsel %vm5522, 1, 0
      %v6294 = vsel %vm5523, 1, 0
      %v6295 = vsel %vm5524, 1, 0
      %v6296 = vsel %vm5525, 1, 0
      %v6297 = vsel %vm5526, 1, 0
      %v6298 = vsel %vm5527, 1, 0
      %v6299 = vsel %vm5528, 1, 0
      %v6300 = vsel %vm5529, 1, 0
      %v6301 = vsel %vm5530, 1, 0
      %v6302 = vsel %vm5531, 1, 0
      %v6303 = vsel %vm5532, 1, 0
      %v6304 = vsel %vm5533, 1, 0
      %v6305 = vsel %vm5534, 1, 0
      %v6306 = vsel %vm5535, 1, 0
      %v6307 = vsel %vm5536, 1, 0
      %v6308 = vsel %vm5537, 1, 0
      %v6309 = vsel %vm5538, 1, 0
      %v6310 = vsel %vm5539, 1, 0
      %v6311 = vsel %vm5540, 1, 0
      %v6312 = vsel %vm5541, 1, 0
      %vm6313 = vcmp.eq.s32.totalorder %v6281, 1
      %vm6314 = vcmp.eq.s32.totalorder %v6282, 1
      %vm6315 = vcmp.eq.s32.totalorder %v6283, 1
      %vm6316 = vcmp.eq.s32.totalorder %v6284, 1
      %vm6317 = vcmp.eq.s32.totalorder %v6285, 1
      %vm6318 = vcmp.eq.s32.totalorder %v6286, 1
      %vm6319 = vcmp.eq.s32.totalorder %v6287, 1
      %vm6320 = vcmp.eq.s32.totalorder %v6288, 1
      %vm6321 = vcmp.eq.s32.totalorder %v6289, 1
      %vm6322 = vcmp.eq.s32.totalorder %v6290, 1
      %vm6323 = vcmp.eq.s32.totalorder %v6291, 1
      %vm6324 = vcmp.eq.s32.totalorder %v6292, 1
      %vm6325 = vcmp.eq.s32.totalorder %v6293, 1
      %vm6326 = vcmp.eq.s32.totalorder %v6294, 1
      %vm6327 = vcmp.eq.s32.totalorder %v6295, 1
      %vm6328 = vcmp.eq.s32.totalorder %v6296, 1
      %vm6329 = vcmp.eq.s32.totalorder %v6297, 1
      %vm6330 = vcmp.eq.s32.totalorder %v6298, 1
      %vm6331 = vcmp.eq.s32.totalorder %v6299, 1
      %vm6332 = vcmp.eq.s32.totalorder %v6300, 1
      %vm6333 = vcmp.eq.s32.totalorder %v6301, 1
      %vm6334 = vcmp.eq.s32.totalorder %v6302, 1
      %vm6335 = vcmp.eq.s32.totalorder %v6303, 1
      %vm6336 = vcmp.eq.s32.totalorder %v6304, 1
      %vm6337 = vcmp.eq.s32.totalorder %v6305, 1
      %vm6338 = vcmp.eq.s32.totalorder %v6306, 1
      %vm6339 = vcmp.eq.s32.totalorder %v6307, 1
      %vm6340 = vcmp.eq.s32.totalorder %v6308, 1
      %vm6341 = vcmp.eq.s32.totalorder %v6309, 1
      %vm6342 = vcmp.eq.s32.totalorder %v6310, 1
      %vm6343 = vcmp.eq.s32.totalorder %v6311, 1
      %vm6344 = vcmp.eq.s32.totalorder %v6312, 1
      %v6345 = vsel %vm6313, %v5476, 0.0
      %v6346 = vsel %vm6314, %v5354, 0.0
      %v6347 = vsel %vm6315, %v5355, 0.0
      %v6348 = vsel %vm6316, %v5356, 0.0
      %v6349 = vsel %vm6317, %v5357, 0.0
      %v6350 = vsel %vm6318, %v5358, 0.0
      %v6351 = vsel %vm6319, %v5359, 0.0
      %v6352 = vsel %vm6320, %v5360, 0.0
      %v6353 = vsel %vm6321, %v5361, 0.0
      %v6354 = vsel %vm6322, %v5362, 0.0
      %v6355 = vsel %vm6323, %v5363, 0.0
      %v6356 = vsel %vm6324, %v5364, 0.0
      %v6357 = vsel %vm6325, %v5365, 0.0
      %v6358 = vsel %vm6326, %v5366, 0.0
      %v6359 = vsel %vm6327, %v5367, 0.0
      %v6360 = vsel %vm6328, %v5368, 0.0
      %v6361 = vsel %vm6329, %v5369, 0.0
      %v6362 = vsel %vm6330, %v5370, 0.0
      %v6363 = vsel %vm6331, %v5371, 0.0
      %v6364 = vsel %vm6332, %v5372, 0.0
      %v6365 = vsel %vm6333, %v5373, 0.0
      %v6366 = vsel %vm6334, %v5374, 0.0
      %v6367 = vsel %vm6335, %v5375, 0.0
      %v6368 = vsel %vm6336, %v5376, 0.0
      %v6369 = vsel %vm6337, %v5377, 0.0
      %v6370 = vsel %vm6338, %v5378, 0.0
      %v6371 = vsel %vm6339, %v5379, 0.0
      %v6372 = vsel %vm6340, %v5380, 0.0
      %v6373 = vsel %vm6341, %v5381, 0.0
      %v6374 = vsel %vm6342, %v5382, 0.0
      %v6375 = vsel %vm6343, %v5383, 0.0
      %v6376 = vsel %vm6344, %v5168, 0.0
      %v6377 = vsel %vm6313, %v5477, 0.0
      %v6378 = vsel %vm6314, %v5384, 0.0
      %v6379 = vsel %vm6315, %v5385, 0.0
      %v6380 = vsel %vm6316, %v5386, 0.0
      %v6381 = vsel %vm6317, %v5387, 0.0
      %v6382 = vsel %vm6318, %v5388, 0.0
      %v6383 = vsel %vm6319, %v5389, 0.0
      %v6384 = vsel %vm6320, %v5390, 0.0
      %v6385 = vsel %vm6321, %v5391, 0.0
      %v6386 = vsel %vm6322, %v5392, 0.0
      %v6387 = vsel %vm6323, %v5393, 0.0
      %v6388 = vsel %vm6324, %v5394, 0.0
      %v6389 = vsel %vm6325, %v5395, 0.0
      %v6390 = vsel %vm6326, %v5396, 0.0
      %v6391 = vsel %vm6327, %v5397, 0.0
      %v6392 = vsel %vm6328, %v5398, 0.0
      %v6393 = vsel %vm6329, %v5399, 0.0
      %v6394 = vsel %vm6330, %v5400, 0.0
      %v6395 = vsel %vm6331, %v5401, 0.0
      %v6396 = vsel %vm6332, %v5402, 0.0
      %v6397 = vsel %vm6333, %v5403, 0.0
      %v6398 = vsel %vm6334, %v5404, 0.0
      %v6399 = vsel %vm6335, %v5405, 0.0
      %v6400 = vsel %vm6336, %v5406, 0.0
      %v6401 = vsel %vm6337, %v5407, 0.0
      %v6402 = vsel %vm6338, %v5408, 0.0
      %v6403 = vsel %vm6339, %v5409, 0.0
      %v6404 = vsel %vm6340, %v5410, 0.0
      %v6405 = vsel %vm6341, %v5411, 0.0
      %v6406 = vsel %vm6342, %v5412, 0.0
      %v6407 = vsel %vm6343, %v5413, 0.0
      %v6408 = vsel %vm6344, %v5169, 0.0
      %v6409 = vsel %vm6089, 1, 0
      %v6410 = vsel %vm6090, 1, 0
      %v6411 = vsel %vm6091, 1, 0
      %v6412 = vsel %vm6092, 1, 0
      %v6413 = vsel %vm6093, 1, 0
      %v6414 = vsel %vm6094, 1, 0
      %v6415 = vsel %vm6095, 1, 0
      %v6416 = vsel %vm6096, 1, 0
      %v6417 = vsel %vm6097, 1, 0
      %v6418 = vsel %vm6098, 1, 0
      %v6419 = vsel %vm6099, 1, 0
      %v6420 = vsel %vm6100, 1, 0
      %v6421 = vsel %vm6101, 1, 0
      %v6422 = vsel %vm6102, 1, 0
      %v6423 = vsel %vm6103, 1, 0
      %v6424 = vsel %vm6104, 1, 0
      %v6425 = vsel %vm6105, 1, 0
      %v6426 = vsel %vm6106, 1, 0
      %v6427 = vsel %vm6107, 1, 0
      %v6428 = vsel %vm6108, 1, 0
      %v6429 = vsel %vm6109, 1, 0
      %v6430 = vsel %vm6110, 1, 0
      %v6431 = vsel %vm6111, 1, 0
      %v6432 = vsel %vm6112, 1, 0
      %v6433 = vsel %vm6113, 1, 0
      %v6434 = vsel %vm6114, 1, 0
      %v6435 = vsel %vm6115, 1, 0
      %v6436 = vsel %vm6116, 1, 0
      %v6437 = vsel %vm6117, 1, 0
      %v6438 = vsel %vm6118, 1, 0
      %v6439 = vsel %vm6119, 1, 0
      %v6440 = vsel %vm6120, 1, 0
      %vm6441 = vcmp.eq.s32.totalorder %v6409, 1
      %vm6442 = vcmp.eq.s32.totalorder %v6410, 1
      %vm6443 = vcmp.eq.s32.totalorder %v6411, 1
      %vm6444 = vcmp.eq.s32.totalorder %v6412, 1
      %vm6445 = vcmp.eq.s32.totalorder %v6413, 1
      %vm6446 = vcmp.eq.s32.totalorder %v6414, 1
      %vm6447 = vcmp.eq.s32.totalorder %v6415, 1
      %vm6448 = vcmp.eq.s32.totalorder %v6416, 1
      %vm6449 = vcmp.eq.s32.totalorder %v6417, 1
      %vm6450 = vcmp.eq.s32.totalorder %v6418, 1
      %vm6451 = vcmp.eq.s32.totalorder %v6419, 1
      %vm6452 = vcmp.eq.s32.totalorder %v6420, 1
      %vm6453 = vcmp.eq.s32.totalorder %v6421, 1
      %vm6454 = vcmp.eq.s32.totalorder %v6422, 1
      %vm6455 = vcmp.eq.s32.totalorder %v6423, 1
      %vm6456 = vcmp.eq.s32.totalorder %v6424, 1
      %vm6457 = vcmp.eq.s32.totalorder %v6425, 1
      %vm6458 = vcmp.eq.s32.totalorder %v6426, 1
      %vm6459 = vcmp.eq.s32.totalorder %v6427, 1
      %vm6460 = vcmp.eq.s32.totalorder %v6428, 1
      %vm6461 = vcmp.eq.s32.totalorder %v6429, 1
      %vm6462 = vcmp.eq.s32.totalorder %v6430, 1
      %vm6463 = vcmp.eq.s32.totalorder %v6431, 1
      %vm6464 = vcmp.eq.s32.totalorder %v6432, 1
      %vm6465 = vcmp.eq.s32.totalorder %v6433, 1
      %vm6466 = vcmp.eq.s32.totalorder %v6434, 1
      %vm6467 = vcmp.eq.s32.totalorder %v6435, 1
      %vm6468 = vcmp.eq.s32.totalorder %v6436, 1
      %vm6469 = vcmp.eq.s32.totalorder %v6437, 1
      %vm6470 = vcmp.eq.s32.totalorder %v6438, 1
      %vm6471 = vcmp.eq.s32.totalorder %v6439, 1
      %vm6472 = vcmp.eq.s32.totalorder %v6440, 1
      %v6473 = vsel %vm6441, %v5961, 0.0
      %v6474 = vsel %vm6442, %v5962, 0.0
      %v6475 = vsel %vm6443, %v5963, 0.0
      %v6476 = vsel %vm6444, %v5964, 0.0
      %v6477 = vsel %vm6445, %v5965, 0.0
      %v6478 = vsel %vm6446, %v5966, 0.0
      %v6479 = vsel %vm6447, %v5967, 0.0
      %v6480 = vsel %vm6448, %v5968, 0.0
      %v6481 = vsel %vm6449, %v5969, 0.0
      %v6482 = vsel %vm6450, %v5970, 0.0
      %v6483 = vsel %vm6451, %v5971, 0.0
      %v6484 = vsel %vm6452, %v5972, 0.0
      %v6485 = vsel %vm6453, %v5973, 0.0
      %v6486 = vsel %vm6454, %v5974, 0.0
      %v6487 = vsel %vm6455, %v5975, 0.0
      %v6488 = vsel %vm6456, %v5976, 0.0
      %v6489 = vsel %vm6457, %v5977, 0.0
      %v6490 = vsel %vm6458, %v5978, 0.0
      %v6491 = vsel %vm6459, %v5979, 0.0
      %v6492 = vsel %vm6460, %v5980, 0.0
      %v6493 = vsel %vm6461, %v5981, 0.0
      %v6494 = vsel %vm6462, %v5982, 0.0
      %v6495 = vsel %vm6463, %v5983, 0.0
      %v6496 = vsel %vm6464, %v5984, 0.0
      %v6497 = vsel %vm6465, %v5985, 0.0
      %v6498 = vsel %vm6466, %v5986, 0.0
      %v6499 = vsel %vm6467, %v5987, 0.0
      %v6500 = vsel %vm6468, %v5988, 0.0
      %v6501 = vsel %vm6469, %v5989, 0.0
      %v6502 = vsel %vm6470, %v5990, 0.0
      %v6503 = vsel %vm6471, %v5991, 0.0
      %v6504 = vsel %vm6472, %v6087, 0.0
      %v6505 = vsel %vm6441, %v5992, 0.0
      %v6506 = vsel %vm6442, %v5993, 0.0
      %v6507 = vsel %vm6443, %v5994, 0.0
      %v6508 = vsel %vm6444, %v5995, 0.0
      %v6509 = vsel %vm6445, %v5996, 0.0
      %v6510 = vsel %vm6446, %v5997, 0.0
      %v6511 = vsel %vm6447, %v5998, 0.0
      %v6512 = vsel %vm6448, %v5999, 0.0
      %v6513 = vsel %vm6449, %v6000, 0.0
      %v6514 = vsel %vm6450, %v6001, 0.0
      %v6515 = vsel %vm6451, %v6002, 0.0
      %v6516 = vsel %vm6452, %v6003, 0.0
      %v6517 = vsel %vm6453, %v6004, 0.0
      %v6518 = vsel %vm6454, %v6005, 0.0
      %v6519 = vsel %vm6455, %v6006, 0.0
      %v6520 = vsel %vm6456, %v6007, 0.0
      %v6521 = vsel %vm6457, %v6008, 0.0
      %v6522 = vsel %vm6458, %v6009, 0.0
      %v6523 = vsel %vm6459, %v6010, 0.0
      %v6524 = vsel %vm6460, %v6011, 0.0
      %v6525 = vsel %vm6461, %v6012, 0.0
      %v6526 = vsel %vm6462, %v6013, 0.0
      %v6527 = vsel %vm6463, %v6014, 0.0
      %v6528 = vsel %vm6464, %v6015, 0.0
      %v6529 = vsel %vm6465, %v6016, 0.0
      %v6530 = vsel %vm6466, %v6017, 0.0
      %v6531 = vsel %vm6467, %v6018, 0.0
      %v6532 = vsel %vm6468, %v6019, 0.0
      %v6533 = vsel %vm6469, %v6020, 0.0
      %v6534 = vsel %vm6470, %v6021, 0.0
      %v6535 = vsel %vm6471, %v6022, 0.0
      %v6536 = vsel %vm6472, %v6088, 0.0
      %vm6537 = vcmp.lt.s32.totalorder %v345, 62
      %vm6538 = vcmp.lt.s32.totalorder %v346, 62
      %vm6539 = vcmp.lt.s32.totalorder %v347, 62
      %vm6540 = vcmp.lt.s32.totalorder %v348, 62
      %vm6541 = vcmp.lt.s32.totalorder %v349, 62
      %vm6542 = vcmp.lt.s32.totalorder %v350, 62
      %vm6543 = vcmp.lt.s32.totalorder %v351, 62
      %vm6544 = vcmp.lt.s32.totalorder %v352, 62
      %vm6545 = vcmp.lt.s32.totalorder %v353, 62
      %vm6546 = vcmp.lt.s32.totalorder %v354, 62
      %vm6547 = vcmp.lt.s32.totalorder %v355, 62
      %vm6548 = vcmp.lt.s32.totalorder %v356, 62
      %vm6549 = vcmp.lt.s32.totalorder %v357, 62
      %vm6550 = vcmp.lt.s32.totalorder %v358, 62
      %vm6551 = vcmp.lt.s32.totalorder %v359, 62
      %vm6552 = vcmp.lt.s32.totalorder %v360, 62
      %vm6553 = vcmp.lt.s32.totalorder %v361, 62
      %vm6554 = vcmp.lt.s32.totalorder %v362, 62
      %vm6555 = vcmp.lt.s32.totalorder %v363, 62
      %vm6556 = vcmp.lt.s32.totalorder %v364, 62
      %vm6557 = vcmp.lt.s32.totalorder %v365, 62
      %vm6558 = vcmp.lt.s32.totalorder %v366, 62
      %vm6559 = vcmp.lt.s32.totalorder %v367, 62
      %vm6560 = vcmp.lt.s32.totalorder %v368, 62
      %vm6561 = vcmp.lt.s32.totalorder %v369, 62
      %vm6562 = vcmp.lt.s32.totalorder %v370, 62
      %vm6563 = vcmp.lt.s32.totalorder %v371, 62
      %vm6564 = vcmp.lt.s32.totalorder %v372, 62
      %vm6565 = vcmp.lt.s32.totalorder %v373, 62
      %vm6566 = vcmp.lt.s32.totalorder %v374, 62
      %vm6567 = vcmp.lt.s32.totalorder %v375, 62
      %vm6568 = vcmp.lt.s32.totalorder %v376, 62
      %vm6569 = vmand %vm6537, %vm5510
      %vm6570 = vmand %vm6538, %vm5511
      %vm6571 = vmand %vm6539, %vm5512
      %vm6572 = vmand %vm6540, %vm5513
      %vm6573 = vmand %vm6541, %vm5514
      %vm6574 = vmand %vm6542, %vm5515
      %vm6575 = vmand %vm6543, %vm5516
      %vm6576 = vmand %vm6544, %vm5517
      %vm6577 = vmand %vm6545, %vm5518
      %vm6578 = vmand %vm6546, %vm5519
      %vm6579 = vmand %vm6547, %vm5520
      %vm6580 = vmand %vm6548, %vm5521
      %vm6581 = vmand %vm6549, %vm5522
      %vm6582 = vmand %vm6550, %vm5523
      %vm6583 = vmand %vm6551, %vm5524
      %vm6584 = vmand %vm6552, %vm5525
      %vm6585 = vmand %vm6553, %vm5526
      %vm6586 = vmand %vm6554, %vm5527
      %vm6587 = vmand %vm6555, %vm5528
      %vm6588 = vmand %vm6556, %vm5529
      %vm6589 = vmand %vm6557, %vm5530
      %vm6590 = vmand %vm6558, %vm5531
      %vm6591 = vmand %vm6559, %vm5532
      %vm6592 = vmand %vm6560, %vm5533
      %vm6593 = vmand %vm6561, %vm5534
      %vm6594 = vmand %vm6562, %vm5535
      %vm6595 = vmand %vm6563, %vm5536
      %vm6596 = vmand %vm6564, %vm5537
      %vm6597 = vmand %vm6565, %vm5538
      %vm6598 = vmand %vm6566, %vm5539
      %vm6599 = vmand %vm6567, %vm5540
      %vm6600 = vmand %vm6568, %vm5541
      %v6601 = vsel %vm6569, 1, 0
      %v6602 = vsel %vm6570, 1, 0
      %v6603 = vsel %vm6571, 1, 0
      %v6604 = vsel %vm6572, 1, 0
      %v6605 = vsel %vm6573, 1, 0
      %v6606 = vsel %vm6574, 1, 0
      %v6607 = vsel %vm6575, 1, 0
      %v6608 = vsel %vm6576, 1, 0
      %v6609 = vsel %vm6577, 1, 0
      %v6610 = vsel %vm6578, 1, 0
      %v6611 = vsel %vm6579, 1, 0
      %v6612 = vsel %vm6580, 1, 0
      %v6613 = vsel %vm6581, 1, 0
      %v6614 = vsel %vm6582, 1, 0
      %v6615 = vsel %vm6583, 1, 0
      %v6616 = vsel %vm6584, 1, 0
      %v6617 = vsel %vm6585, 1, 0
      %v6618 = vsel %vm6586, 1, 0
      %v6619 = vsel %vm6587, 1, 0
      %v6620 = vsel %vm6588, 1, 0
      %v6621 = vsel %vm6589, 1, 0
      %v6622 = vsel %vm6590, 1, 0
      %v6623 = vsel %vm6591, 1, 0
      %v6624 = vsel %vm6592, 1, 0
      %v6625 = vsel %vm6593, 1, 0
      %v6626 = vsel %vm6594, 1, 0
      %v6627 = vsel %vm6595, 1, 0
      %v6628 = vsel %vm6596, 1, 0
      %v6629 = vsel %vm6597, 1, 0
      %v6630 = vsel %vm6598, 1, 0
      %v6631 = vsel %vm6599, 1, 0
      %v6632 = vsel %vm6600, 1, 0
      %vm6633 = vcmp.eq.s32.totalorder %v6601, 1
      %vm6634 = vcmp.eq.s32.totalorder %v6602, 1
      %vm6635 = vcmp.eq.s32.totalorder %v6603, 1
      %vm6636 = vcmp.eq.s32.totalorder %v6604, 1
      %vm6637 = vcmp.eq.s32.totalorder %v6605, 1
      %vm6638 = vcmp.eq.s32.totalorder %v6606, 1
      %vm6639 = vcmp.eq.s32.totalorder %v6607, 1
      %vm6640 = vcmp.eq.s32.totalorder %v6608, 1
      %vm6641 = vcmp.eq.s32.totalorder %v6609, 1
      %vm6642 = vcmp.eq.s32.totalorder %v6610, 1
      %vm6643 = vcmp.eq.s32.totalorder %v6611, 1
      %vm6644 = vcmp.eq.s32.totalorder %v6612, 1
      %vm6645 = vcmp.eq.s32.totalorder %v6613, 1
      %vm6646 = vcmp.eq.s32.totalorder %v6614, 1
      %vm6647 = vcmp.eq.s32.totalorder %v6615, 1
      %vm6648 = vcmp.eq.s32.totalorder %v6616, 1
      %vm6649 = vcmp.eq.s32.totalorder %v6617, 1
      %vm6650 = vcmp.eq.s32.totalorder %v6618, 1
      %vm6651 = vcmp.eq.s32.totalorder %v6619, 1
      %vm6652 = vcmp.eq.s32.totalorder %v6620, 1
      %vm6653 = vcmp.eq.s32.totalorder %v6621, 1
      %vm6654 = vcmp.eq.s32.totalorder %v6622, 1
      %vm6655 = vcmp.eq.s32.totalorder %v6623, 1
      %vm6656 = vcmp.eq.s32.totalorder %v6624, 1
      %vm6657 = vcmp.eq.s32.totalorder %v6625, 1
      %vm6658 = vcmp.eq.s32.totalorder %v6626, 1
      %vm6659 = vcmp.eq.s32.totalorder %v6627, 1
      %vm6660 = vcmp.eq.s32.totalorder %v6628, 1
      %vm6661 = vcmp.eq.s32.totalorder %v6629, 1
      %vm6662 = vcmp.eq.s32.totalorder %v6630, 1
      %vm6663 = vcmp.eq.s32.totalorder %v6631, 1
      %vm6664 = vcmp.eq.s32.totalorder %v6632, 1
      %v6665 = vsel %vm6633, %v5354, 0.0
      %v6666 = vsel %vm6634, %v5355, 0.0
      %v6667 = vsel %vm6635, %v5356, 0.0
      %v6668 = vsel %vm6636, %v5357, 0.0
      %v6669 = vsel %vm6637, %v5358, 0.0
      %v6670 = vsel %vm6638, %v5359, 0.0
      %v6671 = vsel %vm6639, %v5360, 0.0
      %v6672 = vsel %vm6640, %v5361, 0.0
      %v6673 = vsel %vm6641, %v5362, 0.0
      %v6674 = vsel %vm6642, %v5363, 0.0
      %v6675 = vsel %vm6643, %v5364, 0.0
      %v6676 = vsel %vm6644, %v5365, 0.0
      %v6677 = vsel %vm6645, %v5366, 0.0
      %v6678 = vsel %vm6646, %v5367, 0.0
      %v6679 = vsel %vm6647, %v5368, 0.0
      %v6680 = vsel %vm6648, %v5369, 0.0
      %v6681 = vsel %vm6649, %v5370, 0.0
      %v6682 = vsel %vm6650, %v5371, 0.0
      %v6683 = vsel %vm6651, %v5372, 0.0
      %v6684 = vsel %vm6652, %v5373, 0.0
      %v6685 = vsel %vm6653, %v5374, 0.0
      %v6686 = vsel %vm6654, %v5375, 0.0
      %v6687 = vsel %vm6655, %v5376, 0.0
      %v6688 = vsel %vm6656, %v5377, 0.0
      %v6689 = vsel %vm6657, %v5378, 0.0
      %v6690 = vsel %vm6658, %v5379, 0.0
      %v6691 = vsel %vm6659, %v5380, 0.0
      %v6692 = vsel %vm6660, %v5381, 0.0
      %v6693 = vsel %vm6661, %v5382, 0.0
      %v6694 = vsel %vm6662, %v5383, 0.0
      %v6695 = vsel %vm6663, %v5168, 0.0
      %v6696 = vsel %vm6664, %v5476, 0.0
      %v6697 = vsel %vm6633, %v5384, 0.0
      %v6698 = vsel %vm6634, %v5385, 0.0
      %v6699 = vsel %vm6635, %v5386, 0.0
      %v6700 = vsel %vm6636, %v5387, 0.0
      %v6701 = vsel %vm6637, %v5388, 0.0
      %v6702 = vsel %vm6638, %v5389, 0.0
      %v6703 = vsel %vm6639, %v5390, 0.0
      %v6704 = vsel %vm6640, %v5391, 0.0
      %v6705 = vsel %vm6641, %v5392, 0.0
      %v6706 = vsel %vm6642, %v5393, 0.0
      %v6707 = vsel %vm6643, %v5394, 0.0
      %v6708 = vsel %vm6644, %v5395, 0.0
      %v6709 = vsel %vm6645, %v5396, 0.0
      %v6710 = vsel %vm6646, %v5397, 0.0
      %v6711 = vsel %vm6647, %v5398, 0.0
      %v6712 = vsel %vm6648, %v5399, 0.0
      %v6713 = vsel %vm6649, %v5400, 0.0
      %v6714 = vsel %vm6650, %v5401, 0.0
      %v6715 = vsel %vm6651, %v5402, 0.0
      %v6716 = vsel %vm6652, %v5403, 0.0
      %v6717 = vsel %vm6653, %v5404, 0.0
      %v6718 = vsel %vm6654, %v5405, 0.0
      %v6719 = vsel %vm6655, %v5406, 0.0
      %v6720 = vsel %vm6656, %v5407, 0.0
      %v6721 = vsel %vm6657, %v5408, 0.0
      %v6722 = vsel %vm6658, %v5409, 0.0
      %v6723 = vsel %vm6659, %v5410, 0.0
      %v6724 = vsel %vm6660, %v5411, 0.0
      %v6725 = vsel %vm6661, %v5412, 0.0
      %v6726 = vsel %vm6662, %v5413, 0.0
      %v6727 = vsel %vm6663, %v5169, 0.0
      %v6728 = vsel %vm6664, %v5477, 0.0
      %v6729 = vsel %vm6537, 1, 0
      %v6730 = vsel %vm6538, 1, 0
      %v6731 = vsel %vm6539, 1, 0
      %v6732 = vsel %vm6540, 1, 0
      %v6733 = vsel %vm6541, 1, 0
      %v6734 = vsel %vm6542, 1, 0
      %v6735 = vsel %vm6543, 1, 0
      %v6736 = vsel %vm6544, 1, 0
      %v6737 = vsel %vm6545, 1, 0
      %v6738 = vsel %vm6546, 1, 0
      %v6739 = vsel %vm6547, 1, 0
      %v6740 = vsel %vm6548, 1, 0
      %v6741 = vsel %vm6549, 1, 0
      %v6742 = vsel %vm6550, 1, 0
      %v6743 = vsel %vm6551, 1, 0
      %v6744 = vsel %vm6552, 1, 0
      %v6745 = vsel %vm6553, 1, 0
      %v6746 = vsel %vm6554, 1, 0
      %v6747 = vsel %vm6555, 1, 0
      %v6748 = vsel %vm6556, 1, 0
      %v6749 = vsel %vm6557, 1, 0
      %v6750 = vsel %vm6558, 1, 0
      %v6751 = vsel %vm6559, 1, 0
      %v6752 = vsel %vm6560, 1, 0
      %v6753 = vsel %vm6561, 1, 0
      %v6754 = vsel %vm6562, 1, 0
      %v6755 = vsel %vm6563, 1, 0
      %v6756 = vsel %vm6564, 1, 0
      %v6757 = vsel %vm6565, 1, 0
      %v6758 = vsel %vm6566, 1, 0
      %v6759 = vsel %vm6567, 1, 0
      %v6760 = vsel %vm6568, 1, 0
      %vm6761 = vcmp.eq.s32.totalorder %v6729, 1
      %vm6762 = vcmp.eq.s32.totalorder %v6730, 1
      %vm6763 = vcmp.eq.s32.totalorder %v6731, 1
      %vm6764 = vcmp.eq.s32.totalorder %v6732, 1
      %vm6765 = vcmp.eq.s32.totalorder %v6733, 1
      %vm6766 = vcmp.eq.s32.totalorder %v6734, 1
      %vm6767 = vcmp.eq.s32.totalorder %v6735, 1
      %vm6768 = vcmp.eq.s32.totalorder %v6736, 1
      %vm6769 = vcmp.eq.s32.totalorder %v6737, 1
      %vm6770 = vcmp.eq.s32.totalorder %v6738, 1
      %vm6771 = vcmp.eq.s32.totalorder %v6739, 1
      %vm6772 = vcmp.eq.s32.totalorder %v6740, 1
      %vm6773 = vcmp.eq.s32.totalorder %v6741, 1
      %vm6774 = vcmp.eq.s32.totalorder %v6742, 1
      %vm6775 = vcmp.eq.s32.totalorder %v6743, 1
      %vm6776 = vcmp.eq.s32.totalorder %v6744, 1
      %vm6777 = vcmp.eq.s32.totalorder %v6745, 1
      %vm6778 = vcmp.eq.s32.totalorder %v6746, 1
      %vm6779 = vcmp.eq.s32.totalorder %v6747, 1
      %vm6780 = vcmp.eq.s32.totalorder %v6748, 1
      %vm6781 = vcmp.eq.s32.totalorder %v6749, 1
      %vm6782 = vcmp.eq.s32.totalorder %v6750, 1
      %vm6783 = vcmp.eq.s32.totalorder %v6751, 1
      %vm6784 = vcmp.eq.s32.totalorder %v6752, 1
      %vm6785 = vcmp.eq.s32.totalorder %v6753, 1
      %vm6786 = vcmp.eq.s32.totalorder %v6754, 1
      %vm6787 = vcmp.eq.s32.totalorder %v6755, 1
      %vm6788 = vcmp.eq.s32.totalorder %v6756, 1
      %vm6789 = vcmp.eq.s32.totalorder %v6757, 1
      %vm6790 = vcmp.eq.s32.totalorder %v6758, 1
      %vm6791 = vcmp.eq.s32.totalorder %v6759, 1
      %vm6792 = vcmp.eq.s32.totalorder %v6760, 1
      %v6793 = vsel %vm6761, %v5092, 0.0
      %v6794 = vsel %vm6762, %v5093, 0.0
      %v6795 = vsel %vm6763, %v5094, 0.0
      %v6796 = vsel %vm6764, %v5095, 0.0
      %v6797 = vsel %vm6765, %v5096, 0.0
      %v6798 = vsel %vm6766, %v5097, 0.0
      %v6799 = vsel %vm6767, %v5098, 0.0
      %v6800 = vsel %vm6768, %v5099, 0.0
      %v6801 = vsel %vm6769, %v5100, 0.0
      %v6802 = vsel %vm6770, %v5101, 0.0
      %v6803 = vsel %vm6771, %v5102, 0.0
      %v6804 = vsel %vm6772, %v5103, 0.0
      %v6805 = vsel %vm6773, %v5104, 0.0
      %v6806 = vsel %vm6774, %v5105, 0.0
      %v6807 = vsel %vm6775, %v5106, 0.0
      %v6808 = vsel %vm6776, %v5107, 0.0
      %v6809 = vsel %vm6777, %v5108, 0.0
      %v6810 = vsel %vm6778, %v5109, 0.0
      %v6811 = vsel %vm6779, %v5110, 0.0
      %v6812 = vsel %vm6780, %v5111, 0.0
      %v6813 = vsel %vm6781, %v5112, 0.0
      %v6814 = vsel %vm6782, %v5113, 0.0
      %v6815 = vsel %vm6783, %v5114, 0.0
      %v6816 = vsel %vm6784, %v5115, 0.0
      %v6817 = vsel %vm6785, %v5116, 0.0
      %v6818 = vsel %vm6786, %v5117, 0.0
      %v6819 = vsel %vm6787, %v5118, 0.0
      %v6820 = vsel %vm6788, %v5119, 0.0
      %v6821 = vsel %vm6789, %v5120, 0.0
      %v6822 = vsel %vm6790, %v5121, 0.0
      %v6823 = vsel %vm6791, %v5122, 0.0
      %v6824 = vsel %vm6792, %v5091, 0.0
      %v6825 = vsel %vm6761, %v5124, 0.0
      %v6826 = vsel %vm6762, %v5125, 0.0
      %v6827 = vsel %vm6763, %v5126, 0.0
      %v6828 = vsel %vm6764, %v5127, 0.0
      %v6829 = vsel %vm6765, %v5128, 0.0
      %v6830 = vsel %vm6766, %v5129, 0.0
      %v6831 = vsel %vm6767, %v5130, 0.0
      %v6832 = vsel %vm6768, %v5131, 0.0
      %v6833 = vsel %vm6769, %v5132, 0.0
      %v6834 = vsel %vm6770, %v5133, 0.0
      %v6835 = vsel %vm6771, %v5134, 0.0
      %v6836 = vsel %vm6772, %v5135, 0.0
      %v6837 = vsel %vm6773, %v5136, 0.0
      %v6838 = vsel %vm6774, %v5137, 0.0
      %v6839 = vsel %vm6775, %v5138, 0.0
      %v6840 = vsel %vm6776, %v5139, 0.0
      %v6841 = vsel %vm6777, %v5140, 0.0
      %v6842 = vsel %vm6778, %v5141, 0.0
      %v6843 = vsel %vm6779, %v5142, 0.0
      %v6844 = vsel %vm6780, %v5143, 0.0
      %v6845 = vsel %vm6781, %v5144, 0.0
      %v6846 = vsel %vm6782, %v5145, 0.0
      %v6847 = vsel %vm6783, %v5146, 0.0
      %v6848 = vsel %vm6784, %v5147, 0.0
      %v6849 = vsel %vm6785, %v5148, 0.0
      %v6850 = vsel %vm6786, %v5149, 0.0
      %v6851 = vsel %vm6787, %v5150, 0.0
      %v6852 = vsel %vm6788, %v5151, 0.0
      %v6853 = vsel %vm6789, %v5152, 0.0
      %v6854 = vsel %vm6790, %v5153, 0.0
      %v6855 = vsel %vm6791, %v5154, 0.0
      %v6856 = vsel %vm6792, %v5123, 0.0
      %vm6857 = vmand %vm6537, %vm6089
      %vm6858 = vmand %vm6538, %vm6090
      %vm6859 = vmand %vm6539, %vm6091
      %vm6860 = vmand %vm6540, %vm6092
      %vm6861 = vmand %vm6541, %vm6093
      %vm6862 = vmand %vm6542, %vm6094
      %vm6863 = vmand %vm6543, %vm6095
      %vm6864 = vmand %vm6544, %vm6096
      %vm6865 = vmand %vm6545, %vm6097
      %vm6866 = vmand %vm6546, %vm6098
      %vm6867 = vmand %vm6547, %vm6099
      %vm6868 = vmand %vm6548, %vm6100
      %vm6869 = vmand %vm6549, %vm6101
      %vm6870 = vmand %vm6550, %vm6102
      %vm6871 = vmand %vm6551, %vm6103
      %vm6872 = vmand %vm6552, %vm6104
      %vm6873 = vmand %vm6553, %vm6105
      %vm6874 = vmand %vm6554, %vm6106
      %vm6875 = vmand %vm6555, %vm6107
      %vm6876 = vmand %vm6556, %vm6108
      %vm6877 = vmand %vm6557, %vm6109
      %vm6878 = vmand %vm6558, %vm6110
      %vm6879 = vmand %vm6559, %vm6111
      %vm6880 = vmand %vm6560, %vm6112
      %vm6881 = vmand %vm6561, %vm6113
      %vm6882 = vmand %vm6562, %vm6114
      %vm6883 = vmand %vm6563, %vm6115
      %vm6884 = vmand %vm6564, %vm6116
      %vm6885 = vmand %vm6565, %vm6117
      %vm6886 = vmand %vm6566, %vm6118
      %vm6887 = vmand %vm6567, %vm6119
      %vm6888 = vmand %vm6568, %vm6120
      %v6889 = vsel %vm6857, 1, 0
      %v6890 = vsel %vm6858, 1, 0
      %v6891 = vsel %vm6859, 1, 0
      %v6892 = vsel %vm6860, 1, 0
      %v6893 = vsel %vm6861, 1, 0
      %v6894 = vsel %vm6862, 1, 0
      %v6895 = vsel %vm6863, 1, 0
      %v6896 = vsel %vm6864, 1, 0
      %v6897 = vsel %vm6865, 1, 0
      %v6898 = vsel %vm6866, 1, 0
      %v6899 = vsel %vm6867, 1, 0
      %v6900 = vsel %vm6868, 1, 0
      %v6901 = vsel %vm6869, 1, 0
      %v6902 = vsel %vm6870, 1, 0
      %v6903 = vsel %vm6871, 1, 0
      %v6904 = vsel %vm6872, 1, 0
      %v6905 = vsel %vm6873, 1, 0
      %v6906 = vsel %vm6874, 1, 0
      %v6907 = vsel %vm6875, 1, 0
      %v6908 = vsel %vm6876, 1, 0
      %v6909 = vsel %vm6877, 1, 0
      %v6910 = vsel %vm6878, 1, 0
      %v6911 = vsel %vm6879, 1, 0
      %v6912 = vsel %vm6880, 1, 0
      %v6913 = vsel %vm6881, 1, 0
      %v6914 = vsel %vm6882, 1, 0
      %v6915 = vsel %vm6883, 1, 0
      %v6916 = vsel %vm6884, 1, 0
      %v6917 = vsel %vm6885, 1, 0
      %v6918 = vsel %vm6886, 1, 0
      %v6919 = vsel %vm6887, 1, 0
      %v6920 = vsel %vm6888, 1, 0
      %vm6921 = vcmp.eq.s32.totalorder %v6889, 1
      %vm6922 = vcmp.eq.s32.totalorder %v6890, 1
      %vm6923 = vcmp.eq.s32.totalorder %v6891, 1
      %vm6924 = vcmp.eq.s32.totalorder %v6892, 1
      %vm6925 = vcmp.eq.s32.totalorder %v6893, 1
      %vm6926 = vcmp.eq.s32.totalorder %v6894, 1
      %vm6927 = vcmp.eq.s32.totalorder %v6895, 1
      %vm6928 = vcmp.eq.s32.totalorder %v6896, 1
      %vm6929 = vcmp.eq.s32.totalorder %v6897, 1
      %vm6930 = vcmp.eq.s32.totalorder %v6898, 1
      %vm6931 = vcmp.eq.s32.totalorder %v6899, 1
      %vm6932 = vcmp.eq.s32.totalorder %v6900, 1
      %vm6933 = vcmp.eq.s32.totalorder %v6901, 1
      %vm6934 = vcmp.eq.s32.totalorder %v6902, 1
      %vm6935 = vcmp.eq.s32.totalorder %v6903, 1
      %vm6936 = vcmp.eq.s32.totalorder %v6904, 1
      %vm6937 = vcmp.eq.s32.totalorder %v6905, 1
      %vm6938 = vcmp.eq.s32.totalorder %v6906, 1
      %vm6939 = vcmp.eq.s32.totalorder %v6907, 1
      %vm6940 = vcmp.eq.s32.totalorder %v6908, 1
      %vm6941 = vcmp.eq.s32.totalorder %v6909, 1
      %vm6942 = vcmp.eq.s32.totalorder %v6910, 1
      %vm6943 = vcmp.eq.s32.totalorder %v6911, 1
      %vm6944 = vcmp.eq.s32.totalorder %v6912, 1
      %vm6945 = vcmp.eq.s32.totalorder %v6913, 1
      %vm6946 = vcmp.eq.s32.totalorder %v6914, 1
      %vm6947 = vcmp.eq.s32.totalorder %v6915, 1
      %vm6948 = vcmp.eq.s32.totalorder %v6916, 1
      %vm6949 = vcmp.eq.s32.totalorder %v6917, 1
      %vm6950 = vcmp.eq.s32.totalorder %v6918, 1
      %vm6951 = vcmp.eq.s32.totalorder %v6919, 1
      %vm6952 = vcmp.eq.s32.totalorder %v6920, 1
      %v6953 = vsel %vm6921, %v5962, 0.0
      %v6954 = vsel %vm6922, %v5963, 0.0
      %v6955 = vsel %vm6923, %v5964, 0.0
      %v6956 = vsel %vm6924, %v5965, 0.0
      %v6957 = vsel %vm6925, %v5966, 0.0
      %v6958 = vsel %vm6926, %v5967, 0.0
      %v6959 = vsel %vm6927, %v5968, 0.0
      %v6960 = vsel %vm6928, %v5969, 0.0
      %v6961 = vsel %vm6929, %v5970, 0.0
      %v6962 = vsel %vm6930, %v5971, 0.0
      %v6963 = vsel %vm6931, %v5972, 0.0
      %v6964 = vsel %vm6932, %v5973, 0.0
      %v6965 = vsel %vm6933, %v5974, 0.0
      %v6966 = vsel %vm6934, %v5975, 0.0
      %v6967 = vsel %vm6935, %v5976, 0.0
      %v6968 = vsel %vm6936, %v5977, 0.0
      %v6969 = vsel %vm6937, %v5978, 0.0
      %v6970 = vsel %vm6938, %v5979, 0.0
      %v6971 = vsel %vm6939, %v5980, 0.0
      %v6972 = vsel %vm6940, %v5981, 0.0
      %v6973 = vsel %vm6941, %v5982, 0.0
      %v6974 = vsel %vm6942, %v5983, 0.0
      %v6975 = vsel %vm6943, %v5984, 0.0
      %v6976 = vsel %vm6944, %v5985, 0.0
      %v6977 = vsel %vm6945, %v5986, 0.0
      %v6978 = vsel %vm6946, %v5987, 0.0
      %v6979 = vsel %vm6947, %v5988, 0.0
      %v6980 = vsel %vm6948, %v5989, 0.0
      %v6981 = vsel %vm6949, %v5990, 0.0
      %v6982 = vsel %vm6950, %v5991, 0.0
      %v6983 = vsel %vm6951, %v6087, 0.0
      %v6984 = vsel %vm6952, %v5961, 0.0
      %v6985 = vsel %vm6921, %v5993, 0.0
      %v6986 = vsel %vm6922, %v5994, 0.0
      %v6987 = vsel %vm6923, %v5995, 0.0
      %v6988 = vsel %vm6924, %v5996, 0.0
      %v6989 = vsel %vm6925, %v5997, 0.0
      %v6990 = vsel %vm6926, %v5998, 0.0
      %v6991 = vsel %vm6927, %v5999, 0.0
      %v6992 = vsel %vm6928, %v6000, 0.0
      %v6993 = vsel %vm6929, %v6001, 0.0
      %v6994 = vsel %vm6930, %v6002, 0.0
      %v6995 = vsel %vm6931, %v6003, 0.0
      %v6996 = vsel %vm6932, %v6004, 0.0
      %v6997 = vsel %vm6933, %v6005, 0.0
      %v6998 = vsel %vm6934, %v6006, 0.0
      %v6999 = vsel %vm6935, %v6007, 0.0
      %v7000 = vsel %vm6936, %v6008, 0.0
      %v7001 = vsel %vm6937, %v6009, 0.0
      %v7002 = vsel %vm6938, %v6010, 0.0
      %v7003 = vsel %vm6939, %v6011, 0.0
      %v7004 = vsel %vm6940, %v6012, 0.0
      %v7005 = vsel %vm6941, %v6013, 0.0
      %v7006 = vsel %vm6942, %v6014, 0.0
      %v7007 = vsel %vm6943, %v6015, 0.0
      %v7008 = vsel %vm6944, %v6016, 0.0
      %v7009 = vsel %vm6945, %v6017, 0.0
      %v7010 = vsel %vm6946, %v6018, 0.0
      %v7011 = vsel %vm6947, %v6019, 0.0
      %v7012 = vsel %vm6948, %v6020, 0.0
      %v7013 = vsel %vm6949, %v6021, 0.0
      %v7014 = vsel %vm6950, %v6022, 0.0
      %v7015 = vsel %vm6951, %v6088, 0.0
      %v7016 = vsel %vm6952, %v5992, 0.0
      %v7017 = vpack.c.bf16 %v5670, %v5638
      %v7018 = vpack.c.bf16 %v5671, %v5639
      %v7019 = vpack.c.bf16 %v5672, %v5640
      %v7020 = vpack.c.bf16 %v5673, %v5641
      %v7021 = vpack.c.bf16 %v5674, %v5642
      %v7022 = vpack.c.bf16 %v5675, %v5643
      %v7023 = vpack.c.bf16 %v5676, %v5644
      %v7024 = vpack.c.bf16 %v5677, %v5645
      %v7025 = vpack.c.bf16 %v5678, %v5646
      %v7026 = vpack.c.bf16 %v5679, %v5647
      %v7027 = vpack.c.bf16 %v5680, %v5648
      %v7028 = vpack.c.bf16 %v5681, %v5649
      %v7029 = vpack.c.bf16 %v5682, %v5650
      %v7030 = vpack.c.bf16 %v5683, %v5651
      %v7031 = vpack.c.bf16 %v5684, %v5652
      %v7032 = vpack.c.bf16 %v5685, %v5653
      %v7033 = vpack.c.bf16 %v5686, %v5654
      %v7034 = vpack.c.bf16 %v5687, %v5655
      %v7035 = vpack.c.bf16 %v5688, %v5656
      %v7036 = vpack.c.bf16 %v5689, %v5657
      %v7037 = vpack.c.bf16 %v5690, %v5658
      %v7038 = vpack.c.bf16 %v5691, %v5659
      %v7039 = vpack.c.bf16 %v5692, %v5660
      %v7040 = vpack.c.bf16 %v5693, %v5661
      %v7041 = vpack.c.bf16 %v5694, %v5662
      %v7042 = vpack.c.bf16 %v5695, %v5663
      %v7043 = vpack.c.bf16 %v5696, %v5664
      %v7044 = vpack.c.bf16 %v5697, %v5665
      %v7045 = vpack.c.bf16 %v5698, %v5666
      %v7046 = vpack.c.bf16 %v5699, %v5667
      %v7047 = vpack.c.bf16 %v5700, %v5668
      %v7048 = vpack.c.bf16 %v5701, %v5669
      %v7049 = vpack.c.bf16 %v5798, %v5766
      %v7050 = vpack.c.bf16 %v5799, %v5767
      %v7051 = vpack.c.bf16 %v5800, %v5768
      %v7052 = vpack.c.bf16 %v5801, %v5769
      %v7053 = vpack.c.bf16 %v5802, %v5770
      %v7054 = vpack.c.bf16 %v5803, %v5771
      %v7055 = vpack.c.bf16 %v5804, %v5772
      %v7056 = vpack.c.bf16 %v5805, %v5773
      %v7057 = vpack.c.bf16 %v5806, %v5774
      %v7058 = vpack.c.bf16 %v5807, %v5775
      %v7059 = vpack.c.bf16 %v5808, %v5776
      %v7060 = vpack.c.bf16 %v5809, %v5777
      %v7061 = vpack.c.bf16 %v5810, %v5778
      %v7062 = vpack.c.bf16 %v5811, %v5779
      %v7063 = vpack.c.bf16 %v5812, %v5780
      %v7064 = vpack.c.bf16 %v5813, %v5781
      %v7065 = vpack.c.bf16 %v5814, %v5782
      %v7066 = vpack.c.bf16 %v5815, %v5783
      %v7067 = vpack.c.bf16 %v5816, %v5784
      %v7068 = vpack.c.bf16 %v5817, %v5785
      %v7069 = vpack.c.bf16 %v5818, %v5786
      %v7070 = vpack.c.bf16 %v5819, %v5787
      %v7071 = vpack.c.bf16 %v5820, %v5788
      %v7072 = vpack.c.bf16 %v5821, %v5789
      %v7073 = vpack.c.bf16 %v5822, %v5790
      %v7074 = vpack.c.bf16 %v5823, %v5791
      %v7075 = vpack.c.bf16 %v5824, %v5792
      %v7076 = vpack.c.bf16 %v5825, %v5793
      %v7077 = vpack.c.bf16 %v5826, %v5794
      %v7078 = vpack.c.bf16 %v5827, %v5795
      %v7079 = vpack.c.bf16 %v5828, %v5796
      %v7080 = vpack.c.bf16 %v5829, %v5797
      %v7081 = vpack.c.bf16 %v6249, %v6217
      %v7082 = vpack.c.bf16 %v6250, %v6218
      %v7083 = vpack.c.bf16 %v6251, %v6219
      %v7084 = vpack.c.bf16 %v6252, %v6220
      %v7085 = vpack.c.bf16 %v6253, %v6221
      %v7086 = vpack.c.bf16 %v6254, %v6222
      %v7087 = vpack.c.bf16 %v6255, %v6223
      %v7088 = vpack.c.bf16 %v6256, %v6224
      %v7089 = vpack.c.bf16 %v6257, %v6225
      %v7090 = vpack.c.bf16 %v6258, %v6226
      %v7091 = vpack.c.bf16 %v6259, %v6227
      %v7092 = vpack.c.bf16 %v6260, %v6228
      %v7093 = vpack.c.bf16 %v6261, %v6229
      %v7094 = vpack.c.bf16 %v6262, %v6230
      %v7095 = vpack.c.bf16 %v6263, %v6231
      %v7096 = vpack.c.bf16 %v6264, %v6232
      %v7097 = vpack.c.bf16 %v6265, %v6233
      %v7098 = vpack.c.bf16 %v6266, %v6234
      %v7099 = vpack.c.bf16 %v6267, %v6235
      %v7100 = vpack.c.bf16 %v6268, %v6236
      %v7101 = vpack.c.bf16 %v6269, %v6237
      %v7102 = vpack.c.bf16 %v6270, %v6238
      %v7103 = vpack.c.bf16 %v6271, %v6239
      %v7104 = vpack.c.bf16 %v6272, %v6240
      %v7105 = vpack.c.bf16 %v6273, %v6241
      %v7106 = vpack.c.bf16 %v6274, %v6242
      %v7107 = vpack.c.bf16 %v6275, %v6243
      %v7108 = vpack.c.bf16 %v6276, %v6244
      %v7109 = vpack.c.bf16 %v6277, %v6245
      %v7110 = vpack.c.bf16 %v6278, %v6246
      %v7111 = vpack.c.bf16 %v6279, %v6247
      %v7112 = vpack.c.bf16 %v6280, %v6248
      %v7113 = vpack.c.bf16 %v6377, %v6345
      %v7114 = vpack.c.bf16 %v6378, %v6346
      %v7115 = vpack.c.bf16 %v6379, %v6347
      %v7116 = vpack.c.bf16 %v6380, %v6348
      %v7117 = vpack.c.bf16 %v6381, %v6349
      %v7118 = vpack.c.bf16 %v6382, %v6350
      %v7119 = vpack.c.bf16 %v6383, %v6351
      %v7120 = vpack.c.bf16 %v6384, %v6352
      %v7121 = vpack.c.bf16 %v6385, %v6353
      %v7122 = vpack.c.bf16 %v6386, %v6354
      %v7123 = vpack.c.bf16 %v6387, %v6355
      %v7124 = vpack.c.bf16 %v6388, %v6356
      %v7125 = vpack.c.bf16 %v6389, %v6357
      %v7126 = vpack.c.bf16 %v6390, %v6358
      %v7127 = vpack.c.bf16 %v6391, %v6359
      %v7128 = vpack.c.bf16 %v6392, %v6360
      %v7129 = vpack.c.bf16 %v6393, %v6361
      %v7130 = vpack.c.bf16 %v6394, %v6362
      %v7131 = vpack.c.bf16 %v6395, %v6363
      %v7132 = vpack.c.bf16 %v6396, %v6364
      %v7133 = vpack.c.bf16 %v6397, %v6365
      %v7134 = vpack.c.bf16 %v6398, %v6366
      %v7135 = vpack.c.bf16 %v6399, %v6367
      %v7136 = vpack.c.bf16 %v6400, %v6368
      %v7137 = vpack.c.bf16 %v6401, %v6369
      %v7138 = vpack.c.bf16 %v6402, %v6370
      %v7139 = vpack.c.bf16 %v6403, %v6371
      %v7140 = vpack.c.bf16 %v6404, %v6372
      %v7141 = vpack.c.bf16 %v6405, %v6373
      %v7142 = vpack.c.bf16 %v6406, %v6374
      %v7143 = vpack.c.bf16 %v6407, %v6375
      %v7144 = vpack.c.bf16 %v6408, %v6376
      %v7145 = vpack.c.bf16 %v5123, %v5091
      %v7146 = vpack.c.bf16 %v5124, %v5092
      %v7147 = vpack.c.bf16 %v5125, %v5093
      %v7148 = vpack.c.bf16 %v5126, %v5094
      %v7149 = vpack.c.bf16 %v5127, %v5095
      %v7150 = vpack.c.bf16 %v5128, %v5096
      %v7151 = vpack.c.bf16 %v5129, %v5097
      %v7152 = vpack.c.bf16 %v5130, %v5098
      %v7153 = vpack.c.bf16 %v5131, %v5099
      %v7154 = vpack.c.bf16 %v5132, %v5100
      %v7155 = vpack.c.bf16 %v5133, %v5101
      %v7156 = vpack.c.bf16 %v5134, %v5102
      %v7157 = vpack.c.bf16 %v5135, %v5103
      %v7158 = vpack.c.bf16 %v5136, %v5104
      %v7159 = vpack.c.bf16 %v5137, %v5105
      %v7160 = vpack.c.bf16 %v5138, %v5106
      %v7161 = vpack.c.bf16 %v5139, %v5107
      %v7162 = vpack.c.bf16 %v5140, %v5108
      %v7163 = vpack.c.bf16 %v5141, %v5109
      %v7164 = vpack.c.bf16 %v5142, %v5110
      %v7165 = vpack.c.bf16 %v5143, %v5111
      %v7166 = vpack.c.bf16 %v5144, %v5112
      %v7167 = vpack.c.bf16 %v5145, %v5113
      %v7168 = vpack.c.bf16 %v5146, %v5114
      %v7169 = vpack.c.bf16 %v5147, %v5115
      %v7170 = vpack.c.bf16 %v5148, %v5116
      %v7171 = vpack.c.bf16 %v5149, %v5117
      %v7172 = vpack.c.bf16 %v5150, %v5118
      %v7173 = vpack.c.bf16 %v5151, %v5119
      %v7174 = vpack.c.bf16 %v5152, %v5120
      %v7175 = vpack.c.bf16 %v5153, %v5121
      %v7176 = vpack.c.bf16 %v5154, %v5122
      %v7177 = vpack.c.bf16 %v6505, %v6473
      %v7178 = vpack.c.bf16 %v6506, %v6474
      %v7179 = vpack.c.bf16 %v6507, %v6475
      %v7180 = vpack.c.bf16 %v6508, %v6476
      %v7181 = vpack.c.bf16 %v6509, %v6477
      %v7182 = vpack.c.bf16 %v6510, %v6478
      %v7183 = vpack.c.bf16 %v6511, %v6479
      %v7184 = vpack.c.bf16 %v6512, %v6480
      %v7185 = vpack.c.bf16 %v6513, %v6481
      %v7186 = vpack.c.bf16 %v6514, %v6482
      %v7187 = vpack.c.bf16 %v6515, %v6483
      %v7188 = vpack.c.bf16 %v6516, %v6484
      %v7189 = vpack.c.bf16 %v6517, %v6485
      %v7190 = vpack.c.bf16 %v6518, %v6486
      %v7191 = vpack.c.bf16 %v6519, %v6487
      %v7192 = vpack.c.bf16 %v6520, %v6488
      %v7193 = vpack.c.bf16 %v6521, %v6489
      %v7194 = vpack.c.bf16 %v6522, %v6490
      %v7195 = vpack.c.bf16 %v6523, %v6491
      %v7196 = vpack.c.bf16 %v6524, %v6492
      %v7197 = vpack.c.bf16 %v6525, %v6493
      %v7198 = vpack.c.bf16 %v6526, %v6494
      %v7199 = vpack.c.bf16 %v6527, %v6495
      %v7200 = vpack.c.bf16 %v6528, %v6496
      %v7201 = vpack.c.bf16 %v6529, %v6497
      %v7202 = vpack.c.bf16 %v6530, %v6498
      %v7203 = vpack.c.bf16 %v6531, %v6499
      %v7204 = vpack.c.bf16 %v6532, %v6500
      %v7205 = vpack.c.bf16 %v6533, %v6501
      %v7206 = vpack.c.bf16 %v6534, %v6502
      %v7207 = vpack.c.bf16 %v6535, %v6503
      %v7208 = vpack.c.bf16 %v6536, %v6504
      %v7209 = vpack.c.bf16 %v6697, %v6665
      %v7210 = vpack.c.bf16 %v6698, %v6666
      %v7211 = vpack.c.bf16 %v6699, %v6667
      %v7212 = vpack.c.bf16 %v6700, %v6668
      %v7213 = vpack.c.bf16 %v6701, %v6669
      %v7214 = vpack.c.bf16 %v6702, %v6670
      %v7215 = vpack.c.bf16 %v6703, %v6671
      %v7216 = vpack.c.bf16 %v6704, %v6672
      %v7217 = vpack.c.bf16 %v6705, %v6673
      %v7218 = vpack.c.bf16 %v6706, %v6674
      %v7219 = vpack.c.bf16 %v6707, %v6675
      %v7220 = vpack.c.bf16 %v6708, %v6676
      %v7221 = vpack.c.bf16 %v6709, %v6677
      %v7222 = vpack.c.bf16 %v6710, %v6678
      %v7223 = vpack.c.bf16 %v6711, %v6679
      %v7224 = vpack.c.bf16 %v6712, %v6680
      %v7225 = vpack.c.bf16 %v6713, %v6681
      %v7226 = vpack.c.bf16 %v6714, %v6682
      %v7227 = vpack.c.bf16 %v6715, %v6683
      %v7228 = vpack.c.bf16 %v6716, %v6684
      %v7229 = vpack.c.bf16 %v6717, %v6685
      %v7230 = vpack.c.bf16 %v6718, %v6686
      %v7231 = vpack.c.bf16 %v6719, %v6687
      %v7232 = vpack.c.bf16 %v6720, %v6688
      %v7233 = vpack.c.bf16 %v6721, %v6689
      %v7234 = vpack.c.bf16 %v6722, %v6690
      %v7235 = vpack.c.bf16 %v6723, %v6691
      %v7236 = vpack.c.bf16 %v6724, %v6692
      %v7237 = vpack.c.bf16 %v6725, %v6693
      %v7238 = vpack.c.bf16 %v6726, %v6694
      %v7239 = vpack.c.bf16 %v6727, %v6695
      %v7240 = vpack.c.bf16 %v6728, %v6696
      %v7241 = vpack.c.bf16 %v6825, %v6793
      %v7242 = vpack.c.bf16 %v6826, %v6794
      %v7243 = vpack.c.bf16 %v6827, %v6795
      %v7244 = vpack.c.bf16 %v6828, %v6796
      %v7245 = vpack.c.bf16 %v6829, %v6797
      %v7246 = vpack.c.bf16 %v6830, %v6798
      %v7247 = vpack.c.bf16 %v6831, %v6799
      %v7248 = vpack.c.bf16 %v6832, %v6800
      %v7249 = vpack.c.bf16 %v6833, %v6801
      %v7250 = vpack.c.bf16 %v6834, %v6802
      %v7251 = vpack.c.bf16 %v6835, %v6803
      %v7252 = vpack.c.bf16 %v6836, %v6804
      %v7253 = vpack.c.bf16 %v6837, %v6805
      %v7254 = vpack.c.bf16 %v6838, %v6806
      %v7255 = vpack.c.bf16 %v6839, %v6807
      %v7256 = vpack.c.bf16 %v6840, %v6808
      %v7257 = vpack.c.bf16 %v6841, %v6809
      %v7258 = vpack.c.bf16 %v6842, %v6810
      %v7259 = vpack.c.bf16 %v6843, %v6811
      %v7260 = vpack.c.bf16 %v6844, %v6812
      %v7261 = vpack.c.bf16 %v6845, %v6813
      %v7262 = vpack.c.bf16 %v6846, %v6814
      %v7263 = vpack.c.bf16 %v6847, %v6815
      %v7264 = vpack.c.bf16 %v6848, %v6816
      %v7265 = vpack.c.bf16 %v6849, %v6817
      %v7266 = vpack.c.bf16 %v6850, %v6818
      %v7267 = vpack.c.bf16 %v6851, %v6819
      %v7268 = vpack.c.bf16 %v6852, %v6820
      %v7269 = vpack.c.bf16 %v6853, %v6821
      %v7270 = vpack.c.bf16 %v6854, %v6822
      %v7271 = vpack.c.bf16 %v6855, %v6823
      %v7272 = vpack.c.bf16 %v6856, %v6824
      %v7273 = vpack.c.bf16 %v6985, %v6953
      %v7274 = vpack.c.bf16 %v6986, %v6954
      %v7275 = vpack.c.bf16 %v6987, %v6955
      %v7276 = vpack.c.bf16 %v6988, %v6956
      %v7277 = vpack.c.bf16 %v6989, %v6957
      %v7278 = vpack.c.bf16 %v6990, %v6958
      %v7279 = vpack.c.bf16 %v6991, %v6959
      %v7280 = vpack.c.bf16 %v6992, %v6960
      %v7281 = vpack.c.bf16 %v6993, %v6961
      %v7282 = vpack.c.bf16 %v6994, %v6962
      %v7283 = vpack.c.bf16 %v6995, %v6963
      %v7284 = vpack.c.bf16 %v6996, %v6964
      %v7285 = vpack.c.bf16 %v6997, %v6965
      %v7286 = vpack.c.bf16 %v6998, %v6966
      %v7287 = vpack.c.bf16 %v6999, %v6967
      %v7288 = vpack.c.bf16 %v7000, %v6968
      %v7289 = vpack.c.bf16 %v7001, %v6969
      %v7290 = vpack.c.bf16 %v7002, %v6970
      %v7291 = vpack.c.bf16 %v7003, %v6971
      %v7292 = vpack.c.bf16 %v7004, %v6972
      %v7293 = vpack.c.bf16 %v7005, %v6973
      %v7294 = vpack.c.bf16 %v7006, %v6974
      %v7295 = vpack.c.bf16 %v7007, %v6975
      %v7296 = vpack.c.bf16 %v7008, %v6976
      %v7297 = vpack.c.bf16 %v7009, %v6977
      %v7298 = vpack.c.bf16 %v7010, %v6978
      %v7299 = vpack.c.bf16 %v7011, %v6979
      %v7300 = vpack.c.bf16 %v7012, %v6980
      %v7301 = vpack.c.bf16 %v7013, %v6981
      %v7302 = vpack.c.bf16 %v7014, %v6982
      %v7303 = vpack.c.bf16 %v7015, %v6983
      %v7304 = vpack.c.bf16 %v7016, %v6984
      %v7305 = vld [vmem:[%s3] sm:$0xff]
      %v7306 = vld [vmem:[%s3 + $0x8] sm:$0xff]
      %v7307 = vld [vmem:[%s3 + $0x10] sm:$0xff]
      %v7308 = vld [vmem:[%s3 + $0x18] sm:$0xff]
      %v7309 = vld [vmem:[%s4] sm:$0xff]
      %v7310 = vld [vmem:[%s4 + $0x8] sm:$0xff]
      %v7311 = vld [vmem:[%s4 + $0x10] sm:$0xff]
      %v7312 = vld [vmem:[%s4 + $0x18] sm:$0xff]
      %7314 = vset.pattern.permute.xlu0 0
      %7315 = vperm.xlu0 %7314, %v7309
      %v7316 = vpop.permute.xlu0 %7315
      %7319 = vset.pattern.permute.xlu0 0
      %7320 = vperm.xlu0 %7319, %v7310
      %v7321 = vpop.permute.xlu0 %7320
      %7324 = vset.pattern.permute.xlu0 0
      %7325 = vperm.xlu0 %7324, %v7311
      %v7326 = vpop.permute.xlu0 %7325
      %7329 = vset.pattern.permute.xlu0 0
      %7330 = vperm.xlu0 %7329, %v7312
      %v7331 = vpop.permute.xlu0 %7330
      %v7337 = vunpack.c.l.b16 %v7305
      %v7338 = vunpack.c.h.b16 %v7305
      %v7339 = vunpack.c.l.b16 %v7306
      %v7340 = vunpack.c.h.b16 %v7306
      %v7341 = vunpack.c.l.b16 %v7307
      %v7342 = vunpack.c.h.b16 %v7307
      %v7343 = vunpack.c.l.b16 %v7308
      %v7344 = vunpack.c.h.b16 %v7308
      %v7345 = vpack.c.b16 %v7339, %v7337
      %v7346 = vpack.c.b16 %v7340, %v7338
      %v7347 = vpack.c.b16 %v7343, %v7341
      %v7348 = vpack.c.b16 %v7344, %v7342
      %vm7351 = vcmask 130048
      %v7353 = vsel %vm7351, %v7346, 0
      %v7356 = vsel %vm7351, %v7348, 0
      %7358 = vmatprep.subr.bf16.mxu0 %v7018
      %7359 = vmatpush1.bf16.msra.mxu0 %v7017
      %7360 = vmatprep.subr.bf16.mxu0 %v7050
      %7361 = vmatpush1.bf16.msra.mxu0 %v7049
      %7362 = vmatprep.subr.bf16.mxu0 %v7082
      %7363 = vmatpush1.bf16.msra.mxu0 %v7081
      %7364 = vmatprep.subr.bf16.mxu0 %v7114
      %7365 = vmatpush1.bf16.msra.mxu0 %v7113
      %7366 = vmatprep.subr.bf16.mxu0 %v7146
      %7367 = vmatpush1.bf16.msra.mxu0 %v7145
      %7368 = vmatprep.subr.bf16.mxu0 %v7178
      %7369 = vmatpush1.bf16.msra.mxu0 %v7177
      %7370 = vmatprep.subr.bf16.mxu0 %v7210
      %7371 = vmatpush1.bf16.msra.mxu0 %v7209
      %7372 = vmatprep.subr.bf16.mxu0 %v7242
      %7373 = vmatpush1.bf16.msra.mxu0 %v7241
      %7374 = vmatprep.subr.bf16.mxu0 %v7274
      %7375 = vmatpush1.bf16.msra.mxu0 %v7273
      %7376 = vmatprep.subr.bf16.mxu0 0
      %7377 = vmatpush1.bf16.msra.mxu0 0
      %7378 = vmatprep.subr.bf16.mxu0 0
      %7379 = vmatpush1.bf16.msra.mxu0 0
      %7380 = vmatprep.subr.bf16.mxu0 0
      %7381 = vmatpush1.bf16.msra.mxu0 0
      %7382 = vmatprep.subr.bf16.mxu0 0
      %7383 = vmatpush1.bf16.msra.mxu0 0
      %7384 = vmatprep.subr.bf16.mxu0 0
      %7385 = vmatpush1.bf16.msra.mxu0 0
      %7386 = vmatprep.subr.bf16.mxu0 0
      %7387 = vmatpush1.bf16.msra.mxu0 0
      %7388 = vmatprep.subr.bf16.mxu0 0
      %7389 = vmatpush1.bf16.msra.mxu0 0
      %7390 = vmatprep.mubr.bf16.mxu0 %v7353
      %7391 = vmatmul.mubr.bf16.gmra.mrb[0].mxu0 %v7345
      %v7392 = vpop.f32.mrb[0].mxu0
      %v7393 = vadd.f32 %v7316, %v7392
      %v7394 = vpop.f32.mrb[0].mxu0
      %v7395 = vadd.f32 %v7316, %v7394
      %v7396 = vpop.f32.mrb[0].mxu0
      %v7397 = vadd.f32 %v7321, %v7396
      %v7398 = vpop.f32.mrb[0].mxu0
      %v7399 = vadd.f32 %v7321, %v7398
      %7400 = vmatprep.mubr.bf16.mxu0 %v7356
      %7401 = vmatmul.mubr.bf16.gmra.mrb[0].mxu0 %v7347
      %v7402 = vpop.f32.mrb[0].mxu0
      %v7403 = vadd.f32 %v7326, %v7402
      %v7404 = vpop.f32.mrb[0].mxu0
      %v7405 = vadd.f32 %v7326, %v7404
      %v7406 = vpop.f32.mrb[0].mxu0
      %v7407 = vadd.f32 %v7331, %v7406
      %v7408 = vpop.f32.mrb[0].mxu0
      %v7409 = vadd.f32 %v7331, %v7408
      %7410 = vdwg.mxu0
      %7411 = vmatprep.subr.bf16.mxu0 %v7020
      %7412 = vmatpush1.bf16.msra.mxu0 %v7019
      %7413 = vmatprep.subr.bf16.mxu0 %v7052
      %7414 = vmatpush1.bf16.msra.mxu0 %v7051
      %7415 = vmatprep.subr.bf16.mxu0 %v7084
      %7416 = vmatpush1.bf16.msra.mxu0 %v7083
      %7417 = vmatprep.subr.bf16.mxu0 %v7116
      %7418 = vmatpush1.bf16.msra.mxu0 %v7115
      %7419 = vmatprep.subr.bf16.mxu0 %v7148
      %7420 = vmatpush1.bf16.msra.mxu0 %v7147
      %7421 = vmatprep.subr.bf16.mxu0 %v7180
      %7422 = vmatpush1.bf16.msra.mxu0 %v7179
      %7423 = vmatprep.subr.bf16.mxu0 %v7212
      %7424 = vmatpush1.bf16.msra.mxu0 %v7211
      %7425 = vmatprep.subr.bf16.mxu0 %v7244
      %7426 = vmatpush1.bf16.msra.mxu0 %v7243
      %7427 = vmatprep.subr.bf16.mxu0 %v7276
      %7428 = vmatpush1.bf16.msra.mxu0 %v7275
      %7429 = vmatprep.subr.bf16.mxu0 0
      %7430 = vmatpush1.bf16.msra.mxu0 0
      %7431 = vmatprep.subr.bf16.mxu0 0
      %7432 = vmatpush1.bf16.msra.mxu0 0
      %7433 = vmatprep.subr.bf16.mxu0 0
      %7434 = vmatpush1.bf16.msra.mxu0 0
      %7435 = vmatprep.subr.bf16.mxu0 0
      %7436 = vmatpush1.bf16.msra.mxu0 0
      %7437 = vmatprep.subr.bf16.mxu0 0
      %7438 = vmatpush1.bf16.msra.mxu0 0
      %7439 = vmatprep.subr.bf16.mxu0 0
      %7440 = vmatpush1.bf16.msra.mxu0 0
      %7441 = vmatprep.subr.bf16.mxu0 0
      %7442 = vmatpush1.bf16.msra.mxu0 0
      %7443 = vmatprep.mubr.bf16.mxu0 %v7353
      %7444 = vmatmul.mubr.bf16.gmra.mrb[0].mxu0 %v7345
      %v7445 = vpop.f32.mrb[0].mxu0
      %v7446 = vadd.f32 %v7316, %v7445
      %v7447 = vpop.f32.mrb[0].mxu0
      %v7448 = vadd.f32 %v7316, %v7447
      %v7449 = vpop.f32.mrb[0].mxu0
      %v7450 = vadd.f32 %v7321, %v7449
      %v7451 = vpop.f32.mrb[0].mxu0
      %v7452 = vadd.f32 %v7321, %v7451
      %7453 = vmatprep.mubr.bf16.mxu0 %v7356
      %7454 = vmatmul.mubr.bf16.gmra.mrb[0].mxu0 %v7347
      %v7455 = vpop.f32.mrb[0].mxu0
      %v7456 = vadd.f32 %v7326, %v7455
      %v7457 = vpop.f32.mrb[0].mxu0
      %v7458 = vadd.f32 %v7326, %v7457
      %v7459 = vpop.f32.mrb[0].mxu0
      %v7460 = vadd.f32 %v7331, %v7459
      %v7461 = vpop.f32.mrb[0].mxu0
      %v7462 = vadd.f32 %v7331, %v7461
      %7463 = vdwg.mxu0
      %7464 = vmatprep.subr.bf16.mxu0 %v7022
      %7465 = vmatpush1.bf16.msra.mxu0 %v7021
      %7466 = vmatprep.subr.bf16.mxu0 %v7054
      %7467 = vmatpush1.bf16.msra.mxu0 %v7053
      %7468 = vmatprep.subr.bf16.mxu0 %v7086
      %7469 = vmatpush1.bf16.msra.mxu0 %v7085
      %7470 = vmatprep.subr.bf16.mxu0 %v7118
      %7471 = vmatpush1.bf16.msra.mxu0 %v7117
      %7472 = vmatprep.subr.bf16.mxu0 %v7150
      %7473 = vmatpush1.bf16.msra.mxu0 %v7149
      %7474 = vmatprep.subr.bf16.mxu0 %v7182
      %7475 = vmatpush1.bf16.msra.mxu0 %v7181
      %7476 = vmatprep.subr.bf16.mxu0 %v7214
      %7477 = vmatpush1.bf16.msra.mxu0 %v7213
      %7478 = vmatprep.subr.bf16.mxu0 %v7246
      %7479 = vmatpush1.bf16.msra.mxu0 %v7245
      %7480 = vmatprep.subr.bf16.mxu0 %v7278
      %7481 = vmatpush1.bf16.msra.mxu0 %v7277
      %7482 = vmatprep.subr.bf16.mxu0 0
      %7483 = vmatpush1.bf16.msra.mxu0 0
      %7484 = vmatprep.subr.bf16.mxu0 0
      %7485 = vmatpush1.bf16.msra.mxu0 0
      %7486 = vmatprep.subr.bf16.mxu0 0
      %7487 = vmatpush1.bf16.msra.mxu0 0
      %7488 = vmatprep.subr.bf16.mxu0 0
      %7489 = vmatpush1.bf16.msra.mxu0 0
      %7490 = vmatprep.subr.bf16.mxu0 0
      %7491 = vmatpush1.bf16.msra.mxu0 0
      %7492 = vmatprep.subr.bf16.mxu0 0
      %7493 = vmatpush1.bf16.msra.mxu0 0
      %7494 = vmatprep.subr.bf16.mxu0 0
      %7495 = vmatpush1.bf16.msra.mxu0 0
      %7496 = vmatprep.mubr.bf16.mxu0 %v7353
      %7497 = vmatmul.mubr.bf16.gmra.mrb[0].mxu0 %v7345
      %v7498 = vpop.f32.mrb[0].mxu0
      %v7499 = vadd.f32 %v7316, %v7498
      %v7500 = vpop.f32.mrb[0].mxu0
      %v7501 = vadd.f32 %v7316, %v7500
      %v7502 = vpop.f32.mrb[0].mxu0
      %v7503 = vadd.f32 %v7321, %v7502
      %v7504 = vpop.f32.mrb[0].mxu0
      %v7505 = vadd.f32 %v7321, %v7504
      %7506 = vmatprep.mubr.bf16.mxu0 %v7356
      %7507 = vmatmul.mubr.bf16.gmra.mrb[0].mxu0 %v7347
      %v7508 = vpop.f32.mrb[0].mxu0
      %v7509 = vadd.f32 %v7326, %v7508
      %v7510 = vpop.f32.mrb[0].mxu0
      %v7511 = vadd.f32 %v7326, %v7510
      %v7512 = vpop.f32.mrb[0].mxu0
      %v7513 = vadd.f32 %v7331, %v7512
      %v7514 = vpop.f32.mrb[0].mxu0
      %v7515 = vadd.f32 %v7331, %v7514
      %7516 = vdwg.mxu0
      %7517 = vmatprep.subr.bf16.mxu0 %v7024
      %7518 = vmatpush1.bf16.msra.mxu0 %v7023
      %7519 = vmatprep.subr.bf16.mxu0 %v7056
      %7520 = vmatpush1.bf16.msra.mxu0 %v7055
      %7521 = vmatprep.subr.bf16.mxu0 %v7088
      %7522 = vmatpush1.bf16.msra.mxu0 %v7087
      %7523 = vmatprep.subr.bf16.mxu0 %v7120
      %7524 = vmatpush1.bf16.msra.mxu0 %v7119
      %7525 = vmatprep.subr.bf16.mxu0 %v7152
      %7526 = vmatpush1.bf16.msra.mxu0 %v7151
      %7527 = vmatprep.subr.bf16.mxu0 %v7184
      %7528 = vmatpush1.bf16.msra.mxu0 %v7183
      %7529 = vmatprep.subr.bf16.mxu0 %v7216
      %7530 = vmatpush1.bf16.msra.mxu0 %v7215
      %7531 = vmatprep.subr.bf16.mxu0 %v7248
      %7532 = vmatpush1.bf16.msra.mxu0 %v7247
      %7533 = vmatprep.subr.bf16.mxu0 %v7280
      %7534 = vmatpush1.bf16.msra.mxu0 %v7279
      %7535 = vmatprep.subr.bf16.mxu0 0
      %7536 = vmatpush1.bf16.msra.mxu0 0
      %7537 = vmatprep.subr.bf16.mxu0 0
      %7538 = vmatpush1.bf16.msra.mxu0 0
      %7539 = vmatprep.subr.bf16.mxu0 0
      %7540 = vmatpush1.bf16.msra.mxu0 0
      %7541 = vmatprep.subr.bf16.mxu0 0
      %7542 = vmatpush1.bf16.msra.mxu0 0
      %7543 = vmatprep.subr.bf16.mxu0 0
      %7544 = vmatpush1.bf16.msra.mxu0 0
      %7545 = vmatprep.subr.bf16.mxu0 0
      %7546 = vmatpush1.bf16.msra.mxu0 0
      %7547 = vmatprep.subr.bf16.mxu0 0
      %7548 = vmatpush1.bf16.msra.mxu0 0
      %7549 = vmatprep.mubr.bf16.mxu0 %v7353
      %7550 = vmatmul.mubr.bf16.gmra.mrb[0].mxu0 %v7345
      %v7551 = vpop.f32.mrb[0].mxu0
      %v7552 = vadd.f32 %v7316, %v7551
      %v7553 = vpop.f32.mrb[0].mxu0
      %v7554 = vadd.f32 %v7316, %v7553
      %v7555 = vpop.f32.mrb[0].mxu0
      %v7556 = vadd.f32 %v7321, %v7555
      %v7557 = vpop.f32.mrb[0].mxu0
      %v7558 = vadd.f32 %v7321, %v7557
      %7559 = vmatprep.mubr.bf16.mxu0 %v7356
      %7560 = vmatmul.mubr.bf16.gmra.mrb[0].mxu0 %v7347
      %v7561 = vpop.f32.mrb[0].mxu0
      %v7562 = vadd.f32 %v7326, %v7561
      %v7563 = vpop.f32.mrb[0].mxu0
      %v7564 = vadd.f32 %v7326, %v7563
      %v7565 = vpop.f32.mrb[0].mxu0
      %v7566 = vadd.f32 %v7331, %v7565
      %v7567 = vpop.f32.mrb[0].mxu0
      %v7568 = vadd.f32 %v7331, %v7567
      %7569 = vdwg.mxu0
      %7570 = vmatprep.subr.bf16.mxu0 %v7026
      %7571 = vmatpush1.bf16.msra.mxu0 %v7025
      %7572 = vmatprep.subr.bf16.mxu0 %v7058
      %7573 = vmatpush1.bf16.msra.mxu0 %v7057
      %7574 = vmatprep.subr.bf16.mxu0 %v7090
      %7575 = vmatpush1.bf16.msra.mxu0 %v7089
      %7576 = vmatprep.subr.bf16.mxu0 %v7122
      %7577 = vmatpush1.bf16.msra.mxu0 %v7121
      %7578 = vmatprep.subr.bf16.mxu0 %v7154
      %7579 = vmatpush1.bf16.msra.mxu0 %v7153
      %7580 = vmatprep.subr.bf16.mxu0 %v7186
      %7581 = vmatpush1.bf16.msra.mxu0 %v7185
      %7582 = vmatprep.subr.bf16.mxu0 %v7218
      %7583 = vmatpush1.bf16.msra.mxu0 %v7217
      %7584 = vmatprep.subr.bf16.mxu0 %v7250
      %7585 = vmatpush1.bf16.msra.mxu0 %v7249
      %7586 = vmatprep.subr.bf16.mxu0 %v7282
      %7587 = vmatpush1.bf16.msra.mxu0 %v7281
      %7588 = vmatprep.subr.bf16.mxu0 0
      %7589 = vmatpush1.bf16.msra.mxu0 0
      %7590 = vmatprep.subr.bf16.mxu0 0
      %7591 = vmatpush1.bf16.msra.mxu0 0
      %7592 = vmatprep.subr.bf16.mxu0 0
      %7593 = vmatpush1.bf16.msra.mxu0 0
      %7594 = vmatprep.subr.bf16.mxu0 0
      %7595 = vmatpush1.bf16.msra.mxu0 0
      %7596 = vmatprep.subr.bf16.mxu0 0
      %7597 = vmatpush1.bf16.msra.mxu0 0
      %7598 = vmatprep.subr.bf16.mxu0 0
      %7599 = vmatpush1.bf16.msra.mxu0 0
      %7600 = vmatprep.subr.bf16.mxu0 0
      %7601 = vmatpush1.bf16.msra.mxu0 0
      %7602 = vmatprep.mubr.bf16.mxu0 %v7353
      %7603 = vmatmul.mubr.bf16.gmra.mrb[0].mxu0 %v7345
      %v7604 = vpop.f32.mrb[0].mxu0
      %v7605 = vadd.f32 %v7316, %v7604
      %v7606 = vpop.f32.mrb[0].mxu0
      %v7607 = vadd.f32 %v7316, %v7606
      %v7608 = vpop.f32.mrb[0].mxu0
      %v7609 = vadd.f32 %v7321, %v7608
      %v7610 = vpop.f32.mrb[0].mxu0
      %v7611 = vadd.f32 %v7321, %v7610
      %7612 = vmatprep.mubr.bf16.mxu0 %v7356
      %7613 = vmatmul.mubr.bf16.gmra.mrb[0].mxu0 %v7347
      %v7614 = vpop.f32.mrb[0].mxu0
      %v7615 = vadd.f32 %v7326, %v7614
      %v7616 = vpop.f32.mrb[0].mxu0
      %v7617 = vadd.f32 %v7326, %v7616
      %v7618 = vpop.f32.mrb[0].mxu0
      %v7619 = vadd.f32 %v7331, %v7618
      %v7620 = vpop.f32.mrb[0].mxu0
      %v7621 = vadd.f32 %v7331, %v7620
      %7622 = vdwg.mxu0
      %7623 = vmatprep.subr.bf16.mxu0 %v7028
      %7624 = vmatpush1.bf16.msra.mxu0 %v7027
      %7625 = vmatprep.subr.bf16.mxu0 %v7060
      %7626 = vmatpush1.bf16.msra.mxu0 %v7059
      %7627 = vmatprep.subr.bf16.mxu0 %v7092
      %7628 = vmatpush1.bf16.msra.mxu0 %v7091
      %7629 = vmatprep.subr.bf16.mxu0 %v7124
      %7630 = vmatpush1.bf16.msra.mxu0 %v7123
      %7631 = vmatprep.subr.bf16.mxu0 %v7156
      %7632 = vmatpush1.bf16.msra.mxu0 %v7155
      %7633 = vmatprep.subr.bf16.mxu0 %v7188
      %7634 = vmatpush1.bf16.msra.mxu0 %v7187
      %7635 = vmatprep.subr.bf16.mxu0 %v7220
      %7636 = vmatpush1.bf16.msra.mxu0 %v7219
      %7637 = vmatprep.subr.bf16.mxu0 %v7252
      %7638 = vmatpush1.bf16.msra.mxu0 %v7251
      %7639 = vmatprep.subr.bf16.mxu0 %v7284
      %7640 = vmatpush1.bf16.msra.mxu0 %v7283
      %7641 = vmatprep.subr.bf16.mxu0 0
      %7642 = vmatpush1.bf16.msra.mxu0 0
      %7643 = vmatprep.subr.bf16.mxu0 0
      %7644 = vmatpush1.bf16.msra.mxu0 0
      %7645 = vmatprep.subr.bf16.mxu0 0
      %7646 = vmatpush1.bf16.msra.mxu0 0
      %7647 = vmatprep.subr.bf16.mxu0 0
      %7648 = vmatpush1.bf16.msra.mxu0 0
      %7649 = vmatprep.subr.bf16.mxu0 0
      %7650 = vmatpush1.bf16.msra.mxu0 0
      %7651 = vmatprep.subr.bf16.mxu0 0
      %7652 = vmatpush1.bf16.msra.mxu0 0
      %7653 = vmatprep.subr.bf16.mxu0 0
      %7654 = vmatpush1.bf16.msra.mxu0 0
      %7655 = vmatprep.mubr.bf16.mxu0 %v7353
      %7656 = vmatmul.mubr.bf16.gmra.mrb[0].mxu0 %v7345
      %v7657 = vpop.f32.mrb[0].mxu0
      %v7658 = vadd.f32 %v7316, %v7657
      %v7659 = vpop.f32.mrb[0].mxu0
      %v7660 = vadd.f32 %v7316, %v7659
      %v7661 = vpop.f32.mrb[0].mxu0
      %v7662 = vadd.f32 %v7321, %v7661
      %v7663 = vpop.f32.mrb[0].mxu0
      %v7664 = vadd.f32 %v7321, %v7663
      %7665 = vmatprep.mubr.bf16.mxu0 %v7356
      %7666 = vmatmul.mubr.bf16.gmra.mrb[0].mxu0 %v7347
      %v7667 = vpop.f32.mrb[0].mxu0
      %v7668 = vadd.f32 %v7326, %v7667
      %v7669 = vpop.f32.mrb[0].mxu0
      %v7670 = vadd.f32 %v7326, %v7669
      %v7671 = vpop.f32.mrb[0].mxu0
      %v7672 = vadd.f32 %v7331, %v7671
      %v7673 = vpop.f32.mrb[0].mxu0
      %v7674 = vadd.f32 %v7331, %v7673
      %7675 = vdwg.mxu0
      %7676 = vmatprep.subr.bf16.mxu0 %v7030
      %7677 = vmatpush1.bf16.msra.mxu0 %v7029
      %7678 = vmatprep.subr.bf16.mxu0 %v7062
      %7679 = vmatpush1.bf16.msra.mxu0 %v7061
      %7680 = vmatprep.subr.bf16.mxu0 %v7094
      %7681 = vmatpush1.bf16.msra.mxu0 %v7093
      %7682 = vmatprep.subr.bf16.mxu0 %v7126
      %7683 = vmatpush1.bf16.msra.mxu0 %v7125
      %7684 = vmatprep.subr.bf16.mxu0 %v7158
      %7685 = vmatpush1.bf16.msra.mxu0 %v7157
      %7686 = vmatprep.subr.bf16.mxu0 %v7190
      %7687 = vmatpush1.bf16.msra.mxu0 %v7189
      %7688 = vmatprep.subr.bf16.mxu0 %v7222
      %7689 = vmatpush1.bf16.msra.mxu0 %v7221
      %7690 = vmatprep.subr.bf16.mxu0 %v7254
      %7691 = vmatpush1.bf16.msra.mxu0 %v7253
      %7692 = vmatprep.subr.bf16.mxu0 %v7286
      %7693 = vmatpush1.bf16.msra.mxu0 %v7285
      %7694 = vmatprep.subr.bf16.mxu0 0
      %7695 = vmatpush1.bf16.msra.mxu0 0
      %7696 = vmatprep.subr.bf16.mxu0 0
      %7697 = vmatpush1.bf16.msra.mxu0 0
      %7698 = vmatprep.subr.bf16.mxu0 0
      %7699 = vmatpush1.bf16.msra.mxu0 0
      %7700 = vmatprep.subr.bf16.mxu0 0
      %7701 = vmatpush1.bf16.msra.mxu0 0
      %7702 = vmatprep.subr.bf16.mxu0 0
      %7703 = vmatpush1.bf16.msra.mxu0 0
      %7704 = vmatprep.subr.bf16.mxu0 0
      %7705 = vmatpush1.bf16.msra.mxu0 0
      %7706 = vmatprep.subr.bf16.mxu0 0
      %7707 = vmatpush1.bf16.msra.mxu0 0
      %7708 = vmatprep.mubr.bf16.mxu0 %v7353
      %7709 = vmatmul.mubr.bf16.gmra.mrb[0].mxu0 %v7345
      %v7710 = vpop.f32.mrb[0].mxu0
      %v7711 = vadd.f32 %v7316, %v7710
      %v7712 = vpop.f32.mrb[0].mxu0
      %v7713 = vadd.f32 %v7316, %v7712
      %v7714 = vpop.f32.mrb[0].mxu0
      %v7715 = vadd.f32 %v7321, %v7714
      %v7716 = vpop.f32.mrb[0].mxu0
      %v7717 = vadd.f32 %v7321, %v7716
      %7718 = vmatprep.mubr.bf16.mxu0 %v7356
      %7719 = vmatmul.mubr.bf16.gmra.mrb[0].mxu0 %v7347
      %v7720 = vpop.f32.mrb[0].mxu0
      %v7721 = vadd.f32 %v7326, %v7720
      %v7722 = vpop.f32.mrb[0].mxu0
      %v7723 = vadd.f32 %v7326, %v7722
      %v7724 = vpop.f32.mrb[0].mxu0
      %v7725 = vadd.f32 %v7331, %v7724
      %v7726 = vpop.f32.mrb[0].mxu0
      %v7727 = vadd.f32 %v7331, %v7726
      %7728 = vdwg.mxu0
      %7729 = vmatprep.subr.bf16.mxu0 %v7032
      %7730 = vmatpush1.bf16.msra.mxu0 %v7031
      %7731 = vmatprep.subr.bf16.mxu0 %v7064
      %7732 = vmatpush1.bf16.msra.mxu0 %v7063
      %7733 = vmatprep.subr.bf16.mxu0 %v7096
      %7734 = vmatpush1.bf16.msra.mxu0 %v7095
      %7735 = vmatprep.subr.bf16.mxu0 %v7128
      %7736 = vmatpush1.bf16.msra.mxu0 %v7127
      %7737 = vmatprep.subr.bf16.mxu0 %v7160
      %7738 = vmatpush1.bf16.msra.mxu0 %v7159
      %7739 = vmatprep.subr.bf16.mxu0 %v7192
      %7740 = vmatpush1.bf16.msra.mxu0 %v7191
      %7741 = vmatprep.subr.bf16.mxu0 %v7224
      %7742 = vmatpush1.bf16.msra.mxu0 %v7223
      %7743 = vmatprep.subr.bf16.mxu0 %v7256
      %7744 = vmatpush1.bf16.msra.mxu0 %v7255
      %7745 = vmatprep.subr.bf16.mxu0 %v7288
      %7746 = vmatpush1.bf16.msra.mxu0 %v7287
      %7747 = vmatprep.subr.bf16.mxu0 0
      %7748 = vmatpush1.bf16.msra.mxu0 0
      %7749 = vmatprep.subr.bf16.mxu0 0
      %7750 = vmatpush1.bf16.msra.mxu0 0
      %7751 = vmatprep.subr.bf16.mxu0 0
      %7752 = vmatpush1.bf16.msra.mxu0 0
      %7753 = vmatprep.subr.bf16.mxu0 0
      %7754 = vmatpush1.bf16.msra.mxu0 0
      %7755 = vmatprep.subr.bf16.mxu0 0
      %7756 = vmatpush1.bf16.msra.mxu0 0
      %7757 = vmatprep.subr.bf16.mxu0 0
      %7758 = vmatpush1.bf16.msra.mxu0 0
      %7759 = vmatprep.subr.bf16.mxu0 0
      %7760 = vmatpush1.bf16.msra.mxu0 0
      %7761 = vmatprep.mubr.bf16.mxu0 %v7353
      %7762 = vmatmul.mubr.bf16.gmra.mrb[0].mxu0 %v7345
      %v7763 = vpop.f32.mrb[0].mxu0
      %v7764 = vadd.f32 %v7316, %v7763
      %v7765 = vpop.f32.mrb[0].mxu0
      %v7766 = vadd.f32 %v7316, %v7765
      %v7767 = vpop.f32.mrb[0].mxu0
      %v7768 = vadd.f32 %v7321, %v7767
      %v7769 = vpop.f32.mrb[0].mxu0
      %v7770 = vadd.f32 %v7321, %v7769
      %7771 = vmatprep.mubr.bf16.mxu0 %v7356
      %7772 = vmatmul.mubr.bf16.gmra.mrb[0].mxu0 %v7347
      %v7773 = vpop.f32.mrb[0].mxu0
      %v7774 = vadd.f32 %v7326, %v7773
      %v7775 = vpop.f32.mrb[0].mxu0
      %v7776 = vadd.f32 %v7326, %v7775
      %v7777 = vpop.f32.mrb[0].mxu0
      %v7778 = vadd.f32 %v7331, %v7777
      %v7779 = vpop.f32.mrb[0].mxu0
      %v7780 = vadd.f32 %v7331, %v7779
      %7781 = vdwg.mxu0
      %7782 = vmatprep.subr.bf16.mxu0 %v7034
      %7783 = vmatpush1.bf16.msra.mxu0 %v7033
      %7784 = vmatprep.subr.bf16.mxu0 %v7066
      %7785 = vmatpush1.bf16.msra.mxu0 %v7065
      %7786 = vmatprep.subr.bf16.mxu0 %v7098
      %7787 = vmatpush1.bf16.msra.mxu0 %v7097
      %7788 = vmatprep.subr.bf16.mxu0 %v7130
      %7789 = vmatpush1.bf16.msra.mxu0 %v7129
      %7790 = vmatprep.subr.bf16.mxu0 %v7162
      %7791 = vmatpush1.bf16.msra.mxu0 %v7161
      %7792 = vmatprep.subr.bf16.mxu0 %v7194
      %7793 = vmatpush1.bf16.msra.mxu0 %v7193
      %7794 = vmatprep.subr.bf16.mxu0 %v7226
      %7795 = vmatpush1.bf16.msra.mxu0 %v7225
      %7796 = vmatprep.subr.bf16.mxu0 %v7258
      %7797 = vmatpush1.bf16.msra.mxu0 %v7257
      %7798 = vmatprep.subr.bf16.mxu0 %v7290
      %7799 = vmatpush1.bf16.msra.mxu0 %v7289
      %7800 = vmatprep.subr.bf16.mxu0 0
      %7801 = vmatpush1.bf16.msra.mxu0 0
      %7802 = vmatprep.subr.bf16.mxu0 0
      %7803 = vmatpush1.bf16.msra.mxu0 0
      %7804 = vmatprep.subr.bf16.mxu0 0
      %7805 = vmatpush1.bf16.msra.mxu0 0
      %7806 = vmatprep.subr.bf16.mxu0 0
      %7807 = vmatpush1.bf16.msra.mxu0 0
      %7808 = vmatprep.subr.bf16.mxu0 0
      %7809 = vmatpush1.bf16.msra.mxu0 0
      %7810 = vmatprep.subr.bf16.mxu0 0
      %7811 = vmatpush1.bf16.msra.mxu0 0
      %7812 = vmatprep.subr.bf16.mxu0 0
      %7813 = vmatpush1.bf16.msra.mxu0 0
      %7814 = vmatprep.mubr.bf16.mxu0 %v7353
      %7815 = vmatmul.mubr.bf16.gmra.mrb[0].mxu0 %v7345
      %v7816 = vpop.f32.mrb[0].mxu0
      %v7817 = vadd.f32 %v7316, %v7816
      %v7818 = vpop.f32.mrb[0].mxu0
      %v7819 = vadd.f32 %v7316, %v7818
      %v7820 = vpop.f32.mrb[0].mxu0
      %v7821 = vadd.f32 %v7321, %v7820
      %v7822 = vpop.f32.mrb[0].mxu0
      %v7823 = vadd.f32 %v7321, %v7822
      %7824 = vmatprep.mubr.bf16.mxu0 %v7356
      %7825 = vmatmul.mubr.bf16.gmra.mrb[0].mxu0 %v7347
      %v7826 = vpop.f32.mrb[0].mxu0
      %v7827 = vadd.f32 %v7326, %v7826
      %v7828 = vpop.f32.mrb[0].mxu0
      %v7829 = vadd.f32 %v7326, %v7828
      %v7830 = vpop.f32.mrb[0].mxu0
      %v7831 = vadd.f32 %v7331, %v7830
      %v7832 = vpop.f32.mrb[0].mxu0
      %v7833 = vadd.f32 %v7331, %v7832
      %7834 = vdwg.mxu0
      %7835 = vmatprep.subr.bf16.mxu0 %v7036
      %7836 = vmatpush1.bf16.msra.mxu0 %v7035
      %7837 = vmatprep.subr.bf16.mxu0 %v7068
      %7838 = vmatpush1.bf16.msra.mxu0 %v7067
      %7839 = vmatprep.subr.bf16.mxu0 %v7100
      %7840 = vmatpush1.bf16.msra.mxu0 %v7099
      %7841 = vmatprep.subr.bf16.mxu0 %v7132
      %7842 = vmatpush1.bf16.msra.mxu0 %v7131
      %7843 = vmatprep.subr.bf16.mxu0 %v7164
      %7844 = vmatpush1.bf16.msra.mxu0 %v7163
      %7845 = vmatprep.subr.bf16.mxu0 %v7196
      %7846 = vmatpush1.bf16.msra.mxu0 %v7195
      %7847 = vmatprep.subr.bf16.mxu0 %v7228
      %7848 = vmatpush1.bf16.msra.mxu0 %v7227
      %7849 = vmatprep.subr.bf16.mxu0 %v7260
      %7850 = vmatpush1.bf16.msra.mxu0 %v7259
      %7851 = vmatprep.subr.bf16.mxu0 %v7292
      %7852 = vmatpush1.bf16.msra.mxu0 %v7291
      %7853 = vmatprep.subr.bf16.mxu0 0
      %7854 = vmatpush1.bf16.msra.mxu0 0
      %7855 = vmatprep.subr.bf16.mxu0 0
      %7856 = vmatpush1.bf16.msra.mxu0 0
      %7857 = vmatprep.subr.bf16.mxu0 0
      %7858 = vmatpush1.bf16.msra.mxu0 0
      %7859 = vmatprep.subr.bf16.mxu0 0
      %7860 = vmatpush1.bf16.msra.mxu0 0
      %7861 = vmatprep.subr.bf16.mxu0 0
      %7862 = vmatpush1.bf16.msra.mxu0 0
      %7863 = vmatprep.subr.bf16.mxu0 0
      %7864 = vmatpush1.bf16.msra.mxu0 0
      %7865 = vmatprep.subr.bf16.mxu0 0
      %7866 = vmatpush1.bf16.msra.mxu0 0
      %7867 = vmatprep.mubr.bf16.mxu0 %v7353
      %7868 = vmatmul.mubr.bf16.gmra.mrb[0].mxu0 %v7345
      %v7869 = vpop.f32.mrb[0].mxu0
      %v7870 = vadd.f32 %v7316, %v7869
      %v7871 = vpop.f32.mrb[0].mxu0
      %v7872 = vadd.f32 %v7316, %v7871
      %v7873 = vpop.f32.mrb[0].mxu0
      %v7874 = vadd.f32 %v7321, %v7873
      %v7875 = vpop.f32.mrb[0].mxu0
      %v7876 = vadd.f32 %v7321, %v7875
      %7877 = vmatprep.mubr.bf16.mxu0 %v7356
      %7878 = vmatmul.mubr.bf16.gmra.mrb[0].mxu0 %v7347
      %v7879 = vpop.f32.mrb[0].mxu0
      %v7880 = vadd.f32 %v7326, %v7879
      %v7881 = vpop.f32.mrb[0].mxu0
      %v7882 = vadd.f32 %v7326, %v7881
      %v7883 = vpop.f32.mrb[0].mxu0
      %v7884 = vadd.f32 %v7331, %v7883
      %v7885 = vpop.f32.mrb[0].mxu0
      %v7886 = vadd.f32 %v7331, %v7885
      %7887 = vdwg.mxu0
      %7888 = vmatprep.subr.bf16.mxu0 %v7038
      %7889 = vmatpush1.bf16.msra.mxu0 %v7037
      %7890 = vmatprep.subr.bf16.mxu0 %v7070
      %7891 = vmatpush1.bf16.msra.mxu0 %v7069
      %7892 = vmatprep.subr.bf16.mxu0 %v7102
      %7893 = vmatpush1.bf16.msra.mxu0 %v7101
      %7894 = vmatprep.subr.bf16.mxu0 %v7134
      %7895 = vmatpush1.bf16.msra.mxu0 %v7133
      %7896 = vmatprep.subr.bf16.mxu0 %v7166
      %7897 = vmatpush1.bf16.msra.mxu0 %v7165
      %7898 = vmatprep.subr.bf16.mxu0 %v7198
      %7899 = vmatpush1.bf16.msra.mxu0 %v7197
      %7900 = vmatprep.subr.bf16.mxu0 %v7230
      %7901 = vmatpush1.bf16.msra.mxu0 %v7229
      %7902 = vmatprep.subr.bf16.mxu0 %v7262
      %7903 = vmatpush1.bf16.msra.mxu0 %v7261
      %7904 = vmatprep.subr.bf16.mxu0 %v7294
      %7905 = vmatpush1.bf16.msra.mxu0 %v7293
      %7906 = vmatprep.subr.bf16.mxu0 0
      %7907 = vmatpush1.bf16.msra.mxu0 0
      %7908 = vmatprep.subr.bf16.mxu0 0
      %7909 = vmatpush1.bf16.msra.mxu0 0
      %7910 = vmatprep.subr.bf16.mxu0 0
      %7911 = vmatpush1.bf16.msra.mxu0 0
      %7912 = vmatprep.subr.bf16.mxu0 0
      %7913 = vmatpush1.bf16.msra.mxu0 0
      %7914 = vmatprep.subr.bf16.mxu0 0
      %7915 = vmatpush1.bf16.msra.mxu0 0
      %7916 = vmatprep.subr.bf16.mxu0 0
      %7917 = vmatpush1.bf16.msra.mxu0 0
      %7918 = vmatprep.subr.bf16.mxu0 0
      %7919 = vmatpush1.bf16.msra.mxu0 0
      %7920 = vmatprep.mubr.bf16.mxu0 %v7353
      %7921 = vmatmul.mubr.bf16.gmra.mrb[0].mxu0 %v7345
      %v7922 = vpop.f32.mrb[0].mxu0
      %v7923 = vadd.f32 %v7316, %v7922
      %v7924 = vpop.f32.mrb[0].mxu0
      %v7925 = vadd.f32 %v7316, %v7924
      %v7926 = vpop.f32.mrb[0].mxu0
      %v7927 = vadd.f32 %v7321, %v7926
      %v7928 = vpop.f32.mrb[0].mxu0
      %v7929 = vadd.f32 %v7321, %v7928
      %7930 = vmatprep.mubr.bf16.mxu0 %v7356
      %7931 = vmatmul.mubr.bf16.gmra.mrb[0].mxu0 %v7347
      %v7932 = vpop.f32.mrb[0].mxu0
      %v7933 = vadd.f32 %v7326, %v7932
      %v7934 = vpop.f32.mrb[0].mxu0
      %v7935 = vadd.f32 %v7326, %v7934
      %v7936 = vpop.f32.mrb[0].mxu0
      %v7937 = vadd.f32 %v7331, %v7936
      %v7938 = vpop.f32.mrb[0].mxu0
      %v7939 = vadd.f32 %v7331, %v7938
      %7940 = vdwg.mxu0
      %7941 = vmatprep.subr.bf16.mxu0 %v7040
      %7942 = vmatpush1.bf16.msra.mxu0 %v7039
      %7943 = vmatprep.subr.bf16.mxu0 %v7072
      %7944 = vmatpush1.bf16.msra.mxu0 %v7071
      %7945 = vmatprep.subr.bf16.mxu0 %v7104
      %7946 = vmatpush1.bf16.msra.mxu0 %v7103
      %7947 = vmatprep.subr.bf16.mxu0 %v7136
      %7948 = vmatpush1.bf16.msra.mxu0 %v7135
      %7949 = vmatprep.subr.bf16.mxu0 %v7168
      %7950 = vmatpush1.bf16.msra.mxu0 %v7167
      %7951 = vmatprep.subr.bf16.mxu0 %v7200
      %7952 = vmatpush1.bf16.msra.mxu0 %v7199
      %7953 = vmatprep.subr.bf16.mxu0 %v7232
      %7954 = vmatpush1.bf16.msra.mxu0 %v7231
      %7955 = vmatprep.subr.bf16.mxu0 %v7264
      %7956 = vmatpush1.bf16.msra.mxu0 %v7263
      %7957 = vmatprep.subr.bf16.mxu0 %v7296
      %7958 = vmatpush1.bf16.msra.mxu0 %v7295
      %7959 = vmatprep.subr.bf16.mxu0 0
      %7960 = vmatpush1.bf16.msra.mxu0 0
      %7961 = vmatprep.subr.bf16.mxu0 0
      %7962 = vmatpush1.bf16.msra.mxu0 0
      %7963 = vmatprep.subr.bf16.mxu0 0
      %7964 = vmatpush1.bf16.msra.mxu0 0
      %7965 = vmatprep.subr.bf16.mxu0 0
      %7966 = vmatpush1.bf16.msra.mxu0 0
      %7967 = vmatprep.subr.bf16.mxu0 0
      %7968 = vmatpush1.bf16.msra.mxu0 0
      %7969 = vmatprep.subr.bf16.mxu0 0
      %7970 = vmatpush1.bf16.msra.mxu0 0
      %7971 = vmatprep.subr.bf16.mxu0 0
      %7972 = vmatpush1.bf16.msra.mxu0 0
      %7973 = vmatprep.mubr.bf16.mxu0 %v7353
      %7974 = vmatmul.mubr.bf16.gmra.mrb[0].mxu0 %v7345
      %v7975 = vpop.f32.mrb[0].mxu0
      %v7976 = vadd.f32 %v7316, %v7975
      %v7977 = vpop.f32.mrb[0].mxu0
      %v7978 = vadd.f32 %v7316, %v7977
      %v7979 = vpop.f32.mrb[0].mxu0
      %v7980 = vadd.f32 %v7321, %v7979
      %v7981 = vpop.f32.mrb[0].mxu0
      %v7982 = vadd.f32 %v7321, %v7981
      %7983 = vmatprep.mubr.bf16.mxu0 %v7356
      %7984 = vmatmul.mubr.bf16.gmra.mrb[0].mxu0 %v7347
      %v7985 = vpop.f32.mrb[0].mxu0
      %v7986 = vadd.f32 %v7326, %v7985
      %v7987 = vpop.f32.mrb[0].mxu0
      %v7988 = vadd.f32 %v7326, %v7987
      %v7989 = vpop.f32.mrb[0].mxu0
      %v7990 = vadd.f32 %v7331, %v7989
      %v7991 = vpop.f32.mrb[0].mxu0
      %v7992 = vadd.f32 %v7331, %v7991
      %7993 = vdwg.mxu0
      %7994 = vmatprep.subr.bf16.mxu0 %v7042
      %7995 = vmatpush1.bf16.msra.mxu0 %v7041
      %7996 = vmatprep.subr.bf16.mxu0 %v7074
      %7997 = vmatpush1.bf16.msra.mxu0 %v7073
      %7998 = vmatprep.subr.bf16.mxu0 %v7106
      %7999 = vmatpush1.bf16.msra.mxu0 %v7105
      %8000 = vmatprep.subr.bf16.mxu0 %v7138
      %8001 = vmatpush1.bf16.msra.mxu0 %v7137
      %8002 = vmatprep.subr.bf16.mxu0 %v7170
      %8003 = vmatpush1.bf16.msra.mxu0 %v7169
      %8004 = vmatprep.subr.bf16.mxu0 %v7202
      %8005 = vmatpush1.bf16.msra.mxu0 %v7201
      %8006 = vmatprep.subr.bf16.mxu0 %v7234
      %8007 = vmatpush1.bf16.msra.mxu0 %v7233
      %8008 = vmatprep.subr.bf16.mxu0 %v7266
      %8009 = vmatpush1.bf16.msra.mxu0 %v7265
      %8010 = vmatprep.subr.bf16.mxu0 %v7298
      %8011 = vmatpush1.bf16.msra.mxu0 %v7297
      %8012 = vmatprep.subr.bf16.mxu0 0
      %8013 = vmatpush1.bf16.msra.mxu0 0
      %8014 = vmatprep.subr.bf16.mxu0 0
      %8015 = vmatpush1.bf16.msra.mxu0 0
      %8016 = vmatprep.subr.bf16.mxu0 0
      %8017 = vmatpush1.bf16.msra.mxu0 0
      %8018 = vmatprep.subr.bf16.mxu0 0
      %8019 = vmatpush1.bf16.msra.mxu0 0
      %8020 = vmatprep.subr.bf16.mxu0 0
      %8021 = vmatpush1.bf16.msra.mxu0 0
      %8022 = vmatprep.subr.bf16.mxu0 0
      %8023 = vmatpush1.bf16.msra.mxu0 0
      %8024 = vmatprep.subr.bf16.mxu0 0
      %8025 = vmatpush1.bf16.msra.mxu0 0
      %8026 = vmatprep.mubr.bf16.mxu0 %v7353
      %8027 = vmatmul.mubr.bf16.gmra.mrb[0].mxu0 %v7345
      %v8028 = vpop.f32.mrb[0].mxu0
      %v8029 = vadd.f32 %v7316, %v8028
      %v8030 = vpop.f32.mrb[0].mxu0
      %v8031 = vadd.f32 %v7316, %v8030
      %v8032 = vpop.f32.mrb[0].mxu0
      %v8033 = vadd.f32 %v7321, %v8032
      %v8034 = vpop.f32.mrb[0].mxu0
      %v8035 = vadd.f32 %v7321, %v8034
      %8036 = vmatprep.mubr.bf16.mxu0 %v7356
      %8037 = vmatmul.mubr.bf16.gmra.mrb[0].mxu0 %v7347
      %v8038 = vpop.f32.mrb[0].mxu0
      %v8039 = vadd.f32 %v7326, %v8038
      %v8040 = vpop.f32.mrb[0].mxu0
      %v8041 = vadd.f32 %v7326, %v8040
      %v8042 = vpop.f32.mrb[0].mxu0
      %v8043 = vadd.f32 %v7331, %v8042
      %v8044 = vpop.f32.mrb[0].mxu0
      %v8045 = vadd.f32 %v7331, %v8044
      %8046 = vdwg.mxu0
      %8047 = vmatprep.subr.bf16.mxu0 %v7044
      %8048 = vmatpush1.bf16.msra.mxu0 %v7043
      %8049 = vmatprep.subr.bf16.mxu0 %v7076
      %8050 = vmatpush1.bf16.msra.mxu0 %v7075
      %8051 = vmatprep.subr.bf16.mxu0 %v7108
      %8052 = vmatpush1.bf16.msra.mxu0 %v7107
      %8053 = vmatprep.subr.bf16.mxu0 %v7140
      %8054 = vmatpush1.bf16.msra.mxu0 %v7139
      %8055 = vmatprep.subr.bf16.mxu0 %v7172
      %8056 = vmatpush1.bf16.msra.mxu0 %v7171
      %8057 = vmatprep.subr.bf16.mxu0 %v7204
      %8058 = vmatpush1.bf16.msra.mxu0 %v7203
      %8059 = vmatprep.subr.bf16.mxu0 %v7236
      %8060 = vmatpush1.bf16.msra.mxu0 %v7235
      %8061 = vmatprep.subr.bf16.mxu0 %v7268
      %8062 = vmatpush1.bf16.msra.mxu0 %v7267
      %8063 = vmatprep.subr.bf16.mxu0 %v7300
      %8064 = vmatpush1.bf16.msra.mxu0 %v7299
      %8065 = vmatprep.subr.bf16.mxu0 0
      %8066 = vmatpush1.bf16.msra.mxu0 0
      %8067 = vmatprep.subr.bf16.mxu0 0
      %8068 = vmatpush1.bf16.msra.mxu0 0
      %8069 = vmatprep.subr.bf16.mxu0 0
      %8070 = vmatpush1.bf16.msra.mxu0 0
      %8071 = vmatprep.subr.bf16.mxu0 0
      %8072 = vmatpush1.bf16.msra.mxu0 0
      %8073 = vmatprep.subr.bf16.mxu0 0
      %8074 = vmatpush1.bf16.msra.mxu0 0
      %8075 = vmatprep.subr.bf16.mxu0 0
      %8076 = vmatpush1.bf16.msra.mxu0 0
      %8077 = vmatprep.subr.bf16.mxu0 0
      %8078 = vmatpush1.bf16.msra.mxu0 0
      %8079 = vmatprep.mubr.bf16.mxu0 %v7353
      %8080 = vmatmul.mubr.bf16.gmra.mrb[0].mxu0 %v7345
      %v8081 = vpop.f32.mrb[0].mxu0
      %v8082 = vadd.f32 %v7316, %v8081
      %v8083 = vpop.f32.mrb[0].mxu0
      %v8084 = vadd.f32 %v7316, %v8083
      %v8085 = vpop.f32.mrb[0].mxu0
      %v8086 = vadd.f32 %v7321, %v8085
      %v8087 = vpop.f32.mrb[0].mxu0
      %v8088 = vadd.f32 %v7321, %v8087
      %8089 = vmatprep.mubr.bf16.mxu0 %v7356
      %8090 = vmatmul.mubr.bf16.gmra.mrb[0].mxu0 %v7347
      %v8091 = vpop.f32.mrb[0].mxu0
      %v8092 = vadd.f32 %v7326, %v8091
      %v8093 = vpop.f32.mrb[0].mxu0
      %v8094 = vadd.f32 %v7326, %v8093
      %v8095 = vpop.f32.mrb[0].mxu0
      %v8096 = vadd.f32 %v7331, %v8095
      %v8097 = vpop.f32.mrb[0].mxu0
      %v8098 = vadd.f32 %v7331, %v8097
      %8099 = vdwg.mxu0
      %8100 = vmatprep.subr.bf16.mxu0 %v7046
      %8101 = vmatpush1.bf16.msra.mxu0 %v7045
      %8102 = vmatprep.subr.bf16.mxu0 %v7078
      %8103 = vmatpush1.bf16.msra.mxu0 %v7077
      %8104 = vmatprep.subr.bf16.mxu0 %v7110
      %8105 = vmatpush1.bf16.msra.mxu0 %v7109
      %8106 = vmatprep.subr.bf16.mxu0 %v7142
      %8107 = vmatpush1.bf16.msra.mxu0 %v7141
      %8108 = vmatprep.subr.bf16.mxu0 %v7174
      %8109 = vmatpush1.bf16.msra.mxu0 %v7173
      %8110 = vmatprep.subr.bf16.mxu0 %v7206
      %8111 = vmatpush1.bf16.msra.mxu0 %v7205
      %8112 = vmatprep.subr.bf16.mxu0 %v7238
      %8113 = vmatpush1.bf16.msra.mxu0 %v7237
      %8114 = vmatprep.subr.bf16.mxu0 %v7270
      %8115 = vmatpush1.bf16.msra.mxu0 %v7269
      %8116 = vmatprep.subr.bf16.mxu0 %v7302
      %8117 = vmatpush1.bf16.msra.mxu0 %v7301
      %8118 = vmatprep.subr.bf16.mxu0 0
      %8119 = vmatpush1.bf16.msra.mxu0 0
      %8120 = vmatprep.subr.bf16.mxu0 0
      %8121 = vmatpush1.bf16.msra.mxu0 0
      %8122 = vmatprep.subr.bf16.mxu0 0
      %8123 = vmatpush1.bf16.msra.mxu0 0
      %8124 = vmatprep.subr.bf16.mxu0 0
      %8125 = vmatpush1.bf16.msra.mxu0 0
      %8126 = vmatprep.subr.bf16.mxu0 0
      %8127 = vmatpush1.bf16.msra.mxu0 0
      %8128 = vmatprep.subr.bf16.mxu0 0
      %8129 = vmatpush1.bf16.msra.mxu0 0
      %8130 = vmatprep.subr.bf16.mxu0 0
      %8131 = vmatpush1.bf16.msra.mxu0 0
      %8132 = vmatprep.mubr.bf16.mxu0 %v7353
      %8133 = vmatmul.mubr.bf16.gmra.mrb[0].mxu0 %v7345
      %v8134 = vpop.f32.mrb[0].mxu0
      %v8135 = vadd.f32 %v7316, %v8134
      %v8136 = vpop.f32.mrb[0].mxu0
      %v8137 = vadd.f32 %v7316, %v8136
      %v8138 = vpop.f32.mrb[0].mxu0
      %v8139 = vadd.f32 %v7321, %v8138
      %v8140 = vpop.f32.mrb[0].mxu0
      %v8141 = vadd.f32 %v7321, %v8140
      %8142 = vmatprep.mubr.bf16.mxu0 %v7356
      %8143 = vmatmul.mubr.bf16.gmra.mrb[0].mxu0 %v7347
      %v8144 = vpop.f32.mrb[0].mxu0
      %v8145 = vadd.f32 %v7326, %v8144
      %v8146 = vpop.f32.mrb[0].mxu0
      %v8147 = vadd.f32 %v7326, %v8146
      %v8148 = vpop.f32.mrb[0].mxu0
      %v8149 = vadd.f32 %v7331, %v8148
      %v8150 = vpop.f32.mrb[0].mxu0
      %v8151 = vadd.f32 %v7331, %v8150
      %8152 = vdwg.mxu0
      %8153 = vmatprep.subr.bf16.mxu0 %v7048
      %8154 = vmatpush1.bf16.msra.mxu0 %v7047
      %8155 = vmatprep.subr.bf16.mxu0 %v7080
      %8156 = vmatpush1.bf16.msra.mxu0 %v7079
      %8157 = vmatprep.subr.bf16.mxu0 %v7112
      %8158 = vmatpush1.bf16.msra.mxu0 %v7111
      %8159 = vmatprep.subr.bf16.mxu0 %v7144
      %8160 = vmatpush1.bf16.msra.mxu0 %v7143
      %8161 = vmatprep.subr.bf16.mxu0 %v7176
      %8162 = vmatpush1.bf16.msra.mxu0 %v7175
      %8163 = vmatprep.subr.bf16.mxu0 %v7208
      %8164 = vmatpush1.bf16.msra.mxu0 %v7207
      %8165 = vmatprep.subr.bf16.mxu0 %v7240
      %8166 = vmatpush1.bf16.msra.mxu0 %v7239
      %8167 = vmatprep.subr.bf16.mxu0 %v7272
      %8168 = vmatpush1.bf16.msra.mxu0 %v7271
      %8169 = vmatprep.subr.bf16.mxu0 %v7304
      %8170 = vmatpush1.bf16.msra.mxu0 %v7303
      %8171 = vmatprep.subr.bf16.mxu0 0
      %8172 = vmatpush1.bf16.msra.mxu0 0
      %8173 = vmatprep.subr.bf16.mxu0 0
      %8174 = vmatpush1.bf16.msra.mxu0 0
      %8175 = vmatprep.subr.bf16.mxu0 0
      %8176 = vmatpush1.bf16.msra.mxu0 0
      %8177 = vmatprep.subr.bf16.mxu0 0
      %8178 = vmatpush1.bf16.msra.mxu0 0
      %8179 = vmatprep.subr.bf16.mxu0 0
      %8180 = vmatpush1.bf16.msra.mxu0 0
      %8181 = vmatprep.subr.bf16.mxu0 0
      %8182 = vmatpush1.bf16.msra.mxu0 0
      %8183 = vmatprep.subr.bf16.mxu0 0
      %8184 = vmatpush1.bf16.msra.mxu0 0
      %8185 = vmatprep.mubr.bf16.mxu0 %v7353
      %8186 = vmatmul.mubr.bf16.gmra.mrb[0].mxu0 %v7345
      %v8187 = vpop.f32.mrb[0].mxu0
      %v8188 = vadd.f32 %v7316, %v8187
      %v8189 = vpop.f32.mrb[0].mxu0
      %v8190 = vadd.f32 %v7316, %v8189
      %v8191 = vpop.f32.mrb[0].mxu0
      %v8192 = vadd.f32 %v7321, %v8191
      %v8193 = vpop.f32.mrb[0].mxu0
      %v8194 = vadd.f32 %v7321, %v8193
      %8195 = vmatprep.mubr.bf16.mxu0 %v7356
      %8196 = vmatmul.mubr.bf16.gmra.mrb[0].mxu0 %v7347
      %v8197 = vpop.f32.mrb[0].mxu0
      %v8198 = vadd.f32 %v7326, %v8197
      %v8199 = vpop.f32.mrb[0].mxu0
      %v8200 = vadd.f32 %v7326, %v8199
      %v8201 = vpop.f32.mrb[0].mxu0
      %v8202 = vadd.f32 %v7331, %v8201
      %v8203 = vpop.f32.mrb[0].mxu0
      %v8204 = vadd.f32 %v7331, %v8203
      %8205 = vdwg.mxu0
      %v8206 = vmax.f32 %v7393, 0.0
      %v8207 = vmax.f32 %v7395, 0.0
      %v8208 = vmax.f32 %v7446, 0.0
      %v8209 = vmax.f32 %v7448, 0.0
      %v8210 = vmax.f32 %v7499, 0.0
      %v8211 = vmax.f32 %v7501, 0.0
      %v8212 = vmax.f32 %v7552, 0.0
      %v8213 = vmax.f32 %v7554, 0.0
      %v8214 = vmax.f32 %v7605, 0.0
      %v8215 = vmax.f32 %v7607, 0.0
      %v8216 = vmax.f32 %v7658, 0.0
      %v8217 = vmax.f32 %v7660, 0.0
      %v8218 = vmax.f32 %v7711, 0.0
      %v8219 = vmax.f32 %v7713, 0.0
      %v8220 = vmax.f32 %v7764, 0.0
      %v8221 = vmax.f32 %v7766, 0.0
      %v8222 = vmax.f32 %v7817, 0.0
      %v8223 = vmax.f32 %v7819, 0.0
      %v8224 = vmax.f32 %v7870, 0.0
      %v8225 = vmax.f32 %v7872, 0.0
      %v8226 = vmax.f32 %v7923, 0.0
      %v8227 = vmax.f32 %v7925, 0.0
      %v8228 = vmax.f32 %v7976, 0.0
      %v8229 = vmax.f32 %v7978, 0.0
      %v8230 = vmax.f32 %v8029, 0.0
      %v8231 = vmax.f32 %v8031, 0.0
      %v8232 = vmax.f32 %v8082, 0.0
      %v8233 = vmax.f32 %v8084, 0.0
      %v8234 = vmax.f32 %v8135, 0.0
      %v8235 = vmax.f32 %v8137, 0.0
      %v8236 = vmax.f32 %v8188, 0.0
      %v8237 = vmax.f32 %v8190, 0.0
      %v8238 = vmax.f32 %v7397, 0.0
      %v8239 = vmax.f32 %v7399, 0.0
      %v8240 = vmax.f32 %v7450, 0.0
      %v8241 = vmax.f32 %v7452, 0.0
      %v8242 = vmax.f32 %v7503, 0.0
      %v8243 = vmax.f32 %v7505, 0.0
      %v8244 = vmax.f32 %v7556, 0.0
      %v8245 = vmax.f32 %v7558, 0.0
      %v8246 = vmax.f32 %v7609, 0.0
      %v8247 = vmax.f32 %v7611, 0.0
      %v8248 = vmax.f32 %v7662, 0.0
      %v8249 = vmax.f32 %v7664, 0.0
      %v8250 = vmax.f32 %v7715, 0.0
      %v8251 = vmax.f32 %v7717, 0.0
      %v8252 = vmax.f32 %v7768, 0.0
      %v8253 = vmax.f32 %v7770, 0.0
      %v8254 = vmax.f32 %v7821, 0.0
      %v8255 = vmax.f32 %v7823, 0.0
      %v8256 = vmax.f32 %v7874, 0.0
      %v8257 = vmax.f32 %v7876, 0.0
      %v8258 = vmax.f32 %v7927, 0.0
      %v8259 = vmax.f32 %v7929, 0.0
      %v8260 = vmax.f32 %v7980, 0.0
      %v8261 = vmax.f32 %v7982, 0.0
      %v8262 = vmax.f32 %v8033, 0.0
      %v8263 = vmax.f32 %v8035, 0.0
      %v8264 = vmax.f32 %v8086, 0.0
      %v8265 = vmax.f32 %v8088, 0.0
      %v8266 = vmax.f32 %v8139, 0.0
      %v8267 = vmax.f32 %v8141, 0.0
      %v8268 = vmax.f32 %v8192, 0.0
      %v8269 = vmax.f32 %v8194, 0.0
      %v8270 = vmax.f32 %v7403, 0.0
      %v8271 = vmax.f32 %v7405, 0.0
      %v8272 = vmax.f32 %v7456, 0.0
      %v8273 = vmax.f32 %v7458, 0.0
      %v8274 = vmax.f32 %v7509, 0.0
      %v8275 = vmax.f32 %v7511, 0.0
      %v8276 = vmax.f32 %v7562, 0.0
      %v8277 = vmax.f32 %v7564, 0.0
      %v8278 = vmax.f32 %v7615, 0.0
      %v8279 = vmax.f32 %v7617, 0.0
      %v8280 = vmax.f32 %v7668, 0.0
      %v8281 = vmax.f32 %v7670, 0.0
      %v8282 = vmax.f32 %v7721, 0.0
      %v8283 = vmax.f32 %v7723, 0.0
      %v8284 = vmax.f32 %v7774, 0.0
      %v8285 = vmax.f32 %v7776, 0.0
      %v8286 = vmax.f32 %v7827, 0.0
      %v8287 = vmax.f32 %v7829, 0.0
      %v8288 = vmax.f32 %v7880, 0.0
      %v8289 = vmax.f32 %v7882, 0.0
      %v8290 = vmax.f32 %v7933, 0.0
      %v8291 = vmax.f32 %v7935, 0.0
      %v8292 = vmax.f32 %v7986, 0.0
      %v8293 = vmax.f32 %v7988, 0.0
      %v8294 = vmax.f32 %v8039, 0.0
      %v8295 = vmax.f32 %v8041, 0.0
      %v8296 = vmax.f32 %v8092, 0.0
      %v8297 = vmax.f32 %v8094, 0.0
      %v8298 = vmax.f32 %v8145, 0.0
      %v8299 = vmax.f32 %v8147, 0.0
      %v8300 = vmax.f32 %v8198, 0.0
      %v8301 = vmax.f32 %v8200, 0.0
      %v8302 = vmax.f32 %v7407, 0.0
      %v8303 = vmax.f32 %v7409, 0.0
      %v8304 = vmax.f32 %v7460, 0.0
      %v8305 = vmax.f32 %v7462, 0.0
      %v8306 = vmax.f32 %v7513, 0.0
      %v8307 = vmax.f32 %v7515, 0.0
      %v8308 = vmax.f32 %v7566, 0.0
      %v8309 = vmax.f32 %v7568, 0.0
      %v8310 = vmax.f32 %v7619, 0.0
      %v8311 = vmax.f32 %v7621, 0.0
      %v8312 = vmax.f32 %v7672, 0.0
      %v8313 = vmax.f32 %v7674, 0.0
      %v8314 = vmax.f32 %v7725, 0.0
      %v8315 = vmax.f32 %v7727, 0.0
      %v8316 = vmax.f32 %v7778, 0.0
      %v8317 = vmax.f32 %v7780, 0.0
      %v8318 = vmax.f32 %v7831, 0.0
      %v8319 = vmax.f32 %v7833, 0.0
      %v8320 = vmax.f32 %v7884, 0.0
      %v8321 = vmax.f32 %v7886, 0.0
      %v8322 = vmax.f32 %v7937, 0.0
      %v8323 = vmax.f32 %v7939, 0.0
      %v8324 = vmax.f32 %v7990, 0.0
      %v8325 = vmax.f32 %v7992, 0.0
      %v8326 = vmax.f32 %v8043, 0.0
      %v8327 = vmax.f32 %v8045, 0.0
      %v8328 = vmax.f32 %v8096, 0.0
      %v8329 = vmax.f32 %v8098, 0.0
      %v8330 = vmax.f32 %v8149, 0.0
      %v8331 = vmax.f32 %v8151, 0.0
      %v8332 = vmax.f32 %v8202, 0.0
      %v8333 = vmax.f32 %v8204, 0.0
      %8462 = vrot.lane.b32.xlu0 %v8206, 126
      %v8463 = vpop.permute.xlu0 %8462
      %8464 = vrot.lane.b32.xlu0 %v8207, 126
      %v8465 = vpop.permute.xlu0 %8464
      %8466 = vrot.lane.b32.xlu0 %v8208, 126
      %v8467 = vpop.permute.xlu0 %8466
      %8468 = vrot.lane.b32.xlu0 %v8209, 126
      %v8469 = vpop.permute.xlu0 %8468
      %8470 = vrot.lane.b32.xlu0 %v8210, 126
      %v8471 = vpop.permute.xlu0 %8470
      %8472 = vrot.lane.b32.xlu0 %v8211, 126
      %v8473 = vpop.permute.xlu0 %8472
      %8474 = vrot.lane.b32.xlu0 %v8212, 126
      %v8475 = vpop.permute.xlu0 %8474
      %8476 = vrot.lane.b32.xlu0 %v8213, 126
      %v8477 = vpop.permute.xlu0 %8476
      %8478 = vrot.lane.b32.xlu0 %v8214, 126
      %v8479 = vpop.permute.xlu0 %8478
      %8480 = vrot.lane.b32.xlu0 %v8215, 126
      %v8481 = vpop.permute.xlu0 %8480
      %8482 = vrot.lane.b32.xlu0 %v8216, 126
      %v8483 = vpop.permute.xlu0 %8482
      %8484 = vrot.lane.b32.xlu0 %v8217, 126
      %v8485 = vpop.permute.xlu0 %8484
      %8486 = vrot.lane.b32.xlu0 %v8218, 126
      %v8487 = vpop.permute.xlu0 %8486
      %8488 = vrot.lane.b32.xlu0 %v8219, 126
      %v8489 = vpop.permute.xlu0 %8488
      %8490 = vrot.lane.b32.xlu0 %v8220, 126
      %v8491 = vpop.permute.xlu0 %8490
      %8492 = vrot.lane.b32.xlu0 %v8221, 126
      %v8493 = vpop.permute.xlu0 %8492
      %8494 = vrot.lane.b32.xlu0 %v8222, 126
      %v8495 = vpop.permute.xlu0 %8494
      %8496 = vrot.lane.b32.xlu0 %v8223, 126
      %v8497 = vpop.permute.xlu0 %8496
      %8498 = vrot.lane.b32.xlu0 %v8224, 126
      %v8499 = vpop.permute.xlu0 %8498
      %8500 = vrot.lane.b32.xlu0 %v8225, 126
      %v8501 = vpop.permute.xlu0 %8500
      %8502 = vrot.lane.b32.xlu0 %v8226, 126
      %v8503 = vpop.permute.xlu0 %8502
      %8504 = vrot.lane.b32.xlu0 %v8227, 126
      %v8505 = vpop.permute.xlu0 %8504
      %8506 = vrot.lane.b32.xlu0 %v8228, 126
      %v8507 = vpop.permute.xlu0 %8506
      %8508 = vrot.lane.b32.xlu0 %v8229, 126
      %v8509 = vpop.permute.xlu0 %8508
      %8510 = vrot.lane.b32.xlu0 %v8230, 126
      %v8511 = vpop.permute.xlu0 %8510
      %8512 = vrot.lane.b32.xlu0 %v8231, 126
      %v8513 = vpop.permute.xlu0 %8512
      %8514 = vrot.lane.b32.xlu0 %v8232, 126
      %v8515 = vpop.permute.xlu0 %8514
      %8516 = vrot.lane.b32.xlu0 %v8233, 126
      %v8517 = vpop.permute.xlu0 %8516
      %8518 = vrot.lane.b32.xlu0 %v8234, 126
      %v8519 = vpop.permute.xlu0 %8518
      %8520 = vrot.lane.b32.xlu0 %v8235, 126
      %v8521 = vpop.permute.xlu0 %8520
      %8522 = vrot.lane.b32.xlu0 %v8236, 126
      %v8523 = vpop.permute.xlu0 %8522
      %8524 = vrot.lane.b32.xlu0 %v8237, 126
      %v8525 = vpop.permute.xlu0 %8524
      %8526 = vrot.lane.b32.xlu0 %v8238, 126
      %v8527 = vpop.permute.xlu0 %8526
      %8528 = vrot.lane.b32.xlu0 %v8239, 126
      %v8529 = vpop.permute.xlu0 %8528
      %8530 = vrot.lane.b32.xlu0 %v8240, 126
      %v8531 = vpop.permute.xlu0 %8530
      %8532 = vrot.lane.b32.xlu0 %v8241, 126
      %v8533 = vpop.permute.xlu0 %8532
      %8534 = vrot.lane.b32.xlu0 %v8242, 126
      %v8535 = vpop.permute.xlu0 %8534
      %8536 = vrot.lane.b32.xlu0 %v8243, 126
      %v8537 = vpop.permute.xlu0 %8536
      %8538 = vrot.lane.b32.xlu0 %v8244, 126
      %v8539 = vpop.permute.xlu0 %8538
      %8540 = vrot.lane.b32.xlu0 %v8245, 126
      %v8541 = vpop.permute.xlu0 %8540
      %8542 = vrot.lane.b32.xlu0 %v8246, 126
      %v8543 = vpop.permute.xlu0 %8542
      %8544 = vrot.lane.b32.xlu0 %v8247, 126
      %v8545 = vpop.permute.xlu0 %8544
      %8546 = vrot.lane.b32.xlu0 %v8248, 126
      %v8547 = vpop.permute.xlu0 %8546
      %8548 = vrot.lane.b32.xlu0 %v8249, 126
      %v8549 = vpop.permute.xlu0 %8548
      %8550 = vrot.lane.b32.xlu0 %v8250, 126
      %v8551 = vpop.permute.xlu0 %8550
      %8552 = vrot.lane.b32.xlu0 %v8251, 126
      %v8553 = vpop.permute.xlu0 %8552
      %8554 = vrot.lane.b32.xlu0 %v8252, 126
      %v8555 = vpop.permute.xlu0 %8554
      %8556 = vrot.lane.b32.xlu0 %v8253, 126
      %v8557 = vpop.permute.xlu0 %8556
      %8558 = vrot.lane.b32.xlu0 %v8254, 126
      %v8559 = vpop.permute.xlu0 %8558
      %8560 = vrot.lane.b32.xlu0 %v8255, 126
      %v8561 = vpop.permute.xlu0 %8560
      %8562 = vrot.lane.b32.xlu0 %v8256, 126
      %v8563 = vpop.permute.xlu0 %8562
      %8564 = vrot.lane.b32.xlu0 %v8257, 126
      %v8565 = vpop.permute.xlu0 %8564
      %8566 = vrot.lane.b32.xlu0 %v8258, 126
      %v8567 = vpop.permute.xlu0 %8566
      %8568 = vrot.lane.b32.xlu0 %v8259, 126
      %v8569 = vpop.permute.xlu0 %8568
      %8570 = vrot.lane.b32.xlu0 %v8260, 126
      %v8571 = vpop.permute.xlu0 %8570
      %8572 = vrot.lane.b32.xlu0 %v8261, 126
      %v8573 = vpop.permute.xlu0 %8572
      %8574 = vrot.lane.b32.xlu0 %v8262, 126
      %v8575 = vpop.permute.xlu0 %8574
      %8576 = vrot.lane.b32.xlu0 %v8263, 126
      %v8577 = vpop.permute.xlu0 %8576
      %8578 = vrot.lane.b32.xlu0 %v8264, 126
      %v8579 = vpop.permute.xlu0 %8578
      %8580 = vrot.lane.b32.xlu0 %v8265, 126
      %v8581 = vpop.permute.xlu0 %8580
      %8582 = vrot.lane.b32.xlu0 %v8266, 126
      %v8583 = vpop.permute.xlu0 %8582
      %8584 = vrot.lane.b32.xlu0 %v8267, 126
      %v8585 = vpop.permute.xlu0 %8584
      %8586 = vrot.lane.b32.xlu0 %v8268, 126
      %v8587 = vpop.permute.xlu0 %8586
      %8588 = vrot.lane.b32.xlu0 %v8269, 126
      %v8589 = vpop.permute.xlu0 %8588
      %8590 = vrot.lane.b32.xlu0 %v8270, 126
      %v8591 = vpop.permute.xlu0 %8590
      %8592 = vrot.lane.b32.xlu0 %v8271, 126
      %v8593 = vpop.permute.xlu0 %8592
      %8594 = vrot.lane.b32.xlu0 %v8272, 126
      %v8595 = vpop.permute.xlu0 %8594
      %8596 = vrot.lane.b32.xlu0 %v8273, 126
      %v8597 = vpop.permute.xlu0 %8596
      %8598 = vrot.lane.b32.xlu0 %v8274, 126
      %v8599 = vpop.permute.xlu0 %8598
      %8600 = vrot.lane.b32.xlu0 %v8275, 126
      %v8601 = vpop.permute.xlu0 %8600
      %8602 = vrot.lane.b32.xlu0 %v8276, 126
      %v8603 = vpop.permute.xlu0 %8602
      %8604 = vrot.lane.b32.xlu0 %v8277, 126
      %v8605 = vpop.permute.xlu0 %8604
      %8606 = vrot.lane.b32.xlu0 %v8278, 126
      %v8607 = vpop.permute.xlu0 %8606
      %8608 = vrot.lane.b32.xlu0 %v8279, 126
      %v8609 = vpop.permute.xlu0 %8608
      %8610 = vrot.lane.b32.xlu0 %v8280, 126
      %v8611 = vpop.permute.xlu0 %8610
      %8612 = vrot.lane.b32.xlu0 %v8281, 126
      %v8613 = vpop.permute.xlu0 %8612
      %8614 = vrot.lane.b32.xlu0 %v8282, 126
      %v8615 = vpop.permute.xlu0 %8614
      %8616 = vrot.lane.b32.xlu0 %v8283, 126
      %v8617 = vpop.permute.xlu0 %8616
      %8618 = vrot.lane.b32.xlu0 %v8284, 126
      %v8619 = vpop.permute.xlu0 %8618
      %8620 = vrot.lane.b32.xlu0 %v8285, 126
      %v8621 = vpop.permute.xlu0 %8620
      %8622 = vrot.lane.b32.xlu0 %v8286, 126
      %v8623 = vpop.permute.xlu0 %8622
      %8624 = vrot.lane.b32.xlu0 %v8287, 126
      %v8625 = vpop.permute.xlu0 %8624
      %8626 = vrot.lane.b32.xlu0 %v8288, 126
      %v8627 = vpop.permute.xlu0 %8626
      %8628 = vrot.lane.b32.xlu0 %v8289, 126
      %v8629 = vpop.permute.xlu0 %8628
      %8630 = vrot.lane.b32.xlu0 %v8290, 126
      %v8631 = vpop.permute.xlu0 %8630
      %8632 = vrot.lane.b32.xlu0 %v8291, 126
      %v8633 = vpop.permute.xlu0 %8632
      %8634 = vrot.lane.b32.xlu0 %v8292, 126
      %v8635 = vpop.permute.xlu0 %8634
      %8636 = vrot.lane.b32.xlu0 %v8293, 126
      %v8637 = vpop.permute.xlu0 %8636
      %8638 = vrot.lane.b32.xlu0 %v8294, 126
      %v8639 = vpop.permute.xlu0 %8638
      %8640 = vrot.lane.b32.xlu0 %v8295, 126
      %v8641 = vpop.permute.xlu0 %8640
      %8642 = vrot.lane.b32.xlu0 %v8296, 126
      %v8643 = vpop.permute.xlu0 %8642
      %8644 = vrot.lane.b32.xlu0 %v8297, 126
      %v8645 = vpop.permute.xlu0 %8644
      %8646 = vrot.lane.b32.xlu0 %v8298, 126
      %v8647 = vpop.permute.xlu0 %8646
      %8648 = vrot.lane.b32.xlu0 %v8299, 126
      %v8649 = vpop.permute.xlu0 %8648
      %8650 = vrot.lane.b32.xlu0 %v8300, 126
      %v8651 = vpop.permute.xlu0 %8650
      %8652 = vrot.lane.b32.xlu0 %v8301, 126
      %v8653 = vpop.permute.xlu0 %8652
      %8654 = vrot.lane.b32.xlu0 %v8302, 126
      %v8655 = vpop.permute.xlu0 %8654
      %8656 = vrot.lane.b32.xlu0 %v8303, 126
      %v8657 = vpop.permute.xlu0 %8656
      %8658 = vrot.lane.b32.xlu0 %v8304, 126
      %v8659 = vpop.permute.xlu0 %8658
      %8660 = vrot.lane.b32.xlu0 %v8305, 126
      %v8661 = vpop.permute.xlu0 %8660
      %8662 = vrot.lane.b32.xlu0 %v8306, 126
      %v8663 = vpop.permute.xlu0 %8662
      %8664 = vrot.lane.b32.xlu0 %v8307, 126
      %v8665 = vpop.permute.xlu0 %8664
      %8666 = vrot.lane.b32.xlu0 %v8308, 126
      %v8667 = vpop.permute.xlu0 %8666
      %8668 = vrot.lane.b32.xlu0 %v8309, 126
      %v8669 = vpop.permute.xlu0 %8668
      %8670 = vrot.lane.b32.xlu0 %v8310, 126
      %v8671 = vpop.permute.xlu0 %8670
      %8672 = vrot.lane.b32.xlu0 %v8311, 126
      %v8673 = vpop.permute.xlu0 %8672
      %8674 = vrot.lane.b32.xlu0 %v8312, 126
      %v8675 = vpop.permute.xlu0 %8674
      %8676 = vrot.lane.b32.xlu0 %v8313, 126
      %v8677 = vpop.permute.xlu0 %8676
      %8678 = vrot.lane.b32.xlu0 %v8314, 126
      %v8679 = vpop.permute.xlu0 %8678
      %8680 = vrot.lane.b32.xlu0 %v8315, 126
      %v8681 = vpop.permute.xlu0 %8680
      %8682 = vrot.lane.b32.xlu0 %v8316, 126
      %v8683 = vpop.permute.xlu0 %8682
      %8684 = vrot.lane.b32.xlu0 %v8317, 126
      %v8685 = vpop.permute.xlu0 %8684
      %8686 = vrot.lane.b32.xlu0 %v8318, 126
      %v8687 = vpop.permute.xlu0 %8686
      %8688 = vrot.lane.b32.xlu0 %v8319, 126
      %v8689 = vpop.permute.xlu0 %8688
      %8690 = vrot.lane.b32.xlu0 %v8320, 126
      %v8691 = vpop.permute.xlu0 %8690
      %8692 = vrot.lane.b32.xlu0 %v8321, 126
      %v8693 = vpop.permute.xlu0 %8692
      %8694 = vrot.lane.b32.xlu0 %v8322, 126
      %v8695 = vpop.permute.xlu0 %8694
      %8696 = vrot.lane.b32.xlu0 %v8323, 126
      %v8697 = vpop.permute.xlu0 %8696
      %8698 = vrot.lane.b32.xlu0 %v8324, 126
      %v8699 = vpop.permute.xlu0 %8698
      %8700 = vrot.lane.b32.xlu0 %v8325, 126
      %v8701 = vpop.permute.xlu0 %8700
      %8702 = vrot.lane.b32.xlu0 %v8326, 126
      %v8703 = vpop.permute.xlu0 %8702
      %8704 = vrot.lane.b32.xlu0 %v8327, 126
      %v8705 = vpop.permute.xlu0 %8704
      %8706 = vrot.lane.b32.xlu0 %v8328, 126
      %v8707 = vpop.permute.xlu0 %8706
      %8708 = vrot.lane.b32.xlu0 %v8329, 126
      %v8709 = vpop.permute.xlu0 %8708
      %8710 = vrot.lane.b32.xlu0 %v8330, 126
      %v8711 = vpop.permute.xlu0 %8710
      %8712 = vrot.lane.b32.xlu0 %v8331, 126
      %v8713 = vpop.permute.xlu0 %8712
      %8714 = vrot.lane.b32.xlu0 %v8332, 126
      %v8715 = vpop.permute.xlu0 %8714
      %8716 = vrot.lane.b32.xlu0 %v8333, 126
      %v8717 = vpop.permute.xlu0 %8716
      %v8718 = vsel %vm5960, %v8463, %v8465
      %v8719 = vsel %vm5960, %v8465, %v8467
      %v8720 = vsel %vm5960, %v8467, %v8469
      %v8721 = vsel %vm5960, %v8469, %v8471
      %v8722 = vsel %vm5960, %v8471, %v8473
      %v8723 = vsel %vm5960, %v8473, %v8475
      %v8724 = vsel %vm5960, %v8475, %v8477
      %v8725 = vsel %vm5960, %v8477, %v8479
      %v8726 = vsel %vm5960, %v8479, %v8481
      %v8727 = vsel %vm5960, %v8481, %v8483
      %v8728 = vsel %vm5960, %v8483, %v8485
      %v8729 = vsel %vm5960, %v8485, %v8487
      %v8730 = vsel %vm5960, %v8487, %v8489
      %v8731 = vsel %vm5960, %v8489, %v8491
      %v8732 = vsel %vm5960, %v8491, %v8493
      %v8733 = vsel %vm5960, %v8493, %v8495
      %v8734 = vsel %vm5960, %v8495, %v8497
      %v8735 = vsel %vm5960, %v8497, %v8499
      %v8736 = vsel %vm5960, %v8499, %v8501
      %v8737 = vsel %vm5960, %v8501, %v8503
      %v8738 = vsel %vm5960, %v8503, %v8505
      %v8739 = vsel %vm5960, %v8505, %v8507
      %v8740 = vsel %vm5960, %v8507, %v8509
      %v8741 = vsel %vm5960, %v8509, %v8511
      %v8742 = vsel %vm5960, %v8511, %v8513
      %v8743 = vsel %vm5960, %v8513, %v8515
      %v8744 = vsel %vm5960, %v8515, %v8517
      %v8745 = vsel %vm5960, %v8517, %v8519
      %v8746 = vsel %vm5960, %v8519, %v8521
      %v8747 = vsel %vm5960, %v8521, %v8523
      %v8748 = vsel %vm5960, %v8523, %v8525
      %v8749 = vsel %vm5960, %v8527, %v8529
      %v8750 = vsel %vm5960, %v8529, %v8531
      %v8751 = vsel %vm5960, %v8531, %v8533
      %v8752 = vsel %vm5960, %v8533, %v8535
      %v8753 = vsel %vm5960, %v8535, %v8537
      %v8754 = vsel %vm5960, %v8537, %v8539
      %v8755 = vsel %vm5960, %v8539, %v8541
      %v8756 = vsel %vm5960, %v8541, %v8543
      %v8757 = vsel %vm5960, %v8543, %v8545
      %v8758 = vsel %vm5960, %v8545, %v8547
      %v8759 = vsel %vm5960, %v8547, %v8549
      %v8760 = vsel %vm5960, %v8549, %v8551
      %v8761 = vsel %vm5960, %v8551, %v8553
      %v8762 = vsel %vm5960, %v8553, %v8555
      %v8763 = vsel %vm5960, %v8555, %v8557
      %v8764 = vsel %vm5960, %v8557, %v8559
      %v8765 = vsel %vm5960, %v8559, %v8561
      %v8766 = vsel %vm5960, %v8561, %v8563
      %v8767 = vsel %vm5960, %v8563, %v8565
      %v8768 = vsel %vm5960, %v8565, %v8567
      %v8769 = vsel %vm5960, %v8567, %v8569
      %v8770 = vsel %vm5960, %v8569, %v8571
      %v8771 = vsel %vm5960, %v8571, %v8573
      %v8772 = vsel %vm5960, %v8573, %v8575
      %v8773 = vsel %vm5960, %v8575, %v8577
      %v8774 = vsel %vm5960, %v8577, %v8579
      %v8775 = vsel %vm5960, %v8579, %v8581
      %v8776 = vsel %vm5960, %v8581, %v8583
      %v8777 = vsel %vm5960, %v8583, %v8585
      %v8778 = vsel %vm5960, %v8585, %v8587
      %v8779 = vsel %vm5960, %v8587, %v8589
      %v8780 = vsel %vm5960, %v8591, %v8593
      %v8781 = vsel %vm5960, %v8593, %v8595
      %v8782 = vsel %vm5960, %v8595, %v8597
      %v8783 = vsel %vm5960, %v8597, %v8599
      %v8784 = vsel %vm5960, %v8599, %v8601
      %v8785 = vsel %vm5960, %v8601, %v8603
      %v8786 = vsel %vm5960, %v8603, %v8605
      %v8787 = vsel %vm5960, %v8605, %v8607
      %v8788 = vsel %vm5960, %v8607, %v8609
      %v8789 = vsel %vm5960, %v8609, %v8611
      %v8790 = vsel %vm5960, %v8611, %v8613
      %v8791 = vsel %vm5960, %v8613, %v8615
      %v8792 = vsel %vm5960, %v8615, %v8617
      %v8793 = vsel %vm5960, %v8617, %v8619
      %v8794 = vsel %vm5960, %v8619, %v8621
      %v8795 = vsel %vm5960, %v8621, %v8623
      %v8796 = vsel %vm5960, %v8623, %v8625
      %v8797 = vsel %vm5960, %v8625, %v8627
      %v8798 = vsel %vm5960, %v8627, %v8629
      %v8799 = vsel %vm5960, %v8629, %v8631
      %v8800 = vsel %vm5960, %v8631, %v8633
      %v8801 = vsel %vm5960, %v8633, %v8635
      %v8802 = vsel %vm5960, %v8635, %v8637
      %v8803 = vsel %vm5960, %v8637, %v8639
      %v8804 = vsel %vm5960, %v8639, %v8641
      %v8805 = vsel %vm5960, %v8641, %v8643
      %v8806 = vsel %vm5960, %v8643, %v8645
      %v8807 = vsel %vm5960, %v8645, %v8647
      %v8808 = vsel %vm5960, %v8647, %v8649
      %v8809 = vsel %vm5960, %v8649, %v8651
      %v8810 = vsel %vm5960, %v8651, %v8653
      %v8811 = vsel %vm5960, %v8655, %v8657
      %v8812 = vsel %vm5960, %v8657, %v8659
      %v8813 = vsel %vm5960, %v8659, %v8661
      %v8814 = vsel %vm5960, %v8661, %v8663
      %v8815 = vsel %vm5960, %v8663, %v8665
      %v8816 = vsel %vm5960, %v8665, %v8667
      %v8817 = vsel %vm5960, %v8667, %v8669
      %v8818 = vsel %vm5960, %v8669, %v8671
      %v8819 = vsel %vm5960, %v8671, %v8673
      %v8820 = vsel %vm5960, %v8673, %v8675
      %v8821 = vsel %vm5960, %v8675, %v8677
      %v8822 = vsel %vm5960, %v8677, %v8679
      %v8823 = vsel %vm5960, %v8679, %v8681
      %v8824 = vsel %vm5960, %v8681, %v8683
      %v8825 = vsel %vm5960, %v8683, %v8685
      %v8826 = vsel %vm5960, %v8685, %v8687
      %v8827 = vsel %vm5960, %v8687, %v8689
      %v8828 = vsel %vm5960, %v8689, %v8691
      %v8829 = vsel %vm5960, %v8691, %v8693
      %v8830 = vsel %vm5960, %v8693, %v8695
      %v8831 = vsel %vm5960, %v8695, %v8697
      %v8832 = vsel %vm5960, %v8697, %v8699
      %v8833 = vsel %vm5960, %v8699, %v8701
      %v8834 = vsel %vm5960, %v8701, %v8703
      %v8835 = vsel %vm5960, %v8703, %v8705
      %v8836 = vsel %vm5960, %v8705, %v8707
      %v8837 = vsel %vm5960, %v8707, %v8709
      %v8838 = vsel %vm5960, %v8709, %v8711
      %v8839 = vsel %vm5960, %v8711, %v8713
      %v8840 = vsel %vm5960, %v8713, %v8715
      %v8841 = vsel %vm5960, %v8715, %v8717
      %v8974 = vsel %vm5960, %v8525, %v8463
      %v8975 = vsel %vm5960, %v8589, %v8527
      %v8976 = vsel %vm5960, %v8653, %v8591
      %v8977 = vsel %vm5960, %v8717, %v8655
      %v8978 = vmax.f32 %v8206, %v8718
      %v8979 = vmax.f32 %v8207, %v8719
      %v8980 = vmax.f32 %v8208, %v8720
      %v8981 = vmax.f32 %v8209, %v8721
      %v8982 = vmax.f32 %v8210, %v8722
      %v8983 = vmax.f32 %v8211, %v8723
      %v8984 = vmax.f32 %v8212, %v8724
      %v8985 = vmax.f32 %v8213, %v8725
      %v8986 = vmax.f32 %v8214, %v8726
      %v8987 = vmax.f32 %v8215, %v8727
      %v8988 = vmax.f32 %v8216, %v8728
      %v8989 = vmax.f32 %v8217, %v8729
      %v8990 = vmax.f32 %v8218, %v8730
      %v8991 = vmax.f32 %v8219, %v8731
      %v8992 = vmax.f32 %v8220, %v8732
      %v8993 = vmax.f32 %v8221, %v8733
      %v8994 = vmax.f32 %v8222, %v8734
      %v8995 = vmax.f32 %v8223, %v8735
      %v8996 = vmax.f32 %v8224, %v8736
      %v8997 = vmax.f32 %v8225, %v8737
      %v8998 = vmax.f32 %v8226, %v8738
      %v8999 = vmax.f32 %v8227, %v8739
      %v9000 = vmax.f32 %v8228, %v8740
      %v9001 = vmax.f32 %v8229, %v8741
      %v9002 = vmax.f32 %v8230, %v8742
      %v9003 = vmax.f32 %v8231, %v8743
      %v9004 = vmax.f32 %v8232, %v8744
      %v9005 = vmax.f32 %v8233, %v8745
      %v9006 = vmax.f32 %v8234, %v8746
      %v9007 = vmax.f32 %v8235, %v8747
      %v9008 = vmax.f32 %v8236, %v8748
      %v9009 = vmax.f32 %v8237, %v8974
      %v9010 = vmax.f32 %v8238, %v8749
      %v9011 = vmax.f32 %v8239, %v8750
      %v9012 = vmax.f32 %v8240, %v8751
      %v9013 = vmax.f32 %v8241, %v8752
      %v9014 = vmax.f32 %v8242, %v8753
      %v9015 = vmax.f32 %v8243, %v8754
      %v9016 = vmax.f32 %v8244, %v8755
      %v9017 = vmax.f32 %v8245, %v8756
      %v9018 = vmax.f32 %v8246, %v8757
      %v9019 = vmax.f32 %v8247, %v8758
      %v9020 = vmax.f32 %v8248, %v8759
      %v9021 = vmax.f32 %v8249, %v8760
      %v9022 = vmax.f32 %v8250, %v8761
      %v9023 = vmax.f32 %v8251, %v8762
      %v9024 = vmax.f32 %v8252, %v8763
      %v9025 = vmax.f32 %v8253, %v8764
      %v9026 = vmax.f32 %v8254, %v8765
      %v9027 = vmax.f32 %v8255, %v8766
      %v9028 = vmax.f32 %v8256, %v8767
      %v9029 = vmax.f32 %v8257, %v8768
      %v9030 = vmax.f32 %v8258, %v8769
      %v9031 = vmax.f32 %v8259, %v8770
      %v9032 = vmax.f32 %v8260, %v8771
      %v9033 = vmax.f32 %v8261, %v8772
      %v9034 = vmax.f32 %v8262, %v8773
      %v9035 = vmax.f32 %v8263, %v8774
      %v9036 = vmax.f32 %v8264, %v8775
      %v9037 = vmax.f32 %v8265, %v8776
      %v9038 = vmax.f32 %v8266, %v8777
      %v9039 = vmax.f32 %v8267, %v8778
      %v9040 = vmax.f32 %v8268, %v8779
      %v9041 = vmax.f32 %v8269, %v8975
      %v9042 = vmax.f32 %v8270, %v8780
      %v9043 = vmax.f32 %v8271, %v8781
      %v9044 = vmax.f32 %v8272, %v8782
      %v9045 = vmax.f32 %v8273, %v8783
      %v9046 = vmax.f32 %v8274, %v8784
      %v9047 = vmax.f32 %v8275, %v8785
      %v9048 = vmax.f32 %v8276, %v8786
      %v9049 = vmax.f32 %v8277, %v8787
      %v9050 = vmax.f32 %v8278, %v8788
      %v9051 = vmax.f32 %v8279, %v8789
      %v9052 = vmax.f32 %v8280, %v8790
      %v9053 = vmax.f32 %v8281, %v8791
      %v9054 = vmax.f32 %v8282, %v8792
      %v9055 = vmax.f32 %v8283, %v8793
      %v9056 = vmax.f32 %v8284, %v8794
      %v9057 = vmax.f32 %v8285, %v8795
      %v9058 = vmax.f32 %v8286, %v8796
      %v9059 = vmax.f32 %v8287, %v8797
      %v9060 = vmax.f32 %v8288, %v8798
      %v9061 = vmax.f32 %v8289, %v8799
      %v9062 = vmax.f32 %v8290, %v8800
      %v9063 = vmax.f32 %v8291, %v8801
      %v9064 = vmax.f32 %v8292, %v8802
      %v9065 = vmax.f32 %v8293, %v8803
      %v9066 = vmax.f32 %v8294, %v8804
      %v9067 = vmax.f32 %v8295, %v8805
      %v9068 = vmax.f32 %v8296, %v8806
      %v9069 = vmax.f32 %v8297, %v8807
      %v9070 = vmax.f32 %v8298, %v8808
      %v9071 = vmax.f32 %v8299, %v8809
      %v9072 = vmax.f32 %v8300, %v8810
      %v9073 = vmax.f32 %v8301, %v8976
      %v9074 = vmax.f32 %v8302, %v8811
      %v9075 = vmax.f32 %v8303, %v8812
      %v9076 = vmax.f32 %v8304, %v8813
      %v9077 = vmax.f32 %v8305, %v8814
      %v9078 = vmax.f32 %v8306, %v8815
      %v9079 = vmax.f32 %v8307, %v8816
      %v9080 = vmax.f32 %v8308, %v8817
      %v9081 = vmax.f32 %v8309, %v8818
      %v9082 = vmax.f32 %v8310, %v8819
      %v9083 = vmax.f32 %v8311, %v8820
      %v9084 = vmax.f32 %v8312, %v8821
      %v9085 = vmax.f32 %v8313, %v8822
      %v9086 = vmax.f32 %v8314, %v8823
      %v9087 = vmax.f32 %v8315, %v8824
      %v9088 = vmax.f32 %v8316, %v8825
      %v9089 = vmax.f32 %v8317, %v8826
      %v9090 = vmax.f32 %v8318, %v8827
      %v9091 = vmax.f32 %v8319, %v8828
      %v9092 = vmax.f32 %v8320, %v8829
      %v9093 = vmax.f32 %v8321, %v8830
      %v9094 = vmax.f32 %v8322, %v8831
      %v9095 = vmax.f32 %v8323, %v8832
      %v9096 = vmax.f32 %v8324, %v8833
      %v9097 = vmax.f32 %v8325, %v8834
      %v9098 = vmax.f32 %v8326, %v8835
      %v9099 = vmax.f32 %v8327, %v8836
      %v9100 = vmax.f32 %v8328, %v8837
      %v9101 = vmax.f32 %v8329, %v8838
      %v9102 = vmax.f32 %v8330, %v8839
      %v9103 = vmax.f32 %v8331, %v8840
      %v9104 = vmax.f32 %v8332, %v8841
      %v9105 = vmax.f32 %v8333, %v8977
      %v9106 = vmax.f32 %v8978, %v8979
      %v9107 = vmax.f32 %v8979, %v8980
      %v9108 = vmax.f32 %v8980, %v8981
      %v9109 = vmax.f32 %v8981, %v8982
      %v9110 = vmax.f32 %v8982, %v8983
      %v9111 = vmax.f32 %v8983, %v8984
      %v9112 = vmax.f32 %v8984, %v8985
      %v9113 = vmax.f32 %v8985, %v8986
      %v9114 = vmax.f32 %v8986, %v8987
      %v9115 = vmax.f32 %v8987, %v8988
      %v9116 = vmax.f32 %v8988, %v8989
      %v9117 = vmax.f32 %v8989, %v8990
      %v9118 = vmax.f32 %v8990, %v8991
      %v9119 = vmax.f32 %v8991, %v8992
      %v9120 = vmax.f32 %v8992, %v8993
      %v9121 = vmax.f32 %v8993, %v8994
      %v9122 = vmax.f32 %v8994, %v8995
      %v9123 = vmax.f32 %v8995, %v8996
      %v9124 = vmax.f32 %v8996, %v8997
      %v9125 = vmax.f32 %v8997, %v8998
      %v9126 = vmax.f32 %v8998, %v8999
      %v9127 = vmax.f32 %v8999, %v9000
      %v9128 = vmax.f32 %v9000, %v9001
      %v9129 = vmax.f32 %v9001, %v9002
      %v9130 = vmax.f32 %v9002, %v9003
      %v9131 = vmax.f32 %v9003, %v9004
      %v9132 = vmax.f32 %v9004, %v9005
      %v9133 = vmax.f32 %v9005, %v9006
      %v9134 = vmax.f32 %v9006, %v9007
      %v9135 = vmax.f32 %v9007, %v9008
      %v9136 = vmax.f32 %v9008, %v9009
      %v9137 = vmax.f32 %v9009, %v8978
      %v9138 = vmax.f32 %v9010, %v9011
      %v9139 = vmax.f32 %v9011, %v9012
      %v9140 = vmax.f32 %v9012, %v9013
      %v9141 = vmax.f32 %v9013, %v9014
      %v9142 = vmax.f32 %v9014, %v9015
      %v9143 = vmax.f32 %v9015, %v9016
      %v9144 = vmax.f32 %v9016, %v9017
      %v9145 = vmax.f32 %v9017, %v9018
      %v9146 = vmax.f32 %v9018, %v9019
      %v9147 = vmax.f32 %v9019, %v9020
      %v9148 = vmax.f32 %v9020, %v9021
      %v9149 = vmax.f32 %v9021, %v9022
      %v9150 = vmax.f32 %v9022, %v9023
      %v9151 = vmax.f32 %v9023, %v9024
      %v9152 = vmax.f32 %v9024, %v9025
      %v9153 = vmax.f32 %v9025, %v9026
      %v9154 = vmax.f32 %v9026, %v9027
      %v9155 = vmax.f32 %v9027, %v9028
      %v9156 = vmax.f32 %v9028, %v9029
      %v9157 = vmax.f32 %v9029, %v9030
      %v9158 = vmax.f32 %v9030, %v9031
      %v9159 = vmax.f32 %v9031, %v9032
      %v9160 = vmax.f32 %v9032, %v9033
      %v9161 = vmax.f32 %v9033, %v9034
      %v9162 = vmax.f32 %v9034, %v9035
      %v9163 = vmax.f32 %v9035, %v9036
      %v9164 = vmax.f32 %v9036, %v9037
      %v9165 = vmax.f32 %v9037, %v9038
      %v9166 = vmax.f32 %v9038, %v9039
      %v9167 = vmax.f32 %v9039, %v9040
      %v9168 = vmax.f32 %v9040, %v9041
      %v9169 = vmax.f32 %v9041, %v9010
      %v9170 = vmax.f32 %v9042, %v9043
      %v9171 = vmax.f32 %v9043, %v9044
      %v9172 = vmax.f32 %v9044, %v9045
      %v9173 = vmax.f32 %v9045, %v9046
      %v9174 = vmax.f32 %v9046, %v9047
      %v9175 = vmax.f32 %v9047, %v9048
      %v9176 = vmax.f32 %v9048, %v9049
      %v9177 = vmax.f32 %v9049, %v9050
      %v9178 = vmax.f32 %v9050, %v9051
      %v9179 = vmax.f32 %v9051, %v9052
      %v9180 = vmax.f32 %v9052, %v9053
      %v9181 = vmax.f32 %v9053, %v9054
      %v9182 = vmax.f32 %v9054, %v9055
      %v9183 = vmax.f32 %v9055, %v9056
      %v9184 = vmax.f32 %v9056, %v9057
      %v9185 = vmax.f32 %v9057, %v9058
      %v9186 = vmax.f32 %v9058, %v9059
      %v9187 = vmax.f32 %v9059, %v9060
      %v9188 = vmax.f32 %v9060, %v9061
      %v9189 = vmax.f32 %v9061, %v9062
      %v9190 = vmax.f32 %v9062, %v9063
      %v9191 = vmax.f32 %v9063, %v9064
      %v9192 = vmax.f32 %v9064, %v9065
      %v9193 = vmax.f32 %v9065, %v9066
      %v9194 = vmax.f32 %v9066, %v9067
      %v9195 = vmax.f32 %v9067, %v9068
      %v9196 = vmax.f32 %v9068, %v9069
      %v9197 = vmax.f32 %v9069, %v9070
      %v9198 = vmax.f32 %v9070, %v9071
      %v9199 = vmax.f32 %v9071, %v9072
      %v9200 = vmax.f32 %v9072, %v9073
      %v9201 = vmax.f32 %v9073, %v9042
      %v9202 = vmax.f32 %v9074, %v9075
      %v9203 = vmax.f32 %v9075, %v9076
      %v9204 = vmax.f32 %v9076, %v9077
      %v9205 = vmax.f32 %v9077, %v9078
      %v9206 = vmax.f32 %v9078, %v9079
      %v9207 = vmax.f32 %v9079, %v9080
      %v9208 = vmax.f32 %v9080, %v9081
      %v9209 = vmax.f32 %v9081, %v9082
      %v9210 = vmax.f32 %v9082, %v9083
      %v9211 = vmax.f32 %v9083, %v9084
      %v9212 = vmax.f32 %v9084, %v9085
      %v9213 = vmax.f32 %v9085, %v9086
      %v9214 = vmax.f32 %v9086, %v9087
      %v9215 = vmax.f32 %v9087, %v9088
      %v9216 = vmax.f32 %v9088, %v9089
      %v9217 = vmax.f32 %v9089, %v9090
      %v9218 = vmax.f32 %v9090, %v9091
      %v9219 = vmax.f32 %v9091, %v9092
      %v9220 = vmax.f32 %v9092, %v9093
      %v9221 = vmax.f32 %v9093, %v9094
      %v9222 = vmax.f32 %v9094, %v9095
      %v9223 = vmax.f32 %v9095, %v9096
      %v9224 = vmax.f32 %v9096, %v9097
      %v9225 = vmax.f32 %v9097, %v9098
      %v9226 = vmax.f32 %v9098, %v9099
      %v9227 = vmax.f32 %v9099, %v9100
      %v9228 = vmax.f32 %v9100, %v9101
      %v9229 = vmax.f32 %v9101, %v9102
      %v9230 = vmax.f32 %v9102, %v9103
      %v9231 = vmax.f32 %v9103, %v9104
      %v9232 = vmax.f32 %v9104, %v9105
      %v9233 = vmax.f32 %v9105, %v9074
      %v9234 = vld [vmem:[%s5] sm:$0xff]
      %v9235 = vld [vmem:[%s5 + $0x8] sm:$0xff]
      %v9236 = vld [vmem:[%s5 + $0x10] sm:$0xff]
      %v9237 = vld [vmem:[%s5 + $0x18] sm:$0xff]
      %v9238 = vld [vmem:[%s5 + $0x20] sm:$0xff]
      %v9239 = vld [vmem:[%s5 + $0x28] sm:$0xff]
      %v9240 = vld [vmem:[%s5 + $0x30] sm:$0xff]
      %v9241 = vld [vmem:[%s5 + $0x38] sm:$0xff]
      %v9242 = vld [vmem:[%s5 + $0x40] sm:$0xff]
      %v9243 = vld [vmem:[%s5 + $0x48] sm:$0xff]
      %v9244 = vld [vmem:[%s5 + $0x50] sm:$0xff]
      %v9245 = vld [vmem:[%s5 + $0x58] sm:$0xff]
      %v9246 = vld [vmem:[%s5 + $0x60] sm:$0xff]
      %v9247 = vld [vmem:[%s5 + $0x68] sm:$0xff]
      %v9248 = vld [vmem:[%s5 + $0x70] sm:$0xff]
      %v9249 = vld [vmem:[%s5 + $0x78] sm:$0xff]
      %v9250 = vld [vmem:[%s5 + $0x80] sm:$0xff]
      %v9251 = vld [vmem:[%s5 + $0x88] sm:$0xff]
      %v9252 = vld [vmem:[%s5 + $0x90] sm:$0xff]
      %v9253 = vld [vmem:[%s5 + $0x98] sm:$0xff]
      %v9254 = vld [vmem:[%s5 + $0xa0] sm:$0xff]
      %v9255 = vld [vmem:[%s5 + $0xa8] sm:$0xff]
      %v9256 = vld [vmem:[%s5 + $0xb0] sm:$0xff]
      %v9257 = vld [vmem:[%s5 + $0xb8] sm:$0xff]
      %v9258 = vld [vmem:[%s5 + $0xc0] sm:$0xff]
      %v9259 = vld [vmem:[%s5 + $0xc8] sm:$0xff]
      %v9260 = vld [vmem:[%s5 + $0xd0] sm:$0xff]
      %v9261 = vld [vmem:[%s5 + $0xd8] sm:$0xff]
      %v9262 = vld [vmem:[%s5 + $0xe0] sm:$0xff]
      %v9263 = vld [vmem:[%s5 + $0xe8] sm:$0xff]
      %v9264 = vld [vmem:[%s5 + $0xf0] sm:$0xff]
      %v9265 = vld [vmem:[%s5 + $0xf8] sm:$0xff]
      %v9266 = vld [vmem:[%s5 + $0x100] sm:$0xff]
      %v9267 = vld [vmem:[%s5 + $0x108] sm:$0xff]
      %v9268 = vld [vmem:[%s5 + $0x110] sm:$0xff]
      %v9269 = vld [vmem:[%s5 + $0x118] sm:$0xff]
      %v9270 = vld [vmem:[%s5 + $0x120] sm:$0xff]
      %v9271 = vld [vmem:[%s5 + $0x128] sm:$0xff]
      %v9272 = vld [vmem:[%s5 + $0x130] sm:$0xff]
      %v9273 = vld [vmem:[%s5 + $0x138] sm:$0xff]
      %v9274 = vld [vmem:[%s5 + $0x140] sm:$0xff]
      %v9275 = vld [vmem:[%s5 + $0x148] sm:$0xff]
      %v9276 = vld [vmem:[%s5 + $0x150] sm:$0xff]
      %v9277 = vld [vmem:[%s5 + $0x158] sm:$0xff]
      %v9278 = vld [vmem:[%s5 + $0x160] sm:$0xff]
      %v9279 = vld [vmem:[%s5 + $0x168] sm:$0xff]
      %v9280 = vld [vmem:[%s5 + $0x170] sm:$0xff]
      %v9281 = vld [vmem:[%s5 + $0x178] sm:$0xff]
      %v9282 = vld [vmem:[%s5 + $0x180] sm:$0xff]
      %v9283 = vld [vmem:[%s5 + $0x188] sm:$0xff]
      %v9284 = vld [vmem:[%s5 + $0x190] sm:$0xff]
      %v9285 = vld [vmem:[%s5 + $0x198] sm:$0xff]
      %v9286 = vld [vmem:[%s5 + $0x1a0] sm:$0xff]
      %v9287 = vld [vmem:[%s5 + $0x1a8] sm:$0xff]
      %v9288 = vld [vmem:[%s5 + $0x1b0] sm:$0xff]
      %v9289 = vld [vmem:[%s5 + $0x1b8] sm:$0xff]
      %v9290 = vld [vmem:[%s5 + $0x1c0] sm:$0xff]
      %v9291 = vld [vmem:[%s5 + $0x1c8] sm:$0xff]
      %v9292 = vld [vmem:[%s5 + $0x1d0] sm:$0xff]
      %v9293 = vld [vmem:[%s5 + $0x1d8] sm:$0xff]
      %v9294 = vld [vmem:[%s5 + $0x1e0] sm:$0xff]
      %v9295 = vld [vmem:[%s5 + $0x1e8] sm:$0xff]
      %v9296 = vld [vmem:[%s5 + $0x1f0] sm:$0xff]
      %v9297 = vld [vmem:[%s5 + $0x1f8] sm:$0xff]
      %v9298 = vld [vmem:[%s5 + $0x200] sm:$0xff]
      %v9299 = vld [vmem:[%s5 + $0x208] sm:$0xff]
      %v9300 = vld [vmem:[%s5 + $0x210] sm:$0xff]
      %v9301 = vld [vmem:[%s5 + $0x218] sm:$0xff]
      %v9302 = vld [vmem:[%s5 + $0x220] sm:$0xff]
      %v9303 = vld [vmem:[%s5 + $0x228] sm:$0xff]
      %v9304 = vld [vmem:[%s5 + $0x230] sm:$0xff]
      %v9305 = vld [vmem:[%s5 + $0x238] sm:$0xff]
      %v9306 = vld [vmem:[%s5 + $0x240] sm:$0xff]
      %v9307 = vld [vmem:[%s5 + $0x248] sm:$0xff]
      %v9308 = vld [vmem:[%s5 + $0x250] sm:$0xff]
      %v9309 = vld [vmem:[%s5 + $0x258] sm:$0xff]
      %v9310 = vld [vmem:[%s5 + $0x260] sm:$0xff]
      %v9311 = vld [vmem:[%s5 + $0x268] sm:$0xff]
      %v9312 = vld [vmem:[%s5 + $0x270] sm:$0xff]
      %v9313 = vld [vmem:[%s5 + $0x278] sm:$0xff]
      %v9314 = vld [vmem:[%s5 + $0x280] sm:$0xff]
      %v9315 = vld [vmem:[%s5 + $0x288] sm:$0xff]
      %v9316 = vld [vmem:[%s5 + $0x290] sm:$0xff]
      %v9317 = vld [vmem:[%s5 + $0x298] sm:$0xff]
      %v9318 = vld [vmem:[%s5 + $0x2a0] sm:$0xff]
      %v9319 = vld [vmem:[%s5 + $0x2a8] sm:$0xff]
      %v9320 = vld [vmem:[%s5 + $0x2b0] sm:$0xff]
      %v9321 = vld [vmem:[%s5 + $0x2b8] sm:$0xff]
      %v9322 = vld [vmem:[%s5 + $0x2c0] sm:$0xff]
      %v9323 = vld [vmem:[%s5 + $0x2c8] sm:$0xff]
      %v9324 = vld [vmem:[%s5 + $0x2d0] sm:$0xff]
      %v9325 = vld [vmem:[%s5 + $0x2d8] sm:$0xff]
      %v9326 = vld [vmem:[%s5 + $0x2e0] sm:$0xff]
      %v9327 = vld [vmem:[%s5 + $0x2e8] sm:$0xff]
      %v9328 = vld [vmem:[%s5 + $0x2f0] sm:$0xff]
      %v9329 = vld [vmem:[%s5 + $0x2f8] sm:$0xff]
      %v9330 = vld [vmem:[%s5 + $0x300] sm:$0xff]
      %v9331 = vld [vmem:[%s5 + $0x308] sm:$0xff]
      %v9332 = vld [vmem:[%s5 + $0x310] sm:$0xff]
      %v9333 = vld [vmem:[%s5 + $0x318] sm:$0xff]
      %v9334 = vld [vmem:[%s5 + $0x320] sm:$0xff]
      %v9335 = vld [vmem:[%s5 + $0x328] sm:$0xff]
      %v9336 = vld [vmem:[%s5 + $0x330] sm:$0xff]
      %v9337 = vld [vmem:[%s5 + $0x338] sm:$0xff]
      %v9338 = vld [vmem:[%s5 + $0x340] sm:$0xff]
      %v9339 = vld [vmem:[%s5 + $0x348] sm:$0xff]
      %v9340 = vld [vmem:[%s5 + $0x350] sm:$0xff]
      %v9341 = vld [vmem:[%s5 + $0x358] sm:$0xff]
      %v9342 = vld [vmem:[%s5 + $0x360] sm:$0xff]
      %v9343 = vld [vmem:[%s5 + $0x368] sm:$0xff]
      %v9344 = vld [vmem:[%s5 + $0x370] sm:$0xff]
      %v9345 = vld [vmem:[%s5 + $0x378] sm:$0xff]
      %v9346 = vld [vmem:[%s5 + $0x380] sm:$0xff]
      %v9347 = vld [vmem:[%s5 + $0x388] sm:$0xff]
      %v9348 = vld [vmem:[%s5 + $0x390] sm:$0xff]
      %v9349 = vld [vmem:[%s5 + $0x398] sm:$0xff]
      %v9350 = vld [vmem:[%s5 + $0x3a0] sm:$0xff]
      %v9351 = vld [vmem:[%s5 + $0x3a8] sm:$0xff]
      %v9352 = vld [vmem:[%s5 + $0x3b0] sm:$0xff]
      %v9353 = vld [vmem:[%s5 + $0x3b8] sm:$0xff]
      %v9354 = vld [vmem:[%s5 + $0x3c0] sm:$0xff]
      %v9355 = vld [vmem:[%s5 + $0x3c8] sm:$0xff]
      %v9356 = vld [vmem:[%s5 + $0x3d0] sm:$0xff]
      %v9357 = vld [vmem:[%s5 + $0x3d8] sm:$0xff]
      %v9358 = vld [vmem:[%s5 + $0x3e0] sm:$0xff]
      %v9359 = vld [vmem:[%s5 + $0x3e8] sm:$0xff]
      %v9360 = vld [vmem:[%s5 + $0x3f0] sm:$0xff]
      %v9361 = vld [vmem:[%s5 + $0x3f8] sm:$0xff]
      %v9362 = vmul.f32 %v9234, %v9106
      %v9363 = vmul.f32 %v9235, %v9107
      %v9364 = vmul.f32 %v9236, %v9108
      %v9365 = vmul.f32 %v9237, %v9109
      %v9366 = vmul.f32 %v9238, %v9110
      %v9367 = vmul.f32 %v9239, %v9111
      %v9368 = vmul.f32 %v9240, %v9112
      %v9369 = vmul.f32 %v9241, %v9113
      %v9370 = vmul.f32 %v9242, %v9114
      %v9371 = vmul.f32 %v9243, %v9115
      %v9372 = vmul.f32 %v9244, %v9116
      %v9373 = vmul.f32 %v9245, %v9117
      %v9374 = vmul.f32 %v9246, %v9118
      %v9375 = vmul.f32 %v9247, %v9119
      %v9376 = vmul.f32 %v9248, %v9120
      %v9377 = vmul.f32 %v9249, %v9121
      %v9378 = vmul.f32 %v9250, %v9122
      %v9379 = vmul.f32 %v9251, %v9123
      %v9380 = vmul.f32 %v9252, %v9124
      %v9381 = vmul.f32 %v9253, %v9125
      %v9382 = vmul.f32 %v9254, %v9126
      %v9383 = vmul.f32 %v9255, %v9127
      %v9384 = vmul.f32 %v9256, %v9128
      %v9385 = vmul.f32 %v9257, %v9129
      %v9386 = vmul.f32 %v9258, %v9130
      %v9387 = vmul.f32 %v9259, %v9131
      %v9388 = vmul.f32 %v9260, %v9132
      %v9389 = vmul.f32 %v9261, %v9133
      %v9390 = vmul.f32 %v9262, %v9134
      %v9391 = vmul.f32 %v9263, %v9135
      %v9392 = vmul.f32 %v9264, %v9136
      %v9393 = vmul.f32 %v9265, %v9137
      %v9394 = vmul.f32 %v9266, %v9138
      %v9395 = vmul.f32 %v9267, %v9139
      %v9396 = vmul.f32 %v9268, %v9140
      %v9397 = vmul.f32 %v9269, %v9141
      %v9398 = vmul.f32 %v9270, %v9142
      %v9399 = vmul.f32 %v9271, %v9143
      %v9400 = vmul.f32 %v9272, %v9144
      %v9401 = vmul.f32 %v9273, %v9145
      %v9402 = vmul.f32 %v9274, %v9146
      %v9403 = vmul.f32 %v9275, %v9147
      %v9404 = vmul.f32 %v9276, %v9148
      %v9405 = vmul.f32 %v9277, %v9149
      %v9406 = vmul.f32 %v9278, %v9150
      %v9407 = vmul.f32 %v9279, %v9151
      %v9408 = vmul.f32 %v9280, %v9152
      %v9409 = vmul.f32 %v9281, %v9153
      %v9410 = vmul.f32 %v9282, %v9154
      %v9411 = vmul.f32 %v9283, %v9155
      %v9412 = vmul.f32 %v9284, %v9156
      %v9413 = vmul.f32 %v9285, %v9157
      %v9414 = vmul.f32 %v9286, %v9158
      %v9415 = vmul.f32 %v9287, %v9159
      %v9416 = vmul.f32 %v9288, %v9160
      %v9417 = vmul.f32 %v9289, %v9161
      %v9418 = vmul.f32 %v9290, %v9162
      %v9419 = vmul.f32 %v9291, %v9163
      %v9420 = vmul.f32 %v9292, %v9164
      %v9421 = vmul.f32 %v9293, %v9165
      %v9422 = vmul.f32 %v9294, %v9166
      %v9423 = vmul.f32 %v9295, %v9167
      %v9424 = vmul.f32 %v9296, %v9168
      %v9425 = vmul.f32 %v9297, %v9169
      %v9426 = vmul.f32 %v9298, %v9170
      %v9427 = vmul.f32 %v9299, %v9171
      %v9428 = vmul.f32 %v9300, %v9172
      %v9429 = vmul.f32 %v9301, %v9173
      %v9430 = vmul.f32 %v9302, %v9174
      %v9431 = vmul.f32 %v9303, %v9175
      %v9432 = vmul.f32 %v9304, %v9176
      %v9433 = vmul.f32 %v9305, %v9177
      %v9434 = vmul.f32 %v9306, %v9178
      %v9435 = vmul.f32 %v9307, %v9179
      %v9436 = vmul.f32 %v9308, %v9180
      %v9437 = vmul.f32 %v9309, %v9181
      %v9438 = vmul.f32 %v9310, %v9182
      %v9439 = vmul.f32 %v9311, %v9183
      %v9440 = vmul.f32 %v9312, %v9184
      %v9441 = vmul.f32 %v9313, %v9185
      %v9442 = vmul.f32 %v9314, %v9186
      %v9443 = vmul.f32 %v9315, %v9187
      %v9444 = vmul.f32 %v9316, %v9188
      %v9445 = vmul.f32 %v9317, %v9189
      %v9446 = vmul.f32 %v9318, %v9190
      %v9447 = vmul.f32 %v9319, %v9191
      %v9448 = vmul.f32 %v9320, %v9192
      %v9449 = vmul.f32 %v9321, %v9193
      %v9450 = vmul.f32 %v9322, %v9194
      %v9451 = vmul.f32 %v9323, %v9195
      %v9452 = vmul.f32 %v9324, %v9196
      %v9453 = vmul.f32 %v9325, %v9197
      %v9454 = vmul.f32 %v9326, %v9198
      %v9455 = vmul.f32 %v9327, %v9199
      %v9456 = vmul.f32 %v9328, %v9200
      %v9457 = vmul.f32 %v9329, %v9201
      %v9458 = vmul.f32 %v9330, %v9202
      %v9459 = vmul.f32 %v9331, %v9203
      %v9460 = vmul.f32 %v9332, %v9204
      %v9461 = vmul.f32 %v9333, %v9205
      %v9462 = vmul.f32 %v9334, %v9206
      %v9463 = vmul.f32 %v9335, %v9207
      %v9464 = vmul.f32 %v9336, %v9208
      %v9465 = vmul.f32 %v9337, %v9209
      %v9466 = vmul.f32 %v9338, %v9210
      %v9467 = vmul.f32 %v9339, %v9211
      %v9468 = vmul.f32 %v9340, %v9212
      %v9469 = vmul.f32 %v9341, %v9213
      %v9470 = vmul.f32 %v9342, %v9214
      %v9471 = vmul.f32 %v9343, %v9215
      %v9472 = vmul.f32 %v9344, %v9216
      %v9473 = vmul.f32 %v9345, %v9217
      %v9474 = vmul.f32 %v9346, %v9218
      %v9475 = vmul.f32 %v9347, %v9219
      %v9476 = vmul.f32 %v9348, %v9220
      %v9477 = vmul.f32 %v9349, %v9221
      %v9478 = vmul.f32 %v9350, %v9222
      %v9479 = vmul.f32 %v9351, %v9223
      %v9480 = vmul.f32 %v9352, %v9224
      %v9481 = vmul.f32 %v9353, %v9225
      %v9482 = vmul.f32 %v9354, %v9226
      %v9483 = vmul.f32 %v9355, %v9227
      %v9484 = vmul.f32 %v9356, %v9228
      %v9485 = vmul.f32 %v9357, %v9229
      %v9486 = vmul.f32 %v9358, %v9230
      %v9487 = vmul.f32 %v9359, %v9231
      %v9488 = vmul.f32 %v9360, %v9232
      %v9489 = vmul.f32 %v9361, %v9233
      %v9490 = vadd.f32 %v9362, %v9363
      %v9491 = vadd.f32 %v9490, %v9364
      %v9492 = vadd.f32 %v9491, %v9365
      %v9493 = vadd.f32 %v9492, %v9366
      %v9494 = vadd.f32 %v9493, %v9367
      %v9495 = vadd.f32 %v9494, %v9368
      %v9496 = vadd.f32 %v9495, %v9369
      %v9497 = vadd.f32 %v9496, %v9370
      %v9498 = vadd.f32 %v9497, %v9371
      %v9499 = vadd.f32 %v9498, %v9372
      %v9500 = vadd.f32 %v9499, %v9373
      %v9501 = vadd.f32 %v9500, %v9374
      %v9502 = vadd.f32 %v9501, %v9375
      %v9503 = vadd.f32 %v9502, %v9376
      %v9504 = vadd.f32 %v9503, %v9377
      %v9505 = vadd.f32 %v9504, %v9378
      %v9506 = vadd.f32 %v9505, %v9379
      %v9507 = vadd.f32 %v9506, %v9380
      %v9508 = vadd.f32 %v9507, %v9381
      %v9509 = vadd.f32 %v9508, %v9382
      %v9510 = vadd.f32 %v9509, %v9383
      %v9511 = vadd.f32 %v9510, %v9384
      %v9512 = vadd.f32 %v9511, %v9385
      %v9513 = vadd.f32 %v9512, %v9386
      %v9514 = vadd.f32 %v9513, %v9387
      %v9515 = vadd.f32 %v9514, %v9388
      %v9516 = vadd.f32 %v9515, %v9389
      %v9517 = vadd.f32 %v9516, %v9390
      %v9518 = vadd.f32 %v9517, %v9391
      %v9519 = vadd.f32 %v9518, %v9392
      %v9520 = vadd.f32 %v9519, %v9393
      %9521 = vadd.xlane.f32.xlu0 %v9520
      %v9522 = vpop.xlane.xlu0 %9521
      %v9523 = vadd.f32 %v9394, %v9395
      %v9524 = vadd.f32 %v9523, %v9396
      %v9525 = vadd.f32 %v9524, %v9397
      %v9526 = vadd.f32 %v9525, %v9398
      %v9527 = vadd.f32 %v9526, %v9399
      %v9528 = vadd.f32 %v9527, %v9400
      %v9529 = vadd.f32 %v9528, %v9401
      %v9530 = vadd.f32 %v9529, %v9402
      %v9531 = vadd.f32 %v9530, %v9403
      %v9532 = vadd.f32 %v9531, %v9404
      %v9533 = vadd.f32 %v9532, %v9405
      %v9534 = vadd.f32 %v9533, %v9406
      %v9535 = vadd.f32 %v9534, %v9407
      %v9536 = vadd.f32 %v9535, %v9408
      %v9537 = vadd.f32 %v9536, %v9409
      %v9538 = vadd.f32 %v9537, %v9410
      %v9539 = vadd.f32 %v9538, %v9411
      %v9540 = vadd.f32 %v9539, %v9412
      %v9541 = vadd.f32 %v9540, %v9413
      %v9542 = vadd.f32 %v9541, %v9414
      %v9543 = vadd.f32 %v9542, %v9415
      %v9544 = vadd.f32 %v9543, %v9416
      %v9545 = vadd.f32 %v9544, %v9417
      %v9546 = vadd.f32 %v9545, %v9418
      %v9547 = vadd.f32 %v9546, %v9419
      %v9548 = vadd.f32 %v9547, %v9420
      %v9549 = vadd.f32 %v9548, %v9421
      %v9550 = vadd.f32 %v9549, %v9422
      %v9551 = vadd.f32 %v9550, %v9423
      %v9552 = vadd.f32 %v9551, %v9424
      %v9553 = vadd.f32 %v9552, %v9425
      %9554 = vadd.xlane.f32.xlu0 %v9553
      %v9555 = vpop.xlane.xlu0 %9554
      %v9556 = vadd.f32 %v9426, %v9427
      %v9557 = vadd.f32 %v9556, %v9428
      %v9558 = vadd.f32 %v9557, %v9429
      %v9559 = vadd.f32 %v9558, %v9430
      %v9560 = vadd.f32 %v9559, %v9431
      %v9561 = vadd.f32 %v9560, %v9432
      %v9562 = vadd.f32 %v9561, %v9433
      %v9563 = vadd.f32 %v9562, %v9434
      %v9564 = vadd.f32 %v9563, %v9435
      %v9565 = vadd.f32 %v9564, %v9436
      %v9566 = vadd.f32 %v9565, %v9437
      %v9567 = vadd.f32 %v9566, %v9438
      %v9568 = vadd.f32 %v9567, %v9439
      %v9569 = vadd.f32 %v9568, %v9440
      %v9570 = vadd.f32 %v9569, %v9441
      %v9571 = vadd.f32 %v9570, %v9442
      %v9572 = vadd.f32 %v9571, %v9443
      %v9573 = vadd.f32 %v9572, %v9444
      %v9574 = vadd.f32 %v9573, %v9445
      %v9575 = vadd.f32 %v9574, %v9446
      %v9576 = vadd.f32 %v9575, %v9447
      %v9577 = vadd.f32 %v9576, %v9448
      %v9578 = vadd.f32 %v9577, %v9449
      %v9579 = vadd.f32 %v9578, %v9450
      %v9580 = vadd.f32 %v9579, %v9451
      %v9581 = vadd.f32 %v9580, %v9452
      %v9582 = vadd.f32 %v9581, %v9453
      %v9583 = vadd.f32 %v9582, %v9454
      %v9584 = vadd.f32 %v9583, %v9455
      %v9585 = vadd.f32 %v9584, %v9456
      %v9586 = vadd.f32 %v9585, %v9457
      %9587 = vadd.xlane.f32.xlu0 %v9586
      %v9588 = vpop.xlane.xlu0 %9587
      %v9589 = vadd.f32 %v9458, %v9459
      %v9590 = vadd.f32 %v9589, %v9460
      %v9591 = vadd.f32 %v9590, %v9461
      %v9592 = vadd.f32 %v9591, %v9462
      %v9593 = vadd.f32 %v9592, %v9463
      %v9594 = vadd.f32 %v9593, %v9464
      %v9595 = vadd.f32 %v9594, %v9465
      %v9596 = vadd.f32 %v9595, %v9466
      %v9597 = vadd.f32 %v9596, %v9467
      %v9598 = vadd.f32 %v9597, %v9468
      %v9599 = vadd.f32 %v9598, %v9469
      %v9600 = vadd.f32 %v9599, %v9470
      %v9601 = vadd.f32 %v9600, %v9471
      %v9602 = vadd.f32 %v9601, %v9472
      %v9603 = vadd.f32 %v9602, %v9473
      %v9604 = vadd.f32 %v9603, %v9474
      %v9605 = vadd.f32 %v9604, %v9475
      %v9606 = vadd.f32 %v9605, %v9476
      %v9607 = vadd.f32 %v9606, %v9477
      %v9608 = vadd.f32 %v9607, %v9478
      %v9609 = vadd.f32 %v9608, %v9479
      %v9610 = vadd.f32 %v9609, %v9480
      %v9611 = vadd.f32 %v9610, %v9481
      %v9612 = vadd.f32 %v9611, %v9482
      %v9613 = vadd.f32 %v9612, %v9483
      %v9614 = vadd.f32 %v9613, %v9484
      %v9615 = vadd.f32 %v9614, %v9485
      %v9616 = vadd.f32 %v9615, %v9486
      %v9617 = vadd.f32 %v9616, %v9487
      %v9618 = vadd.f32 %v9617, %v9488
      %v9619 = vadd.f32 %v9618, %v9489
      %9620 = vadd.xlane.f32.xlu0 %v9619
      %v9621 = vpop.xlane.xlu0 %9620
      %v9622 = vadd.f32 %v9522, %v9555
      %v9623 = vadd.f32 %v9622, %v9588
      %v9624 = vadd.f32 %v9623, %v9621
      %v9625 = vrot.slane %v9624, 4
      %v9626 = vadd.f32 %v9624, %v9625
      %v9627 = vrot.slane %v9626, 2
      %v9628 = vadd.f32 %v9626, %v9627
      %v9629 = vrot.slane %v9628, 1
      %v9630 = vadd.f32 %v9628, %v9629
      %s9631 = scalar_lea.vmem %s5, 1024
      %v9632 = vld [vmem:[%s9631] sm:$0xff]
      %v9633 = vld [vmem:[%s9631 + $0x8] sm:$0xff]
      %v9634 = vld [vmem:[%s9631 + $0x10] sm:$0xff]
      %v9635 = vld [vmem:[%s9631 + $0x18] sm:$0xff]
      %v9636 = vld [vmem:[%s9631 + $0x20] sm:$0xff]
      %v9637 = vld [vmem:[%s9631 + $0x28] sm:$0xff]
      %v9638 = vld [vmem:[%s9631 + $0x30] sm:$0xff]
      %v9639 = vld [vmem:[%s9631 + $0x38] sm:$0xff]
      %v9640 = vld [vmem:[%s9631 + $0x40] sm:$0xff]
      %v9641 = vld [vmem:[%s9631 + $0x48] sm:$0xff]
      %v9642 = vld [vmem:[%s9631 + $0x50] sm:$0xff]
      %v9643 = vld [vmem:[%s9631 + $0x58] sm:$0xff]
      %v9644 = vld [vmem:[%s9631 + $0x60] sm:$0xff]
      %v9645 = vld [vmem:[%s9631 + $0x68] sm:$0xff]
      %v9646 = vld [vmem:[%s9631 + $0x70] sm:$0xff]
      %v9647 = vld [vmem:[%s9631 + $0x78] sm:$0xff]
      %v9648 = vld [vmem:[%s9631 + $0x80] sm:$0xff]
      %v9649 = vld [vmem:[%s9631 + $0x88] sm:$0xff]
      %v9650 = vld [vmem:[%s9631 + $0x90] sm:$0xff]
      %v9651 = vld [vmem:[%s9631 + $0x98] sm:$0xff]
      %v9652 = vld [vmem:[%s9631 + $0xa0] sm:$0xff]
      %v9653 = vld [vmem:[%s9631 + $0xa8] sm:$0xff]
      %v9654 = vld [vmem:[%s9631 + $0xb0] sm:$0xff]
      %v9655 = vld [vmem:[%s9631 + $0xb8] sm:$0xff]
      %v9656 = vld [vmem:[%s9631 + $0xc0] sm:$0xff]
      %v9657 = vld [vmem:[%s9631 + $0xc8] sm:$0xff]
      %v9658 = vld [vmem:[%s9631 + $0xd0] sm:$0xff]
      %v9659 = vld [vmem:[%s9631 + $0xd8] sm:$0xff]
      %v9660 = vld [vmem:[%s9631 + $0xe0] sm:$0xff]
      %v9661 = vld [vmem:[%s9631 + $0xe8] sm:$0xff]
      %v9662 = vld [vmem:[%s9631 + $0xf0] sm:$0xff]
      %v9663 = vld [vmem:[%s9631 + $0xf8] sm:$0xff]
      %v9664 = vld [vmem:[%s9631 + $0x100] sm:$0xff]
      %v9665 = vld [vmem:[%s9631 + $0x108] sm:$0xff]
      %v9666 = vld [vmem:[%s9631 + $0x110] sm:$0xff]
      %v9667 = vld [vmem:[%s9631 + $0x118] sm:$0xff]
      %v9668 = vld [vmem:[%s9631 + $0x120] sm:$0xff]
      %v9669 = vld [vmem:[%s9631 + $0x128] sm:$0xff]
      %v9670 = vld [vmem:[%s9631 + $0x130] sm:$0xff]
      %v9671 = vld [vmem:[%s9631 + $0x138] sm:$0xff]
      %v9672 = vld [vmem:[%s9631 + $0x140] sm:$0xff]
      %v9673 = vld [vmem:[%s9631 + $0x148] sm:$0xff]
      %v9674 = vld [vmem:[%s9631 + $0x150] sm:$0xff]
      %v9675 = vld [vmem:[%s9631 + $0x158] sm:$0xff]
      %v9676 = vld [vmem:[%s9631 + $0x160] sm:$0xff]
      %v9677 = vld [vmem:[%s9631 + $0x168] sm:$0xff]
      %v9678 = vld [vmem:[%s9631 + $0x170] sm:$0xff]
      %v9679 = vld [vmem:[%s9631 + $0x178] sm:$0xff]
      %v9680 = vld [vmem:[%s9631 + $0x180] sm:$0xff]
      %v9681 = vld [vmem:[%s9631 + $0x188] sm:$0xff]
      %v9682 = vld [vmem:[%s9631 + $0x190] sm:$0xff]
      %v9683 = vld [vmem:[%s9631 + $0x198] sm:$0xff]
      %v9684 = vld [vmem:[%s9631 + $0x1a0] sm:$0xff]
      %v9685 = vld [vmem:[%s9631 + $0x1a8] sm:$0xff]
      %v9686 = vld [vmem:[%s9631 + $0x1b0] sm:$0xff]
      %v9687 = vld [vmem:[%s9631 + $0x1b8] sm:$0xff]
      %v9688 = vld [vmem:[%s9631 + $0x1c0] sm:$0xff]
      %v9689 = vld [vmem:[%s9631 + $0x1c8] sm:$0xff]
      %v9690 = vld [vmem:[%s9631 + $0x1d0] sm:$0xff]
      %v9691 = vld [vmem:[%s9631 + $0x1d8] sm:$0xff]
      %v9692 = vld [vmem:[%s9631 + $0x1e0] sm:$0xff]
      %v9693 = vld [vmem:[%s9631 + $0x1e8] sm:$0xff]
      %v9694 = vld [vmem:[%s9631 + $0x1f0] sm:$0xff]
      %v9695 = vld [vmem:[%s9631 + $0x1f8] sm:$0xff]
      %v9696 = vld [vmem:[%s9631 + $0x200] sm:$0xff]
      %v9697 = vld [vmem:[%s9631 + $0x208] sm:$0xff]
      %v9698 = vld [vmem:[%s9631 + $0x210] sm:$0xff]
      %v9699 = vld [vmem:[%s9631 + $0x218] sm:$0xff]
      %v9700 = vld [vmem:[%s9631 + $0x220] sm:$0xff]
      %v9701 = vld [vmem:[%s9631 + $0x228] sm:$0xff]
      %v9702 = vld [vmem:[%s9631 + $0x230] sm:$0xff]
      %v9703 = vld [vmem:[%s9631 + $0x238] sm:$0xff]
      %v9704 = vld [vmem:[%s9631 + $0x240] sm:$0xff]
      %v9705 = vld [vmem:[%s9631 + $0x248] sm:$0xff]
      %v9706 = vld [vmem:[%s9631 + $0x250] sm:$0xff]
      %v9707 = vld [vmem:[%s9631 + $0x258] sm:$0xff]
      %v9708 = vld [vmem:[%s9631 + $0x260] sm:$0xff]
      %v9709 = vld [vmem:[%s9631 + $0x268] sm:$0xff]
      %v9710 = vld [vmem:[%s9631 + $0x270] sm:$0xff]
      %v9711 = vld [vmem:[%s9631 + $0x278] sm:$0xff]
      %v9712 = vld [vmem:[%s9631 + $0x280] sm:$0xff]
      %v9713 = vld [vmem:[%s9631 + $0x288] sm:$0xff]
      %v9714 = vld [vmem:[%s9631 + $0x290] sm:$0xff]
      %v9715 = vld [vmem:[%s9631 + $0x298] sm:$0xff]
      %v9716 = vld [vmem:[%s9631 + $0x2a0] sm:$0xff]
      %v9717 = vld [vmem:[%s9631 + $0x2a8] sm:$0xff]
      %v9718 = vld [vmem:[%s9631 + $0x2b0] sm:$0xff]
      %v9719 = vld [vmem:[%s9631 + $0x2b8] sm:$0xff]
      %v9720 = vld [vmem:[%s9631 + $0x2c0] sm:$0xff]
      %v9721 = vld [vmem:[%s9631 + $0x2c8] sm:$0xff]
      %v9722 = vld [vmem:[%s9631 + $0x2d0] sm:$0xff]
      %v9723 = vld [vmem:[%s9631 + $0x2d8] sm:$0xff]
      %v9724 = vld [vmem:[%s9631 + $0x2e0] sm:$0xff]
      %v9725 = vld [vmem:[%s9631 + $0x2e8] sm:$0xff]
      %v9726 = vld [vmem:[%s9631 + $0x2f0] sm:$0xff]
      %v9727 = vld [vmem:[%s9631 + $0x2f8] sm:$0xff]
      %v9728 = vld [vmem:[%s9631 + $0x300] sm:$0xff]
      %v9729 = vld [vmem:[%s9631 + $0x308] sm:$0xff]
      %v9730 = vld [vmem:[%s9631 + $0x310] sm:$0xff]
      %v9731 = vld [vmem:[%s9631 + $0x318] sm:$0xff]
      %v9732 = vld [vmem:[%s9631 + $0x320] sm:$0xff]
      %v9733 = vld [vmem:[%s9631 + $0x328] sm:$0xff]
      %v9734 = vld [vmem:[%s9631 + $0x330] sm:$0xff]
      %v9735 = vld [vmem:[%s9631 + $0x338] sm:$0xff]
      %v9736 = vld [vmem:[%s9631 + $0x340] sm:$0xff]
      %v9737 = vld [vmem:[%s9631 + $0x348] sm:$0xff]
      %v9738 = vld [vmem:[%s9631 + $0x350] sm:$0xff]
      %v9739 = vld [vmem:[%s9631 + $0x358] sm:$0xff]
      %v9740 = vld [vmem:[%s9631 + $0x360] sm:$0xff]
      %v9741 = vld [vmem:[%s9631 + $0x368] sm:$0xff]
      %v9742 = vld [vmem:[%s9631 + $0x370] sm:$0xff]
      %v9743 = vld [vmem:[%s9631 + $0x378] sm:$0xff]
      %v9744 = vld [vmem:[%s9631 + $0x380] sm:$0xff]
      %v9745 = vld [vmem:[%s9631 + $0x388] sm:$0xff]
      %v9746 = vld [vmem:[%s9631 + $0x390] sm:$0xff]
      %v9747 = vld [vmem:[%s9631 + $0x398] sm:$0xff]
      %v9748 = vld [vmem:[%s9631 + $0x3a0] sm:$0xff]
      %v9749 = vld [vmem:[%s9631 + $0x3a8] sm:$0xff]
      %v9750 = vld [vmem:[%s9631 + $0x3b0] sm:$0xff]
      %v9751 = vld [vmem:[%s9631 + $0x3b8] sm:$0xff]
      %v9752 = vld [vmem:[%s9631 + $0x3c0] sm:$0xff]
      %v9753 = vld [vmem:[%s9631 + $0x3c8] sm:$0xff]
      %v9754 = vld [vmem:[%s9631 + $0x3d0] sm:$0xff]
      %v9755 = vld [vmem:[%s9631 + $0x3d8] sm:$0xff]
      %v9756 = vld [vmem:[%s9631 + $0x3e0] sm:$0xff]
      %v9757 = vld [vmem:[%s9631 + $0x3e8] sm:$0xff]
      %v9758 = vld [vmem:[%s9631 + $0x3f0] sm:$0xff]
      %v9759 = vld [vmem:[%s9631 + $0x3f8] sm:$0xff]
      %v9760 = vmul.f32 %v9632, %v9106
      %v9761 = vmul.f32 %v9633, %v9107
      %v9762 = vmul.f32 %v9634, %v9108
      %v9763 = vmul.f32 %v9635, %v9109
      %v9764 = vmul.f32 %v9636, %v9110
      %v9765 = vmul.f32 %v9637, %v9111
      %v9766 = vmul.f32 %v9638, %v9112
      %v9767 = vmul.f32 %v9639, %v9113
      %v9768 = vmul.f32 %v9640, %v9114
      %v9769 = vmul.f32 %v9641, %v9115
      %v9770 = vmul.f32 %v9642, %v9116
      %v9771 = vmul.f32 %v9643, %v9117
      %v9772 = vmul.f32 %v9644, %v9118
      %v9773 = vmul.f32 %v9645, %v9119
      %v9774 = vmul.f32 %v9646, %v9120
      %v9775 = vmul.f32 %v9647, %v9121
      %v9776 = vmul.f32 %v9648, %v9122
      %v9777 = vmul.f32 %v9649, %v9123
      %v9778 = vmul.f32 %v9650, %v9124
      %v9779 = vmul.f32 %v9651, %v9125
      %v9780 = vmul.f32 %v9652, %v9126
      %v9781 = vmul.f32 %v9653, %v9127
      %v9782 = vmul.f32 %v9654, %v9128
      %v9783 = vmul.f32 %v9655, %v9129
      %v9784 = vmul.f32 %v9656, %v9130
      %v9785 = vmul.f32 %v9657, %v9131
      %v9786 = vmul.f32 %v9658, %v9132
      %v9787 = vmul.f32 %v9659, %v9133
      %v9788 = vmul.f32 %v9660, %v9134
      %v9789 = vmul.f32 %v9661, %v9135
      %v9790 = vmul.f32 %v9662, %v9136
      %v9791 = vmul.f32 %v9663, %v9137
      %v9792 = vmul.f32 %v9664, %v9138
      %v9793 = vmul.f32 %v9665, %v9139
      %v9794 = vmul.f32 %v9666, %v9140
      %v9795 = vmul.f32 %v9667, %v9141
      %v9796 = vmul.f32 %v9668, %v9142
      %v9797 = vmul.f32 %v9669, %v9143
      %v9798 = vmul.f32 %v9670, %v9144
      %v9799 = vmul.f32 %v9671, %v9145
      %v9800 = vmul.f32 %v9672, %v9146
      %v9801 = vmul.f32 %v9673, %v9147
      %v9802 = vmul.f32 %v9674, %v9148
      %v9803 = vmul.f32 %v9675, %v9149
      %v9804 = vmul.f32 %v9676, %v9150
      %v9805 = vmul.f32 %v9677, %v9151
      %v9806 = vmul.f32 %v9678, %v9152
      %v9807 = vmul.f32 %v9679, %v9153
      %v9808 = vmul.f32 %v9680, %v9154
      %v9809 = vmul.f32 %v9681, %v9155
      %v9810 = vmul.f32 %v9682, %v9156
      %v9811 = vmul.f32 %v9683, %v9157
      %v9812 = vmul.f32 %v9684, %v9158
      %v9813 = vmul.f32 %v9685, %v9159
      %v9814 = vmul.f32 %v9686, %v9160
      %v9815 = vmul.f32 %v9687, %v9161
      %v9816 = vmul.f32 %v9688, %v9162
      %v9817 = vmul.f32 %v9689, %v9163
      %v9818 = vmul.f32 %v9690, %v9164
      %v9819 = vmul.f32 %v9691, %v9165
      %v9820 = vmul.f32 %v9692, %v9166
      %v9821 = vmul.f32 %v9693, %v9167
      %v9822 = vmul.f32 %v9694, %v9168
      %v9823 = vmul.f32 %v9695, %v9169
      %v9824 = vmul.f32 %v9696, %v9170
      %v9825 = vmul.f32 %v9697, %v9171
      %v9826 = vmul.f32 %v9698, %v9172
      %v9827 = vmul.f32 %v9699, %v9173
      %v9828 = vmul.f32 %v9700, %v9174
      %v9829 = vmul.f32 %v9701, %v9175
      %v9830 = vmul.f32 %v9702, %v9176
      %v9831 = vmul.f32 %v9703, %v9177
      %v9832 = vmul.f32 %v9704, %v9178
      %v9833 = vmul.f32 %v9705, %v9179
      %v9834 = vmul.f32 %v9706, %v9180
      %v9835 = vmul.f32 %v9707, %v9181
      %v9836 = vmul.f32 %v9708, %v9182
      %v9837 = vmul.f32 %v9709, %v9183
      %v9838 = vmul.f32 %v9710, %v9184
      %v9839 = vmul.f32 %v9711, %v9185
      %v9840 = vmul.f32 %v9712, %v9186
      %v9841 = vmul.f32 %v9713, %v9187
      %v9842 = vmul.f32 %v9714, %v9188
      %v9843 = vmul.f32 %v9715, %v9189
      %v9844 = vmul.f32 %v9716, %v9190
      %v9845 = vmul.f32 %v9717, %v9191
      %v9846 = vmul.f32 %v9718, %v9192
      %v9847 = vmul.f32 %v9719, %v9193
      %v9848 = vmul.f32 %v9720, %v9194
      %v9849 = vmul.f32 %v9721, %v9195
      %v9850 = vmul.f32 %v9722, %v9196
      %v9851 = vmul.f32 %v9723, %v9197
      %v9852 = vmul.f32 %v9724, %v9198
      %v9853 = vmul.f32 %v9725, %v9199
      %v9854 = vmul.f32 %v9726, %v9200
      %v9855 = vmul.f32 %v9727, %v9201
      %v9856 = vmul.f32 %v9728, %v9202
      %v9857 = vmul.f32 %v9729, %v9203
      %v9858 = vmul.f32 %v9730, %v9204
      %v9859 = vmul.f32 %v9731, %v9205
      %v9860 = vmul.f32 %v9732, %v9206
      %v9861 = vmul.f32 %v9733, %v9207
      %v9862 = vmul.f32 %v9734, %v9208
      %v9863 = vmul.f32 %v9735, %v9209
      %v9864 = vmul.f32 %v9736, %v9210
      %v9865 = vmul.f32 %v9737, %v9211
      %v9866 = vmul.f32 %v9738, %v9212
      %v9867 = vmul.f32 %v9739, %v9213
      %v9868 = vmul.f32 %v9740, %v9214
      %v9869 = vmul.f32 %v9741, %v9215
      %v9870 = vmul.f32 %v9742, %v9216
      %v9871 = vmul.f32 %v9743, %v9217
      %v9872 = vmul.f32 %v9744, %v9218
      %v9873 = vmul.f32 %v9745, %v9219
      %v9874 = vmul.f32 %v9746, %v9220
      %v9875 = vmul.f32 %v9747, %v9221
      %v9876 = vmul.f32 %v9748, %v9222
      %v9877 = vmul.f32 %v9749, %v9223
      %v9878 = vmul.f32 %v9750, %v9224
      %v9879 = vmul.f32 %v9751, %v9225
      %v9880 = vmul.f32 %v9752, %v9226
      %v9881 = vmul.f32 %v9753, %v9227
      %v9882 = vmul.f32 %v9754, %v9228
      %v9883 = vmul.f32 %v9755, %v9229
      %v9884 = vmul.f32 %v9756, %v9230
      %v9885 = vmul.f32 %v9757, %v9231
      %v9886 = vmul.f32 %v9758, %v9232
      %v9887 = vmul.f32 %v9759, %v9233
      %v9888 = vadd.f32 %v9760, %v9761
      %v9889 = vadd.f32 %v9888, %v9762
      %v9890 = vadd.f32 %v9889, %v9763
      %v9891 = vadd.f32 %v9890, %v9764
      %v9892 = vadd.f32 %v9891, %v9765
      %v9893 = vadd.f32 %v9892, %v9766
      %v9894 = vadd.f32 %v9893, %v9767
      %v9895 = vadd.f32 %v9894, %v9768
      %v9896 = vadd.f32 %v9895, %v9769
      %v9897 = vadd.f32 %v9896, %v9770
      %v9898 = vadd.f32 %v9897, %v9771
      %v9899 = vadd.f32 %v9898, %v9772
      %v9900 = vadd.f32 %v9899, %v9773
      %v9901 = vadd.f32 %v9900, %v9774
      %v9902 = vadd.f32 %v9901, %v9775
      %v9903 = vadd.f32 %v9902, %v9776
      %v9904 = vadd.f32 %v9903, %v9777
      %v9905 = vadd.f32 %v9904, %v9778
      %v9906 = vadd.f32 %v9905, %v9779
      %v9907 = vadd.f32 %v9906, %v9780
      %v9908 = vadd.f32 %v9907, %v9781
      %v9909 = vadd.f32 %v9908, %v9782
      %v9910 = vadd.f32 %v9909, %v9783
      %v9911 = vadd.f32 %v9910, %v9784
      %v9912 = vadd.f32 %v9911, %v9785
      %v9913 = vadd.f32 %v9912, %v9786
      %v9914 = vadd.f32 %v9913, %v9787
      %v9915 = vadd.f32 %v9914, %v9788
      %v9916 = vadd.f32 %v9915, %v9789
      %v9917 = vadd.f32 %v9916, %v9790
      %v9918 = vadd.f32 %v9917, %v9791
      %9919 = vadd.xlane.f32.xlu0 %v9918
      %v9920 = vpop.xlane.xlu0 %9919
      %v9921 = vadd.f32 %v9792, %v9793
      %v9922 = vadd.f32 %v9921, %v9794
      %v9923 = vadd.f32 %v9922, %v9795
      %v9924 = vadd.f32 %v9923, %v9796
      %v9925 = vadd.f32 %v9924, %v9797
      %v9926 = vadd.f32 %v9925, %v9798
      %v9927 = vadd.f32 %v9926, %v9799
      %v9928 = vadd.f32 %v9927, %v9800
      %v9929 = vadd.f32 %v9928, %v9801
      %v9930 = vadd.f32 %v9929, %v9802
      %v9931 = vadd.f32 %v9930, %v9803
      %v9932 = vadd.f32 %v9931, %v9804
      %v9933 = vadd.f32 %v9932, %v9805
      %v9934 = vadd.f32 %v9933, %v9806
      %v9935 = vadd.f32 %v9934, %v9807
      %v9936 = vadd.f32 %v9935, %v9808
      %v9937 = vadd.f32 %v9936, %v9809
      %v9938 = vadd.f32 %v9937, %v9810
      %v9939 = vadd.f32 %v9938, %v9811
      %v9940 = vadd.f32 %v9939, %v9812
      %v9941 = vadd.f32 %v9940, %v9813
      %v9942 = vadd.f32 %v9941, %v9814
      %v9943 = vadd.f32 %v9942, %v9815
      %v9944 = vadd.f32 %v9943, %v9816
      %v9945 = vadd.f32 %v9944, %v9817
      %v9946 = vadd.f32 %v9945, %v9818
      %v9947 = vadd.f32 %v9946, %v9819
      %v9948 = vadd.f32 %v9947, %v9820
      %v9949 = vadd.f32 %v9948, %v9821
      %v9950 = vadd.f32 %v9949, %v9822
      %v9951 = vadd.f32 %v9950, %v9823
      %9952 = vadd.xlane.f32.xlu0 %v9951
      %v9953 = vpop.xlane.xlu0 %9952
      %v9954 = vadd.f32 %v9824, %v9825
      %v9955 = vadd.f32 %v9954, %v9826
      %v9956 = vadd.f32 %v9955, %v9827
      %v9957 = vadd.f32 %v9956, %v9828
      %v9958 = vadd.f32 %v9957, %v9829
      %v9959 = vadd.f32 %v9958, %v9830
      %v9960 = vadd.f32 %v9959, %v9831
      %v9961 = vadd.f32 %v9960, %v9832
      %v9962 = vadd.f32 %v9961, %v9833
      %v9963 = vadd.f32 %v9962, %v9834
      %v9964 = vadd.f32 %v9963, %v9835
      %v9965 = vadd.f32 %v9964, %v9836
      %v9966 = vadd.f32 %v9965, %v9837
      %v9967 = vadd.f32 %v9966, %v9838
      %v9968 = vadd.f32 %v9967, %v9839
      %v9969 = vadd.f32 %v9968, %v9840
      %v9970 = vadd.f32 %v9969, %v9841
      %v9971 = vadd.f32 %v9970, %v9842
      %v9972 = vadd.f32 %v9971, %v9843
      %v9973 = vadd.f32 %v9972, %v9844
      %v9974 = vadd.f32 %v9973, %v9845
      %v9975 = vadd.f32 %v9974, %v9846
      %v9976 = vadd.f32 %v9975, %v9847
      %v9977 = vadd.f32 %v9976, %v9848
      %v9978 = vadd.f32 %v9977, %v9849
      %v9979 = vadd.f32 %v9978, %v9850
      %v9980 = vadd.f32 %v9979, %v9851
      %v9981 = vadd.f32 %v9980, %v9852
      %v9982 = vadd.f32 %v9981, %v9853
      %v9983 = vadd.f32 %v9982, %v9854
      %v9984 = vadd.f32 %v9983, %v9855
      %9985 = vadd.xlane.f32.xlu0 %v9984
      %v9986 = vpop.xlane.xlu0 %9985
      %v9987 = vadd.f32 %v9856, %v9857
      %v9988 = vadd.f32 %v9987, %v9858
      %v9989 = vadd.f32 %v9988, %v9859
      %v9990 = vadd.f32 %v9989, %v9860
      %v9991 = vadd.f32 %v9990, %v9861
      %v9992 = vadd.f32 %v9991, %v9862
      %v9993 = vadd.f32 %v9992, %v9863
      %v9994 = vadd.f32 %v9993, %v9864
      %v9995 = vadd.f32 %v9994, %v9865
      %v9996 = vadd.f32 %v9995, %v9866
      %v9997 = vadd.f32 %v9996, %v9867
      %v9998 = vadd.f32 %v9997, %v9868
      %v9999 = vadd.f32 %v9998, %v9869
      %v10000 = vadd.f32 %v9999, %v9870
      %v10001 = vadd.f32 %v10000, %v9871
      %v10002 = vadd.f32 %v10001, %v9872
      %v10003 = vadd.f32 %v10002, %v9873
      %v10004 = vadd.f32 %v10003, %v9874
      %v10005 = vadd.f32 %v10004, %v9875
      %v10006 = vadd.f32 %v10005, %v9876
      %v10007 = vadd.f32 %v10006, %v9877
      %v10008 = vadd.f32 %v10007, %v9878
      %v10009 = vadd.f32 %v10008, %v9879
      %v10010 = vadd.f32 %v10009, %v9880
      %v10011 = vadd.f32 %v10010, %v9881
      %v10012 = vadd.f32 %v10011, %v9882
      %v10013 = vadd.f32 %v10012, %v9883
      %v10014 = vadd.f32 %v10013, %v9884
      %v10015 = vadd.f32 %v10014, %v9885
      %v10016 = vadd.f32 %v10015, %v9886
      %v10017 = vadd.f32 %v10016, %v9887
      %10018 = vadd.xlane.f32.xlu0 %v10017
      %v10019 = vpop.xlane.xlu0 %10018
      %v10020 = vadd.f32 %v9920, %v9953
      %v10021 = vadd.f32 %v10020, %v9986
      %v10022 = vadd.f32 %v10021, %v10019
      %v10023 = vrot.slane %v10022, 4
      %v10024 = vadd.f32 %v10022, %v10023
      %v10025 = vrot.slane %v10024, 2
      %v10026 = vadd.f32 %v10024, %v10025
      %v10027 = vrot.slane %v10026, 1
      %v10028 = vadd.f32 %v10026, %v10027
      %s10029 = scalar_lea.vmem %s5, 2048
      %v10030 = vld [vmem:[%s10029] sm:$0xff]
      %v10031 = vld [vmem:[%s10029 + $0x8] sm:$0xff]
      %v10032 = vld [vmem:[%s10029 + $0x10] sm:$0xff]
      %v10033 = vld [vmem:[%s10029 + $0x18] sm:$0xff]
      %v10034 = vld [vmem:[%s10029 + $0x20] sm:$0xff]
      %v10035 = vld [vmem:[%s10029 + $0x28] sm:$0xff]
      %v10036 = vld [vmem:[%s10029 + $0x30] sm:$0xff]
      %v10037 = vld [vmem:[%s10029 + $0x38] sm:$0xff]
      %v10038 = vld [vmem:[%s10029 + $0x40] sm:$0xff]
      %v10039 = vld [vmem:[%s10029 + $0x48] sm:$0xff]
      %v10040 = vld [vmem:[%s10029 + $0x50] sm:$0xff]
      %v10041 = vld [vmem:[%s10029 + $0x58] sm:$0xff]
      %v10042 = vld [vmem:[%s10029 + $0x60] sm:$0xff]
      %v10043 = vld [vmem:[%s10029 + $0x68] sm:$0xff]
      %v10044 = vld [vmem:[%s10029 + $0x70] sm:$0xff]
      %v10045 = vld [vmem:[%s10029 + $0x78] sm:$0xff]
      %v10046 = vld [vmem:[%s10029 + $0x80] sm:$0xff]
      %v10047 = vld [vmem:[%s10029 + $0x88] sm:$0xff]
      %v10048 = vld [vmem:[%s10029 + $0x90] sm:$0xff]
      %v10049 = vld [vmem:[%s10029 + $0x98] sm:$0xff]
      %v10050 = vld [vmem:[%s10029 + $0xa0] sm:$0xff]
      %v10051 = vld [vmem:[%s10029 + $0xa8] sm:$0xff]
      %v10052 = vld [vmem:[%s10029 + $0xb0] sm:$0xff]
      %v10053 = vld [vmem:[%s10029 + $0xb8] sm:$0xff]
      %v10054 = vld [vmem:[%s10029 + $0xc0] sm:$0xff]
      %v10055 = vld [vmem:[%s10029 + $0xc8] sm:$0xff]
      %v10056 = vld [vmem:[%s10029 + $0xd0] sm:$0xff]
      %v10057 = vld [vmem:[%s10029 + $0xd8] sm:$0xff]
      %v10058 = vld [vmem:[%s10029 + $0xe0] sm:$0xff]
      %v10059 = vld [vmem:[%s10029 + $0xe8] sm:$0xff]
      %v10060 = vld [vmem:[%s10029 + $0xf0] sm:$0xff]
      %v10061 = vld [vmem:[%s10029 + $0xf8] sm:$0xff]
      %v10062 = vld [vmem:[%s10029 + $0x100] sm:$0xff]
      %v10063 = vld [vmem:[%s10029 + $0x108] sm:$0xff]
      %v10064 = vld [vmem:[%s10029 + $0x110] sm:$0xff]
      %v10065 = vld [vmem:[%s10029 + $0x118] sm:$0xff]
      %v10066 = vld [vmem:[%s10029 + $0x120] sm:$0xff]
      %v10067 = vld [vmem:[%s10029 + $0x128] sm:$0xff]
      %v10068 = vld [vmem:[%s10029 + $0x130] sm:$0xff]
      %v10069 = vld [vmem:[%s10029 + $0x138] sm:$0xff]
      %v10070 = vld [vmem:[%s10029 + $0x140] sm:$0xff]
      %v10071 = vld [vmem:[%s10029 + $0x148] sm:$0xff]
      %v10072 = vld [vmem:[%s10029 + $0x150] sm:$0xff]
      %v10073 = vld [vmem:[%s10029 + $0x158] sm:$0xff]
      %v10074 = vld [vmem:[%s10029 + $0x160] sm:$0xff]
      %v10075 = vld [vmem:[%s10029 + $0x168] sm:$0xff]
      %v10076 = vld [vmem:[%s10029 + $0x170] sm:$0xff]
      %v10077 = vld [vmem:[%s10029 + $0x178] sm:$0xff]
      %v10078 = vld [vmem:[%s10029 + $0x180] sm:$0xff]
      %v10079 = vld [vmem:[%s10029 + $0x188] sm:$0xff]
      %v10080 = vld [vmem:[%s10029 + $0x190] sm:$0xff]
      %v10081 = vld [vmem:[%s10029 + $0x198] sm:$0xff]
      %v10082 = vld [vmem:[%s10029 + $0x1a0] sm:$0xff]
      %v10083 = vld [vmem:[%s10029 + $0x1a8] sm:$0xff]
      %v10084 = vld [vmem:[%s10029 + $0x1b0] sm:$0xff]
      %v10085 = vld [vmem:[%s10029 + $0x1b8] sm:$0xff]
      %v10086 = vld [vmem:[%s10029 + $0x1c0] sm:$0xff]
      %v10087 = vld [vmem:[%s10029 + $0x1c8] sm:$0xff]
      %v10088 = vld [vmem:[%s10029 + $0x1d0] sm:$0xff]
      %v10089 = vld [vmem:[%s10029 + $0x1d8] sm:$0xff]
      %v10090 = vld [vmem:[%s10029 + $0x1e0] sm:$0xff]
      %v10091 = vld [vmem:[%s10029 + $0x1e8] sm:$0xff]
      %v10092 = vld [vmem:[%s10029 + $0x1f0] sm:$0xff]
      %v10093 = vld [vmem:[%s10029 + $0x1f8] sm:$0xff]
      %v10094 = vld [vmem:[%s10029 + $0x200] sm:$0xff]
      %v10095 = vld [vmem:[%s10029 + $0x208] sm:$0xff]
      %v10096 = vld [vmem:[%s10029 + $0x210] sm:$0xff]
      %v10097 = vld [vmem:[%s10029 + $0x218] sm:$0xff]
      %v10098 = vld [vmem:[%s10029 + $0x220] sm:$0xff]
      %v10099 = vld [vmem:[%s10029 + $0x228] sm:$0xff]
      %v10100 = vld [vmem:[%s10029 + $0x230] sm:$0xff]
      %v10101 = vld [vmem:[%s10029 + $0x238] sm:$0xff]
      %v10102 = vld [vmem:[%s10029 + $0x240] sm:$0xff]
      %v10103 = vld [vmem:[%s10029 + $0x248] sm:$0xff]
      %v10104 = vld [vmem:[%s10029 + $0x250] sm:$0xff]
      %v10105 = vld [vmem:[%s10029 + $0x258] sm:$0xff]
      %v10106 = vld [vmem:[%s10029 + $0x260] sm:$0xff]
      %v10107 = vld [vmem:[%s10029 + $0x268] sm:$0xff]
      %v10108 = vld [vmem:[%s10029 + $0x270] sm:$0xff]
      %v10109 = vld [vmem:[%s10029 + $0x278] sm:$0xff]
      %v10110 = vld [vmem:[%s10029 + $0x280] sm:$0xff]
      %v10111 = vld [vmem:[%s10029 + $0x288] sm:$0xff]
      %v10112 = vld [vmem:[%s10029 + $0x290] sm:$0xff]
      %v10113 = vld [vmem:[%s10029 + $0x298] sm:$0xff]
      %v10114 = vld [vmem:[%s10029 + $0x2a0] sm:$0xff]
      %v10115 = vld [vmem:[%s10029 + $0x2a8] sm:$0xff]
      %v10116 = vld [vmem:[%s10029 + $0x2b0] sm:$0xff]
      %v10117 = vld [vmem:[%s10029 + $0x2b8] sm:$0xff]
      %v10118 = vld [vmem:[%s10029 + $0x2c0] sm:$0xff]
      %v10119 = vld [vmem:[%s10029 + $0x2c8] sm:$0xff]
      %v10120 = vld [vmem:[%s10029 + $0x2d0] sm:$0xff]
      %v10121 = vld [vmem:[%s10029 + $0x2d8] sm:$0xff]
      %v10122 = vld [vmem:[%s10029 + $0x2e0] sm:$0xff]
      %v10123 = vld [vmem:[%s10029 + $0x2e8] sm:$0xff]
      %v10124 = vld [vmem:[%s10029 + $0x2f0] sm:$0xff]
      %v10125 = vld [vmem:[%s10029 + $0x2f8] sm:$0xff]
      %v10126 = vld [vmem:[%s10029 + $0x300] sm:$0xff]
      %v10127 = vld [vmem:[%s10029 + $0x308] sm:$0xff]
      %v10128 = vld [vmem:[%s10029 + $0x310] sm:$0xff]
      %v10129 = vld [vmem:[%s10029 + $0x318] sm:$0xff]
      %v10130 = vld [vmem:[%s10029 + $0x320] sm:$0xff]
      %v10131 = vld [vmem:[%s10029 + $0x328] sm:$0xff]
      %v10132 = vld [vmem:[%s10029 + $0x330] sm:$0xff]
      %v10133 = vld [vmem:[%s10029 + $0x338] sm:$0xff]
      %v10134 = vld [vmem:[%s10029 + $0x340] sm:$0xff]
      %v10135 = vld [vmem:[%s10029 + $0x348] sm:$0xff]
      %v10136 = vld [vmem:[%s10029 + $0x350] sm:$0xff]
      %v10137 = vld [vmem:[%s10029 + $0x358] sm:$0xff]
      %v10138 = vld [vmem:[%s10029 + $0x360] sm:$0xff]
      %v10139 = vld [vmem:[%s10029 + $0x368] sm:$0xff]
      %v10140 = vld [vmem:[%s10029 + $0x370] sm:$0xff]
      %v10141 = vld [vmem:[%s10029 + $0x378] sm:$0xff]
      %v10142 = vld [vmem:[%s10029 + $0x380] sm:$0xff]
      %v10143 = vld [vmem:[%s10029 + $0x388] sm:$0xff]
      %v10144 = vld [vmem:[%s10029 + $0x390] sm:$0xff]
      %v10145 = vld [vmem:[%s10029 + $0x398] sm:$0xff]
      %v10146 = vld [vmem:[%s10029 + $0x3a0] sm:$0xff]
      %v10147 = vld [vmem:[%s10029 + $0x3a8] sm:$0xff]
      %v10148 = vld [vmem:[%s10029 + $0x3b0] sm:$0xff]
      %v10149 = vld [vmem:[%s10029 + $0x3b8] sm:$0xff]
      %v10150 = vld [vmem:[%s10029 + $0x3c0] sm:$0xff]
      %v10151 = vld [vmem:[%s10029 + $0x3c8] sm:$0xff]
      %v10152 = vld [vmem:[%s10029 + $0x3d0] sm:$0xff]
      %v10153 = vld [vmem:[%s10029 + $0x3d8] sm:$0xff]
      %v10154 = vld [vmem:[%s10029 + $0x3e0] sm:$0xff]
      %v10155 = vld [vmem:[%s10029 + $0x3e8] sm:$0xff]
      %v10156 = vld [vmem:[%s10029 + $0x3f0] sm:$0xff]
      %v10157 = vld [vmem:[%s10029 + $0x3f8] sm:$0xff]
      %v10158 = vmul.f32 %v10030, %v9106
      %v10159 = vmul.f32 %v10031, %v9107
      %v10160 = vmul.f32 %v10032, %v9108
      %v10161 = vmul.f32 %v10033, %v9109
      %v10162 = vmul.f32 %v10034, %v9110
      %v10163 = vmul.f32 %v10035, %v9111
      %v10164 = vmul.f32 %v10036, %v9112
      %v10165 = vmul.f32 %v10037, %v9113
      %v10166 = vmul.f32 %v10038, %v9114
      %v10167 = vmul.f32 %v10039, %v9115
      %v10168 = vmul.f32 %v10040, %v9116
      %v10169 = vmul.f32 %v10041, %v9117
      %v10170 = vmul.f32 %v10042, %v9118
      %v10171 = vmul.f32 %v10043, %v9119
      %v10172 = vmul.f32 %v10044, %v9120
      %v10173 = vmul.f32 %v10045, %v9121
      %v10174 = vmul.f32 %v10046, %v9122
      %v10175 = vmul.f32 %v10047, %v9123
      %v10176 = vmul.f32 %v10048, %v9124
      %v10177 = vmul.f32 %v10049, %v9125
      %v10178 = vmul.f32 %v10050, %v9126
      %v10179 = vmul.f32 %v10051, %v9127
      %v10180 = vmul.f32 %v10052, %v9128
      %v10181 = vmul.f32 %v10053, %v9129
      %v10182 = vmul.f32 %v10054, %v9130
      %v10183 = vmul.f32 %v10055, %v9131
      %v10184 = vmul.f32 %v10056, %v9132
      %v10185 = vmul.f32 %v10057, %v9133
      %v10186 = vmul.f32 %v10058, %v9134
      %v10187 = vmul.f32 %v10059, %v9135
      %v10188 = vmul.f32 %v10060, %v9136
      %v10189 = vmul.f32 %v10061, %v9137
      %v10190 = vmul.f32 %v10062, %v9138
      %v10191 = vmul.f32 %v10063, %v9139
      %v10192 = vmul.f32 %v10064, %v9140
      %v10193 = vmul.f32 %v10065, %v9141
      %v10194 = vmul.f32 %v10066, %v9142
      %v10195 = vmul.f32 %v10067, %v9143
      %v10196 = vmul.f32 %v10068, %v9144
      %v10197 = vmul.f32 %v10069, %v9145
      %v10198 = vmul.f32 %v10070, %v9146
      %v10199 = vmul.f32 %v10071, %v9147
      %v10200 = vmul.f32 %v10072, %v9148
      %v10201 = vmul.f32 %v10073, %v9149
      %v10202 = vmul.f32 %v10074, %v9150
      %v10203 = vmul.f32 %v10075, %v9151
      %v10204 = vmul.f32 %v10076, %v9152
      %v10205 = vmul.f32 %v10077, %v9153
      %v10206 = vmul.f32 %v10078, %v9154
      %v10207 = vmul.f32 %v10079, %v9155
      %v10208 = vmul.f32 %v10080, %v9156
      %v10209 = vmul.f32 %v10081, %v9157
      %v10210 = vmul.f32 %v10082, %v9158
      %v10211 = vmul.f32 %v10083, %v9159
      %v10212 = vmul.f32 %v10084, %v9160
      %v10213 = vmul.f32 %v10085, %v9161
      %v10214 = vmul.f32 %v10086, %v9162
      %v10215 = vmul.f32 %v10087, %v9163
      %v10216 = vmul.f32 %v10088, %v9164
      %v10217 = vmul.f32 %v10089, %v9165
      %v10218 = vmul.f32 %v10090, %v9166
      %v10219 = vmul.f32 %v10091, %v9167
      %v10220 = vmul.f32 %v10092, %v9168
      %v10221 = vmul.f32 %v10093, %v9169
      %v10222 = vmul.f32 %v10094, %v9170
      %v10223 = vmul.f32 %v10095, %v9171
      %v10224 = vmul.f32 %v10096, %v9172
      %v10225 = vmul.f32 %v10097, %v9173
      %v10226 = vmul.f32 %v10098, %v9174
      %v10227 = vmul.f32 %v10099, %v9175
      %v10228 = vmul.f32 %v10100, %v9176
      %v10229 = vmul.f32 %v10101, %v9177
      %v10230 = vmul.f32 %v10102, %v9178
      %v10231 = vmul.f32 %v10103, %v9179
      %v10232 = vmul.f32 %v10104, %v9180
      %v10233 = vmul.f32 %v10105, %v9181
      %v10234 = vmul.f32 %v10106, %v9182
      %v10235 = vmul.f32 %v10107, %v9183
      %v10236 = vmul.f32 %v10108, %v9184
      %v10237 = vmul.f32 %v10109, %v9185
      %v10238 = vmul.f32 %v10110, %v9186
      %v10239 = vmul.f32 %v10111, %v9187
      %v10240 = vmul.f32 %v10112, %v9188
      %v10241 = vmul.f32 %v10113, %v9189
      %v10242 = vmul.f32 %v10114, %v9190
      %v10243 = vmul.f32 %v10115, %v9191
      %v10244 = vmul.f32 %v10116, %v9192
      %v10245 = vmul.f32 %v10117, %v9193
      %v10246 = vmul.f32 %v10118, %v9194
      %v10247 = vmul.f32 %v10119, %v9195
      %v10248 = vmul.f32 %v10120, %v9196
      %v10249 = vmul.f32 %v10121, %v9197
      %v10250 = vmul.f32 %v10122, %v9198
      %v10251 = vmul.f32 %v10123, %v9199
      %v10252 = vmul.f32 %v10124, %v9200
      %v10253 = vmul.f32 %v10125, %v9201
      %v10254 = vmul.f32 %v10126, %v9202
      %v10255 = vmul.f32 %v10127, %v9203
      %v10256 = vmul.f32 %v10128, %v9204
      %v10257 = vmul.f32 %v10129, %v9205
      %v10258 = vmul.f32 %v10130, %v9206
      %v10259 = vmul.f32 %v10131, %v9207
      %v10260 = vmul.f32 %v10132, %v9208
      %v10261 = vmul.f32 %v10133, %v9209
      %v10262 = vmul.f32 %v10134, %v9210
      %v10263 = vmul.f32 %v10135, %v9211
      %v10264 = vmul.f32 %v10136, %v9212
      %v10265 = vmul.f32 %v10137, %v9213
      %v10266 = vmul.f32 %v10138, %v9214
      %v10267 = vmul.f32 %v10139, %v9215
      %v10268 = vmul.f32 %v10140, %v9216
      %v10269 = vmul.f32 %v10141, %v9217
      %v10270 = vmul.f32 %v10142, %v9218
      %v10271 = vmul.f32 %v10143, %v9219
      %v10272 = vmul.f32 %v10144, %v9220
      %v10273 = vmul.f32 %v10145, %v9221
      %v10274 = vmul.f32 %v10146, %v9222
      %v10275 = vmul.f32 %v10147, %v9223
      %v10276 = vmul.f32 %v10148, %v9224
      %v10277 = vmul.f32 %v10149, %v9225
      %v10278 = vmul.f32 %v10150, %v9226
      %v10279 = vmul.f32 %v10151, %v9227
      %v10280 = vmul.f32 %v10152, %v9228
      %v10281 = vmul.f32 %v10153, %v9229
      %v10282 = vmul.f32 %v10154, %v9230
      %v10283 = vmul.f32 %v10155, %v9231
      %v10284 = vmul.f32 %v10156, %v9232
      %v10285 = vmul.f32 %v10157, %v9233
      %v10286 = vadd.f32 %v10158, %v10159
      %v10287 = vadd.f32 %v10286, %v10160
      %v10288 = vadd.f32 %v10287, %v10161
      %v10289 = vadd.f32 %v10288, %v10162
      %v10290 = vadd.f32 %v10289, %v10163
      %v10291 = vadd.f32 %v10290, %v10164
      %v10292 = vadd.f32 %v10291, %v10165
      %v10293 = vadd.f32 %v10292, %v10166
      %v10294 = vadd.f32 %v10293, %v10167
      %v10295 = vadd.f32 %v10294, %v10168
      %v10296 = vadd.f32 %v10295, %v10169
      %v10297 = vadd.f32 %v10296, %v10170
      %v10298 = vadd.f32 %v10297, %v10171
      %v10299 = vadd.f32 %v10298, %v10172
      %v10300 = vadd.f32 %v10299, %v10173
      %v10301 = vadd.f32 %v10300, %v10174
      %v10302 = vadd.f32 %v10301, %v10175
      %v10303 = vadd.f32 %v10302, %v10176
      %v10304 = vadd.f32 %v10303, %v10177
      %v10305 = vadd.f32 %v10304, %v10178
      %v10306 = vadd.f32 %v10305, %v10179
      %v10307 = vadd.f32 %v10306, %v10180
      %v10308 = vadd.f32 %v10307, %v10181
      %v10309 = vadd.f32 %v10308, %v10182
      %v10310 = vadd.f32 %v10309, %v10183
      %v10311 = vadd.f32 %v10310, %v10184
      %v10312 = vadd.f32 %v10311, %v10185
      %v10313 = vadd.f32 %v10312, %v10186
      %v10314 = vadd.f32 %v10313, %v10187
      %v10315 = vadd.f32 %v10314, %v10188
      %v10316 = vadd.f32 %v10315, %v10189
      %10317 = vadd.xlane.f32.xlu0 %v10316
      %v10318 = vpop.xlane.xlu0 %10317
      %v10319 = vadd.f32 %v10190, %v10191
      %v10320 = vadd.f32 %v10319, %v10192
      %v10321 = vadd.f32 %v10320, %v10193
      %v10322 = vadd.f32 %v10321, %v10194
      %v10323 = vadd.f32 %v10322, %v10195
      %v10324 = vadd.f32 %v10323, %v10196
      %v10325 = vadd.f32 %v10324, %v10197
      %v10326 = vadd.f32 %v10325, %v10198
      %v10327 = vadd.f32 %v10326, %v10199
      %v10328 = vadd.f32 %v10327, %v10200
      %v10329 = vadd.f32 %v10328, %v10201
      %v10330 = vadd.f32 %v10329, %v10202
      %v10331 = vadd.f32 %v10330, %v10203
      %v10332 = vadd.f32 %v10331, %v10204
      %v10333 = vadd.f32 %v10332, %v10205
      %v10334 = vadd.f32 %v10333, %v10206
      %v10335 = vadd.f32 %v10334, %v10207
      %v10336 = vadd.f32 %v10335, %v10208
      %v10337 = vadd.f32 %v10336, %v10209
      %v10338 = vadd.f32 %v10337, %v10210
      %v10339 = vadd.f32 %v10338, %v10211
      %v10340 = vadd.f32 %v10339, %v10212
      %v10341 = vadd.f32 %v10340, %v10213
      %v10342 = vadd.f32 %v10341, %v10214
      %v10343 = vadd.f32 %v10342, %v10215
      %v10344 = vadd.f32 %v10343, %v10216
      %v10345 = vadd.f32 %v10344, %v10217
      %v10346 = vadd.f32 %v10345, %v10218
      %v10347 = vadd.f32 %v10346, %v10219
      %v10348 = vadd.f32 %v10347, %v10220
      %v10349 = vadd.f32 %v10348, %v10221
      %10350 = vadd.xlane.f32.xlu0 %v10349
      %v10351 = vpop.xlane.xlu0 %10350
      %v10352 = vadd.f32 %v10222, %v10223
      %v10353 = vadd.f32 %v10352, %v10224
      %v10354 = vadd.f32 %v10353, %v10225
      %v10355 = vadd.f32 %v10354, %v10226
      %v10356 = vadd.f32 %v10355, %v10227
      %v10357 = vadd.f32 %v10356, %v10228
      %v10358 = vadd.f32 %v10357, %v10229
      %v10359 = vadd.f32 %v10358, %v10230
      %v10360 = vadd.f32 %v10359, %v10231
      %v10361 = vadd.f32 %v10360, %v10232
      %v10362 = vadd.f32 %v10361, %v10233
      %v10363 = vadd.f32 %v10362, %v10234
      %v10364 = vadd.f32 %v10363, %v10235
      %v10365 = vadd.f32 %v10364, %v10236
      %v10366 = vadd.f32 %v10365, %v10237
      %v10367 = vadd.f32 %v10366, %v10238
      %v10368 = vadd.f32 %v10367, %v10239
      %v10369 = vadd.f32 %v10368, %v10240
      %v10370 = vadd.f32 %v10369, %v10241
      %v10371 = vadd.f32 %v10370, %v10242
      %v10372 = vadd.f32 %v10371, %v10243
      %v10373 = vadd.f32 %v10372, %v10244
      %v10374 = vadd.f32 %v10373, %v10245
      %v10375 = vadd.f32 %v10374, %v10246
      %v10376 = vadd.f32 %v10375, %v10247
      %v10377 = vadd.f32 %v10376, %v10248
      %v10378 = vadd.f32 %v10377, %v10249
      %v10379 = vadd.f32 %v10378, %v10250
      %v10380 = vadd.f32 %v10379, %v10251
      %v10381 = vadd.f32 %v10380, %v10252
      %v10382 = vadd.f32 %v10381, %v10253
      %10383 = vadd.xlane.f32.xlu0 %v10382
      %v10384 = vpop.xlane.xlu0 %10383
      %v10385 = vadd.f32 %v10254, %v10255
      %v10386 = vadd.f32 %v10385, %v10256
      %v10387 = vadd.f32 %v10386, %v10257
      %v10388 = vadd.f32 %v10387, %v10258
      %v10389 = vadd.f32 %v10388, %v10259
      %v10390 = vadd.f32 %v10389, %v10260
      %v10391 = vadd.f32 %v10390, %v10261
      %v10392 = vadd.f32 %v10391, %v10262
      %v10393 = vadd.f32 %v10392, %v10263
      %v10394 = vadd.f32 %v10393, %v10264
      %v10395 = vadd.f32 %v10394, %v10265
      %v10396 = vadd.f32 %v10395, %v10266
      %v10397 = vadd.f32 %v10396, %v10267
      %v10398 = vadd.f32 %v10397, %v10268
      %v10399 = vadd.f32 %v10398, %v10269
      %v10400 = vadd.f32 %v10399, %v10270
      %v10401 = vadd.f32 %v10400, %v10271
      %v10402 = vadd.f32 %v10401, %v10272
      %v10403 = vadd.f32 %v10402, %v10273
      %v10404 = vadd.f32 %v10403, %v10274
      %v10405 = vadd.f32 %v10404, %v10275
      %v10406 = vadd.f32 %v10405, %v10276
      %v10407 = vadd.f32 %v10406, %v10277
      %v10408 = vadd.f32 %v10407, %v10278
      %v10409 = vadd.f32 %v10408, %v10279
      %v10410 = vadd.f32 %v10409, %v10280
      %v10411 = vadd.f32 %v10410, %v10281
      %v10412 = vadd.f32 %v10411, %v10282
      %v10413 = vadd.f32 %v10412, %v10283
      %v10414 = vadd.f32 %v10413, %v10284
      %v10415 = vadd.f32 %v10414, %v10285
      %10416 = vadd.xlane.f32.xlu0 %v10415
      %v10417 = vpop.xlane.xlu0 %10416
      %v10418 = vadd.f32 %v10318, %v10351
      %v10419 = vadd.f32 %v10418, %v10384
      %v10420 = vadd.f32 %v10419, %v10417
      %v10421 = vrot.slane %v10420, 4
      %v10422 = vadd.f32 %v10420, %v10421
      %v10423 = vrot.slane %v10422, 2
      %v10424 = vadd.f32 %v10422, %v10423
      %v10425 = vrot.slane %v10424, 1
      %v10426 = vadd.f32 %v10424, %v10425
      %s10427 = scalar_lea.vmem %s5, 3072
      %v10428 = vld [vmem:[%s10427] sm:$0xff]
      %v10429 = vld [vmem:[%s10427 + $0x8] sm:$0xff]
      %v10430 = vld [vmem:[%s10427 + $0x10] sm:$0xff]
      %v10431 = vld [vmem:[%s10427 + $0x18] sm:$0xff]
      %v10432 = vld [vmem:[%s10427 + $0x20] sm:$0xff]
      %v10433 = vld [vmem:[%s10427 + $0x28] sm:$0xff]
      %v10434 = vld [vmem:[%s10427 + $0x30] sm:$0xff]
      %v10435 = vld [vmem:[%s10427 + $0x38] sm:$0xff]
      %v10436 = vld [vmem:[%s10427 + $0x40] sm:$0xff]
      %v10437 = vld [vmem:[%s10427 + $0x48] sm:$0xff]
      %v10438 = vld [vmem:[%s10427 + $0x50] sm:$0xff]
      %v10439 = vld [vmem:[%s10427 + $0x58] sm:$0xff]
      %v10440 = vld [vmem:[%s10427 + $0x60] sm:$0xff]
      %v10441 = vld [vmem:[%s10427 + $0x68] sm:$0xff]
      %v10442 = vld [vmem:[%s10427 + $0x70] sm:$0xff]
      %v10443 = vld [vmem:[%s10427 + $0x78] sm:$0xff]
      %v10444 = vld [vmem:[%s10427 + $0x80] sm:$0xff]
      %v10445 = vld [vmem:[%s10427 + $0x88] sm:$0xff]
      %v10446 = vld [vmem:[%s10427 + $0x90] sm:$0xff]
      %v10447 = vld [vmem:[%s10427 + $0x98] sm:$0xff]
      %v10448 = vld [vmem:[%s10427 + $0xa0] sm:$0xff]
      %v10449 = vld [vmem:[%s10427 + $0xa8] sm:$0xff]
      %v10450 = vld [vmem:[%s10427 + $0xb0] sm:$0xff]
      %v10451 = vld [vmem:[%s10427 + $0xb8] sm:$0xff]
      %v10452 = vld [vmem:[%s10427 + $0xc0] sm:$0xff]
      %v10453 = vld [vmem:[%s10427 + $0xc8] sm:$0xff]
      %v10454 = vld [vmem:[%s10427 + $0xd0] sm:$0xff]
      %v10455 = vld [vmem:[%s10427 + $0xd8] sm:$0xff]
      %v10456 = vld [vmem:[%s10427 + $0xe0] sm:$0xff]
      %v10457 = vld [vmem:[%s10427 + $0xe8] sm:$0xff]
      %v10458 = vld [vmem:[%s10427 + $0xf0] sm:$0xff]
      %v10459 = vld [vmem:[%s10427 + $0xf8] sm:$0xff]
      %v10460 = vld [vmem:[%s10427 + $0x100] sm:$0xff]
      %v10461 = vld [vmem:[%s10427 + $0x108] sm:$0xff]
      %v10462 = vld [vmem:[%s10427 + $0x110] sm:$0xff]
      %v10463 = vld [vmem:[%s10427 + $0x118] sm:$0xff]
      %v10464 = vld [vmem:[%s10427 + $0x120] sm:$0xff]
      %v10465 = vld [vmem:[%s10427 + $0x128] sm:$0xff]
      %v10466 = vld [vmem:[%s10427 + $0x130] sm:$0xff]
      %v10467 = vld [vmem:[%s10427 + $0x138] sm:$0xff]
      %v10468 = vld [vmem:[%s10427 + $0x140] sm:$0xff]
      %v10469 = vld [vmem:[%s10427 + $0x148] sm:$0xff]
      %v10470 = vld [vmem:[%s10427 + $0x150] sm:$0xff]
      %v10471 = vld [vmem:[%s10427 + $0x158] sm:$0xff]
      %v10472 = vld [vmem:[%s10427 + $0x160] sm:$0xff]
      %v10473 = vld [vmem:[%s10427 + $0x168] sm:$0xff]
      %v10474 = vld [vmem:[%s10427 + $0x170] sm:$0xff]
      %v10475 = vld [vmem:[%s10427 + $0x178] sm:$0xff]
      %v10476 = vld [vmem:[%s10427 + $0x180] sm:$0xff]
      %v10477 = vld [vmem:[%s10427 + $0x188] sm:$0xff]
      %v10478 = vld [vmem:[%s10427 + $0x190] sm:$0xff]
      %v10479 = vld [vmem:[%s10427 + $0x198] sm:$0xff]
      %v10480 = vld [vmem:[%s10427 + $0x1a0] sm:$0xff]
      %v10481 = vld [vmem:[%s10427 + $0x1a8] sm:$0xff]
      %v10482 = vld [vmem:[%s10427 + $0x1b0] sm:$0xff]
      %v10483 = vld [vmem:[%s10427 + $0x1b8] sm:$0xff]
      %v10484 = vld [vmem:[%s10427 + $0x1c0] sm:$0xff]
      %v10485 = vld [vmem:[%s10427 + $0x1c8] sm:$0xff]
      %v10486 = vld [vmem:[%s10427 + $0x1d0] sm:$0xff]
      %v10487 = vld [vmem:[%s10427 + $0x1d8] sm:$0xff]
      %v10488 = vld [vmem:[%s10427 + $0x1e0] sm:$0xff]
      %v10489 = vld [vmem:[%s10427 + $0x1e8] sm:$0xff]
      %v10490 = vld [vmem:[%s10427 + $0x1f0] sm:$0xff]
      %v10491 = vld [vmem:[%s10427 + $0x1f8] sm:$0xff]
      %v10492 = vld [vmem:[%s10427 + $0x200] sm:$0xff]
      %v10493 = vld [vmem:[%s10427 + $0x208] sm:$0xff]
      %v10494 = vld [vmem:[%s10427 + $0x210] sm:$0xff]
      %v10495 = vld [vmem:[%s10427 + $0x218] sm:$0xff]
      %v10496 = vld [vmem:[%s10427 + $0x220] sm:$0xff]
      %v10497 = vld [vmem:[%s10427 + $0x228] sm:$0xff]
      %v10498 = vld [vmem:[%s10427 + $0x230] sm:$0xff]
      %v10499 = vld [vmem:[%s10427 + $0x238] sm:$0xff]
      %v10500 = vld [vmem:[%s10427 + $0x240] sm:$0xff]
      %v10501 = vld [vmem:[%s10427 + $0x248] sm:$0xff]
      %v10502 = vld [vmem:[%s10427 + $0x250] sm:$0xff]
      %v10503 = vld [vmem:[%s10427 + $0x258] sm:$0xff]
      %v10504 = vld [vmem:[%s10427 + $0x260] sm:$0xff]
      %v10505 = vld [vmem:[%s10427 + $0x268] sm:$0xff]
      %v10506 = vld [vmem:[%s10427 + $0x270] sm:$0xff]
      %v10507 = vld [vmem:[%s10427 + $0x278] sm:$0xff]
      %v10508 = vld [vmem:[%s10427 + $0x280] sm:$0xff]
      %v10509 = vld [vmem:[%s10427 + $0x288] sm:$0xff]
      %v10510 = vld [vmem:[%s10427 + $0x290] sm:$0xff]
      %v10511 = vld [vmem:[%s10427 + $0x298] sm:$0xff]
      %v10512 = vld [vmem:[%s10427 + $0x2a0] sm:$0xff]
      %v10513 = vld [vmem:[%s10427 + $0x2a8] sm:$0xff]
      %v10514 = vld [vmem:[%s10427 + $0x2b0] sm:$0xff]
      %v10515 = vld [vmem:[%s10427 + $0x2b8] sm:$0xff]
      %v10516 = vld [vmem:[%s10427 + $0x2c0] sm:$0xff]
      %v10517 = vld [vmem:[%s10427 + $0x2c8] sm:$0xff]
      %v10518 = vld [vmem:[%s10427 + $0x2d0] sm:$0xff]
      %v10519 = vld [vmem:[%s10427 + $0x2d8] sm:$0xff]
      %v10520 = vld [vmem:[%s10427 + $0x2e0] sm:$0xff]
      %v10521 = vld [vmem:[%s10427 + $0x2e8] sm:$0xff]
      %v10522 = vld [vmem:[%s10427 + $0x2f0] sm:$0xff]
      %v10523 = vld [vmem:[%s10427 + $0x2f8] sm:$0xff]
      %v10524 = vld [vmem:[%s10427 + $0x300] sm:$0xff]
      %v10525 = vld [vmem:[%s10427 + $0x308] sm:$0xff]
      %v10526 = vld [vmem:[%s10427 + $0x310] sm:$0xff]
      %v10527 = vld [vmem:[%s10427 + $0x318] sm:$0xff]
      %v10528 = vld [vmem:[%s10427 + $0x320] sm:$0xff]
      %v10529 = vld [vmem:[%s10427 + $0x328] sm:$0xff]
      %v10530 = vld [vmem:[%s10427 + $0x330] sm:$0xff]
      %v10531 = vld [vmem:[%s10427 + $0x338] sm:$0xff]
      %v10532 = vld [vmem:[%s10427 + $0x340] sm:$0xff]
      %v10533 = vld [vmem:[%s10427 + $0x348] sm:$0xff]
      %v10534 = vld [vmem:[%s10427 + $0x350] sm:$0xff]
      %v10535 = vld [vmem:[%s10427 + $0x358] sm:$0xff]
      %v10536 = vld [vmem:[%s10427 + $0x360] sm:$0xff]
      %v10537 = vld [vmem:[%s10427 + $0x368] sm:$0xff]
      %v10538 = vld [vmem:[%s10427 + $0x370] sm:$0xff]
      %v10539 = vld [vmem:[%s10427 + $0x378] sm:$0xff]
      %v10540 = vld [vmem:[%s10427 + $0x380] sm:$0xff]
      %v10541 = vld [vmem:[%s10427 + $0x388] sm:$0xff]
      %v10542 = vld [vmem:[%s10427 + $0x390] sm:$0xff]
      %v10543 = vld [vmem:[%s10427 + $0x398] sm:$0xff]
      %v10544 = vld [vmem:[%s10427 + $0x3a0] sm:$0xff]
      %v10545 = vld [vmem:[%s10427 + $0x3a8] sm:$0xff]
      %v10546 = vld [vmem:[%s10427 + $0x3b0] sm:$0xff]
      %v10547 = vld [vmem:[%s10427 + $0x3b8] sm:$0xff]
      %v10548 = vld [vmem:[%s10427 + $0x3c0] sm:$0xff]
      %v10549 = vld [vmem:[%s10427 + $0x3c8] sm:$0xff]
      %v10550 = vld [vmem:[%s10427 + $0x3d0] sm:$0xff]
      %v10551 = vld [vmem:[%s10427 + $0x3d8] sm:$0xff]
      %v10552 = vld [vmem:[%s10427 + $0x3e0] sm:$0xff]
      %v10553 = vld [vmem:[%s10427 + $0x3e8] sm:$0xff]
      %v10554 = vld [vmem:[%s10427 + $0x3f0] sm:$0xff]
      %v10555 = vld [vmem:[%s10427 + $0x3f8] sm:$0xff]
      %v10556 = vmul.f32 %v10428, %v9106
      %v10557 = vmul.f32 %v10429, %v9107
      %v10558 = vmul.f32 %v10430, %v9108
      %v10559 = vmul.f32 %v10431, %v9109
      %v10560 = vmul.f32 %v10432, %v9110
      %v10561 = vmul.f32 %v10433, %v9111
      %v10562 = vmul.f32 %v10434, %v9112
      %v10563 = vmul.f32 %v10435, %v9113
      %v10564 = vmul.f32 %v10436, %v9114
      %v10565 = vmul.f32 %v10437, %v9115
      %v10566 = vmul.f32 %v10438, %v9116
      %v10567 = vmul.f32 %v10439, %v9117
      %v10568 = vmul.f32 %v10440, %v9118
      %v10569 = vmul.f32 %v10441, %v9119
      %v10570 = vmul.f32 %v10442, %v9120
      %v10571 = vmul.f32 %v10443, %v9121
      %v10572 = vmul.f32 %v10444, %v9122
      %v10573 = vmul.f32 %v10445, %v9123
      %v10574 = vmul.f32 %v10446, %v9124
      %v10575 = vmul.f32 %v10447, %v9125
      %v10576 = vmul.f32 %v10448, %v9126
      %v10577 = vmul.f32 %v10449, %v9127
      %v10578 = vmul.f32 %v10450, %v9128
      %v10579 = vmul.f32 %v10451, %v9129
      %v10580 = vmul.f32 %v10452, %v9130
      %v10581 = vmul.f32 %v10453, %v9131
      %v10582 = vmul.f32 %v10454, %v9132
      %v10583 = vmul.f32 %v10455, %v9133
      %v10584 = vmul.f32 %v10456, %v9134
      %v10585 = vmul.f32 %v10457, %v9135
      %v10586 = vmul.f32 %v10458, %v9136
      %v10587 = vmul.f32 %v10459, %v9137
      %v10588 = vmul.f32 %v10460, %v9138
      %v10589 = vmul.f32 %v10461, %v9139
      %v10590 = vmul.f32 %v10462, %v9140
      %v10591 = vmul.f32 %v10463, %v9141
      %v10592 = vmul.f32 %v10464, %v9142
      %v10593 = vmul.f32 %v10465, %v9143
      %v10594 = vmul.f32 %v10466, %v9144
      %v10595 = vmul.f32 %v10467, %v9145
      %v10596 = vmul.f32 %v10468, %v9146
      %v10597 = vmul.f32 %v10469, %v9147
      %v10598 = vmul.f32 %v10470, %v9148
      %v10599 = vmul.f32 %v10471, %v9149
      %v10600 = vmul.f32 %v10472, %v9150
      %v10601 = vmul.f32 %v10473, %v9151
      %v10602 = vmul.f32 %v10474, %v9152
      %v10603 = vmul.f32 %v10475, %v9153
      %v10604 = vmul.f32 %v10476, %v9154
      %v10605 = vmul.f32 %v10477, %v9155
      %v10606 = vmul.f32 %v10478, %v9156
      %v10607 = vmul.f32 %v10479, %v9157
      %v10608 = vmul.f32 %v10480, %v9158
      %v10609 = vmul.f32 %v10481, %v9159
      %v10610 = vmul.f32 %v10482, %v9160
      %v10611 = vmul.f32 %v10483, %v9161
      %v10612 = vmul.f32 %v10484, %v9162
      %v10613 = vmul.f32 %v10485, %v9163
      %v10614 = vmul.f32 %v10486, %v9164
      %v10615 = vmul.f32 %v10487, %v9165
      %v10616 = vmul.f32 %v10488, %v9166
      %v10617 = vmul.f32 %v10489, %v9167
      %v10618 = vmul.f32 %v10490, %v9168
      %v10619 = vmul.f32 %v10491, %v9169
      %v10620 = vmul.f32 %v10492, %v9170
      %v10621 = vmul.f32 %v10493, %v9171
      %v10622 = vmul.f32 %v10494, %v9172
      %v10623 = vmul.f32 %v10495, %v9173
      %v10624 = vmul.f32 %v10496, %v9174
      %v10625 = vmul.f32 %v10497, %v9175
      %v10626 = vmul.f32 %v10498, %v9176
      %v10627 = vmul.f32 %v10499, %v9177
      %v10628 = vmul.f32 %v10500, %v9178
      %v10629 = vmul.f32 %v10501, %v9179
      %v10630 = vmul.f32 %v10502, %v9180
      %v10631 = vmul.f32 %v10503, %v9181
      %v10632 = vmul.f32 %v10504, %v9182
      %v10633 = vmul.f32 %v10505, %v9183
      %v10634 = vmul.f32 %v10506, %v9184
      %v10635 = vmul.f32 %v10507, %v9185
      %v10636 = vmul.f32 %v10508, %v9186
      %v10637 = vmul.f32 %v10509, %v9187
      %v10638 = vmul.f32 %v10510, %v9188
      %v10639 = vmul.f32 %v10511, %v9189
      %v10640 = vmul.f32 %v10512, %v9190
      %v10641 = vmul.f32 %v10513, %v9191
      %v10642 = vmul.f32 %v10514, %v9192
      %v10643 = vmul.f32 %v10515, %v9193
      %v10644 = vmul.f32 %v10516, %v9194
      %v10645 = vmul.f32 %v10517, %v9195
      %v10646 = vmul.f32 %v10518, %v9196
      %v10647 = vmul.f32 %v10519, %v9197
      %v10648 = vmul.f32 %v10520, %v9198
      %v10649 = vmul.f32 %v10521, %v9199
      %v10650 = vmul.f32 %v10522, %v9200
      %v10651 = vmul.f32 %v10523, %v9201
      %v10652 = vmul.f32 %v10524, %v9202
      %v10653 = vmul.f32 %v10525, %v9203
      %v10654 = vmul.f32 %v10526, %v9204
      %v10655 = vmul.f32 %v10527, %v9205
      %v10656 = vmul.f32 %v10528, %v9206
      %v10657 = vmul.f32 %v10529, %v9207
      %v10658 = vmul.f32 %v10530, %v9208
      %v10659 = vmul.f32 %v10531, %v9209
      %v10660 = vmul.f32 %v10532, %v9210
      %v10661 = vmul.f32 %v10533, %v9211
      %v10662 = vmul.f32 %v10534, %v9212
      %v10663 = vmul.f32 %v10535, %v9213
      %v10664 = vmul.f32 %v10536, %v9214
      %v10665 = vmul.f32 %v10537, %v9215
      %v10666 = vmul.f32 %v10538, %v9216
      %v10667 = vmul.f32 %v10539, %v9217
      %v10668 = vmul.f32 %v10540, %v9218
      %v10669 = vmul.f32 %v10541, %v9219
      %v10670 = vmul.f32 %v10542, %v9220
      %v10671 = vmul.f32 %v10543, %v9221
      %v10672 = vmul.f32 %v10544, %v9222
      %v10673 = vmul.f32 %v10545, %v9223
      %v10674 = vmul.f32 %v10546, %v9224
      %v10675 = vmul.f32 %v10547, %v9225
      %v10676 = vmul.f32 %v10548, %v9226
      %v10677 = vmul.f32 %v10549, %v9227
      %v10678 = vmul.f32 %v10550, %v9228
      %v10679 = vmul.f32 %v10551, %v9229
      %v10680 = vmul.f32 %v10552, %v9230
      %v10681 = vmul.f32 %v10553, %v9231
      %v10682 = vmul.f32 %v10554, %v9232
      %v10683 = vmul.f32 %v10555, %v9233
      %v10684 = vadd.f32 %v10556, %v10557
      %v10685 = vadd.f32 %v10684, %v10558
      %v10686 = vadd.f32 %v10685, %v10559
      %v10687 = vadd.f32 %v10686, %v10560
      %v10688 = vadd.f32 %v10687, %v10561
      %v10689 = vadd.f32 %v10688, %v10562
      %v10690 = vadd.f32 %v10689, %v10563
      %v10691 = vadd.f32 %v10690, %v10564
      %v10692 = vadd.f32 %v10691, %v10565
      %v10693 = vadd.f32 %v10692, %v10566
      %v10694 = vadd.f32 %v10693, %v10567
      %v10695 = vadd.f32 %v10694, %v10568
      %v10696 = vadd.f32 %v10695, %v10569
      %v10697 = vadd.f32 %v10696, %v10570
      %v10698 = vadd.f32 %v10697, %v10571
      %v10699 = vadd.f32 %v10698, %v10572
      %v10700 = vadd.f32 %v10699, %v10573
      %v10701 = vadd.f32 %v10700, %v10574
      %v10702 = vadd.f32 %v10701, %v10575
      %v10703 = vadd.f32 %v10702, %v10576
      %v10704 = vadd.f32 %v10703, %v10577
      %v10705 = vadd.f32 %v10704, %v10578
      %v10706 = vadd.f32 %v10705, %v10579
      %v10707 = vadd.f32 %v10706, %v10580
      %v10708 = vadd.f32 %v10707, %v10581
      %v10709 = vadd.f32 %v10708, %v10582
      %v10710 = vadd.f32 %v10709, %v10583
      %v10711 = vadd.f32 %v10710, %v10584
      %v10712 = vadd.f32 %v10711, %v10585
      %v10713 = vadd.f32 %v10712, %v10586
      %v10714 = vadd.f32 %v10713, %v10587
      %10715 = vadd.xlane.f32.xlu0 %v10714
      %v10716 = vpop.xlane.xlu0 %10715
      %v10717 = vadd.f32 %v10588, %v10589
      %v10718 = vadd.f32 %v10717, %v10590
      %v10719 = vadd.f32 %v10718, %v10591
      %v10720 = vadd.f32 %v10719, %v10592
      %v10721 = vadd.f32 %v10720, %v10593
      %v10722 = vadd.f32 %v10721, %v10594
      %v10723 = vadd.f32 %v10722, %v10595
      %v10724 = vadd.f32 %v10723, %v10596
      %v10725 = vadd.f32 %v10724, %v10597
      %v10726 = vadd.f32 %v10725, %v10598
      %v10727 = vadd.f32 %v10726, %v10599
      %v10728 = vadd.f32 %v10727, %v10600
      %v10729 = vadd.f32 %v10728, %v10601
      %v10730 = vadd.f32 %v10729, %v10602
      %v10731 = vadd.f32 %v10730, %v10603
      %v10732 = vadd.f32 %v10731, %v10604
      %v10733 = vadd.f32 %v10732, %v10605
      %v10734 = vadd.f32 %v10733, %v10606
      %v10735 = vadd.f32 %v10734, %v10607
      %v10736 = vadd.f32 %v10735, %v10608
      %v10737 = vadd.f32 %v10736, %v10609
      %v10738 = vadd.f32 %v10737, %v10610
      %v10739 = vadd.f32 %v10738, %v10611
      %v10740 = vadd.f32 %v10739, %v10612
      %v10741 = vadd.f32 %v10740, %v10613
      %v10742 = vadd.f32 %v10741, %v10614
      %v10743 = vadd.f32 %v10742, %v10615
      %v10744 = vadd.f32 %v10743, %v10616
      %v10745 = vadd.f32 %v10744, %v10617
      %v10746 = vadd.f32 %v10745, %v10618
      %v10747 = vadd.f32 %v10746, %v10619
      %10748 = vadd.xlane.f32.xlu0 %v10747
      %v10749 = vpop.xlane.xlu0 %10748
      %v10750 = vadd.f32 %v10620, %v10621
      %v10751 = vadd.f32 %v10750, %v10622
      %v10752 = vadd.f32 %v10751, %v10623
      %v10753 = vadd.f32 %v10752, %v10624
      %v10754 = vadd.f32 %v10753, %v10625
      %v10755 = vadd.f32 %v10754, %v10626
      %v10756 = vadd.f32 %v10755, %v10627
      %v10757 = vadd.f32 %v10756, %v10628
      %v10758 = vadd.f32 %v10757, %v10629
      %v10759 = vadd.f32 %v10758, %v10630
      %v10760 = vadd.f32 %v10759, %v10631
      %v10761 = vadd.f32 %v10760, %v10632
      %v10762 = vadd.f32 %v10761, %v10633
      %v10763 = vadd.f32 %v10762, %v10634
      %v10764 = vadd.f32 %v10763, %v10635
      %v10765 = vadd.f32 %v10764, %v10636
      %v10766 = vadd.f32 %v10765, %v10637
      %v10767 = vadd.f32 %v10766, %v10638
      %v10768 = vadd.f32 %v10767, %v10639
      %v10769 = vadd.f32 %v10768, %v10640
      %v10770 = vadd.f32 %v10769, %v10641
      %v10771 = vadd.f32 %v10770, %v10642
      %v10772 = vadd.f32 %v10771, %v10643
      %v10773 = vadd.f32 %v10772, %v10644
      %v10774 = vadd.f32 %v10773, %v10645
      %v10775 = vadd.f32 %v10774, %v10646
      %v10776 = vadd.f32 %v10775, %v10647
      %v10777 = vadd.f32 %v10776, %v10648
      %v10778 = vadd.f32 %v10777, %v10649
      %v10779 = vadd.f32 %v10778, %v10650
      %v10780 = vadd.f32 %v10779, %v10651
      %10781 = vadd.xlane.f32.xlu0 %v10780
      %v10782 = vpop.xlane.xlu0 %10781
      %v10783 = vadd.f32 %v10652, %v10653
      %v10784 = vadd.f32 %v10783, %v10654
      %v10785 = vadd.f32 %v10784, %v10655
      %v10786 = vadd.f32 %v10785, %v10656
      %v10787 = vadd.f32 %v10786, %v10657
      %v10788 = vadd.f32 %v10787, %v10658
      %v10789 = vadd.f32 %v10788, %v10659
      %v10790 = vadd.f32 %v10789, %v10660
      %v10791 = vadd.f32 %v10790, %v10661
      %v10792 = vadd.f32 %v10791, %v10662
      %v10793 = vadd.f32 %v10792, %v10663
      %v10794 = vadd.f32 %v10793, %v10664
      %v10795 = vadd.f32 %v10794, %v10665
      %v10796 = vadd.f32 %v10795, %v10666
      %v10797 = vadd.f32 %v10796, %v10667
      %v10798 = vadd.f32 %v10797, %v10668
      %v10799 = vadd.f32 %v10798, %v10669
      %v10800 = vadd.f32 %v10799, %v10670
      %v10801 = vadd.f32 %v10800, %v10671
      %v10802 = vadd.f32 %v10801, %v10672
      %v10803 = vadd.f32 %v10802, %v10673
      %v10804 = vadd.f32 %v10803, %v10674
      %v10805 = vadd.f32 %v10804, %v10675
      %v10806 = vadd.f32 %v10805, %v10676
      %v10807 = vadd.f32 %v10806, %v10677
      %v10808 = vadd.f32 %v10807, %v10678
      %v10809 = vadd.f32 %v10808, %v10679
      %v10810 = vadd.f32 %v10809, %v10680
      %v10811 = vadd.f32 %v10810, %v10681
      %v10812 = vadd.f32 %v10811, %v10682
      %v10813 = vadd.f32 %v10812, %v10683
      %10814 = vadd.xlane.f32.xlu0 %v10813
      %v10815 = vpop.xlane.xlu0 %10814
      %v10816 = vadd.f32 %v10716, %v10749
      %v10817 = vadd.f32 %v10816, %v10782
      %v10818 = vadd.f32 %v10817, %v10815
      %v10819 = vrot.slane %v10818, 4
      %v10820 = vadd.f32 %v10818, %v10819
      %v10821 = vrot.slane %v10820, 2
      %v10822 = vadd.f32 %v10820, %v10821
      %v10823 = vrot.slane %v10822, 1
      %v10824 = vadd.f32 %v10822, %v10823
      %v10825 = vsel %vm2805, %v9630, %v10028
      %v10826 = vsel %vm2904, %v10825, %v10426
      %v10827 = vsel %vm2739, %v10826, %v10824
      %v10828 = vld [vmem:[%s6] sm:$0xf]
      %v10829 = vadd.f32 %v10827, %v10828
      %vm10830 = vcmask 3072
      %10831 = vst.msk [vmem:[%s278] sm:$0xf] %vm10830, %v10829
      %p10832 = scmp.lt.s32.totalorder %s18, 1
      %s10833 = scalar_select %p10832, %s18, 1
      %s10834 = smul.addr %s10833, 4
      %s10835 = scalar_lea.vmem %s7, %s10834
      // Predicated region
      $region49: #{weather_forward.1} parent=47 // pred_check
        %p10836 = pneg %p188
      $region50: #{weather_forward.1} parent=47 // pred_check_branch
        %10838 = sbr.rel (%p10836) target = $region52
      $region51: #{weather_forward.1} parent=47 // pred_region
        _
      $region52: #{weather_forward.1} parent=47 // pred_fallthru
        _
    $region48: #{weather_forward.1} parent=5 // pred_fallthru
      _
    %p10839 = scmp.le.s32.totalorder 2, %s13
    // Predicated region
    $region53: #{weather_forward.1} parent=5 // pred_check
      %p10840 = pneg %p10839
    $region54: #{weather_forward.1} parent=5 // pred_check_branch
      %10842 = sbr.rel (%p10840) target = $region56
    $region55: #{weather_forward.1} parent=5 // pred_region
      %s10843 = ssub.s32 %s13, 2
      // Predicated region
      $region57: #{weather_forward.1} parent=55 // pred_check
        %p10844 = pneg %p194
      $region58: #{weather_forward.1} parent=55 // pred_check_branch
        %10846 = sbr.rel (%p10844) target = $region60
      $region59: #{weather_forward.1} parent=55 // pred_region
        %p10847 = scmp.lt.s32.totalorder %s19, 1
        %s10848 = scalar_select %p10847, %s19, 1
        %s10849 = smul.addr %s10848, 4
        %s10850 = scalar_lea.vmem %s7, %s10849
      $region60: #{weather_forward.1} parent=55 // pred_fallthru
        _
    $region56: #{weather_forward.1} parent=5 // pred_fallthru
      _
  $region6: #{weather_forward.1} parent=0 // loop_footer
    %s17 = sadd.s32 1, %s13
  $region7: #{weather_forward.1} parent=0 // loop_footer_branch
    %12 = sbr.rel target = $region3
  $region8: #{weather_forward.1} parent=0 // loop_exit
    _

</llo_original>
